<compile_context>
chip_gen: v7x
topology: tpu7x:2x2x1
jax: 0.10.0
libtpu: 0.0.40
codegen_flags: <defaults>
</compile_context>

<pallas_src>
import functools

import numpy as np
import jax
import jax.numpy as jnp
from jax.experimental import pallas as pl
from jax.experimental.pallas import tpu as pltpu


# ----------------------------------------------------------------------------
# Pallas kernels
# ----------------------------------------------------------------------------
def _mm_bias_relu_kernel(a_ref, w_ref, b_ref, o_ref):
    # (tm, K) @ (K, N) + bias, ReLU.  bf16 operands, f32 accumulate.
    acc = jnp.dot(a_ref[...], w_ref[...], preferred_element_type=jnp.float32)
    acc = acc + b_ref[...]
    o_ref[...] = jnp.maximum(acc, 0.0).astype(o_ref.dtype)


def _bmm_bias_relu_kernel(a_ref, w_ref, b_ref, o_ref):
    # One network per grid step: (M, K) @ (K, N) + bias, ReLU.
    acc = jnp.dot(a_ref[0], w_ref[0], preferred_element_type=jnp.float32)
    acc = acc + b_ref[0]
    o_ref[0] = jnp.maximum(acc, 0.0).astype(o_ref.dtype)


def _fc_head_kernel(a_ref, fw_ref, fb_ref, hw_ref, hb_ref, o_ref):
    # Fused Linear(3136->512)+ReLU followed by the (padded) head matmul.
    h = jnp.dot(a_ref[0], fw_ref[0], preferred_element_type=jnp.float32)
    h = jnp.maximum(h + fb_ref[0], 0.0)
    out = jnp.dot(h.astype(jnp.bfloat16), hw_ref[0],
                  preferred_element_type=jnp.float32)
    o_ref[0] = out + hb_ref[0]


# ----------------------------------------------------------------------------
# pallas_call wrappers
# ----------------------------------------------------------------------------
def conv1_matmul(p1, w, b):
    """p1: (M, K) bf16, w: (K, N) bf16, b: (1, N) f32 -> (M, N) bf16."""
    m, k = p1.shape
    n = w.shape[1]
    m_tiles = 2 if m % 16 == 0 else 1          # 2-way M split (v7x megacore)
    tm = m // m_tiles
    return pl.pallas_call(
        _mm_bias_relu_kernel,
        out_shape=jax.ShapeDtypeStruct((m, n), jnp.bfloat16),
        grid=(m_tiles,),
        in_specs=[
            pl.BlockSpec((tm, k), lambda i: (i, 0)),
            pl.BlockSpec((k, n), lambda i: (0, 0)),
            pl.BlockSpec((1, n), lambda i: (0, 0)),
        ],
        out_specs=pl.BlockSpec((tm, n), lambda i: (i, 0)),
        compiler_params=pltpu.CompilerParams(
            dimension_semantics=("parallel",)),
    )(p1, w, b)


def batched_conv_matmul(p, w, b):
    """p: (2, M, K) bf16, w: (2, K, N) bf16, b: (2, 1, N) f32 -> (2, M, N) bf16."""
    g, m, k = p.shape
    n = w.shape[2]
    return pl.pallas_call(
        _bmm_bias_relu_kernel,
        out_shape=jax.ShapeDtypeStruct((g, m, n), jnp.bfloat16),
        grid=(g,),
        in_specs=[
            pl.BlockSpec((1, m, k), lambda i: (i, 0, 0)),
            pl.BlockSpec((1, k, n), lambda i: (i, 0, 0)),
            pl.BlockSpec((1, 1, n), lambda i: (i, 0, 0)),
        ],
        out_specs=pl.BlockSpec((1, m, n), lambda i: (i, 0, 0)),
        compiler_params=pltpu.CompilerParams(
            dimension_semantics=("parallel",)),
    )(p, w, b)


def fused_fc_heads(a, fw, fb, hw, hb):
    """a: (2, N, 3136) bf16; fw: (2, 3136, 512); hw: (2, 512, 8) -> (2, N, 8) f32."""
    g, m, k = a.shape
    d = fw.shape[2]
    n = hw.shape[2]
    return pl.pallas_call(
        _fc_head_kernel,
        out_shape=jax.ShapeDtypeStruct((g, m, n), jnp.float32),
        grid=(g,),
        in_specs=[
            pl.BlockSpec((1, m, k), lambda i: (i, 0, 0)),
            pl.BlockSpec((1, k, d), lambda i: (i, 0, 0)),
            pl.BlockSpec((1, 1, d), lambda i: (i, 0, 0)),
            pl.BlockSpec((1, d, n), lambda i: (i, 0, 0)),
            pl.BlockSpec((1, 1, n), lambda i: (i, 0, 0)),
        ],
        out_specs=pl.BlockSpec((1, m, n), lambda i: (i, 0, 0)),
        compiler_params=pltpu.CompilerParams(
            dimension_semantics=("parallel",)),
    )(a, fw, fb, hw, hb)


# ----------------------------------------------------------------------------
# NHWC im2col glue (slices + concat along lanes; no transposes)
# ----------------------------------------------------------------------------
def im2col_nhwc(x, kh, kw, stride):
    """x: (..., H, W, C) -> (..., OH, OW, kh*kw*C); feature order (ki, kj, c)."""
    h, w = x.shape[-3], x.shape[-2]
    oh = (h - kh) // stride + 1
    ow = (w - kw) // stride + 1
    cols = []
    for ki in range(kh):
        for kj in range(kw):
            cols.append(x[..., ki:ki + stride * oh:stride,
                             kj:kj + stride * ow:stride, :])
    return jnp.concatenate(cols, axis=-1)


# ----------------------------------------------------------------------------
# Deterministic parameter init (mirrors layer_init: orthogonal weight, 0 bias)
# ----------------------------------------------------------------------------
def _orthogonal(rng, shape, std):
    rows = shape[0]
    cols = int(np.prod(shape[1:])) if len(shape) > 1 else 1
    a = rng.standard_normal((max(rows, cols), min(rows, cols))).astype(np.float32)
    q, r = np.linalg.qr(a)
    q = q * np.sign(np.diag(r))
    if rows < cols:
        q = q.T
    return (std * q[:rows, :cols]).reshape(shape).astype(np.float32)


def _conv_w_to_mat(w_ockk):
    # torch (O, C, kh, kw) -> (kh*kw*C, O), matching the NHWC im2col feature order.
    o, c, kh, kw = w_ockk.shape
    return np.transpose(w_ockk, (2, 3, 1, 0)).reshape(kh * kw * c, o)


def _fc_w_to_mat(w_torch):
    # torch (512, 64*7*7) with rows ... wait columns in (C,H,W) order -> (3136, 512)
    # with rows permuted to (H, W, C) so it matches the NHWC flatten.
    w = w_torch.reshape(512, 64, 7, 7).transpose(0, 2, 3, 1).reshape(512, 64 * 7 * 7)
    return np.ascontiguousarray(w.T)


def _init_atari_net_torch(rng):
    std = float(np.sqrt(2.0))
    return {
        "c1_w": _orthogonal(rng, (32, 4, 8, 8), std),
        "c2_w": _orthogonal(rng, (64, 32, 4, 4), std),
        "c3_w": _orthogonal(rng, (64, 64, 3, 3), std),
        "fc_w": _orthogonal(rng, (512, 64 * 7 * 7), std),
    }


def build_agent_params(rng, n_actions, head_pad=8):
    a = _init_atari_net_torch(rng)   # actor network
    c = _init_atari_net_torch(rng)   # critic network (share_network=False)
    actor_w = _orthogonal(rng, (n_actions, 512), 0.01)
    critic_w = _orthogonal(rng, (1, 512), 1.0)

    hw = np.zeros((2, 512, head_pad), np.float32)
    hw[0, :, :n_actions] = actor_w.T
    hw[1, :, :1] = critic_w.T

    return {
        # conv1: actor/critic output channels concatenated (shared im2col)
        "c1_w": jnp.asarray(np.concatenate(
            [_conv_w_to_mat(a["c1_w"]), _conv_w_to_mat(c["c1_w"])], axis=1),
            dtype=jnp.bfloat16),                                   # (256, 64)
        "c1_b": jnp.zeros((1, 64), jnp.float32),
        # conv2 / conv3 / fc: stacked along a network axis
        "c2_w": jnp.asarray(np.stack(
            [_conv_w_to_mat(a["c2_w"]), _conv_w_to_mat(c["c2_w"])]),
            dtype=jnp.bfloat16),                                   # (2, 512, 64)
        "c2_b": jnp.zeros((2, 1, 64), jnp.float32),
        "c3_w": jnp.asarray(np.stack(
            [_conv_w_to_mat(a["c3_w"]), _conv_w_to_mat(c["c3_w"])]),
            dtype=jnp.bfloat16),                                   # (2, 576, 64)
        "c3_b": jnp.zeros((2, 1, 64), jnp.float32),
        "fc_w": jnp.asarray(np.stack(
            [_fc_w_to_mat(a["fc_w"]), _fc_w_to_mat(c["fc_w"])]),
            dtype=jnp.bfloat16),                                   # (2, 3136, 512)
        "fc_b": jnp.zeros((2, 1, 512), jnp.float32),
        "head_w": jnp.asarray(hw, dtype=jnp.bfloat16),             # (2, 512, 8)
        "head_b": jnp.zeros((2, 1, head_pad), jnp.float32),
    }


# ----------------------------------------------------------------------------
# Agent forward
# ----------------------------------------------------------------------------
def agent_forward(x_nchw, p, *, n_actions):
    # x: (N, 4, 84, 84) float32 NCHW (PyTorch convention, as forward() expects).
    n = x_nchw.shape[0]
    x = jnp.transpose(x_nchw, (0, 2, 3, 1)).astype(jnp.bfloat16)       # NHWC once

    # conv1: shared im2col, actor+critic output channels fused (32 -> 64 lanes)
    p1 = im2col_nhwc(x, 8, 8, 4).reshape(n * 20 * 20, -1)              # (800, 256)
    y1 = conv1_matmul(p1, p["c1_w"], p["c1_b"])                        # (800, 64)
    y1 = y1.reshape(n, 20, 20, 64)
    y1 = jnp.stack([y1[..., :32], y1[..., 32:]], axis=0)               # (2,N,20,20,32)

    # conv2 (both networks in one call, grid over networks)
    p2 = im2col_nhwc(y1, 4, 4, 2).reshape(2, n * 9 * 9, -1)            # (2, 162, 512)
    y2 = batched_conv_matmul(p2, p["c2_w"], p["c2_b"])                 # (2, 162, 64)
    y2 = y2.reshape(2, n, 9, 9, 64)

    # conv3
    p3 = im2col_nhwc(y2, 3, 3, 1).reshape(2, n * 7 * 7, -1)            # (2, 98, 576)
    y3 = batched_conv_matmul(p3, p["c3_w"], p["c3_b"])                 # (2, 98, 64)

    # flatten (NHWC order matches permuted fc rows) + fc + heads, fused
    feats = y3.reshape(2, n, 7 * 7 * 64)                               # (2, N, 3136)
    out = fused_fc_heads(feats, p["fc_w"], p["fc_b"],
                         p["head_w"], p["head_b"])                     # (2, N, 8)
    logits = out[0, :, :n_actions]
    value = out[1, :, :1]
    return logits, value


if __name__ == "__main__":
    N_ACTIONS = 6
    BATCH = 2

    rng = np.random.default_rng(0)
    params = build_agent_params(rng, N_ACTIONS)

    # Atari-sized input is required by the Linear(64*7*7, 512) layer.
    key = jax.random.PRNGKey(0)
    x = jax.random.uniform(key, (BATCH, 4, 84, 84), dtype=jnp.float32)

    fwd = jax.jit(functools.partial(agent_forward, n_actions=N_ACTIONS))
    logits, value = fwd(x, params)
    jax.block_until_ready((logits, value))

    assert logits.shape == (BATCH, N_ACTIONS) and value.shape == (BATCH, 1)
    assert bool(jnp.all(jnp.isfinite(logits))) and bool(jnp.all(jnp.isfinite(value)))
    print("KERNEL_OK")
</pallas_src>

<mosaic_0001>
module attributes {stable_mosaic.version = 11 : i64} {
  func.func @_mm_bias_relu_kernel(%arg0: i32, %arg1: memref<400x256xbf16, #tpu.memory_space<vmem>>, %arg2: memref<256x64xbf16, #tpu.memory_space<vmem>>, %arg3: memref<1x64xf32, #tpu.memory_space<vmem>>, %arg4: memref<400x64xbf16, #tpu.memory_space<vmem>>) attributes {dimension_semantics = [#tpu.dimension_semantics<parallel>], iteration_bounds = array<i64: 2>, scalar_prefetch = 0 : i64, scratch_operands = 0 : i64, tpu.core_type = #tpu.core_type<tc>, window_params = [{transform_indices = @transform_0, window_bounds = array<i64: 400, 256>}, {pipeline_mode = #tpu.pipeline_mode<synchronous>, transform_indices = @transform_1, window_bounds = array<i64: 256, 64>}, {pipeline_mode = #tpu.pipeline_mode<synchronous>, transform_indices = @transform_2, window_bounds = array<i64: 1, 64>}, {transform_indices = @transform_3, window_bounds = array<i64: 400, 64>}]} {
    %c0 = arith.constant 0 : index
    %c0_0 = arith.constant 0 : index
    %0 = vector.load %arg1[%c0, %c0_0] : memref<400x256xbf16, #tpu.memory_space<vmem>>, vector<400x256xbf16>
    %c0_1 = arith.constant 0 : index
    %c0_2 = arith.constant 0 : index
    %1 = vector.load %arg2[%c0_1, %c0_2] : memref<256x64xbf16, #tpu.memory_space<vmem>>, vector<256x64xbf16>
    %cst = arith.constant dense<0.000000e+00> : vector<400x64xf32>
    %2 = tpu.matmul %0, %1, %cst {dimension_numbers = #tpu.dot_dimension_numbers<[1], [0], [0], [1], [0, 0, 1, 1], [], []>} : vector<400x256xbf16>, vector<256x64xbf16>, vector<400x64xf32> -> vector<400x64xf32>
    %c0_3 = arith.constant 0 : index
    %c0_4 = arith.constant 0 : index
    %3 = vector.load %arg3[%c0_3, %c0_4] : memref<1x64xf32, #tpu.memory_space<vmem>>, vector<1x64xf32>
    %4 = vector.broadcast %3 : vector<1x64xf32> to vector<400x64xf32>
    %5 = arith.addf %2, %4 : vector<400x64xf32>
    %cst_5 = arith.constant 0.000000e+00 : f32
    %6 = vector.broadcast %cst_5 : f32 to vector<400x64xf32>
    %7 = arith.maximumf %5, %6 : vector<400x64xf32>
    %8 = arith.truncf %7 : vector<400x64xf32> to vector<400x64xbf16>
    %c0_6 = arith.constant 0 : index
    %c0_7 = arith.constant 0 : index
    %9 = vector.load %arg4[%c0_6, %c0_7] : memref<400x64xbf16, #tpu.memory_space<vmem>>, vector<400x64xbf16>
    tpu.vector_store %arg4[%c0_6, %c0_7], %8 {strides = array<i32>} : memref<400x64xbf16, #tpu.memory_space<vmem>>, vector<400x64xbf16>,
    return
  }
  func.func @transform_0(%arg0: i32) -> (i32, i32) {
    %c0_i32 = arith.constant 0 : i32
    %c0_i32_0 = arith.constant 0 : i32
    return %arg0, %c0_i32 : i32, i32
  }
  func.func @transform_1(%arg0: i32) -> (i32, i32) {
    %c0_i32 = arith.constant 0 : i32
    %c0_i32_0 = arith.constant 0 : i32
    %c0_i32_1 = arith.constant 0 : i32
    return %c0_i32, %c0_i32_0 : i32, i32
  }
  func.func @transform_2(%arg0: i32) -> (i32, i32) {
    %c0_i32 = arith.constant 0 : i32
    %c0_i32_0 = arith.constant 0 : i32
    %c0_i32_1 = arith.constant 0 : i32
    return %c0_i32, %c0_i32_0 : i32, i32
  }
  func.func @transform_3(%arg0: i32) -> (i32, i32) {
    %c0_i32 = arith.constant 0 : i32
    %c0_i32_0 = arith.constant 0 : i32
    return %arg0, %c0_i32 : i32, i32
  }
}

module attributes {stable_mosaic.version = 11 : i64} {
  func.func @_bmm_bias_relu_kernel(%arg0: i32, %arg1: memref<1x162x512xbf16, #tpu.memory_space<vmem>>, %arg2: memref<1x512x64xbf16, #tpu.memory_space<vmem>>, %arg3: memref<1x1x64xf32, #tpu.memory_space<vmem>>, %arg4: memref<1x162x64xbf16, #tpu.memory_space<vmem>>) attributes {dimension_semantics = [#tpu.dimension_semantics<parallel>], iteration_bounds = array<i64: 2>, scalar_prefetch = 0 : i64, scratch_operands = 0 : i64, tpu.core_type = #tpu.core_type<tc>, window_params = [{transform_indices = @transform_0, window_bounds = array<i64: 1, 162, 512>}, {transform_indices = @transform_1, window_bounds = array<i64: 1, 512, 64>}, {transform_indices = @transform_2, window_bounds = array<i64: 1, 1, 64>}, {transform_indices = @transform_3, window_bounds = array<i64: 1, 162, 64>}]} {
    %c0 = arith.constant 0 : index
    %c0_0 = arith.constant 0 : index
    %c0_1 = arith.constant 0 : index
    %0 = vector.load %arg1[%c0, %c0_0, %c0_1] : memref<1x162x512xbf16, #tpu.memory_space<vmem>>, vector<1x162x512xbf16>
    %1 = vector.shape_cast %0 : vector<1x162x512xbf16> to vector<162x512xbf16>
    %c0_2 = arith.constant 0 : index
    %c0_3 = arith.constant 0 : index
    %c0_4 = arith.constant 0 : index
    %2 = vector.load %arg2[%c0_2, %c0_3, %c0_4] : memref<1x512x64xbf16, #tpu.memory_space<vmem>>, vector<1x512x64xbf16>
    %3 = vector.shape_cast %2 : vector<1x512x64xbf16> to vector<512x64xbf16>
    %cst = arith.constant dense<0.000000e+00> : vector<162x64xf32>
    %4 = tpu.matmul %1, %3, %cst {dimension_numbers = #tpu.dot_dimension_numbers<[1], [0], [0], [1], [0, 0, 1, 1], [], []>} : vector<162x512xbf16>, vector<512x64xbf16>, vector<162x64xf32> -> vector<162x64xf32>
    %c0_5 = arith.constant 0 : index
    %c0_6 = arith.constant 0 : index
    %c0_7 = arith.constant 0 : index
    %5 = vector.load %arg3[%c0_5, %c0_6, %c0_7] : memref<1x1x64xf32, #tpu.memory_space<vmem>>, vector<1x1x64xf32>
    %6 = vector.shape_cast %5 : vector<1x1x64xf32> to vector<1x64xf32>
    %7 = vector.broadcast %6 : vector<1x64xf32> to vector<162x64xf32>
    %8 = arith.addf %4, %7 : vector<162x64xf32>
    %cst_8 = arith.constant 0.000000e+00 : f32
    %9 = vector.broadcast %cst_8 : f32 to vector<162x64xf32>
    %10 = arith.maximumf %8, %9 : vector<162x64xf32>
    %11 = arith.truncf %10 : vector<162x64xf32> to vector<162x64xbf16>
    %c0_9 = arith.constant 0 : index
    %c0_10 = arith.constant 0 : index
    %c0_11 = arith.constant 0 : index
    %12 = vector.load %arg4[%c0_9, %c0_10, %c0_11] : memref<1x162x64xbf16, #tpu.memory_space<vmem>>, vector<1x162x64xbf16>
    %13 = vector.shape_cast %12 : vector<1x162x64xbf16> to vector<162x64xbf16>
    %14 = vector.shape_cast %11 : vector<162x64xbf16> to vector<1x162x64xbf16>
    tpu.vector_store %arg4[%c0_9, %c0_10, %c0_11], %14 {strides = array<i32>} : memref<1x162x64xbf16, #tpu.memory_space<vmem>>, vector<1x162x64xbf16>,
    return
  }
  func.func @transform_0(%arg0: i32) -> (i32, i32, i32) {
    %c0_i32 = arith.constant 0 : i32
    %c0_i32_0 = arith.constant 0 : i32
    %c0_i32_1 = arith.constant 0 : i32
    return %arg0, %c0_i32, %c0_i32_0 : i32, i32, i32
  }
  func.func @transform_1(%arg0: i32) -> (i32, i32, i32) {
    %c0_i32 = arith.constant 0 : i32
    %c0_i32_0 = arith.constant 0 : i32
    %c0_i32_1 = arith.constant 0 : i32
    return %arg0, %c0_i32, %c0_i32_0 : i32, i32, i32
  }
  func.func @transform_2(%arg0: i32) -> (i32, i32, i32) {
    %c0_i32 = arith.constant 0 : i32
    %c0_i32_0 = arith.constant 0 : i32
    %c0_i32_1 = arith.constant 0 : i32
    return %arg0, %c0_i32, %c0_i32_0 : i32, i32, i32
  }
  func.func @transform_3(%arg0: i32) -> (i32, i32, i32) {
    %c0_i32 = arith.constant 0 : i32
    %c0_i32_0 = arith.constant 0 : i32
    %c0_i32_1 = arith.constant 0 : i32
    return %arg0, %c0_i32, %c0_i32_0 : i32, i32, i32
  }
}

module attributes {stable_mosaic.version = 11 : i64} {
  func.func @_bmm_bias_relu_kernel(%arg0: i32, %arg1: memref<1x98x576xbf16, #tpu.memory_space<vmem>>, %arg2: memref<1x576x64xbf16, #tpu.memory_space<vmem>>, %arg3: memref<1x1x64xf32, #tpu.memory_space<vmem>>, %arg4: memref<1x98x64xbf16, #tpu.memory_space<vmem>>) attributes {dimension_semantics = [#tpu.dimension_semantics<parallel>], iteration_bounds = array<i64: 2>, scalar_prefetch = 0 : i64, scratch_operands = 0 : i64, tpu.core_type = #tpu.core_type<tc>, window_params = [{transform_indices = @transform_0, window_bounds = array<i64: 1, 98, 576>}, {transform_indices = @transform_1, window_bounds = array<i64: 1, 576, 64>}, {transform_indices = @transform_2, window_bounds = array<i64: 1, 1, 64>}, {transform_indices = @transform_3, window_bounds = array<i64: 1, 98, 64>}]} {
    %c0 = arith.constant 0 : index
    %c0_0 = arith.constant 0 : index
    %c0_1 = arith.constant 0 : index
    %0 = vector.load %arg1[%c0, %c0_0, %c0_1] : memref<1x98x576xbf16, #tpu.memory_space<vmem>>, vector<1x98x576xbf16>
    %1 = vector.shape_cast %0 : vector<1x98x576xbf16> to vector<98x576xbf16>
    %c0_2 = arith.constant 0 : index
    %c0_3 = arith.constant 0 : index
    %c0_4 = arith.constant 0 : index
    %2 = vector.load %arg2[%c0_2, %c0_3, %c0_4] : memref<1x576x64xbf16, #tpu.memory_space<vmem>>, vector<1x576x64xbf16>
    %3 = vector.shape_cast %2 : vector<1x576x64xbf16> to vector<576x64xbf16>
    %cst = arith.constant dense<0.000000e+00> : vector<98x64xf32>
    %4 = tpu.matmul %1, %3, %cst {dimension_numbers = #tpu.dot_dimension_numbers<[1], [0], [0], [1], [0, 0, 1, 1], [], []>} : vector<98x576xbf16>, vector<576x64xbf16>, vector<98x64xf32> -> vector<98x64xf32>
    %c0_5 = arith.constant 0 : index
    %c0_6 = arith.constant 0 : index
    %c0_7 = arith.constant 0 : index
    %5 = vector.load %arg3[%c0_5, %c0_6, %c0_7] : memref<1x1x64xf32, #tpu.memory_space<vmem>>, vector<1x1x64xf32>
    %6 = vector.shape_cast %5 : vector<1x1x64xf32> to vector<1x64xf32>
    %7 = vector.broadcast %6 : vector<1x64xf32> to vector<98x64xf32>
    %8 = arith.addf %4, %7 : vector<98x64xf32>
    %cst_8 = arith.constant 0.000000e+00 : f32
    %9 = vector.broadcast %cst_8 : f32 to vector<98x64xf32>
    %10 = arith.maximumf %8, %9 : vector<98x64xf32>
    %11 = arith.truncf %10 : vector<98x64xf32> to vector<98x64xbf16>
    %c0_9 = arith.constant 0 : index
    %c0_10 = arith.constant 0 : index
    %c0_11 = arith.constant 0 : index
    %12 = vector.load %arg4[%c0_9, %c0_10, %c0_11] : memref<1x98x64xbf16, #tpu.memory_space<vmem>>, vector<1x98x64xbf16>
    %13 = vector.shape_cast %12 : vector<1x98x64xbf16> to vector<98x64xbf16>
    %14 = vector.shape_cast %11 : vector<98x64xbf16> to vector<1x98x64xbf16>
    tpu.vector_store %arg4[%c0_9, %c0_10, %c0_11], %14 {strides = array<i32>} : memref<1x98x64xbf16, #tpu.memory_space<vmem>>, vector<1x98x64xbf16>,
    return
  }
  func.func @transform_0(%arg0: i32) -> (i32, i32, i32) {
    %c0_i32 = arith.constant 0 : i32
    %c0_i32_0 = arith.constant 0 : i32
    %c0_i32_1 = arith.constant 0 : i32
    return %arg0, %c0_i32, %c0_i32_0 : i32, i32, i32
  }
  func.func @transform_1(%arg0: i32) -> (i32, i32, i32) {
    %c0_i32 = arith.constant 0 : i32
    %c0_i32_0 = arith.constant 0 : i32
    %c0_i32_1 = arith.constant 0 : i32
    return %arg0, %c0_i32, %c0_i32_0 : i32, i32, i32
  }
  func.func @transform_2(%arg0: i32) -> (i32, i32, i32) {
    %c0_i32 = arith.constant 0 : i32
    %c0_i32_0 = arith.constant 0 : i32
    %c0_i32_1 = arith.constant 0 : i32
    return %arg0, %c0_i32, %c0_i32_0 : i32, i32, i32
  }
  func.func @transform_3(%arg0: i32) -> (i32, i32, i32) {
    %c0_i32 = arith.constant 0 : i32
    %c0_i32_0 = arith.constant 0 : i32
    %c0_i32_1 = arith.constant 0 : i32
    return %arg0, %c0_i32, %c0_i32_0 : i32, i32, i32
  }
}

module attributes {stable_mosaic.version = 11 : i64} {
  func.func @_fc_head_kernel(%arg0: i32, %arg1: memref<1x2x3136xbf16, #tpu.memory_space<vmem>>, %arg2: memref<1x3136x512xbf16, #tpu.memory_space<vmem>>, %arg3: memref<1x1x512xf32, #tpu.memory_space<vmem>>, %arg4: memref<1x512x8xbf16, #tpu.memory_space<vmem>>, %arg5: memref<1x1x8xf32, #tpu.memory_space<vmem>>, %arg6: memref<1x2x8xf32, #tpu.memory_space<vmem>>) attributes {dimension_semantics = [#tpu.dimension_semantics<parallel>], iteration_bounds = array<i64: 2>, scalar_prefetch = 0 : i64, scratch_operands = 0 : i64, tpu.core_type = #tpu.core_type<tc>, window_params = [{transform_indices = @transform_0, window_bounds = array<i64: 1, 2, 3136>}, {transform_indices = @transform_1, window_bounds = array<i64: 1, 3136, 512>}, {transform_indices = @transform_2, window_bounds = array<i64: 1, 1, 512>}, {transform_indices = @transform_3, window_bounds = array<i64: 1, 512, 8>}, {transform_indices = @transform_4, window_bounds = array<i64: 1, 1, 8>}, {transform_indices = @transform_5, window_bounds = array<i64: 1, 2, 8>}]} {
    %c0 = arith.constant 0 : index
    %c0_0 = arith.constant 0 : index
    %c0_1 = arith.constant 0 : index
    %0 = vector.load %arg1[%c0, %c0_0, %c0_1] : memref<1x2x3136xbf16, #tpu.memory_space<vmem>>, vector<1x2x3136xbf16>
    %1 = vector.shape_cast %0 : vector<1x2x3136xbf16> to vector<2x3136xbf16>
    %c0_2 = arith.constant 0 : index
    %c0_3 = arith.constant 0 : index
    %c0_4 = arith.constant 0 : index
    %2 = vector.load %arg2[%c0_2, %c0_3, %c0_4] : memref<1x3136x512xbf16, #tpu.memory_space<vmem>>, vector<1x3136x512xbf16>
    %3 = vector.shape_cast %2 : vector<1x3136x512xbf16> to vector<3136x512xbf16>
    %cst = arith.constant dense<0.000000e+00> : vector<2x512xf32>
    %4 = tpu.matmul %1, %3, %cst {dimension_numbers = #tpu.dot_dimension_numbers<[1], [0], [0], [1], [0, 0, 1, 1], [], []>} : vector<2x3136xbf16>, vector<3136x512xbf16>, vector<2x512xf32> -> vector<2x512xf32>
    %c0_5 = arith.constant 0 : index
    %c0_6 = arith.constant 0 : index
    %c0_7 = arith.constant 0 : index
    %5 = vector.load %arg3[%c0_5, %c0_6, %c0_7] : memref<1x1x512xf32, #tpu.memory_space<vmem>>, vector<1x1x512xf32>
    %6 = vector.shape_cast %5 : vector<1x1x512xf32> to vector<1x512xf32>
    %7 = vector.broadcast %6 : vector<1x512xf32> to vector<2x512xf32>
    %8 = arith.addf %4, %7 : vector<2x512xf32>
    %cst_8 = arith.constant 0.000000e+00 : f32
    %9 = vector.broadcast %cst_8 : f32 to vector<2x512xf32>
    %10 = arith.maximumf %8, %9 : vector<2x512xf32>
    %11 = arith.truncf %10 : vector<2x512xf32> to vector<2x512xbf16>
    %c0_9 = arith.constant 0 : index
    %c0_10 = arith.constant 0 : index
    %c0_11 = arith.constant 0 : index
    %12 = vector.load %arg4[%c0_9, %c0_10, %c0_11] : memref<1x512x8xbf16, #tpu.memory_space<vmem>>, vector<1x512x8xbf16>
    %13 = vector.shape_cast %12 : vector<1x512x8xbf16> to vector<512x8xbf16>
    %cst_12 = arith.constant dense<0.000000e+00> : vector<2x8xf32>
    %14 = tpu.matmul %11, %13, %cst_12 {dimension_numbers = #tpu.dot_dimension_numbers<[1], [0], [0], [1], [0, 0, 1, 1], [], []>} : vector<2x512xbf16>, vector<512x8xbf16>, vector<2x8xf32> -> vector<2x8xf32>
    %c0_13 = arith.constant 0 : index
    %c0_14 = arith.constant 0 : index
    %c0_15 = arith.constant 0 : index
    %15 = vector.load %arg5[%c0_13, %c0_14, %c0_15] : memref<1x1x8xf32, #tpu.memory_space<vmem>>, vector<1x1x8xf32>
    %16 = vector.shape_cast %15 : vector<1x1x8xf32> to vector<1x8xf32>
    %17 = vector.broadcast %16 : vector<1x8xf32> to vector<2x8xf32>
    %18 = arith.addf %14, %17 : vector<2x8xf32>
    %c0_16 = arith.constant 0 : index
    %c0_17 = arith.constant 0 : index
    %c0_18 = arith.constant 0 : index
    %19 = vector.load %arg6[%c0_16, %c0_17, %c0_18] : memref<1x2x8xf32, #tpu.memory_space<vmem>>, vector<1x2x8xf32>
    %20 = vector.shape_cast %19 : vector<1x2x8xf32> to vector<2x8xf32>
    %21 = vector.shape_cast %18 : vector<2x8xf32> to vector<1x2x8xf32>
    tpu.vector_store %arg6[%c0_16, %c0_17, %c0_18], %21 {strides = array<i32>} : memref<1x2x8xf32, #tpu.memory_space<vmem>>, vector<1x2x8xf32>,
    return
  }
  func.func @transform_0(%arg0: i32) -> (i32, i32, i32) {
    %c0_i32 = arith.constant 0 : i32
    %c0_i32_0 = arith.constant 0 : i32
    %c0_i32_1 = arith.constant 0 : i32
    return %arg0, %c0_i32, %c0_i32_0 : i32, i32, i32
  }
  func.func @transform_1(%arg0: i32) -> (i32, i32, i32) {
    %c0_i32 = arith.constant 0 : i32
    %c0_i32_0 = arith.constant 0 : i32
    %c0_i32_1 = arith.constant 0 : i32
    return %arg0, %c0_i32, %c0_i32_0 : i32, i32, i32
  }
  func.func @transform_2(%arg0: i32) -> (i32, i32, i32) {
    %c0_i32 = arith.constant 0 : i32
    %c0_i32_0 = arith.constant 0 : i32
    %c0_i32_1 = arith.constant 0 : i32
    return %arg0, %c0_i32, %c0_i32_0 : i32, i32, i32
  }
  func.func @transform_3(%arg0: i32) -> (i32, i32, i32) {
    %c0_i32 = arith.constant 0 : i32
    %c0_i32_0 = arith.constant 0 : i32
    %c0_i32_1 = arith.constant 0 : i32
    return %arg0, %c0_i32, %c0_i32_0 : i32, i32, i32
  }
  func.func @transform_4(%arg0: i32) -> (i32, i32, i32) {
    %c0_i32 = arith.constant 0 : i32
    %c0_i32_0 = arith.constant 0 : i32
    %c0_i32_1 = arith.constant 0 : i32
    return %arg0, %c0_i32, %c0_i32_0 : i32, i32, i32
  }
  func.func @transform_5(%arg0: i32) -> (i32, i32, i32) {
    %c0_i32 = arith.constant 0 : i32
    %c0_i32_0 = arith.constant 0 : i32
    %c0_i32_1 = arith.constant 0 : i32
    return %arg0, %c0_i32, %c0_i32_0 : i32, i32, i32
  }
}

</mosaic_0001>

<llo_original>
// kernel: agent_forward.4
$region0: #{agent_forward.4}
  #allocation0 [shape = 'u32[]', space=smem, size = 0x4, offset = 0x4, fixed_abs, tag = 'smem constant byte address 0x4 - core index']
  #allocation1 [shape = 'u32[144,128]{1,0:T(1,128)}', space=vmem, size = 0x12000, scoped, tag = 'internal scratch']
  %s0 = inlined_call_operand.vmem [shape: bf16[800,256], index: 0, kind: input, shape index: {}]
  %s1 = inlined_call_operand.vmem [shape: bf16[256,64], index: 1, kind: input, shape index: {}]
  %s2 = inlined_call_operand.vmem [shape: f32[1,64], index: 2, kind: input, shape index: {}]
  %s3 = inlined_call_operand.vmem [shape: bf16[800,64], index: 3, kind: output, shape index: {}]
  %s4 = sld [smem:[#allocation0]]
  $region45: #{agent_forward.4} parent=0
    _
  %s6 = ssub.s32 1, %s4
  %s7 = scalar_select 0, %s6, %s4
  loop: start=0, step=1, limit=4
  $region2: #{agent_forward.4} parent=0 // loop_pre_header
    _
  $region3: #{agent_forward.4} parent=0 // loop_header
    %s9 = sphi 0, %s13
    %p10 = scmp.ge.s32.totalorder %s9, 4
    %s19 = sphi 0, %s21
    %s22 = sphi 0, %s19
    %s23 = sphi 0, %s22
    %s39 = sphi 0, %s23
    %s43 = sphi 0, %s43
    %s45 = sphi 0, %s43
    %s46 = sphi 0, %s45
    %s60 = sphi 0, %s46
    %s64 = sphi 0, %s64
    %s66 = sphi 0, %s64
    %s67 = sphi 0, %s66
    %s81 = sphi 0, %s67
    %s87 = sphi 0, %s89
    %s90 = sphi 0, %s87
    %s91 = sphi 0, %s90
    %s107 = sphi 0, %s91
  $region4: #{agent_forward.4} parent=0 // loop_header_branch
    %12 = sbr.rel (%p10) target = $region8
  $region5: #{agent_forward.4} parent=0 // loop_body
    %s14 = ssub.s32 %s9, 1
    %s15 = ssub.s32 %s9, 2
    %s16 = sadd.s32 %s9, 1
    %s17 = ssub.s32 %s9, %s16
    %p18 = scmp.eq.s32.totalorder %s17, 0
    %s20 = sadd.s32 %s19, 1
    %s21 = scalar_select %p18, %s19, %s20
    %p24 = pneg %p18
    %p25 = scmp.eq.s32.totalorder %s9, 1
    %p26 = por %p24, %p25
    %p27 = scmp.ne.s32.totalorder %s19, %s22
    %p28 = scmp.eq.s32.totalorder %s9, 0
    %p29 = por %p27, %p28
    %p30 = scmp.ne.s32.totalorder %s19, %s22
    %p31 = scmp.eq.s32.totalorder %s14, 1
    %p32 = por %p30, %p31
    %p33 = scmp.ne.s32.totalorder %s22, %s23
    %p34 = scmp.eq.s32.totalorder %s14, 0
    %p35 = por %p33, %p34
    %p36 = scmp.ne.s32.totalorder %s22, %s23
    %p37 = scmp.eq.s32.totalorder %s15, 1
    %p38 = por %p36, %p37
    %p40 = scmp.ne.s32.totalorder %s23, %s39
    %p41 = scmp.eq.s32.totalorder %s15, 0
    %p42 = por %p40, %p41
    %s44 = sadd.s32 %s43, 1
    %p47 = scmp.eq.s32.totalorder %s9, 1
    %p48 = scmp.ne.s32.totalorder %s43, %s45
    %p49 = scmp.eq.s32.totalorder %s9, 0
    %p50 = por %p48, %p49
    %p51 = scmp.ne.s32.totalorder %s43, %s45
    %p52 = scmp.eq.s32.totalorder %s14, 1
    %p53 = por %p51, %p52
    %p54 = scmp.ne.s32.totalorder %s45, %s46
    %p55 = scmp.eq.s32.totalorder %s14, 0
    %p56 = por %p54, %p55
    %p57 = scmp.ne.s32.totalorder %s45, %s46
    %p58 = scmp.eq.s32.totalorder %s15, 1
    %p59 = por %p57, %p58
    %p61 = scmp.ne.s32.totalorder %s46, %s60
    %p62 = scmp.eq.s32.totalorder %s15, 0
    %p63 = por %p61, %p62
    %s65 = sadd.s32 %s64, 1
    %p68 = scmp.eq.s32.totalorder %s9, 1
    %p69 = scmp.ne.s32.totalorder %s64, %s66
    %p70 = scmp.eq.s32.totalorder %s9, 0
    %p71 = por %p69, %p70
    %p72 = scmp.ne.s32.totalorder %s64, %s66
    %p73 = scmp.eq.s32.totalorder %s14, 1
    %p74 = por %p72, %p73
    %p75 = scmp.ne.s32.totalorder %s66, %s67
    %p76 = scmp.eq.s32.totalorder %s14, 0
    %p77 = por %p75, %p76
    %p78 = scmp.ne.s32.totalorder %s66, %s67
    %p79 = scmp.eq.s32.totalorder %s15, 1
    %p80 = por %p78, %p79
    %p82 = scmp.ne.s32.totalorder %s67, %s81
    %p83 = scmp.eq.s32.totalorder %s15, 0
    %p84 = por %p82, %p83
    %s85 = ssub.s32 %s9, %s16
    %p86 = scmp.eq.s32.totalorder %s85, 0
    %s88 = sadd.s32 %s87, 1
    %s89 = scalar_select %p86, %s87, %s88
    %p92 = pneg %p86
    %p93 = scmp.eq.s32.totalorder %s9, 1
    %p94 = por %p92, %p93
    %p95 = scmp.ne.s32.totalorder %s87, %s90
    %p96 = scmp.eq.s32.totalorder %s9, 0
    %p97 = por %p95, %p96
    %p98 = scmp.ne.s32.totalorder %s87, %s90
    %p99 = scmp.eq.s32.totalorder %s14, 1
    %p100 = por %p98, %p99
    %p101 = scmp.ne.s32.totalorder %s90, %s91
    %p102 = scmp.eq.s32.totalorder %s14, 0
    %p103 = por %p101, %p102
    %p104 = scmp.ne.s32.totalorder %s90, %s91
    %p105 = scmp.eq.s32.totalorder %s15, 1
    %p106 = por %p104, %p105
    %p108 = scmp.ne.s32.totalorder %s91, %s107
    %p109 = scmp.eq.s32.totalorder %s15, 0
    %p110 = por %p108, %p109
    %p111 = scmp.le.s32.totalorder 1, %s9
    %p112 = scmp.lt.s32.totalorder %s9, 3
    %p113 = pnand %p111, %p112
    %p114 = pneg %p113
    // Predicated region
    $region9: #{agent_forward.4} parent=5 // pred_check
      _
    $region10: #{agent_forward.4} parent=5 // pred_check_branch
      %116 = sbr.rel (%p113) target = $region12
    $region11: #{agent_forward.4} parent=5 // pred_region
      %s117 = ssub.s32 %s9, 1
      // Predicated region
      $region13: #{agent_forward.4} parent=11 // pred_check
        %p118 = pneg %p56
      $region14: #{agent_forward.4} parent=11 // pred_check_branch
        %120 = sbr.rel (%p118) target = $region16
      $region15: #{agent_forward.4} parent=11 // pred_region
        _
      $region16: #{agent_forward.4} parent=11 // pred_fallthru
        _
      // Predicated region
      $region17: #{agent_forward.4} parent=11 // pred_check
        %p121 = pneg %p77
      $region18: #{agent_forward.4} parent=11 // pred_check_branch
        %123 = sbr.rel (%p121) target = $region20
      $region19: #{agent_forward.4} parent=11 // pred_region
        _
      $region20: #{agent_forward.4} parent=11 // pred_fallthru
        _
    $region12: #{agent_forward.4} parent=5 // pred_fallthru
      _
    %p124 = scmp.lt.s32.totalorder %s9, 2
    // Predicated region
    $region21: #{agent_forward.4} parent=5 // pred_check
      %p125 = pneg %p124
    $region22: #{agent_forward.4} parent=5 // pred_check_branch
      %127 = sbr.rel (%p125) target = $region24
    $region23: #{agent_forward.4} parent=5 // pred_region
      // Predicated region
      $region25: #{agent_forward.4} parent=23 // pred_check
        %p128 = pneg %p29
      $region26: #{agent_forward.4} parent=23 // pred_check_branch
        %130 = sbr.rel (%p128) target = $region28
      $region27: #{agent_forward.4} parent=23 // pred_region
        %s131 = smul.u32 50, %s9
        %p132 = scmp.lt.s32.totalorder %s131, 99
        %s133 = scalar_select %p132, %s131, 99
        %s134 = smul.addr %s133, 2
        %s135 = smul.addr %s134, 4
        %s136 = scalar_lea.vmem %s0, %s135
        %s137 = smul.u32 50, %s9
      $region28: #{agent_forward.4} parent=23 // pred_fallthru
        _
    $region24: #{agent_forward.4} parent=5 // pred_fallthru
      _
    %p138 = scmp.le.s32.totalorder 1, %s9
    %p139 = scmp.lt.s32.totalorder %s9, 3
    %p140 = pnand %p138, %p139
    %p141 = pneg %p140
    // Predicated region
    $region29: #{agent_forward.4} parent=5 // pred_check
      _
    $region30: #{agent_forward.4} parent=5 // pred_check_branch
      %143 = sbr.rel (%p140) target = $region32
    $region31: #{agent_forward.4} parent=5 // pred_region
      %s144 = ssub.s32 %s9, 1
      %s145 = smul.u32 50, %s14
      %p146 = scmp.lt.s32.totalorder %s145, 99
      %s147 = scalar_select %p146, %s145, 99
      %s148 = smul.addr %s147, 2
      %s149 = smul.addr %s148, 4
      %s150 = scalar_lea.vmem %s0, %s149
      %p151 = pneg %p35
      %p152 = pneg %p32
      %p153 = pneg %p56
      %p154 = pneg %p53
      %p155 = pneg %p77
      %p156 = pneg %p74
      %p157 = pneg %p103
      %p158 = pneg %p100
      %s159 = smul.u32 50, %s14
      %p160 = scmp.lt.s32.totalorder %s159, 99
      %s161 = scalar_select %p160, %s159, 99
      %s162 = smul.addr %s161, 4
      %s163 = scalar_lea.vmem %s3, %s162
      %s164 = smul.u32 50, %s14
      %p165 = scmp.lt.s32.totalorder %s164, 99
      %s166 = scalar_select %p165, %s164, 99
      %s167 = smul.addr %s166, 2
      %s168 = smul.addr %s167, 4
      %s169 = scalar_lea.vmem %s0, %s168
      %s170 = smul.u32 50, %s14
      %s171 = smul.u32 50, %s14
      %p172 = scmp.lt.s32.totalorder %s171, 99
      %s173 = scalar_select %p172, %s171, 99
      %s174 = smul.addr %s173, 4
      %s175 = scalar_lea.vmem %s3, %s174
      %s176 = smul.u32 50, %s14
      %v178 = vld [vmem:[%s169] sm:$0xff]
      %v179 = vld [vmem:[%s169 + $0x8] sm:$0xff]
      %v180 = vld [vmem:[%s169 + $0x10] sm:$0xff]
      %v181 = vld [vmem:[%s169 + $0x18] sm:$0xff]
      %v182 = vld [vmem:[%s169 + $0x20] sm:$0xff]
      %v183 = vld [vmem:[%s169 + $0x28] sm:$0xff]
      %v184 = vld [vmem:[%s169 + $0x30] sm:$0xff]
      %v185 = vld [vmem:[%s169 + $0x38] sm:$0xff]
      %v186 = vld [vmem:[%s169 + $0x40] sm:$0xff]
      %v187 = vld [vmem:[%s169 + $0x48] sm:$0xff]
      %v188 = vld [vmem:[%s169 + $0x50] sm:$0xff]
      %v189 = vld [vmem:[%s169 + $0x58] sm:$0xff]
      %v190 = vld [vmem:[%s169 + $0x60] sm:$0xff]
      %v191 = vld [vmem:[%s169 + $0x68] sm:$0xff]
      %v192 = vld [vmem:[%s169 + $0x70] sm:$0xff]
      %v193 = vld [vmem:[%s169 + $0x78] sm:$0xff]
      %v194 = vld [vmem:[%s169 + $0x80] sm:$0xff]
      %v195 = vld [vmem:[%s169 + $0x88] sm:$0xff]
      %v196 = vld [vmem:[%s169 + $0x90] sm:$0xff]
      %v197 = vld [vmem:[%s169 + $0x98] sm:$0xff]
      %v198 = vld [vmem:[%s169 + $0xa0] sm:$0xff]
      %v199 = vld [vmem:[%s169 + $0xa8] sm:$0xff]
      %v200 = vld [vmem:[%s169 + $0xb0] sm:$0xff]
      %v201 = vld [vmem:[%s169 + $0xb8] sm:$0xff]
      %v202 = vld [vmem:[%s169 + $0xc0] sm:$0xff]
      %v203 = vld [vmem:[%s169 + $0xc8] sm:$0xff]
      %v204 = vld [vmem:[%s169 + $0xd0] sm:$0xff]
      %v205 = vld [vmem:[%s169 + $0xd8] sm:$0xff]
      %v206 = vld [vmem:[%s169 + $0xe0] sm:$0xff]
      %v207 = vld [vmem:[%s169 + $0xe8] sm:$0xff]
      %v208 = vld [vmem:[%s169 + $0xf0] sm:$0xff]
      %v209 = vld [vmem:[%s169 + $0xf8] sm:$0xff]
      %v210 = vld [vmem:[%s169 + $0x100] sm:$0xff]
      %v211 = vld [vmem:[%s169 + $0x108] sm:$0xff]
      %v212 = vld [vmem:[%s169 + $0x110] sm:$0xff]
      %v213 = vld [vmem:[%s169 + $0x118] sm:$0xff]
      %v214 = vld [vmem:[%s169 + $0x120] sm:$0xff]
      %v215 = vld [vmem:[%s169 + $0x128] sm:$0xff]
      %v216 = vld [vmem:[%s169 + $0x130] sm:$0xff]
      %v217 = vld [vmem:[%s169 + $0x138] sm:$0xff]
      %v218 = vld [vmem:[%s169 + $0x140] sm:$0xff]
      %v219 = vld [vmem:[%s169 + $0x148] sm:$0xff]
      %v220 = vld [vmem:[%s169 + $0x150] sm:$0xff]
      %v221 = vld [vmem:[%s169 + $0x158] sm:$0xff]
      %v222 = vld [vmem:[%s169 + $0x160] sm:$0xff]
      %v223 = vld [vmem:[%s169 + $0x168] sm:$0xff]
      %v224 = vld [vmem:[%s169 + $0x170] sm:$0xff]
      %v225 = vld [vmem:[%s169 + $0x178] sm:$0xff]
      %v226 = vld [vmem:[%s169 + $0x180] sm:$0xff]
      %v227 = vld [vmem:[%s169 + $0x188] sm:$0xff]
      %v228 = vld [vmem:[%s1] sm:$0xf]
      %v229 = vld [vmem:[%s1 + $0x4] sm:$0xf]
      %v230 = vld [vmem:[%s1 + $0x8] sm:$0xf]
      %v231 = vld [vmem:[%s1 + $0xc] sm:$0xf]
      %v232 = vld [vmem:[%s1 + $0x10] sm:$0xf]
      %v233 = vld [vmem:[%s1 + $0x14] sm:$0xf]
      %v234 = vld [vmem:[%s1 + $0x18] sm:$0xf]
      %v235 = vld [vmem:[%s1 + $0x1c] sm:$0xf]
      %v236 = vld [vmem:[%s1 + $0x20] sm:$0xf]
      %v237 = vld [vmem:[%s1 + $0x24] sm:$0xf]
      %v238 = vld [vmem:[%s1 + $0x28] sm:$0xf]
      %v239 = vld [vmem:[%s1 + $0x2c] sm:$0xf]
      %v240 = vld [vmem:[%s1 + $0x30] sm:$0xf]
      %v241 = vld [vmem:[%s1 + $0x34] sm:$0xf]
      %v242 = vld [vmem:[%s1 + $0x38] sm:$0xf]
      %v243 = vld [vmem:[%s1 + $0x3c] sm:$0xf]
      %v244 = vld [vmem:[%s1 + $0x40] sm:$0xf]
      %v245 = vld [vmem:[%s1 + $0x44] sm:$0xf]
      %v246 = vld [vmem:[%s1 + $0x48] sm:$0xf]
      %v247 = vld [vmem:[%s1 + $0x4c] sm:$0xf]
      %v248 = vld [vmem:[%s1 + $0x50] sm:$0xf]
      %v249 = vld [vmem:[%s1 + $0x54] sm:$0xf]
      %v250 = vld [vmem:[%s1 + $0x58] sm:$0xf]
      %v251 = vld [vmem:[%s1 + $0x5c] sm:$0xf]
      %v252 = vld [vmem:[%s1 + $0x60] sm:$0xf]
      %v253 = vld [vmem:[%s1 + $0x64] sm:$0xf]
      %v254 = vld [vmem:[%s1 + $0x68] sm:$0xf]
      %v255 = vld [vmem:[%s1 + $0x6c] sm:$0xf]
      %v256 = vld [vmem:[%s1 + $0x70] sm:$0xf]
      %v257 = vld [vmem:[%s1 + $0x74] sm:$0xf]
      %v258 = vld [vmem:[%s1 + $0x78] sm:$0xf]
      %v259 = vld [vmem:[%s1 + $0x7c] sm:$0xf]
      %v260 = vld [vmem:[%s2] sm:$0x1]
      %v262 = vlaneseq
      %v263 = vshrl.u32 %v262, 7
      %v264 = vsub.s32 0, %v263
      %v265 = vrot.slane %v260, %v264
      %v317 = vunpack.c.l.b16 %v178
      %v318 = vunpack.c.h.b16 %v178
      %v319 = vunpack.c.l.b16 %v179
      %v320 = vunpack.c.h.b16 %v179
      %v321 = vunpack.c.l.b16 %v180
      %v322 = vunpack.c.h.b16 %v180
      %v323 = vunpack.c.l.b16 %v181
      %v324 = vunpack.c.h.b16 %v181
      %v325 = vunpack.c.l.b16 %v182
      %v326 = vunpack.c.h.b16 %v182
      %v327 = vunpack.c.l.b16 %v183
      %v328 = vunpack.c.h.b16 %v183
      %v329 = vunpack.c.l.b16 %v184
      %v330 = vunpack.c.h.b16 %v184
      %v331 = vunpack.c.l.b16 %v185
      %v332 = vunpack.c.h.b16 %v185
      %v333 = vunpack.c.l.b16 %v186
      %v334 = vunpack.c.h.b16 %v186
      %v335 = vunpack.c.l.b16 %v187
      %v336 = vunpack.c.h.b16 %v187
      %v337 = vunpack.c.l.b16 %v188
      %v338 = vunpack.c.h.b16 %v188
      %v339 = vunpack.c.l.b16 %v189
      %v340 = vunpack.c.h.b16 %v189
      %v341 = vunpack.c.l.b16 %v190
      %v342 = vunpack.c.h.b16 %v190
      %v343 = vunpack.c.l.b16 %v191
      %v344 = vunpack.c.h.b16 %v191
      %v345 = vunpack.c.l.b16 %v192
      %v346 = vunpack.c.h.b16 %v192
      %v347 = vunpack.c.l.b16 %v193
      %v348 = vunpack.c.h.b16 %v193
      %v349 = vunpack.c.l.b16 %v194
      %v350 = vunpack.c.h.b16 %v194
      %v351 = vunpack.c.l.b16 %v195
      %v352 = vunpack.c.h.b16 %v195
      %v353 = vunpack.c.l.b16 %v196
      %v354 = vunpack.c.h.b16 %v196
      %v355 = vunpack.c.l.b16 %v197
      %v356 = vunpack.c.h.b16 %v197
      %v357 = vunpack.c.l.b16 %v198
      %v358 = vunpack.c.h.b16 %v198
      %v359 = vunpack.c.l.b16 %v199
      %v360 = vunpack.c.h.b16 %v199
      %v361 = vunpack.c.l.b16 %v200
      %v362 = vunpack.c.h.b16 %v200
      %v363 = vunpack.c.l.b16 %v201
      %v364 = vunpack.c.h.b16 %v201
      %v365 = vunpack.c.l.b16 %v202
      %v366 = vunpack.c.h.b16 %v202
      %v367 = vunpack.c.l.b16 %v203
      %v368 = vunpack.c.h.b16 %v203
      %v369 = vunpack.c.l.b16 %v204
      %v370 = vunpack.c.h.b16 %v204
      %v371 = vunpack.c.l.b16 %v205
      %v372 = vunpack.c.h.b16 %v205
      %v373 = vunpack.c.l.b16 %v206
      %v374 = vunpack.c.h.b16 %v206
      %v375 = vunpack.c.l.b16 %v207
      %v376 = vunpack.c.h.b16 %v207
      %v377 = vunpack.c.l.b16 %v208
      %v378 = vunpack.c.h.b16 %v208
      %v379 = vunpack.c.l.b16 %v209
      %v380 = vunpack.c.h.b16 %v209
      %v381 = vunpack.c.l.b16 %v210
      %v382 = vunpack.c.h.b16 %v210
      %v383 = vunpack.c.l.b16 %v211
      %v384 = vunpack.c.h.b16 %v211
      %v385 = vunpack.c.l.b16 %v212
      %v386 = vunpack.c.h.b16 %v212
      %v387 = vunpack.c.l.b16 %v213
      %v388 = vunpack.c.h.b16 %v213
      %v389 = vunpack.c.l.b16 %v214
      %v390 = vunpack.c.h.b16 %v214
      %v391 = vunpack.c.l.b16 %v215
      %v392 = vunpack.c.h.b16 %v215
      %v393 = vunpack.c.l.b16 %v216
      %v394 = vunpack.c.h.b16 %v216
      %v395 = vunpack.c.l.b16 %v217
      %v396 = vunpack.c.h.b16 %v217
      %v397 = vunpack.c.l.b16 %v218
      %v398 = vunpack.c.h.b16 %v218
      %v399 = vunpack.c.l.b16 %v219
      %v400 = vunpack.c.h.b16 %v219
      %v401 = vunpack.c.l.b16 %v220
      %v402 = vunpack.c.h.b16 %v220
      %v403 = vunpack.c.l.b16 %v221
      %v404 = vunpack.c.h.b16 %v221
      %v405 = vunpack.c.l.b16 %v222
      %v406 = vunpack.c.h.b16 %v222
      %v407 = vunpack.c.l.b16 %v223
      %v408 = vunpack.c.h.b16 %v223
      %v409 = vunpack.c.l.b16 %v224
      %v410 = vunpack.c.h.b16 %v224
      %v411 = vunpack.c.l.b16 %v225
      %v412 = vunpack.c.h.b16 %v225
      %v413 = vunpack.c.l.b16 %v226
      %v414 = vunpack.c.h.b16 %v226
      %v415 = vunpack.c.l.b16 %v227
      %v416 = vunpack.c.h.b16 %v227
      %v417 = vpack.c.b16 %v319, %v317
      %v418 = vpack.c.b16 %v320, %v318
      %v419 = vpack.c.b16 %v323, %v321
      %v420 = vpack.c.b16 %v324, %v322
      %v421 = vpack.c.b16 %v327, %v325
      %v422 = vpack.c.b16 %v328, %v326
      %v423 = vpack.c.b16 %v331, %v329
      %v424 = vpack.c.b16 %v332, %v330
      %v425 = vpack.c.b16 %v335, %v333
      %v426 = vpack.c.b16 %v336, %v334
      %v427 = vpack.c.b16 %v339, %v337
      %v428 = vpack.c.b16 %v340, %v338
      %v429 = vpack.c.b16 %v343, %v341
      %v430 = vpack.c.b16 %v344, %v342
      %v431 = vpack.c.b16 %v347, %v345
      %v432 = vpack.c.b16 %v348, %v346
      %v433 = vpack.c.b16 %v351, %v349
      %v434 = vpack.c.b16 %v352, %v350
      %v435 = vpack.c.b16 %v355, %v353
      %v436 = vpack.c.b16 %v356, %v354
      %v437 = vpack.c.b16 %v359, %v357
      %v438 = vpack.c.b16 %v360, %v358
      %v439 = vpack.c.b16 %v363, %v361
      %v440 = vpack.c.b16 %v364, %v362
      %v441 = vpack.c.b16 %v367, %v365
      %v442 = vpack.c.b16 %v368, %v366
      %v443 = vpack.c.b16 %v371, %v369
      %v444 = vpack.c.b16 %v372, %v370
      %v445 = vpack.c.b16 %v375, %v373
      %v446 = vpack.c.b16 %v376, %v374
      %v447 = vpack.c.b16 %v379, %v377
      %v448 = vpack.c.b16 %v380, %v378
      %v449 = vpack.c.b16 %v383, %v381
      %v450 = vpack.c.b16 %v384, %v382
      %v451 = vpack.c.b16 %v387, %v385
      %v452 = vpack.c.b16 %v388, %v386
      %v453 = vpack.c.b16 %v391, %v389
      %v454 = vpack.c.b16 %v392, %v390
      %v455 = vpack.c.b16 %v395, %v393
      %v456 = vpack.c.b16 %v396, %v394
      %v457 = vpack.c.b16 %v399, %v397
      %v458 = vpack.c.b16 %v400, %v398
      %v459 = vpack.c.b16 %v403, %v401
      %v460 = vpack.c.b16 %v404, %v402
      %v461 = vpack.c.b16 %v407, %v405
      %v462 = vpack.c.b16 %v408, %v406
      %v463 = vpack.c.b16 %v411, %v409
      %v464 = vpack.c.b16 %v412, %v410
      %v465 = vpack.c.b16 %v415, %v413
      %v466 = vpack.c.b16 %v416, %v414
      %v549 = vunpack.c.l.b16 %v228
      %v550 = vunpack.c.l.b16 %v229
      %v551 = vunpack.c.l.b16 %v230
      %v552 = vunpack.c.l.b16 %v231
      %v553 = vunpack.c.l.b16 %v232
      %v554 = vunpack.c.l.b16 %v233
      %v555 = vunpack.c.l.b16 %v234
      %v556 = vunpack.c.l.b16 %v235
      %v557 = vunpack.c.l.b16 %v236
      %v558 = vunpack.c.l.b16 %v237
      %v559 = vunpack.c.l.b16 %v238
      %v560 = vunpack.c.l.b16 %v239
      %v561 = vunpack.c.l.b16 %v240
      %v562 = vunpack.c.l.b16 %v241
      %v563 = vunpack.c.l.b16 %v242
      %v564 = vunpack.c.l.b16 %v243
      %v565 = vunpack.c.l.b16 %v244
      %v566 = vunpack.c.l.b16 %v245
      %v567 = vunpack.c.l.b16 %v246
      %v568 = vunpack.c.l.b16 %v247
      %v569 = vunpack.c.l.b16 %v248
      %v570 = vunpack.c.l.b16 %v249
      %v571 = vunpack.c.l.b16 %v250
      %v572 = vunpack.c.l.b16 %v251
      %v573 = vunpack.c.l.b16 %v252
      %v574 = vunpack.c.l.b16 %v253
      %v575 = vunpack.c.l.b16 %v254
      %v576 = vunpack.c.l.b16 %v255
      %v577 = vunpack.c.l.b16 %v256
      %v578 = vunpack.c.l.b16 %v257
      %v579 = vunpack.c.l.b16 %v258
      %v580 = vunpack.c.l.b16 %v259
      %v581 = vpack.c.b16 %v550, %v549
      %v582 = vpack.c.b16 %v552, %v551
      %v583 = vpack.c.b16 %v554, %v553
      %v584 = vpack.c.b16 %v556, %v555
      %v585 = vpack.c.b16 %v558, %v557
      %v586 = vpack.c.b16 %v560, %v559
      %v587 = vpack.c.b16 %v562, %v561
      %v588 = vpack.c.b16 %v564, %v563
      %v589 = vpack.c.b16 %v566, %v565
      %v590 = vpack.c.b16 %v568, %v567
      %v591 = vpack.c.b16 %v570, %v569
      %v592 = vpack.c.b16 %v572, %v571
      %v593 = vpack.c.b16 %v574, %v573
      %v594 = vpack.c.b16 %v576, %v575
      %v595 = vpack.c.b16 %v578, %v577
      %v596 = vpack.c.b16 %v580, %v579
      %613 = vmatprep.subr.bf16.mxu0 0
      %614 = vmatpush1.bf16.msra.mxu0 %v581
      %615 = vmatprep.subr.bf16.mxu0 0
      %616 = vmatpush1.bf16.msra.mxu0 %v582
      %617 = vmatprep.subr.bf16.mxu0 0
      %618 = vmatpush1.bf16.msra.mxu0 %v583
      %619 = vmatprep.subr.bf16.mxu0 0
      %620 = vmatpush1.bf16.msra.mxu0 %v584
      %621 = vmatprep.subr.bf16.mxu0 0
      %622 = vmatpush1.bf16.msra.mxu0 %v585
      %623 = vmatprep.subr.bf16.mxu0 0
      %624 = vmatpush1.bf16.msra.mxu0 %v586
      %625 = vmatprep.subr.bf16.mxu0 0
      %626 = vmatpush1.bf16.msra.mxu0 %v587
      %627 = vmatprep.subr.bf16.mxu0 0
      %628 = vmatpush1.bf16.msra.mxu0 %v588
      %629 = vmatprep.subr.bf16.mxu0 0
      %630 = vmatpush1.bf16.msra.mxu0 %v589
      %631 = vmatprep.subr.bf16.mxu0 0
      %632 = vmatpush1.bf16.msra.mxu0 %v590
      %633 = vmatprep.subr.bf16.mxu0 0
      %634 = vmatpush1.bf16.msra.mxu0 %v591
      %635 = vmatprep.subr.bf16.mxu0 0
      %636 = vmatpush1.bf16.msra.mxu0 %v592
      %637 = vmatprep.subr.bf16.mxu0 0
      %638 = vmatpush1.bf16.msra.mxu0 %v593
      %639 = vmatprep.subr.bf16.mxu0 0
      %640 = vmatpush1.bf16.msra.mxu0 %v594
      %641 = vmatprep.subr.bf16.mxu0 0
      %642 = vmatpush1.bf16.msra.mxu0 %v595
      %643 = vmatprep.subr.bf16.mxu0 0
      %644 = vmatpush1.bf16.msra.mxu0 %v596
      %645 = vmatprep.mubr.bf16.mxu0 %v418
      %646 = vmatmul.mubr.bf16.gmra.mrb[0].mxu0 %v417
      %v647 = vpop.f32.mrb[0].mxu0
      %v648 = vadd.f32 %v265, %v647
      %v649 = vpop.f32.mrb[0].mxu0
      %v650 = vpop.f32.mrb[0].mxu0
      %v651 = vadd.f32 %v265, %v650
      %v652 = vpop.f32.mrb[0].mxu0
      %653 = vmatprep.mubr.bf16.mxu0 %v420
      %654 = vmatmul.mubr.bf16.gmra.mrb[0].mxu0 %v419
      %v655 = vpop.f32.mrb[0].mxu0
      %v656 = vadd.f32 %v265, %v655
      %v657 = vpop.f32.mrb[0].mxu0
      %v658 = vpop.f32.mrb[0].mxu0
      %v659 = vadd.f32 %v265, %v658
      %v660 = vpop.f32.mrb[0].mxu0
      %661 = vmatprep.mubr.bf16.mxu0 %v422
      %662 = vmatmul.mubr.bf16.gmra.mrb[0].mxu0 %v421
      %v663 = vpop.f32.mrb[0].mxu0
      %v664 = vadd.f32 %v265, %v663
      %v665 = vpop.f32.mrb[0].mxu0
      %v666 = vpop.f32.mrb[0].mxu0
      %v667 = vadd.f32 %v265, %v666
      %v668 = vpop.f32.mrb[0].mxu0
      %669 = vmatprep.mubr.bf16.mxu0 %v424
      %670 = vmatmul.mubr.bf16.gmra.mrb[0].mxu0 %v423
      %v671 = vpop.f32.mrb[0].mxu0
      %v672 = vadd.f32 %v265, %v671
      %v673 = vpop.f32.mrb[0].mxu0
      %v674 = vpop.f32.mrb[0].mxu0
      %v675 = vadd.f32 %v265, %v674
      %v676 = vpop.f32.mrb[0].mxu0
      %677 = vmatprep.mubr.bf16.mxu0 %v426
      %678 = vmatmul.mubr.bf16.gmra.mrb[0].mxu0 %v425
      %v679 = vpop.f32.mrb[0].mxu0
      %v680 = vadd.f32 %v265, %v679
      %v681 = vpop.f32.mrb[0].mxu0
      %v682 = vpop.f32.mrb[0].mxu0
      %v683 = vadd.f32 %v265, %v682
      %v684 = vpop.f32.mrb[0].mxu0
      %685 = vmatprep.mubr.bf16.mxu0 %v428
      %686 = vmatmul.mubr.bf16.gmra.mrb[0].mxu0 %v427
      %v687 = vpop.f32.mrb[0].mxu0
      %v688 = vadd.f32 %v265, %v687
      %v689 = vpop.f32.mrb[0].mxu0
      %v690 = vpop.f32.mrb[0].mxu0
      %v691 = vadd.f32 %v265, %v690
      %v692 = vpop.f32.mrb[0].mxu0
      %693 = vmatprep.mubr.bf16.mxu0 %v430
      %694 = vmatmul.mubr.bf16.gmra.mrb[0].mxu0 %v429
      %v695 = vpop.f32.mrb[0].mxu0
      %v696 = vadd.f32 %v265, %v695
      %v697 = vpop.f32.mrb[0].mxu0
      %v698 = vpop.f32.mrb[0].mxu0
      %v699 = vadd.f32 %v265, %v698
      %v700 = vpop.f32.mrb[0].mxu0
      %701 = vmatprep.mubr.bf16.mxu0 %v432
      %702 = vmatmul.mubr.bf16.gmra.mrb[0].mxu0 %v431
      %v703 = vpop.f32.mrb[0].mxu0
      %v704 = vadd.f32 %v265, %v703
      %v705 = vpop.f32.mrb[0].mxu0
      %v706 = vpop.f32.mrb[0].mxu0
      %v707 = vadd.f32 %v265, %v706
      %v708 = vpop.f32.mrb[0].mxu0
      %709 = vmatprep.mubr.bf16.mxu0 %v434
      %710 = vmatmul.mubr.bf16.gmra.mrb[0].mxu0 %v433
      %v711 = vpop.f32.mrb[0].mxu0
      %v712 = vadd.f32 %v265, %v711
      %v713 = vpop.f32.mrb[0].mxu0
      %v714 = vpop.f32.mrb[0].mxu0
      %v715 = vadd.f32 %v265, %v714
      %v716 = vpop.f32.mrb[0].mxu0
      %717 = vmatprep.mubr.bf16.mxu0 %v436
      %718 = vmatmul.mubr.bf16.gmra.mrb[0].mxu0 %v435
      %v719 = vpop.f32.mrb[0].mxu0
      %v720 = vadd.f32 %v265, %v719
      %v721 = vpop.f32.mrb[0].mxu0
      %v722 = vpop.f32.mrb[0].mxu0
      %v723 = vadd.f32 %v265, %v722
      %v724 = vpop.f32.mrb[0].mxu0
      %725 = vmatprep.mubr.bf16.mxu0 %v438
      %726 = vmatmul.mubr.bf16.gmra.mrb[0].mxu0 %v437
      %v727 = vpop.f32.mrb[0].mxu0
      %v728 = vadd.f32 %v265, %v727
      %v729 = vpop.f32.mrb[0].mxu0
      %v730 = vpop.f32.mrb[0].mxu0
      %v731 = vadd.f32 %v265, %v730
      %v732 = vpop.f32.mrb[0].mxu0
      %733 = vmatprep.mubr.bf16.mxu0 %v440
      %734 = vmatmul.mubr.bf16.gmra.mrb[0].mxu0 %v439
      %v735 = vpop.f32.mrb[0].mxu0
      %v736 = vadd.f32 %v265, %v735
      %v737 = vpop.f32.mrb[0].mxu0
      %v738 = vpop.f32.mrb[0].mxu0
      %v739 = vadd.f32 %v265, %v738
      %v740 = vpop.f32.mrb[0].mxu0
      %741 = vmatprep.mubr.bf16.mxu0 %v442
      %742 = vmatmul.mubr.bf16.gmra.mrb[0].mxu0 %v441
      %v743 = vpop.f32.mrb[0].mxu0
      %v744 = vadd.f32 %v265, %v743
      %v745 = vpop.f32.mrb[0].mxu0
      %v746 = vpop.f32.mrb[0].mxu0
      %v747 = vadd.f32 %v265, %v746
      %v748 = vpop.f32.mrb[0].mxu0
      %749 = vmatprep.mubr.bf16.mxu0 %v444
      %750 = vmatmul.mubr.bf16.gmra.mrb[0].mxu0 %v443
      %v751 = vpop.f32.mrb[0].mxu0
      %v752 = vadd.f32 %v265, %v751
      %v753 = vpop.f32.mrb[0].mxu0
      %v754 = vpop.f32.mrb[0].mxu0
      %v755 = vadd.f32 %v265, %v754
      %v756 = vpop.f32.mrb[0].mxu0
      %757 = vmatprep.mubr.bf16.mxu0 %v446
      %758 = vmatmul.mubr.bf16.gmra.mrb[0].mxu0 %v445
      %v759 = vpop.f32.mrb[0].mxu0
      %v760 = vadd.f32 %v265, %v759
      %v761 = vpop.f32.mrb[0].mxu0
      %v762 = vpop.f32.mrb[0].mxu0
      %v763 = vadd.f32 %v265, %v762
      %v764 = vpop.f32.mrb[0].mxu0
      %765 = vmatprep.mubr.bf16.mxu0 %v448
      %766 = vmatmul.mubr.bf16.gmra.mrb[0].mxu0 %v447
      %v767 = vpop.f32.mrb[0].mxu0
      %v768 = vadd.f32 %v265, %v767
      %v769 = vpop.f32.mrb[0].mxu0
      %v770 = vpop.f32.mrb[0].mxu0
      %v771 = vadd.f32 %v265, %v770
      %v772 = vpop.f32.mrb[0].mxu0
      %773 = vmatprep.mubr.bf16.mxu0 %v450
      %774 = vmatmul.mubr.bf16.gmra.mrb[0].mxu0 %v449
      %v775 = vpop.f32.mrb[0].mxu0
      %v776 = vadd.f32 %v265, %v775
      %v777 = vpop.f32.mrb[0].mxu0
      %v778 = vpop.f32.mrb[0].mxu0
      %v779 = vadd.f32 %v265, %v778
      %v780 = vpop.f32.mrb[0].mxu0
      %781 = vmatprep.mubr.bf16.mxu0 %v452
      %782 = vmatmul.mubr.bf16.gmra.mrb[0].mxu0 %v451
      %v783 = vpop.f32.mrb[0].mxu0
      %v784 = vadd.f32 %v265, %v783
      %v785 = vpop.f32.mrb[0].mxu0
      %v786 = vpop.f32.mrb[0].mxu0
      %v787 = vadd.f32 %v265, %v786
      %v788 = vpop.f32.mrb[0].mxu0
      %789 = vmatprep.mubr.bf16.mxu0 %v454
      %790 = vmatmul.mubr.bf16.gmra.mrb[0].mxu0 %v453
      %v791 = vpop.f32.mrb[0].mxu0
      %v792 = vadd.f32 %v265, %v791
      %v793 = vpop.f32.mrb[0].mxu0
      %v794 = vpop.f32.mrb[0].mxu0
      %v795 = vadd.f32 %v265, %v794
      %v796 = vpop.f32.mrb[0].mxu0
      %797 = vmatprep.mubr.bf16.mxu0 %v456
      %798 = vmatmul.mubr.bf16.gmra.mrb[0].mxu0 %v455
      %v799 = vpop.f32.mrb[0].mxu0
      %v800 = vadd.f32 %v265, %v799
      %v801 = vpop.f32.mrb[0].mxu0
      %v802 = vpop.f32.mrb[0].mxu0
      %v803 = vadd.f32 %v265, %v802
      %v804 = vpop.f32.mrb[0].mxu0
      %805 = vmatprep.mubr.bf16.mxu0 %v458
      %806 = vmatmul.mubr.bf16.gmra.mrb[0].mxu0 %v457
      %v807 = vpop.f32.mrb[0].mxu0
      %v808 = vadd.f32 %v265, %v807
      %v809 = vpop.f32.mrb[0].mxu0
      %v810 = vpop.f32.mrb[0].mxu0
      %v811 = vadd.f32 %v265, %v810
      %v812 = vpop.f32.mrb[0].mxu0
      %813 = vmatprep.mubr.bf16.mxu0 %v460
      %814 = vmatmul.mubr.bf16.gmra.mrb[0].mxu0 %v459
      %v815 = vpop.f32.mrb[0].mxu0
      %v816 = vadd.f32 %v265, %v815
      %v817 = vpop.f32.mrb[0].mxu0
      %v818 = vpop.f32.mrb[0].mxu0
      %v819 = vadd.f32 %v265, %v818
      %v820 = vpop.f32.mrb[0].mxu0
      %821 = vmatprep.mubr.bf16.mxu0 %v462
      %822 = vmatmul.mubr.bf16.gmra.mrb[0].mxu0 %v461
      %v823 = vpop.f32.mrb[0].mxu0
      %v824 = vadd.f32 %v265, %v823
      %v825 = vpop.f32.mrb[0].mxu0
      %v826 = vpop.f32.mrb[0].mxu0
      %v827 = vadd.f32 %v265, %v826
      %v828 = vpop.f32.mrb[0].mxu0
      %829 = vmatprep.mubr.bf16.mxu0 %v464
      %830 = vmatmul.mubr.bf16.gmra.mrb[0].mxu0 %v463
      %v831 = vpop.f32.mrb[0].mxu0
      %v832 = vadd.f32 %v265, %v831
      %v833 = vpop.f32.mrb[0].mxu0
      %v834 = vpop.f32.mrb[0].mxu0
      %v835 = vadd.f32 %v265, %v834
      %v836 = vpop.f32.mrb[0].mxu0
      %837 = vmatprep.mubr.bf16.mxu0 %v466
      %838 = vmatmul.mubr.bf16.gmra.mrb[0].mxu0 %v465
      %v839 = vpop.f32.mrb[0].mxu0
      %v840 = vadd.f32 %v265, %v839
      %v841 = vpop.f32.mrb[0].mxu0
      %v842 = vpop.f32.mrb[0].mxu0
      %v843 = vadd.f32 %v265, %v842
      %v844 = vpop.f32.mrb[0].mxu0
      %845 = vdwg.mxu0
      %v846 = vmax.f32 %v648, 0.0
      %v847 = vmax.f32 %v651, 0.0
      %v848 = vmax.f32 %v656, 0.0
      %v849 = vmax.f32 %v659, 0.0
      %v850 = vmax.f32 %v664, 0.0
      %v851 = vmax.f32 %v667, 0.0
      %v852 = vmax.f32 %v672, 0.0
      %v853 = vmax.f32 %v675, 0.0
      %v854 = vmax.f32 %v680, 0.0
      %v855 = vmax.f32 %v683, 0.0
      %v856 = vmax.f32 %v688, 0.0
      %v857 = vmax.f32 %v691, 0.0
      %v858 = vmax.f32 %v696, 0.0
      %v859 = vmax.f32 %v699, 0.0
      %v860 = vmax.f32 %v704, 0.0
      %v861 = vmax.f32 %v707, 0.0
      %v862 = vmax.f32 %v712, 0.0
      %v863 = vmax.f32 %v715, 0.0
      %v864 = vmax.f32 %v720, 0.0
      %v865 = vmax.f32 %v723, 0.0
      %v866 = vmax.f32 %v728, 0.0
      %v867 = vmax.f32 %v731, 0.0
      %v868 = vmax.f32 %v736, 0.0
      %v869 = vmax.f32 %v739, 0.0
      %v870 = vmax.f32 %v744, 0.0
      %v871 = vmax.f32 %v747, 0.0
      %v872 = vmax.f32 %v752, 0.0
      %v873 = vmax.f32 %v755, 0.0
      %v874 = vmax.f32 %v760, 0.0
      %v875 = vmax.f32 %v763, 0.0
      %v876 = vmax.f32 %v768, 0.0
      %v877 = vmax.f32 %v771, 0.0
      %v878 = vmax.f32 %v776, 0.0
      %v879 = vmax.f32 %v779, 0.0
      %v880 = vmax.f32 %v784, 0.0
      %v881 = vmax.f32 %v787, 0.0
      %v882 = vmax.f32 %v792, 0.0
      %v883 = vmax.f32 %v795, 0.0
      %v884 = vmax.f32 %v800, 0.0
      %v885 = vmax.f32 %v803, 0.0
      %v886 = vmax.f32 %v808, 0.0
      %v887 = vmax.f32 %v811, 0.0
      %v888 = vmax.f32 %v816, 0.0
      %v889 = vmax.f32 %v819, 0.0
      %v890 = vmax.f32 %v824, 0.0
      %v891 = vmax.f32 %v827, 0.0
      %v892 = vmax.f32 %v832, 0.0
      %v893 = vmax.f32 %v835, 0.0
      %v894 = vmax.f32 %v840, 0.0
      %v895 = vmax.f32 %v843, 0.0
      %v896 = vpack.c.bf16 %v847, %v846
      %v897 = vpack.c.bf16 %v849, %v848
      %v898 = vpack.c.bf16 %v851, %v850
      %v899 = vpack.c.bf16 %v853, %v852
      %v900 = vpack.c.bf16 %v855, %v854
      %v901 = vpack.c.bf16 %v857, %v856
      %v902 = vpack.c.bf16 %v859, %v858
      %v903 = vpack.c.bf16 %v861, %v860
      %v904 = vpack.c.bf16 %v863, %v862
      %v905 = vpack.c.bf16 %v865, %v864
      %v906 = vpack.c.bf16 %v867, %v866
      %v907 = vpack.c.bf16 %v869, %v868
      %v908 = vpack.c.bf16 %v871, %v870
      %v909 = vpack.c.bf16 %v873, %v872
      %v910 = vpack.c.bf16 %v875, %v874
      %v911 = vpack.c.bf16 %v877, %v876
      %v912 = vpack.c.bf16 %v879, %v878
      %v913 = vpack.c.bf16 %v881, %v880
      %v914 = vpack.c.bf16 %v883, %v882
      %v915 = vpack.c.bf16 %v885, %v884
      %v916 = vpack.c.bf16 %v887, %v886
      %v917 = vpack.c.bf16 %v889, %v888
      %v918 = vpack.c.bf16 %v891, %v890
      %v919 = vpack.c.bf16 %v893, %v892
      %v920 = vpack.c.bf16 %v895, %v894
      %v946 = vunpack.c.l.b16 %v896
      %v947 = vunpack.c.h.b16 %v896
      %v948 = vunpack.c.l.b16 %v897
      %v949 = vunpack.c.h.b16 %v897
      %v950 = vunpack.c.l.b16 %v898
      %v951 = vunpack.c.h.b16 %v898
      %v952 = vunpack.c.l.b16 %v899
      %v953 = vunpack.c.h.b16 %v899
      %v954 = vunpack.c.l.b16 %v900
      %v955 = vunpack.c.h.b16 %v900
      %v956 = vunpack.c.l.b16 %v901
      %v957 = vunpack.c.h.b16 %v901
      %v958 = vunpack.c.l.b16 %v902
      %v959 = vunpack.c.h.b16 %v902
      %v960 = vunpack.c.l.b16 %v903
      %v961 = vunpack.c.h.b16 %v903
      %v962 = vunpack.c.l.b16 %v904
      %v963 = vunpack.c.h.b16 %v904
      %v964 = vunpack.c.l.b16 %v905
      %v965 = vunpack.c.h.b16 %v905
      %v966 = vunpack.c.l.b16 %v906
      %v967 = vunpack.c.h.b16 %v906
      %v968 = vunpack.c.l.b16 %v907
      %v969 = vunpack.c.h.b16 %v907
      %v970 = vunpack.c.l.b16 %v908
      %v971 = vunpack.c.h.b16 %v908
      %v972 = vunpack.c.l.b16 %v909
      %v973 = vunpack.c.h.b16 %v909
      %v974 = vunpack.c.l.b16 %v910
      %v975 = vunpack.c.h.b16 %v910
      %v976 = vunpack.c.l.b16 %v911
      %v977 = vunpack.c.h.b16 %v911
      %v978 = vunpack.c.l.b16 %v912
      %v979 = vunpack.c.h.b16 %v912
      %v980 = vunpack.c.l.b16 %v913
      %v981 = vunpack.c.h.b16 %v913
      %v982 = vunpack.c.l.b16 %v914
      %v983 = vunpack.c.h.b16 %v914
      %v984 = vunpack.c.l.b16 %v915
      %v985 = vunpack.c.h.b16 %v915
      %v986 = vunpack.c.l.b16 %v916
      %v987 = vunpack.c.h.b16 %v916
      %v988 = vunpack.c.l.b16 %v917
      %v989 = vunpack.c.h.b16 %v917
      %v990 = vunpack.c.l.b16 %v918
      %v991 = vunpack.c.h.b16 %v918
      %v992 = vunpack.c.l.b16 %v919
      %v993 = vunpack.c.h.b16 %v919
      %v994 = vunpack.c.l.b16 %v920
      %v995 = vunpack.c.h.b16 %v920
      %v996 = vpack.c.b16 %v946, %v946
      %v997 = vpack.c.b16 %v947, %v947
      %v998 = vpack.c.b16 %v948, %v948
      %v999 = vpack.c.b16 %v949, %v949
      %v1000 = vpack.c.b16 %v950, %v950
      %v1001 = vpack.c.b16 %v951, %v951
      %v1002 = vpack.c.b16 %v952, %v952
      %v1003 = vpack.c.b16 %v953, %v953
      %v1004 = vpack.c.b16 %v954, %v954
      %v1005 = vpack.c.b16 %v955, %v955
      %v1006 = vpack.c.b16 %v956, %v956
      %v1007 = vpack.c.b16 %v957, %v957
      %v1008 = vpack.c.b16 %v958, %v958
      %v1009 = vpack.c.b16 %v959, %v959
      %v1010 = vpack.c.b16 %v960, %v960
      %v1011 = vpack.c.b16 %v961, %v961
      %v1012 = vpack.c.b16 %v962, %v962
      %v1013 = vpack.c.b16 %v963, %v963
      %v1014 = vpack.c.b16 %v964, %v964
      %v1015 = vpack.c.b16 %v965, %v965
      %v1016 = vpack.c.b16 %v966, %v966
      %v1017 = vpack.c.b16 %v967, %v967
      %v1018 = vpack.c.b16 %v968, %v968
      %v1019 = vpack.c.b16 %v969, %v969
      %v1020 = vpack.c.b16 %v970, %v970
      %v1021 = vpack.c.b16 %v971, %v971
      %v1022 = vpack.c.b16 %v972, %v972
      %v1023 = vpack.c.b16 %v973, %v973
      %v1024 = vpack.c.b16 %v974, %v974
      %v1025 = vpack.c.b16 %v975, %v975
      %v1026 = vpack.c.b16 %v976, %v976
      %v1027 = vpack.c.b16 %v977, %v977
      %v1028 = vpack.c.b16 %v978, %v978
      %v1029 = vpack.c.b16 %v979, %v979
      %v1030 = vpack.c.b16 %v980, %v980
      %v1031 = vpack.c.b16 %v981, %v981
      %v1032 = vpack.c.b16 %v982, %v982
      %v1033 = vpack.c.b16 %v983, %v983
      %v1034 = vpack.c.b16 %v984, %v984
      %v1035 = vpack.c.b16 %v985, %v985
      %v1036 = vpack.c.b16 %v986, %v986
      %v1037 = vpack.c.b16 %v987, %v987
      %v1038 = vpack.c.b16 %v988, %v988
      %v1039 = vpack.c.b16 %v989, %v989
      %v1040 = vpack.c.b16 %v990, %v990
      %v1041 = vpack.c.b16 %v991, %v991
      %v1042 = vpack.c.b16 %v992, %v992
      %v1043 = vpack.c.b16 %v993, %v993
      %v1044 = vpack.c.b16 %v994, %v994
      %v1045 = vpack.c.b16 %v995, %v995
      %vm1096 = vcmask 519168
      %1097 = vst.msk [vmem:[%s175] sm:$0xf] %vm1096, %v996
      %1098 = vst.msk [vmem:[%s175 + $0x4] sm:$0xf] %vm1096, %v997
      %1099 = vst.msk [vmem:[%s175 + $0x8] sm:$0xf] %vm1096, %v998
      %1100 = vst.msk [vmem:[%s175 + $0xc] sm:$0xf] %vm1096, %v999
      %1101 = vst.msk [vmem:[%s175 + $0x10] sm:$0xf] %vm1096, %v1000
      %1102 = vst.msk [vmem:[%s175 + $0x14] sm:$0xf] %vm1096, %v1001
      %1103 = vst.msk [vmem:[%s175 + $0x18] sm:$0xf] %vm1096, %v1002
      %1104 = vst.msk [vmem:[%s175 + $0x1c] sm:$0xf] %vm1096, %v1003
      %1105 = vst.msk [vmem:[%s175 + $0x20] sm:$0xf] %vm1096, %v1004
      %1106 = vst.msk [vmem:[%s175 + $0x24] sm:$0xf] %vm1096, %v1005
      %1107 = vst.msk [vmem:[%s175 + $0x28] sm:$0xf] %vm1096, %v1006
      %1108 = vst.msk [vmem:[%s175 + $0x2c] sm:$0xf] %vm1096, %v1007
      %1109 = vst.msk [vmem:[%s175 + $0x30] sm:$0xf] %vm1096, %v1008
      %1110 = vst.msk [vmem:[%s175 + $0x34] sm:$0xf] %vm1096, %v1009
      %1111 = vst.msk [vmem:[%s175 + $0x38] sm:$0xf] %vm1096, %v1010
      %1112 = vst.msk [vmem:[%s175 + $0x3c] sm:$0xf] %vm1096, %v1011
      %1113 = vst.msk [vmem:[%s175 + $0x40] sm:$0xf] %vm1096, %v1012
      %1114 = vst.msk [vmem:[%s175 + $0x44] sm:$0xf] %vm1096, %v1013
      %1115 = vst.msk [vmem:[%s175 + $0x48] sm:$0xf] %vm1096, %v1014
      %1116 = vst.msk [vmem:[%s175 + $0x4c] sm:$0xf] %vm1096, %v1015
      %1117 = vst.msk [vmem:[%s175 + $0x50] sm:$0xf] %vm1096, %v1016
      %1118 = vst.msk [vmem:[%s175 + $0x54] sm:$0xf] %vm1096, %v1017
      %1119 = vst.msk [vmem:[%s175 + $0x58] sm:$0xf] %vm1096, %v1018
      %1120 = vst.msk [vmem:[%s175 + $0x5c] sm:$0xf] %vm1096, %v1019
      %1121 = vst.msk [vmem:[%s175 + $0x60] sm:$0xf] %vm1096, %v1020
      %1122 = vst.msk [vmem:[%s175 + $0x64] sm:$0xf] %vm1096, %v1021
      %1123 = vst.msk [vmem:[%s175 + $0x68] sm:$0xf] %vm1096, %v1022
      %1124 = vst.msk [vmem:[%s175 + $0x6c] sm:$0xf] %vm1096, %v1023
      %1125 = vst.msk [vmem:[%s175 + $0x70] sm:$0xf] %vm1096, %v1024
      %1126 = vst.msk [vmem:[%s175 + $0x74] sm:$0xf] %vm1096, %v1025
      %1127 = vst.msk [vmem:[%s175 + $0x78] sm:$0xf] %vm1096, %v1026
      %1128 = vst.msk [vmem:[%s175 + $0x7c] sm:$0xf] %vm1096, %v1027
      %1129 = vst.msk [vmem:[%s175 + $0x80] sm:$0xf] %vm1096, %v1028
      %1130 = vst.msk [vmem:[%s175 + $0x84] sm:$0xf] %vm1096, %v1029
      %1131 = vst.msk [vmem:[%s175 + $0x88] sm:$0xf] %vm1096, %v1030
      %1132 = vst.msk [vmem:[%s175 + $0x8c] sm:$0xf] %vm1096, %v1031
      %1133 = vst.msk [vmem:[%s175 + $0x90] sm:$0xf] %vm1096, %v1032
      %1134 = vst.msk [vmem:[%s175 + $0x94] sm:$0xf] %vm1096, %v1033
      %1135 = vst.msk [vmem:[%s175 + $0x98] sm:$0xf] %vm1096, %v1034
      %1136 = vst.msk [vmem:[%s175 + $0x9c] sm:$0xf] %vm1096, %v1035
      %1137 = vst.msk [vmem:[%s175 + $0xa0] sm:$0xf] %vm1096, %v1036
      %1138 = vst.msk [vmem:[%s175 + $0xa4] sm:$0xf] %vm1096, %v1037
      %1139 = vst.msk [vmem:[%s175 + $0xa8] sm:$0xf] %vm1096, %v1038
      %1140 = vst.msk [vmem:[%s175 + $0xac] sm:$0xf] %vm1096, %v1039
      %1141 = vst.msk [vmem:[%s175 + $0xb0] sm:$0xf] %vm1096, %v1040
      %1142 = vst.msk [vmem:[%s175 + $0xb4] sm:$0xf] %vm1096, %v1041
      %1143 = vst.msk [vmem:[%s175 + $0xb8] sm:$0xf] %vm1096, %v1042
      %1144 = vst.msk [vmem:[%s175 + $0xbc] sm:$0xf] %vm1096, %v1043
      %1145 = vst.msk [vmem:[%s175 + $0xc0] sm:$0xf] %vm1096, %v1044
      %1146 = vst.msk [vmem:[%s175 + $0xc4] sm:$0xf] %vm1096, %v1045
      %s1147 = smul.u32 50, %s14
      %p1148 = scmp.lt.s32.totalorder %s1147, 99
      %s1149 = scalar_select %p1148, %s1147, 99
      %s1150 = smul.addr %s1149, 4
      %s1151 = scalar_lea.vmem %s3, %s1150
      // Predicated region
      $region33: #{agent_forward.4} parent=31 // pred_check
        %p1152 = pneg %p100
      $region34: #{agent_forward.4} parent=31 // pred_check_branch
        %1154 = sbr.rel (%p1152) target = $region36
      $region35: #{agent_forward.4} parent=31 // pred_region
        %s1155 = smul.u32 50, %s14
      $region36: #{agent_forward.4} parent=31 // pred_fallthru
        _
    $region32: #{agent_forward.4} parent=5 // pred_fallthru
      _
    %p1156 = scmp.le.s32.totalorder 2, %s9
    // Predicated region
    $region37: #{agent_forward.4} parent=5 // pred_check
      %p1157 = pneg %p1156
    $region38: #{agent_forward.4} parent=5 // pred_check_branch
      %1159 = sbr.rel (%p1157) target = $region40
    $region39: #{agent_forward.4} parent=5 // pred_region
      %s1160 = ssub.s32 %s9, 2
      // Predicated region
      $region41: #{agent_forward.4} parent=39 // pred_check
        %p1161 = pneg %p106
      $region42: #{agent_forward.4} parent=39 // pred_check_branch
        %1163 = sbr.rel (%p1161) target = $region44
      $region43: #{agent_forward.4} parent=39 // pred_region
        %s1164 = smul.u32 50, %s15
        %p1165 = scmp.lt.s32.totalorder %s1164, 99
        %s1166 = scalar_select %p1165, %s1164, 99
        %s1167 = smul.addr %s1166, 4
        %s1168 = scalar_lea.vmem %s3, %s1167
      $region44: #{agent_forward.4} parent=39 // pred_fallthru
        _
    $region40: #{agent_forward.4} parent=5 // pred_fallthru
      _
  $region6: #{agent_forward.4} parent=0 // loop_footer
    %s13 = sadd.s32 1, %s9
  $region7: #{agent_forward.4} parent=0 // loop_footer_branch
    %8 = sbr.rel target = $region3
  $region8: #{agent_forward.4} parent=0 // loop_exit
    _

// kernel: agent_forward.5
$region0: #{agent_forward.5}
  #allocation0 [shape = 'u32[]', space=smem, size = 0x4, offset = 0x4, fixed_abs, tag = 'smem constant byte address 0x4 - core index']
  #allocation1 [shape = 'u32[144,128]{1,0:T(1,128)}', space=vmem, size = 0x12000, scoped, tag = 'internal scratch']
  %s0 = inlined_call_operand.vmem [shape: bf16[2,162,512], index: 0, kind: input, shape index: {}]
  %s1 = inlined_call_operand.vmem [shape: bf16[2,512,64], index: 1, kind: input, shape index: {}]
  %s2 = inlined_call_operand.vmem [shape: f32[2,1,64], index: 2, kind: input, shape index: {}]
  %s3 = inlined_call_operand.vmem [shape: bf16[2,162,64], index: 3, kind: output, shape index: {}]
  %s4 = sld [smem:[#allocation0]]
  $region45: #{agent_forward.5} parent=0
    _
  %s6 = ssub.s32 1, %s4
  %s7 = scalar_select 0, %s6, %s4
  loop: start=0, step=1, limit=4
  $region2: #{agent_forward.5} parent=0 // loop_pre_header
    _
  $region3: #{agent_forward.5} parent=0 // loop_header
    %s9 = sphi 0, %s13
    %p10 = scmp.ge.s32.totalorder %s9, 4
    %s19 = sphi 0, %s21
    %s22 = sphi 0, %s19
    %s23 = sphi 0, %s22
    %s39 = sphi 0, %s23
    %s45 = sphi 0, %s47
    %s48 = sphi 0, %s45
    %s49 = sphi 0, %s48
    %s65 = sphi 0, %s49
    %s71 = sphi 0, %s73
    %s74 = sphi 0, %s71
    %s75 = sphi 0, %s74
    %s91 = sphi 0, %s75
    %s97 = sphi 0, %s99
    %s100 = sphi 0, %s97
    %s101 = sphi 0, %s100
    %s117 = sphi 0, %s101
  $region4: #{agent_forward.5} parent=0 // loop_header_branch
    %12 = sbr.rel (%p10) target = $region8
  $region5: #{agent_forward.5} parent=0 // loop_body
    %s14 = ssub.s32 %s9, 1
    %s15 = ssub.s32 %s9, 2
    %s16 = sadd.s32 %s9, 1
    %s17 = ssub.s32 %s9, %s16
    %p18 = scmp.eq.s32.totalorder %s17, 0
    %s20 = sadd.s32 %s19, 1
    %s21 = scalar_select %p18, %s19, %s20
    %p24 = pneg %p18
    %p25 = scmp.eq.s32.totalorder %s9, 1
    %p26 = por %p24, %p25
    %p27 = scmp.ne.s32.totalorder %s19, %s22
    %p28 = scmp.eq.s32.totalorder %s9, 0
    %p29 = por %p27, %p28
    %p30 = scmp.ne.s32.totalorder %s19, %s22
    %p31 = scmp.eq.s32.totalorder %s14, 1
    %p32 = por %p30, %p31
    %p33 = scmp.ne.s32.totalorder %s22, %s23
    %p34 = scmp.eq.s32.totalorder %s14, 0
    %p35 = por %p33, %p34
    %p36 = scmp.ne.s32.totalorder %s22, %s23
    %p37 = scmp.eq.s32.totalorder %s15, 1
    %p38 = por %p36, %p37
    %p40 = scmp.ne.s32.totalorder %s23, %s39
    %p41 = scmp.eq.s32.totalorder %s15, 0
    %p42 = por %p40, %p41
    %s43 = ssub.s32 %s9, %s16
    %p44 = scmp.eq.s32.totalorder %s43, 0
    %s46 = sadd.s32 %s45, 1
    %s47 = scalar_select %p44, %s45, %s46
    %p50 = pneg %p44
    %p51 = scmp.eq.s32.totalorder %s9, 1
    %p52 = por %p50, %p51
    %p53 = scmp.ne.s32.totalorder %s45, %s48
    %p54 = scmp.eq.s32.totalorder %s9, 0
    %p55 = por %p53, %p54
    %p56 = scmp.ne.s32.totalorder %s45, %s48
    %p57 = scmp.eq.s32.totalorder %s14, 1
    %p58 = por %p56, %p57
    %p59 = scmp.ne.s32.totalorder %s48, %s49
    %p60 = scmp.eq.s32.totalorder %s14, 0
    %p61 = por %p59, %p60
    %p62 = scmp.ne.s32.totalorder %s48, %s49
    %p63 = scmp.eq.s32.totalorder %s15, 1
    %p64 = por %p62, %p63
    %p66 = scmp.ne.s32.totalorder %s49, %s65
    %p67 = scmp.eq.s32.totalorder %s15, 0
    %p68 = por %p66, %p67
    %s69 = ssub.s32 %s9, %s16
    %p70 = scmp.eq.s32.totalorder %s69, 0
    %s72 = sadd.s32 %s71, 1
    %s73 = scalar_select %p70, %s71, %s72
    %p76 = pneg %p70
    %p77 = scmp.eq.s32.totalorder %s9, 1
    %p78 = por %p76, %p77
    %p79 = scmp.ne.s32.totalorder %s71, %s74
    %p80 = scmp.eq.s32.totalorder %s9, 0
    %p81 = por %p79, %p80
    %p82 = scmp.ne.s32.totalorder %s71, %s74
    %p83 = scmp.eq.s32.totalorder %s14, 1
    %p84 = por %p82, %p83
    %p85 = scmp.ne.s32.totalorder %s74, %s75
    %p86 = scmp.eq.s32.totalorder %s14, 0
    %p87 = por %p85, %p86
    %p88 = scmp.ne.s32.totalorder %s74, %s75
    %p89 = scmp.eq.s32.totalorder %s15, 1
    %p90 = por %p88, %p89
    %p92 = scmp.ne.s32.totalorder %s75, %s91
    %p93 = scmp.eq.s32.totalorder %s15, 0
    %p94 = por %p92, %p93
    %s95 = ssub.s32 %s9, %s16
    %p96 = scmp.eq.s32.totalorder %s95, 0
    %s98 = sadd.s32 %s97, 1
    %s99 = scalar_select %p96, %s97, %s98
    %p102 = pneg %p96
    %p103 = scmp.eq.s32.totalorder %s9, 1
    %p104 = por %p102, %p103
    %p105 = scmp.ne.s32.totalorder %s97, %s100
    %p106 = scmp.eq.s32.totalorder %s9, 0
    %p107 = por %p105, %p106
    %p108 = scmp.ne.s32.totalorder %s97, %s100
    %p109 = scmp.eq.s32.totalorder %s14, 1
    %p110 = por %p108, %p109
    %p111 = scmp.ne.s32.totalorder %s100, %s101
    %p112 = scmp.eq.s32.totalorder %s14, 0
    %p113 = por %p111, %p112
    %p114 = scmp.ne.s32.totalorder %s100, %s101
    %p115 = scmp.eq.s32.totalorder %s15, 1
    %p116 = por %p114, %p115
    %p118 = scmp.ne.s32.totalorder %s101, %s117
    %p119 = scmp.eq.s32.totalorder %s15, 0
    %p120 = por %p118, %p119
    %p121 = scmp.le.s32.totalorder 1, %s9
    %p122 = scmp.lt.s32.totalorder %s9, 3
    %p123 = pnand %p121, %p122
    %p124 = pneg %p123
    // Predicated region
    $region9: #{agent_forward.5} parent=5 // pred_check
      _
    $region10: #{agent_forward.5} parent=5 // pred_check_branch
      %126 = sbr.rel (%p123) target = $region12
    $region11: #{agent_forward.5} parent=5 // pred_region
      %s127 = ssub.s32 %s9, 1
    $region12: #{agent_forward.5} parent=5 // pred_fallthru
      _
    %p128 = scmp.lt.s32.totalorder %s9, 2
    // Predicated region
    $region13: #{agent_forward.5} parent=5 // pred_check
      %p129 = pneg %p128
    $region14: #{agent_forward.5} parent=5 // pred_check_branch
      %131 = sbr.rel (%p129) target = $region16
    $region15: #{agent_forward.5} parent=5 // pred_region
      // Predicated region
      $region17: #{agent_forward.5} parent=15 // pred_check
        %p132 = pneg %p29
      $region18: #{agent_forward.5} parent=15 // pred_check_branch
        %134 = sbr.rel (%p132) target = $region20
      $region19: #{agent_forward.5} parent=15 // pred_region
        %p135 = scmp.lt.s32.totalorder %s9, 1
        %s136 = scalar_select %p135, %s9, 1
        %s137 = smul.addr %s136, 84
        %s138 = smul.addr %s137, 4
        %s139 = scalar_lea.vmem %s0, %s138
      $region20: #{agent_forward.5} parent=15 // pred_fallthru
        _
      // Predicated region
      $region21: #{agent_forward.5} parent=15 // pred_check
        %p140 = pneg %p55
      $region22: #{agent_forward.5} parent=15 // pred_check_branch
        %142 = sbr.rel (%p140) target = $region24
      $region23: #{agent_forward.5} parent=15 // pred_region
        %p143 = scmp.lt.s32.totalorder %s9, 1
        %s144 = scalar_select %p143, %s9, 1
        %s145 = smul.addr %s144, 64
        %s146 = smul.addr %s145, 4
        %s147 = scalar_lea.vmem %s1, %s146
      $region24: #{agent_forward.5} parent=15 // pred_fallthru
        _
      // Predicated region
      $region25: #{agent_forward.5} parent=15 // pred_check
        %p148 = pneg %p81
      $region26: #{agent_forward.5} parent=15 // pred_check_branch
        %150 = sbr.rel (%p148) target = $region28
      $region27: #{agent_forward.5} parent=15 // pred_region
        %p151 = scmp.lt.s32.totalorder %s9, 1
        %s152 = scalar_select %p151, %s9, 1
        %s153 = scalar_lea.vmem %s2, %s152
      $region28: #{agent_forward.5} parent=15 // pred_fallthru
        _
    $region16: #{agent_forward.5} parent=5 // pred_fallthru
      _
    %p154 = scmp.le.s32.totalorder 1, %s9
    %p155 = scmp.lt.s32.totalorder %s9, 3
    %p156 = pnand %p154, %p155
    %p157 = pneg %p156
    // Predicated region
    $region29: #{agent_forward.5} parent=5 // pred_check
      _
    $region30: #{agent_forward.5} parent=5 // pred_check_branch
      %159 = sbr.rel (%p156) target = $region32
    $region31: #{agent_forward.5} parent=5 // pred_region
      %s160 = ssub.s32 %s9, 1
      %p161 = scmp.lt.s32.totalorder %s14, 1
      %s162 = scalar_select %p161, %s14, 1
      %s163 = smul.addr %s162, 84
      %s164 = smul.addr %s163, 4
      %s165 = scalar_lea.vmem %s0, %s164
      %p166 = pneg %p35
      %p167 = pneg %p32
      %p168 = scmp.lt.s32.totalorder %s14, 1
      %s169 = scalar_select %p168, %s14, 1
      %s170 = smul.addr %s169, 64
      %s171 = smul.addr %s170, 4
      %s172 = scalar_lea.vmem %s1, %s171
      %p173 = pneg %p61
      %p174 = pneg %p58
      %p175 = scmp.lt.s32.totalorder %s14, 1
      %s176 = scalar_select %p175, %s14, 1
      %s177 = scalar_lea.vmem %s2, %s176
      %p178 = pneg %p87
      %p179 = pneg %p84
      %p180 = pneg %p113
      %p181 = pneg %p110
      %p182 = scmp.lt.s32.totalorder %s14, 1
      %s183 = scalar_select %p182, %s14, 1
      %s184 = smul.addr %s183, 21
      %s185 = smul.addr %s184, 4
      %s186 = scalar_lea.vmem %s3, %s185
      %p187 = scmp.lt.s32.totalorder %s14, 1
      %s188 = scalar_select %p187, %s14, 1
      %s189 = smul.addr %s188, 84
      %s190 = smul.addr %s189, 4
      %s191 = scalar_lea.vmem %s0, %s190
      %p192 = scmp.lt.s32.totalorder %s14, 1
      %s193 = scalar_select %p192, %s14, 1
      %s194 = smul.addr %s193, 64
      %s195 = smul.addr %s194, 4
      %s196 = scalar_lea.vmem %s1, %s195
      %p197 = scmp.lt.s32.totalorder %s14, 1
      %s198 = scalar_select %p197, %s14, 1
      %s199 = scalar_lea.vmem %s2, %s198
      %p200 = scmp.lt.s32.totalorder %s14, 1
      %s201 = scalar_select %p200, %s14, 1
      %s202 = smul.addr %s201, 21
      %s203 = smul.addr %s202, 4
      %s204 = scalar_lea.vmem %s3, %s203
      %v206 = vld [vmem:[%s191] sm:$0xff]
      %v207 = vld [vmem:[%s191 + $0x8] sm:$0xff]
      %v208 = vld [vmem:[%s191 + $0x10] sm:$0xff]
      %v209 = vld [vmem:[%s191 + $0x18] sm:$0xff]
      %v210 = vld [vmem:[%s191 + $0x20] sm:$0xff]
      %v211 = vld [vmem:[%s191 + $0x28] sm:$0xff]
      %v212 = vld [vmem:[%s191 + $0x30] sm:$0xff]
      %v213 = vld [vmem:[%s191 + $0x38] sm:$0xff]
      %v214 = vld [vmem:[%s191 + $0x40] sm:$0xff]
      %v215 = vld [vmem:[%s191 + $0x48] sm:$0xff]
      %v216 = vld [vmem:[%s191 + $0x50] sm:$0xff]
      %v217 = vld [vmem:[%s191 + $0x58] sm:$0xff]
      %v218 = vld [vmem:[%s191 + $0x60] sm:$0xff]
      %v219 = vld [vmem:[%s191 + $0x68] sm:$0xff]
      %v220 = vld [vmem:[%s191 + $0x70] sm:$0xff]
      %v221 = vld [vmem:[%s191 + $0x78] sm:$0xff]
      %v222 = vld [vmem:[%s191 + $0x80] sm:$0xff]
      %v223 = vld [vmem:[%s191 + $0x88] sm:$0xff]
      %v224 = vld [vmem:[%s191 + $0x90] sm:$0xff]
      %v225 = vld [vmem:[%s191 + $0x98] sm:$0xff]
      %v226 = vld [vmem:[%s191 + $0xa0] sm:$0xff]
      %v227 = vld [vmem:[%s191 + $0xa8] sm:$0xff]
      %v228 = vld [vmem:[%s191 + $0xb0] sm:$0xff]
      %v229 = vld [vmem:[%s191 + $0xb8] sm:$0xff]
      %v230 = vld [vmem:[%s191 + $0xc0] sm:$0xff]
      %v231 = vld [vmem:[%s191 + $0xc8] sm:$0xff]
      %v232 = vld [vmem:[%s191 + $0xd0] sm:$0xff]
      %v233 = vld [vmem:[%s191 + $0xd8] sm:$0xff]
      %v234 = vld [vmem:[%s191 + $0xe0] sm:$0xff]
      %v235 = vld [vmem:[%s191 + $0xe8] sm:$0xff]
      %v236 = vld [vmem:[%s191 + $0xf0] sm:$0xff]
      %v237 = vld [vmem:[%s191 + $0xf8] sm:$0xff]
      %v238 = vld [vmem:[%s191 + $0x100] sm:$0xff]
      %v239 = vld [vmem:[%s191 + $0x108] sm:$0xff]
      %v240 = vld [vmem:[%s191 + $0x110] sm:$0xff]
      %v241 = vld [vmem:[%s191 + $0x118] sm:$0xff]
      %v242 = vld [vmem:[%s191 + $0x120] sm:$0xff]
      %v243 = vld [vmem:[%s191 + $0x128] sm:$0xff]
      %v244 = vld [vmem:[%s191 + $0x130] sm:$0xff]
      %v245 = vld [vmem:[%s191 + $0x138] sm:$0xff]
      %v246 = vld [vmem:[%s191 + $0x140] sm:$0x11]
      %v247 = vld [vmem:[%s191 + $0x148] sm:$0x11]
      %v248 = vld [vmem:[%s196] sm:$0xf]
      %v249 = vld [vmem:[%s196 + $0x4] sm:$0xf]
      %v250 = vld [vmem:[%s196 + $0x8] sm:$0xf]
      %v251 = vld [vmem:[%s196 + $0xc] sm:$0xf]
      %v252 = vld [vmem:[%s196 + $0x10] sm:$0xf]
      %v253 = vld [vmem:[%s196 + $0x14] sm:$0xf]
      %v254 = vld [vmem:[%s196 + $0x18] sm:$0xf]
      %v255 = vld [vmem:[%s196 + $0x1c] sm:$0xf]
      %v256 = vld [vmem:[%s196 + $0x20] sm:$0xf]
      %v257 = vld [vmem:[%s196 + $0x24] sm:$0xf]
      %v258 = vld [vmem:[%s196 + $0x28] sm:$0xf]
      %v259 = vld [vmem:[%s196 + $0x2c] sm:$0xf]
      %v260 = vld [vmem:[%s196 + $0x30] sm:$0xf]
      %v261 = vld [vmem:[%s196 + $0x34] sm:$0xf]
      %v262 = vld [vmem:[%s196 + $0x38] sm:$0xf]
      %v263 = vld [vmem:[%s196 + $0x3c] sm:$0xf]
      %v264 = vld [vmem:[%s196 + $0x40] sm:$0xf]
      %v265 = vld [vmem:[%s196 + $0x44] sm:$0xf]
      %v266 = vld [vmem:[%s196 + $0x48] sm:$0xf]
      %v267 = vld [vmem:[%s196 + $0x4c] sm:$0xf]
      %v268 = vld [vmem:[%s196 + $0x50] sm:$0xf]
      %v269 = vld [vmem:[%s196 + $0x54] sm:$0xf]
      %v270 = vld [vmem:[%s196 + $0x58] sm:$0xf]
      %v271 = vld [vmem:[%s196 + $0x5c] sm:$0xf]
      %v272 = vld [vmem:[%s196 + $0x60] sm:$0xf]
      %v273 = vld [vmem:[%s196 + $0x64] sm:$0xf]
      %v274 = vld [vmem:[%s196 + $0x68] sm:$0xf]
      %v275 = vld [vmem:[%s196 + $0x6c] sm:$0xf]
      %v276 = vld [vmem:[%s196 + $0x70] sm:$0xf]
      %v277 = vld [vmem:[%s196 + $0x74] sm:$0xf]
      %v278 = vld [vmem:[%s196 + $0x78] sm:$0xf]
      %v279 = vld [vmem:[%s196 + $0x7c] sm:$0xf]
      %v280 = vld [vmem:[%s196 + $0x80] sm:$0xf]
      %v281 = vld [vmem:[%s196 + $0x84] sm:$0xf]
      %v282 = vld [vmem:[%s196 + $0x88] sm:$0xf]
      %v283 = vld [vmem:[%s196 + $0x8c] sm:$0xf]
      %v284 = vld [vmem:[%s196 + $0x90] sm:$0xf]
      %v285 = vld [vmem:[%s196 + $0x94] sm:$0xf]
      %v286 = vld [vmem:[%s196 + $0x98] sm:$0xf]
      %v287 = vld [vmem:[%s196 + $0x9c] sm:$0xf]
      %v288 = vld [vmem:[%s196 + $0xa0] sm:$0xf]
      %v289 = vld [vmem:[%s196 + $0xa4] sm:$0xf]
      %v290 = vld [vmem:[%s196 + $0xa8] sm:$0xf]
      %v291 = vld [vmem:[%s196 + $0xac] sm:$0xf]
      %v292 = vld [vmem:[%s196 + $0xb0] sm:$0xf]
      %v293 = vld [vmem:[%s196 + $0xb4] sm:$0xf]
      %v294 = vld [vmem:[%s196 + $0xb8] sm:$0xf]
      %v295 = vld [vmem:[%s196 + $0xbc] sm:$0xf]
      %v296 = vld [vmem:[%s196 + $0xc0] sm:$0xf]
      %v297 = vld [vmem:[%s196 + $0xc4] sm:$0xf]
      %v298 = vld [vmem:[%s196 + $0xc8] sm:$0xf]
      %v299 = vld [vmem:[%s196 + $0xcc] sm:$0xf]
      %v300 = vld [vmem:[%s196 + $0xd0] sm:$0xf]
      %v301 = vld [vmem:[%s196 + $0xd4] sm:$0xf]
      %v302 = vld [vmem:[%s196 + $0xd8] sm:$0xf]
      %v303 = vld [vmem:[%s196 + $0xdc] sm:$0xf]
      %v304 = vld [vmem:[%s196 + $0xe0] sm:$0xf]
      %v305 = vld [vmem:[%s196 + $0xe4] sm:$0xf]
      %v306 = vld [vmem:[%s196 + $0xe8] sm:$0xf]
      %v307 = vld [vmem:[%s196 + $0xec] sm:$0xf]
      %v308 = vld [vmem:[%s196 + $0xf0] sm:$0xf]
      %v309 = vld [vmem:[%s196 + $0xf4] sm:$0xf]
      %v310 = vld [vmem:[%s196 + $0xf8] sm:$0xf]
      %v311 = vld [vmem:[%s196 + $0xfc] sm:$0xf]
      %v312 = vld [vmem:[%s199] sm:$0x1]
      %v314 = vlaneseq
      %v315 = vshrl.u32 %v314, 7
      %v316 = vsub.s32 0, %v315
      %v317 = vrot.slane %v312, %v316
      %v361 = vunpack.c.l.b16 %v206
      %v362 = vunpack.c.h.b16 %v206
      %v363 = vunpack.c.l.b16 %v207
      %v364 = vunpack.c.h.b16 %v207
      %v365 = vunpack.c.l.b16 %v208
      %v366 = vunpack.c.h.b16 %v208
      %v367 = vunpack.c.l.b16 %v209
      %v368 = vunpack.c.h.b16 %v209
      %v369 = vunpack.c.l.b16 %v210
      %v370 = vunpack.c.h.b16 %v210
      %v371 = vunpack.c.l.b16 %v211
      %v372 = vunpack.c.h.b16 %v211
      %v373 = vunpack.c.l.b16 %v212
      %v374 = vunpack.c.h.b16 %v212
      %v375 = vunpack.c.l.b16 %v213
      %v376 = vunpack.c.h.b16 %v213
      %v377 = vunpack.c.l.b16 %v214
      %v378 = vunpack.c.h.b16 %v214
      %v379 = vunpack.c.l.b16 %v215
      %v380 = vunpack.c.h.b16 %v215
      %v381 = vunpack.c.l.b16 %v216
      %v382 = vunpack.c.h.b16 %v216
      %v383 = vunpack.c.l.b16 %v217
      %v384 = vunpack.c.h.b16 %v217
      %v385 = vunpack.c.l.b16 %v218
      %v386 = vunpack.c.h.b16 %v218
      %v387 = vunpack.c.l.b16 %v219
      %v388 = vunpack.c.h.b16 %v219
      %v389 = vunpack.c.l.b16 %v220
      %v390 = vunpack.c.h.b16 %v220
      %v391 = vunpack.c.l.b16 %v221
      %v392 = vunpack.c.h.b16 %v221
      %v393 = vunpack.c.l.b16 %v222
      %v394 = vunpack.c.h.b16 %v222
      %v395 = vunpack.c.l.b16 %v223
      %v396 = vunpack.c.h.b16 %v223
      %v397 = vunpack.c.l.b16 %v224
      %v398 = vunpack.c.h.b16 %v224
      %v399 = vunpack.c.l.b16 %v225
      %v400 = vunpack.c.h.b16 %v225
      %v401 = vunpack.c.l.b16 %v226
      %v402 = vunpack.c.h.b16 %v226
      %v403 = vunpack.c.l.b16 %v227
      %v404 = vunpack.c.h.b16 %v227
      %v405 = vunpack.c.l.b16 %v228
      %v406 = vunpack.c.h.b16 %v228
      %v407 = vunpack.c.l.b16 %v229
      %v408 = vunpack.c.h.b16 %v229
      %v409 = vunpack.c.l.b16 %v230
      %v410 = vunpack.c.h.b16 %v230
      %v411 = vunpack.c.l.b16 %v231
      %v412 = vunpack.c.h.b16 %v231
      %v413 = vunpack.c.l.b16 %v232
      %v414 = vunpack.c.h.b16 %v232
      %v415 = vunpack.c.l.b16 %v233
      %v416 = vunpack.c.h.b16 %v233
      %v417 = vunpack.c.l.b16 %v234
      %v418 = vunpack.c.h.b16 %v234
      %v419 = vunpack.c.l.b16 %v235
      %v420 = vunpack.c.h.b16 %v235
      %v421 = vunpack.c.l.b16 %v236
      %v422 = vunpack.c.h.b16 %v236
      %v423 = vunpack.c.l.b16 %v237
      %v424 = vunpack.c.h.b16 %v237
      %v425 = vunpack.c.l.b16 %v238
      %v426 = vunpack.c.h.b16 %v238
      %v427 = vunpack.c.l.b16 %v239
      %v428 = vunpack.c.h.b16 %v239
      %v429 = vunpack.c.l.b16 %v240
      %v430 = vunpack.c.h.b16 %v240
      %v431 = vunpack.c.l.b16 %v241
      %v432 = vunpack.c.h.b16 %v241
      %v433 = vunpack.c.l.b16 %v242
      %v434 = vunpack.c.h.b16 %v242
      %v435 = vunpack.c.l.b16 %v243
      %v436 = vunpack.c.h.b16 %v243
      %v437 = vunpack.c.l.b16 %v244
      %v438 = vunpack.c.h.b16 %v244
      %v439 = vunpack.c.l.b16 %v245
      %v440 = vunpack.c.h.b16 %v245
      %v441 = vunpack.c.l.b16 %v246
      %v442 = vunpack.c.h.b16 %v246
      %v443 = vunpack.c.l.b16 %v247
      %v444 = vunpack.c.h.b16 %v247
      %v445 = vpack.c.b16 %v365, %v361
      %v446 = vpack.c.b16 %v366, %v362
      %v447 = vpack.c.b16 %v367, %v363
      %v448 = vpack.c.b16 %v368, %v364
      %v449 = vpack.c.b16 %v373, %v369
      %v450 = vpack.c.b16 %v374, %v370
      %v451 = vpack.c.b16 %v375, %v371
      %v452 = vpack.c.b16 %v376, %v372
      %v453 = vpack.c.b16 %v381, %v377
      %v454 = vpack.c.b16 %v382, %v378
      %v455 = vpack.c.b16 %v383, %v379
      %v456 = vpack.c.b16 %v384, %v380
      %v457 = vpack.c.b16 %v389, %v385
      %v458 = vpack.c.b16 %v390, %v386
      %v459 = vpack.c.b16 %v391, %v387
      %v460 = vpack.c.b16 %v392, %v388
      %v461 = vpack.c.b16 %v397, %v393
      %v462 = vpack.c.b16 %v398, %v394
      %v463 = vpack.c.b16 %v399, %v395
      %v464 = vpack.c.b16 %v400, %v396
      %v465 = vpack.c.b16 %v405, %v401
      %v466 = vpack.c.b16 %v406, %v402
      %v467 = vpack.c.b16 %v407, %v403
      %v468 = vpack.c.b16 %v408, %v404
      %v469 = vpack.c.b16 %v413, %v409
      %v470 = vpack.c.b16 %v414, %v410
      %v471 = vpack.c.b16 %v415, %v411
      %v472 = vpack.c.b16 %v416, %v412
      %v473 = vpack.c.b16 %v421, %v417
      %v474 = vpack.c.b16 %v422, %v418
      %v475 = vpack.c.b16 %v423, %v419
      %v476 = vpack.c.b16 %v424, %v420
      %v477 = vpack.c.b16 %v429, %v425
      %v478 = vpack.c.b16 %v430, %v426
      %v479 = vpack.c.b16 %v431, %v427
      %v480 = vpack.c.b16 %v432, %v428
      %v481 = vpack.c.b16 %v437, %v433
      %v482 = vpack.c.b16 %v438, %v434
      %v483 = vpack.c.b16 %v439, %v435
      %v484 = vpack.c.b16 %v440, %v436
      %v485 = vpack.c.b16 %v441, %v441
      %v486 = vpack.c.b16 %v442, %v442
      %v487 = vpack.c.b16 %v443, %v443
      %v488 = vpack.c.b16 %v444, %v444
      %v597 = vunpack.c.l.b16 %v248
      %v598 = vunpack.c.l.b16 %v249
      %v599 = vunpack.c.l.b16 %v250
      %v600 = vunpack.c.l.b16 %v251
      %v601 = vunpack.c.l.b16 %v252
      %v602 = vunpack.c.l.b16 %v253
      %v603 = vunpack.c.l.b16 %v254
      %v604 = vunpack.c.l.b16 %v255
      %v605 = vunpack.c.l.b16 %v256
      %v606 = vunpack.c.l.b16 %v257
      %v607 = vunpack.c.l.b16 %v258
      %v608 = vunpack.c.l.b16 %v259
      %v609 = vunpack.c.l.b16 %v260
      %v610 = vunpack.c.l.b16 %v261
      %v611 = vunpack.c.l.b16 %v262
      %v612 = vunpack.c.l.b16 %v263
      %v613 = vunpack.c.l.b16 %v264
      %v614 = vunpack.c.l.b16 %v265
      %v615 = vunpack.c.l.b16 %v266
      %v616 = vunpack.c.l.b16 %v267
      %v617 = vunpack.c.l.b16 %v268
      %v618 = vunpack.c.l.b16 %v269
      %v619 = vunpack.c.l.b16 %v270
      %v620 = vunpack.c.l.b16 %v271
      %v621 = vunpack.c.l.b16 %v272
      %v622 = vunpack.c.l.b16 %v273
      %v623 = vunpack.c.l.b16 %v274
      %v624 = vunpack.c.l.b16 %v275
      %v625 = vunpack.c.l.b16 %v276
      %v626 = vunpack.c.l.b16 %v277
      %v627 = vunpack.c.l.b16 %v278
      %v628 = vunpack.c.l.b16 %v279
      %v629 = vunpack.c.l.b16 %v280
      %v630 = vunpack.c.l.b16 %v281
      %v631 = vunpack.c.l.b16 %v282
      %v632 = vunpack.c.l.b16 %v283
      %v633 = vunpack.c.l.b16 %v284
      %v634 = vunpack.c.l.b16 %v285
      %v635 = vunpack.c.l.b16 %v286
      %v636 = vunpack.c.l.b16 %v287
      %v637 = vunpack.c.l.b16 %v288
      %v638 = vunpack.c.l.b16 %v289
      %v639 = vunpack.c.l.b16 %v290
      %v640 = vunpack.c.l.b16 %v291
      %v641 = vunpack.c.l.b16 %v292
      %v642 = vunpack.c.l.b16 %v293
      %v643 = vunpack.c.l.b16 %v294
      %v644 = vunpack.c.l.b16 %v295
      %v645 = vunpack.c.l.b16 %v296
      %v646 = vunpack.c.l.b16 %v297
      %v647 = vunpack.c.l.b16 %v298
      %v648 = vunpack.c.l.b16 %v299
      %v649 = vunpack.c.l.b16 %v300
      %v650 = vunpack.c.l.b16 %v301
      %v651 = vunpack.c.l.b16 %v302
      %v652 = vunpack.c.l.b16 %v303
      %v653 = vunpack.c.l.b16 %v304
      %v654 = vunpack.c.l.b16 %v305
      %v655 = vunpack.c.l.b16 %v306
      %v656 = vunpack.c.l.b16 %v307
      %v657 = vunpack.c.l.b16 %v308
      %v658 = vunpack.c.l.b16 %v309
      %v659 = vunpack.c.l.b16 %v310
      %v660 = vunpack.c.l.b16 %v311
      %v661 = vpack.c.b16 %v598, %v597
      %v662 = vpack.c.b16 %v600, %v599
      %v663 = vpack.c.b16 %v602, %v601
      %v664 = vpack.c.b16 %v604, %v603
      %v665 = vpack.c.b16 %v606, %v605
      %v666 = vpack.c.b16 %v608, %v607
      %v667 = vpack.c.b16 %v610, %v609
      %v668 = vpack.c.b16 %v612, %v611
      %v669 = vpack.c.b16 %v614, %v613
      %v670 = vpack.c.b16 %v616, %v615
      %v671 = vpack.c.b16 %v618, %v617
      %v672 = vpack.c.b16 %v620, %v619
      %v673 = vpack.c.b16 %v622, %v621
      %v674 = vpack.c.b16 %v624, %v623
      %v675 = vpack.c.b16 %v626, %v625
      %v676 = vpack.c.b16 %v628, %v627
      %v677 = vpack.c.b16 %v630, %v629
      %v678 = vpack.c.b16 %v632, %v631
      %v679 = vpack.c.b16 %v634, %v633
      %v680 = vpack.c.b16 %v636, %v635
      %v681 = vpack.c.b16 %v638, %v637
      %v682 = vpack.c.b16 %v640, %v639
      %v683 = vpack.c.b16 %v642, %v641
      %v684 = vpack.c.b16 %v644, %v643
      %v685 = vpack.c.b16 %v646, %v645
      %v686 = vpack.c.b16 %v648, %v647
      %v687 = vpack.c.b16 %v650, %v649
      %v688 = vpack.c.b16 %v652, %v651
      %v689 = vpack.c.b16 %v654, %v653
      %v690 = vpack.c.b16 %v656, %v655
      %v691 = vpack.c.b16 %v658, %v657
      %v692 = vpack.c.b16 %v660, %v659
      %725 = vmatprep.subr.bf16.mxu0 0
      %726 = vmatpush1.bf16.msra.mxu0 %v661
      %727 = vmatprep.subr.bf16.mxu0 0
      %728 = vmatpush1.bf16.msra.mxu0 %v662
      %729 = vmatprep.subr.bf16.mxu0 0
      %730 = vmatpush1.bf16.msra.mxu0 %v663
      %731 = vmatprep.subr.bf16.mxu0 0
      %732 = vmatpush1.bf16.msra.mxu0 %v664
      %733 = vmatprep.subr.bf16.mxu0 0
      %734 = vmatpush1.bf16.msra.mxu0 %v665
      %735 = vmatprep.subr.bf16.mxu0 0
      %736 = vmatpush1.bf16.msra.mxu0 %v666
      %737 = vmatprep.subr.bf16.mxu0 0
      %738 = vmatpush1.bf16.msra.mxu0 %v667
      %739 = vmatprep.subr.bf16.mxu0 0
      %740 = vmatpush1.bf16.msra.mxu0 %v668
      %741 = vmatprep.subr.bf16.mxu0 0
      %742 = vmatpush1.bf16.msra.mxu0 %v669
      %743 = vmatprep.subr.bf16.mxu0 0
      %744 = vmatpush1.bf16.msra.mxu0 %v670
      %745 = vmatprep.subr.bf16.mxu0 0
      %746 = vmatpush1.bf16.msra.mxu0 %v671
      %747 = vmatprep.subr.bf16.mxu0 0
      %748 = vmatpush1.bf16.msra.mxu0 %v672
      %749 = vmatprep.subr.bf16.mxu0 0
      %750 = vmatpush1.bf16.msra.mxu0 %v673
      %751 = vmatprep.subr.bf16.mxu0 0
      %752 = vmatpush1.bf16.msra.mxu0 %v674
      %753 = vmatprep.subr.bf16.mxu0 0
      %754 = vmatpush1.bf16.msra.mxu0 %v675
      %755 = vmatprep.subr.bf16.mxu0 0
      %756 = vmatpush1.bf16.msra.mxu0 %v676
      %757 = vmatprep.mubr.bf16.mxu0 %v446
      %758 = vmatmul.mubr.bf16.gmra.mrb[0].mxu0 %v445
      %v759 = vpop.f32.mrb[0].mxu0
      %v760 = vadd.f32 %v317, %v759
      %v761 = vpop.f32.mrb[0].mxu0
      %v762 = vpop.f32.mrb[0].mxu0
      %v763 = vadd.f32 %v317, %v762
      %v764 = vpop.f32.mrb[0].mxu0
      %765 = vmatprep.mubr.bf16.mxu0 %v450
      %766 = vmatmul.mubr.bf16.gmra.mrb[0].mxu0 %v449
      %v767 = vpop.f32.mrb[0].mxu0
      %v768 = vadd.f32 %v317, %v767
      %v769 = vpop.f32.mrb[0].mxu0
      %v770 = vpop.f32.mrb[0].mxu0
      %v771 = vadd.f32 %v317, %v770
      %v772 = vpop.f32.mrb[0].mxu0
      %773 = vmatprep.mubr.bf16.mxu0 %v454
      %774 = vmatmul.mubr.bf16.gmra.mrb[0].mxu0 %v453
      %v775 = vpop.f32.mrb[0].mxu0
      %v776 = vadd.f32 %v317, %v775
      %v777 = vpop.f32.mrb[0].mxu0
      %v778 = vpop.f32.mrb[0].mxu0
      %v779 = vadd.f32 %v317, %v778
      %v780 = vpop.f32.mrb[0].mxu0
      %781 = vmatprep.mubr.bf16.mxu0 %v458
      %782 = vmatmul.mubr.bf16.gmra.mrb[0].mxu0 %v457
      %v783 = vpop.f32.mrb[0].mxu0
      %v784 = vadd.f32 %v317, %v783
      %v785 = vpop.f32.mrb[0].mxu0
      %v786 = vpop.f32.mrb[0].mxu0
      %v787 = vadd.f32 %v317, %v786
      %v788 = vpop.f32.mrb[0].mxu0
      %789 = vmatprep.mubr.bf16.mxu0 %v462
      %790 = vmatmul.mubr.bf16.gmra.mrb[0].mxu0 %v461
      %v791 = vpop.f32.mrb[0].mxu0
      %v792 = vadd.f32 %v317, %v791
      %v793 = vpop.f32.mrb[0].mxu0
      %v794 = vpop.f32.mrb[0].mxu0
      %v795 = vadd.f32 %v317, %v794
      %v796 = vpop.f32.mrb[0].mxu0
      %797 = vmatprep.mubr.bf16.mxu0 %v466
      %798 = vmatmul.mubr.bf16.gmra.mrb[0].mxu0 %v465
      %v799 = vpop.f32.mrb[0].mxu0
      %v800 = vadd.f32 %v317, %v799
      %v801 = vpop.f32.mrb[0].mxu0
      %v802 = vpop.f32.mrb[0].mxu0
      %v803 = vadd.f32 %v317, %v802
      %v804 = vpop.f32.mrb[0].mxu0
      %805 = vmatprep.mubr.bf16.mxu0 %v470
      %806 = vmatmul.mubr.bf16.gmra.mrb[0].mxu0 %v469
      %v807 = vpop.f32.mrb[0].mxu0
      %v808 = vadd.f32 %v317, %v807
      %v809 = vpop.f32.mrb[0].mxu0
      %v810 = vpop.f32.mrb[0].mxu0
      %v811 = vadd.f32 %v317, %v810
      %v812 = vpop.f32.mrb[0].mxu0
      %813 = vmatprep.mubr.bf16.mxu0 %v474
      %814 = vmatmul.mubr.bf16.gmra.mrb[0].mxu0 %v473
      %v815 = vpop.f32.mrb[0].mxu0
      %v816 = vadd.f32 %v317, %v815
      %v817 = vpop.f32.mrb[0].mxu0
      %v818 = vpop.f32.mrb[0].mxu0
      %v819 = vadd.f32 %v317, %v818
      %v820 = vpop.f32.mrb[0].mxu0
      %821 = vmatprep.mubr.bf16.mxu0 %v478
      %822 = vmatmul.mubr.bf16.gmra.mrb[0].mxu0 %v477
      %v823 = vpop.f32.mrb[0].mxu0
      %v824 = vadd.f32 %v317, %v823
      %v825 = vpop.f32.mrb[0].mxu0
      %v826 = vpop.f32.mrb[0].mxu0
      %v827 = vadd.f32 %v317, %v826
      %v828 = vpop.f32.mrb[0].mxu0
      %829 = vmatprep.mubr.bf16.mxu0 %v482
      %830 = vmatmul.mubr.bf16.gmra.mrb[0].mxu0 %v481
      %v831 = vpop.f32.mrb[0].mxu0
      %v832 = vadd.f32 %v317, %v831
      %v833 = vpop.f32.mrb[0].mxu0
      %v834 = vpop.f32.mrb[0].mxu0
      %v835 = vadd.f32 %v317, %v834
      %v836 = vpop.f32.mrb[0].mxu0
      %837 = vmatprep.mubr.bf16.mxu0 %v486
      %838 = vmatmul.mubr.bf16.gmra.mrb[0].mxu0 %v485
      %v839 = vpop.f32.mrb[0].mxu0
      %v840 = vadd.f32 %v317, %v839
      %v841 = vpop.f32.mrb[0].mxu0
      %v842 = vpop.f32.mrb[0].mxu0
      %v843 = vpop.f32.mrb[0].mxu0
      %844 = vdwg.mxu0
      %845 = vmatprep.subr.bf16.mxu0 0
      %846 = vmatpush1.bf16.msra.mxu0 %v677
      %847 = vmatprep.subr.bf16.mxu0 0
      %848 = vmatpush1.bf16.msra.mxu0 %v678
      %849 = vmatprep.subr.bf16.mxu0 0
      %850 = vmatpush1.bf16.msra.mxu0 %v679
      %851 = vmatprep.subr.bf16.mxu0 0
      %852 = vmatpush1.bf16.msra.mxu0 %v680
      %853 = vmatprep.subr.bf16.mxu0 0
      %854 = vmatpush1.bf16.msra.mxu0 %v681
      %855 = vmatprep.subr.bf16.mxu0 0
      %856 = vmatpush1.bf16.msra.mxu0 %v682
      %857 = vmatprep.subr.bf16.mxu0 0
      %858 = vmatpush1.bf16.msra.mxu0 %v683
      %859 = vmatprep.subr.bf16.mxu0 0
      %860 = vmatpush1.bf16.msra.mxu0 %v684
      %861 = vmatprep.subr.bf16.mxu0 0
      %862 = vmatpush1.bf16.msra.mxu0 %v685
      %863 = vmatprep.subr.bf16.mxu0 0
      %864 = vmatpush1.bf16.msra.mxu0 %v686
      %865 = vmatprep.subr.bf16.mxu0 0
      %866 = vmatpush1.bf16.msra.mxu0 %v687
      %867 = vmatprep.subr.bf16.mxu0 0
      %868 = vmatpush1.bf16.msra.mxu0 %v688
      %869 = vmatprep.subr.bf16.mxu0 0
      %870 = vmatpush1.bf16.msra.mxu0 %v689
      %871 = vmatprep.subr.bf16.mxu0 0
      %872 = vmatpush1.bf16.msra.mxu0 %v690
      %873 = vmatprep.subr.bf16.mxu0 0
      %874 = vmatpush1.bf16.msra.mxu0 %v691
      %875 = vmatprep.subr.bf16.mxu0 0
      %876 = vmatpush1.bf16.msra.mxu0 %v692
      %877 = vmatprep.mubr.bf16.mxu0 %v448
      %878 = vmatmul.mubr.bf16.gmra.mrb[0].mxu0 %v447
      %v879 = vpop.f32.mrb[0].mxu0
      %v880 = vadd.f32 %v760, %v879
      %v881 = vpop.f32.mrb[0].mxu0
      %v882 = vpop.f32.mrb[0].mxu0
      %v883 = vadd.f32 %v763, %v882
      %v884 = vpop.f32.mrb[0].mxu0
      %885 = vmatprep.mubr.bf16.mxu0 %v452
      %886 = vmatmul.mubr.bf16.gmra.mrb[0].mxu0 %v451
      %v887 = vpop.f32.mrb[0].mxu0
      %v888 = vadd.f32 %v768, %v887
      %v889 = vpop.f32.mrb[0].mxu0
      %v890 = vpop.f32.mrb[0].mxu0
      %v891 = vadd.f32 %v771, %v890
      %v892 = vpop.f32.mrb[0].mxu0
      %893 = vmatprep.mubr.bf16.mxu0 %v456
      %894 = vmatmul.mubr.bf16.gmra.mrb[0].mxu0 %v455
      %v895 = vpop.f32.mrb[0].mxu0
      %v896 = vadd.f32 %v776, %v895
      %v897 = vpop.f32.mrb[0].mxu0
      %v898 = vpop.f32.mrb[0].mxu0
      %v899 = vadd.f32 %v779, %v898
      %v900 = vpop.f32.mrb[0].mxu0
      %901 = vmatprep.mubr.bf16.mxu0 %v460
      %902 = vmatmul.mubr.bf16.gmra.mrb[0].mxu0 %v459
      %v903 = vpop.f32.mrb[0].mxu0
      %v904 = vadd.f32 %v784, %v903
      %v905 = vpop.f32.mrb[0].mxu0
      %v906 = vpop.f32.mrb[0].mxu0
      %v907 = vadd.f32 %v787, %v906
      %v908 = vpop.f32.mrb[0].mxu0
      %909 = vmatprep.mubr.bf16.mxu0 %v464
      %910 = vmatmul.mubr.bf16.gmra.mrb[0].mxu0 %v463
      %v911 = vpop.f32.mrb[0].mxu0
      %v912 = vadd.f32 %v792, %v911
      %v913 = vpop.f32.mrb[0].mxu0
      %v914 = vpop.f32.mrb[0].mxu0
      %v915 = vadd.f32 %v795, %v914
      %v916 = vpop.f32.mrb[0].mxu0
      %917 = vmatprep.mubr.bf16.mxu0 %v468
      %918 = vmatmul.mubr.bf16.gmra.mrb[0].mxu0 %v467
      %v919 = vpop.f32.mrb[0].mxu0
      %v920 = vadd.f32 %v800, %v919
      %v921 = vpop.f32.mrb[0].mxu0
      %v922 = vpop.f32.mrb[0].mxu0
      %v923 = vadd.f32 %v803, %v922
      %v924 = vpop.f32.mrb[0].mxu0
      %925 = vmatprep.mubr.bf16.mxu0 %v472
      %926 = vmatmul.mubr.bf16.gmra.mrb[0].mxu0 %v471
      %v927 = vpop.f32.mrb[0].mxu0
      %v928 = vadd.f32 %v808, %v927
      %v929 = vpop.f32.mrb[0].mxu0
      %v930 = vpop.f32.mrb[0].mxu0
      %v931 = vadd.f32 %v811, %v930
      %v932 = vpop.f32.mrb[0].mxu0
      %933 = vmatprep.mubr.bf16.mxu0 %v476
      %934 = vmatmul.mubr.bf16.gmra.mrb[0].mxu0 %v475
      %v935 = vpop.f32.mrb[0].mxu0
      %v936 = vadd.f32 %v816, %v935
      %v937 = vpop.f32.mrb[0].mxu0
      %v938 = vpop.f32.mrb[0].mxu0
      %v939 = vadd.f32 %v819, %v938
      %v940 = vpop.f32.mrb[0].mxu0
      %941 = vmatprep.mubr.bf16.mxu0 %v480
      %942 = vmatmul.mubr.bf16.gmra.mrb[0].mxu0 %v479
      %v943 = vpop.f32.mrb[0].mxu0
      %v944 = vadd.f32 %v824, %v943
      %v945 = vpop.f32.mrb[0].mxu0
      %v946 = vpop.f32.mrb[0].mxu0
      %v947 = vadd.f32 %v827, %v946
      %v948 = vpop.f32.mrb[0].mxu0
      %949 = vmatprep.mubr.bf16.mxu0 %v484
      %950 = vmatmul.mubr.bf16.gmra.mrb[0].mxu0 %v483
      %v951 = vpop.f32.mrb[0].mxu0
      %v952 = vadd.f32 %v832, %v951
      %v953 = vpop.f32.mrb[0].mxu0
      %v954 = vpop.f32.mrb[0].mxu0
      %v955 = vadd.f32 %v835, %v954
      %v956 = vpop.f32.mrb[0].mxu0
      %957 = vmatprep.mubr.bf16.mxu0 %v488
      %958 = vmatmul.mubr.bf16.gmra.mrb[0].mxu0 %v487
      %v959 = vpop.f32.mrb[0].mxu0
      %v960 = vadd.f32 %v840, %v959
      %v961 = vpop.f32.mrb[0].mxu0
      %v962 = vpop.f32.mrb[0].mxu0
      %v963 = vpop.f32.mrb[0].mxu0
      %964 = vdwg.mxu0
      %v965 = vmax.f32 %v880, 0.0
      %v966 = vmax.f32 %v883, 0.0
      %v967 = vmax.f32 %v888, 0.0
      %v968 = vmax.f32 %v891, 0.0
      %v969 = vmax.f32 %v896, 0.0
      %v970 = vmax.f32 %v899, 0.0
      %v971 = vmax.f32 %v904, 0.0
      %v972 = vmax.f32 %v907, 0.0
      %v973 = vmax.f32 %v912, 0.0
      %v974 = vmax.f32 %v915, 0.0
      %v975 = vmax.f32 %v920, 0.0
      %v976 = vmax.f32 %v923, 0.0
      %v977 = vmax.f32 %v928, 0.0
      %v978 = vmax.f32 %v931, 0.0
      %v979 = vmax.f32 %v936, 0.0
      %v980 = vmax.f32 %v939, 0.0
      %v981 = vmax.f32 %v944, 0.0
      %v982 = vmax.f32 %v947, 0.0
      %v983 = vmax.f32 %v952, 0.0
      %v984 = vmax.f32 %v955, 0.0
      %v985 = vmax.f32 %v960, 0.0
      %v986 = vpack.c.bf16 %v966, %v965
      %v987 = vpack.c.bf16 %v968, %v967
      %v988 = vpack.c.bf16 %v970, %v969
      %v989 = vpack.c.bf16 %v972, %v971
      %v990 = vpack.c.bf16 %v974, %v973
      %v991 = vpack.c.bf16 %v976, %v975
      %v992 = vpack.c.bf16 %v978, %v977
      %v993 = vpack.c.bf16 %v980, %v979
      %v994 = vpack.c.bf16 %v982, %v981
      %v995 = vpack.c.bf16 %v984, %v983
      %v996 = vpack.c.bf16 %v985, %v985
      %v1008 = vunpack.c.l.b16 %v986
      %v1009 = vunpack.c.h.b16 %v986
      %v1010 = vunpack.c.l.b16 %v987
      %v1011 = vunpack.c.h.b16 %v987
      %v1012 = vunpack.c.l.b16 %v988
      %v1013 = vunpack.c.h.b16 %v988
      %v1014 = vunpack.c.l.b16 %v989
      %v1015 = vunpack.c.h.b16 %v989
      %v1016 = vunpack.c.l.b16 %v990
      %v1017 = vunpack.c.h.b16 %v990
      %v1018 = vunpack.c.l.b16 %v991
      %v1019 = vunpack.c.h.b16 %v991
      %v1020 = vunpack.c.l.b16 %v992
      %v1021 = vunpack.c.h.b16 %v992
      %v1022 = vunpack.c.l.b16 %v993
      %v1023 = vunpack.c.h.b16 %v993
      %v1024 = vunpack.c.l.b16 %v994
      %v1025 = vunpack.c.h.b16 %v994
      %v1026 = vunpack.c.l.b16 %v995
      %v1027 = vunpack.c.h.b16 %v995
      %v1028 = vunpack.c.l.b16 %v996
      %v1029 = vpack.c.b16 %v1008, %v1008
      %v1030 = vpack.c.b16 %v1009, %v1009
      %v1031 = vpack.c.b16 %v1010, %v1010
      %v1032 = vpack.c.b16 %v1011, %v1011
      %v1033 = vpack.c.b16 %v1012, %v1012
      %v1034 = vpack.c.b16 %v1013, %v1013
      %v1035 = vpack.c.b16 %v1014, %v1014
      %v1036 = vpack.c.b16 %v1015, %v1015
      %v1037 = vpack.c.b16 %v1016, %v1016
      %v1038 = vpack.c.b16 %v1017, %v1017
      %v1039 = vpack.c.b16 %v1018, %v1018
      %v1040 = vpack.c.b16 %v1019, %v1019
      %v1041 = vpack.c.b16 %v1020, %v1020
      %v1042 = vpack.c.b16 %v1021, %v1021
      %v1043 = vpack.c.b16 %v1022, %v1022
      %v1044 = vpack.c.b16 %v1023, %v1023
      %v1045 = vpack.c.b16 %v1024, %v1024
      %v1046 = vpack.c.b16 %v1025, %v1025
      %v1047 = vpack.c.b16 %v1026, %v1026
      %v1048 = vpack.c.b16 %v1027, %v1027
      %v1049 = vpack.c.b16 %v1028, %v1028
      %vm1071 = vcmask 519168
      %1072 = vst.msk [vmem:[%s204] sm:$0xf] %vm1071, %v1029
      %1073 = vst.msk [vmem:[%s204 + $0x4] sm:$0xf] %vm1071, %v1030
      %1074 = vst.msk [vmem:[%s204 + $0x8] sm:$0xf] %vm1071, %v1031
      %1075 = vst.msk [vmem:[%s204 + $0xc] sm:$0xf] %vm1071, %v1032
      %1076 = vst.msk [vmem:[%s204 + $0x10] sm:$0xf] %vm1071, %v1033
      %1077 = vst.msk [vmem:[%s204 + $0x14] sm:$0xf] %vm1071, %v1034
      %1078 = vst.msk [vmem:[%s204 + $0x18] sm:$0xf] %vm1071, %v1035
      %1079 = vst.msk [vmem:[%s204 + $0x1c] sm:$0xf] %vm1071, %v1036
      %1080 = vst.msk [vmem:[%s204 + $0x20] sm:$0xf] %vm1071, %v1037
      %1081 = vst.msk [vmem:[%s204 + $0x24] sm:$0xf] %vm1071, %v1038
      %1082 = vst.msk [vmem:[%s204 + $0x28] sm:$0xf] %vm1071, %v1039
      %1083 = vst.msk [vmem:[%s204 + $0x2c] sm:$0xf] %vm1071, %v1040
      %1084 = vst.msk [vmem:[%s204 + $0x30] sm:$0xf] %vm1071, %v1041
      %1085 = vst.msk [vmem:[%s204 + $0x34] sm:$0xf] %vm1071, %v1042
      %1086 = vst.msk [vmem:[%s204 + $0x38] sm:$0xf] %vm1071, %v1043
      %1087 = vst.msk [vmem:[%s204 + $0x3c] sm:$0xf] %vm1071, %v1044
      %1088 = vst.msk [vmem:[%s204 + $0x40] sm:$0xf] %vm1071, %v1045
      %1089 = vst.msk [vmem:[%s204 + $0x44] sm:$0xf] %vm1071, %v1046
      %1090 = vst.msk [vmem:[%s204 + $0x48] sm:$0xf] %vm1071, %v1047
      %1091 = vst.msk [vmem:[%s204 + $0x4c] sm:$0xf] %vm1071, %v1048
      %vm1092 = vcmask 516096
      %1093 = vst.msk [vmem:[%s204 + $0x50] sm:$0x1] %vm1092, %v1049
      %p1094 = scmp.lt.s32.totalorder %s14, 1
      %s1095 = scalar_select %p1094, %s14, 1
      %s1096 = smul.addr %s1095, 21
      %s1097 = smul.addr %s1096, 4
      %s1098 = scalar_lea.vmem %s3, %s1097
      // Predicated region
      $region33: #{agent_forward.5} parent=31 // pred_check
        %p1099 = pneg %p110
      $region34: #{agent_forward.5} parent=31 // pred_check_branch
        %1101 = sbr.rel (%p1099) target = $region36
      $region35: #{agent_forward.5} parent=31 // pred_region
        _
      $region36: #{agent_forward.5} parent=31 // pred_fallthru
        _
    $region32: #{agent_forward.5} parent=5 // pred_fallthru
      _
    %p1102 = scmp.le.s32.totalorder 2, %s9
    // Predicated region
    $region37: #{agent_forward.5} parent=5 // pred_check
      %p1103 = pneg %p1102
    $region38: #{agent_forward.5} parent=5 // pred_check_branch
      %1105 = sbr.rel (%p1103) target = $region40
    $region39: #{agent_forward.5} parent=5 // pred_region
      %s1106 = ssub.s32 %s9, 2
      // Predicated region
      $region41: #{agent_forward.5} parent=39 // pred_check
        %p1107 = pneg %p116
      $region42: #{agent_forward.5} parent=39 // pred_check_branch
        %1109 = sbr.rel (%p1107) target = $region44
      $region43: #{agent_forward.5} parent=39 // pred_region
        %p1110 = scmp.lt.s32.totalorder %s15, 1
        %s1111 = scalar_select %p1110, %s15, 1
        %s1112 = smul.addr %s1111, 21
        %s1113 = smul.addr %s1112, 4
        %s1114 = scalar_lea.vmem %s3, %s1113
      $region44: #{agent_forward.5} parent=39 // pred_fallthru
        _
    $region40: #{agent_forward.5} parent=5 // pred_fallthru
      _
  $region6: #{agent_forward.5} parent=0 // loop_footer
    %s13 = sadd.s32 1, %s9
  $region7: #{agent_forward.5} parent=0 // loop_footer_branch
    %8 = sbr.rel target = $region3
  $region8: #{agent_forward.5} parent=0 // loop_exit
    _

// kernel: agent_forward.6
$region0: #{agent_forward.6}
  #allocation0 [shape = 'u32[]', space=smem, size = 0x4, offset = 0x4, fixed_abs, tag = 'smem constant byte address 0x4 - core index']
  #allocation1 [shape = 'u32[144,128]{1,0:T(1,128)}', space=vmem, size = 0x12000, scoped, tag = 'internal scratch']
  %s0 = inlined_call_operand.vmem [shape: bf16[2,98,576], index: 0, kind: input, shape index: {}]
  %s1 = inlined_call_operand.vmem [shape: bf16[2,576,64], index: 1, kind: input, shape index: {}]
  %s2 = inlined_call_operand.vmem [shape: f32[2,1,64], index: 2, kind: input, shape index: {}]
  %s3 = inlined_call_operand.vmem [shape: bf16[2,98,64], index: 3, kind: output, shape index: {}]
  %s4 = sld [smem:[#allocation0]]
  $region45: #{agent_forward.6} parent=0
    _
  %s6 = ssub.s32 1, %s4
  %s7 = scalar_select 0, %s6, %s4
  loop: start=0, step=1, limit=4
  $region2: #{agent_forward.6} parent=0 // loop_pre_header
    _
  $region3: #{agent_forward.6} parent=0 // loop_header
    %s9 = sphi 0, %s13
    %p10 = scmp.ge.s32.totalorder %s9, 4
    %s19 = sphi 0, %s21
    %s22 = sphi 0, %s19
    %s23 = sphi 0, %s22
    %s39 = sphi 0, %s23
    %s45 = sphi 0, %s47
    %s48 = sphi 0, %s45
    %s49 = sphi 0, %s48
    %s65 = sphi 0, %s49
    %s71 = sphi 0, %s73
    %s74 = sphi 0, %s71
    %s75 = sphi 0, %s74
    %s91 = sphi 0, %s75
    %s97 = sphi 0, %s99
    %s100 = sphi 0, %s97
    %s101 = sphi 0, %s100
    %s117 = sphi 0, %s101
  $region4: #{agent_forward.6} parent=0 // loop_header_branch
    %12 = sbr.rel (%p10) target = $region8
  $region5: #{agent_forward.6} parent=0 // loop_body
    %s14 = ssub.s32 %s9, 1
    %s15 = ssub.s32 %s9, 2
    %s16 = sadd.s32 %s9, 1
    %s17 = ssub.s32 %s9, %s16
    %p18 = scmp.eq.s32.totalorder %s17, 0
    %s20 = sadd.s32 %s19, 1
    %s21 = scalar_select %p18, %s19, %s20
    %p24 = pneg %p18
    %p25 = scmp.eq.s32.totalorder %s9, 1
    %p26 = por %p24, %p25
    %p27 = scmp.ne.s32.totalorder %s19, %s22
    %p28 = scmp.eq.s32.totalorder %s9, 0
    %p29 = por %p27, %p28
    %p30 = scmp.ne.s32.totalorder %s19, %s22
    %p31 = scmp.eq.s32.totalorder %s14, 1
    %p32 = por %p30, %p31
    %p33 = scmp.ne.s32.totalorder %s22, %s23
    %p34 = scmp.eq.s32.totalorder %s14, 0
    %p35 = por %p33, %p34
    %p36 = scmp.ne.s32.totalorder %s22, %s23
    %p37 = scmp.eq.s32.totalorder %s15, 1
    %p38 = por %p36, %p37
    %p40 = scmp.ne.s32.totalorder %s23, %s39
    %p41 = scmp.eq.s32.totalorder %s15, 0
    %p42 = por %p40, %p41
    %s43 = ssub.s32 %s9, %s16
    %p44 = scmp.eq.s32.totalorder %s43, 0
    %s46 = sadd.s32 %s45, 1
    %s47 = scalar_select %p44, %s45, %s46
    %p50 = pneg %p44
    %p51 = scmp.eq.s32.totalorder %s9, 1
    %p52 = por %p50, %p51
    %p53 = scmp.ne.s32.totalorder %s45, %s48
    %p54 = scmp.eq.s32.totalorder %s9, 0
    %p55 = por %p53, %p54
    %p56 = scmp.ne.s32.totalorder %s45, %s48
    %p57 = scmp.eq.s32.totalorder %s14, 1
    %p58 = por %p56, %p57
    %p59 = scmp.ne.s32.totalorder %s48, %s49
    %p60 = scmp.eq.s32.totalorder %s14, 0
    %p61 = por %p59, %p60
    %p62 = scmp.ne.s32.totalorder %s48, %s49
    %p63 = scmp.eq.s32.totalorder %s15, 1
    %p64 = por %p62, %p63
    %p66 = scmp.ne.s32.totalorder %s49, %s65
    %p67 = scmp.eq.s32.totalorder %s15, 0
    %p68 = por %p66, %p67
    %s69 = ssub.s32 %s9, %s16
    %p70 = scmp.eq.s32.totalorder %s69, 0
    %s72 = sadd.s32 %s71, 1
    %s73 = scalar_select %p70, %s71, %s72
    %p76 = pneg %p70
    %p77 = scmp.eq.s32.totalorder %s9, 1
    %p78 = por %p76, %p77
    %p79 = scmp.ne.s32.totalorder %s71, %s74
    %p80 = scmp.eq.s32.totalorder %s9, 0
    %p81 = por %p79, %p80
    %p82 = scmp.ne.s32.totalorder %s71, %s74
    %p83 = scmp.eq.s32.totalorder %s14, 1
    %p84 = por %p82, %p83
    %p85 = scmp.ne.s32.totalorder %s74, %s75
    %p86 = scmp.eq.s32.totalorder %s14, 0
    %p87 = por %p85, %p86
    %p88 = scmp.ne.s32.totalorder %s74, %s75
    %p89 = scmp.eq.s32.totalorder %s15, 1
    %p90 = por %p88, %p89
    %p92 = scmp.ne.s32.totalorder %s75, %s91
    %p93 = scmp.eq.s32.totalorder %s15, 0
    %p94 = por %p92, %p93
    %s95 = ssub.s32 %s9, %s16
    %p96 = scmp.eq.s32.totalorder %s95, 0
    %s98 = sadd.s32 %s97, 1
    %s99 = scalar_select %p96, %s97, %s98
    %p102 = pneg %p96
    %p103 = scmp.eq.s32.totalorder %s9, 1
    %p104 = por %p102, %p103
    %p105 = scmp.ne.s32.totalorder %s97, %s100
    %p106 = scmp.eq.s32.totalorder %s9, 0
    %p107 = por %p105, %p106
    %p108 = scmp.ne.s32.totalorder %s97, %s100
    %p109 = scmp.eq.s32.totalorder %s14, 1
    %p110 = por %p108, %p109
    %p111 = scmp.ne.s32.totalorder %s100, %s101
    %p112 = scmp.eq.s32.totalorder %s14, 0
    %p113 = por %p111, %p112
    %p114 = scmp.ne.s32.totalorder %s100, %s101
    %p115 = scmp.eq.s32.totalorder %s15, 1
    %p116 = por %p114, %p115
    %p118 = scmp.ne.s32.totalorder %s101, %s117
    %p119 = scmp.eq.s32.totalorder %s15, 0
    %p120 = por %p118, %p119
    %p121 = scmp.le.s32.totalorder 1, %s9
    %p122 = scmp.lt.s32.totalorder %s9, 3
    %p123 = pnand %p121, %p122
    %p124 = pneg %p123
    // Predicated region
    $region9: #{agent_forward.6} parent=5 // pred_check
      _
    $region10: #{agent_forward.6} parent=5 // pred_check_branch
      %126 = sbr.rel (%p123) target = $region12
    $region11: #{agent_forward.6} parent=5 // pred_region
      %s127 = ssub.s32 %s9, 1
    $region12: #{agent_forward.6} parent=5 // pred_fallthru
      _
    %p128 = scmp.lt.s32.totalorder %s9, 2
    // Predicated region
    $region13: #{agent_forward.6} parent=5 // pred_check
      %p129 = pneg %p128
    $region14: #{agent_forward.6} parent=5 // pred_check_branch
      %131 = sbr.rel (%p129) target = $region16
    $region15: #{agent_forward.6} parent=5 // pred_region
      // Predicated region
      $region17: #{agent_forward.6} parent=15 // pred_check
        %p132 = pneg %p29
      $region18: #{agent_forward.6} parent=15 // pred_check_branch
        %134 = sbr.rel (%p132) target = $region20
      $region19: #{agent_forward.6} parent=15 // pred_region
        %p135 = scmp.lt.s32.totalorder %s9, 1
        %s136 = scalar_select %p135, %s9, 1
        %s137 = smul.addr %s136, 65
        %s138 = smul.addr %s137, 4
        %s139 = scalar_lea.vmem %s0, %s138
      $region20: #{agent_forward.6} parent=15 // pred_fallthru
        _
      // Predicated region
      $region21: #{agent_forward.6} parent=15 // pred_check
        %p140 = pneg %p55
      $region22: #{agent_forward.6} parent=15 // pred_check_branch
        %142 = sbr.rel (%p140) target = $region24
      $region23: #{agent_forward.6} parent=15 // pred_region
        %p143 = scmp.lt.s32.totalorder %s9, 1
        %s144 = scalar_select %p143, %s9, 1
        %s145 = smul.addr %s144, 72
        %s146 = smul.addr %s145, 4
        %s147 = scalar_lea.vmem %s1, %s146
      $region24: #{agent_forward.6} parent=15 // pred_fallthru
        _
      // Predicated region
      $region25: #{agent_forward.6} parent=15 // pred_check
        %p148 = pneg %p81
      $region26: #{agent_forward.6} parent=15 // pred_check_branch
        %150 = sbr.rel (%p148) target = $region28
      $region27: #{agent_forward.6} parent=15 // pred_region
        %p151 = scmp.lt.s32.totalorder %s9, 1
        %s152 = scalar_select %p151, %s9, 1
        %s153 = scalar_lea.vmem %s2, %s152
      $region28: #{agent_forward.6} parent=15 // pred_fallthru
        _
    $region16: #{agent_forward.6} parent=5 // pred_fallthru
      _
    %p154 = scmp.le.s32.totalorder 1, %s9
    %p155 = scmp.lt.s32.totalorder %s9, 3
    %p156 = pnand %p154, %p155
    %p157 = pneg %p156
    // Predicated region
    $region29: #{agent_forward.6} parent=5 // pred_check
      _
    $region30: #{agent_forward.6} parent=5 // pred_check_branch
      %159 = sbr.rel (%p156) target = $region32
    $region31: #{agent_forward.6} parent=5 // pred_region
      %s160 = ssub.s32 %s9, 1
      %p161 = scmp.lt.s32.totalorder %s14, 1
      %s162 = scalar_select %p161, %s14, 1
      %s163 = smul.addr %s162, 65
      %s164 = smul.addr %s163, 4
      %s165 = scalar_lea.vmem %s0, %s164
      %p166 = pneg %p35
      %p167 = pneg %p32
      %p168 = scmp.lt.s32.totalorder %s14, 1
      %s169 = scalar_select %p168, %s14, 1
      %s170 = smul.addr %s169, 72
      %s171 = smul.addr %s170, 4
      %s172 = scalar_lea.vmem %s1, %s171
      %p173 = pneg %p61
      %p174 = pneg %p58
      %p175 = scmp.lt.s32.totalorder %s14, 1
      %s176 = scalar_select %p175, %s14, 1
      %s177 = scalar_lea.vmem %s2, %s176
      %p178 = pneg %p87
      %p179 = pneg %p84
      %p180 = pneg %p113
      %p181 = pneg %p110
      %p182 = scmp.lt.s32.totalorder %s14, 1
      %s183 = scalar_select %p182, %s14, 1
      %s184 = smul.addr %s183, 13
      %s185 = smul.addr %s184, 4
      %s186 = scalar_lea.vmem %s3, %s185
      %p187 = scmp.lt.s32.totalorder %s14, 1
      %s188 = scalar_select %p187, %s14, 1
      %s189 = smul.addr %s188, 65
      %s190 = smul.addr %s189, 4
      %s191 = scalar_lea.vmem %s0, %s190
      %p192 = scmp.lt.s32.totalorder %s14, 1
      %s193 = scalar_select %p192, %s14, 1
      %s194 = smul.addr %s193, 72
      %s195 = smul.addr %s194, 4
      %s196 = scalar_lea.vmem %s1, %s195
      %p197 = scmp.lt.s32.totalorder %s14, 1
      %s198 = scalar_select %p197, %s14, 1
      %s199 = scalar_lea.vmem %s2, %s198
      %p200 = scmp.lt.s32.totalorder %s14, 1
      %s201 = scalar_select %p200, %s14, 1
      %s202 = smul.addr %s201, 13
      %s203 = smul.addr %s202, 4
      %s204 = scalar_lea.vmem %s3, %s203
      %v206 = vld [vmem:[%s191] sm:$0xff]
      %v207 = vld [vmem:[%s191 + $0x8] sm:$0xff]
      %v208 = vld [vmem:[%s191 + $0x10] sm:$0xf]
      %v209 = vld [vmem:[%s191 + $0x14] sm:$0xff]
      %v210 = vld [vmem:[%s191 + $0x1c] sm:$0xff]
      %v211 = vld [vmem:[%s191 + $0x24] sm:$0xf]
      %v212 = vld [vmem:[%s191 + $0x28] sm:$0xff]
      %v213 = vld [vmem:[%s191 + $0x30] sm:$0xff]
      %v214 = vld [vmem:[%s191 + $0x38] sm:$0xf]
      %v215 = vld [vmem:[%s191 + $0x3c] sm:$0xff]
      %v216 = vld [vmem:[%s191 + $0x44] sm:$0xff]
      %v217 = vld [vmem:[%s191 + $0x4c] sm:$0xf]
      %v218 = vld [vmem:[%s191 + $0x50] sm:$0xff]
      %v219 = vld [vmem:[%s191 + $0x58] sm:$0xff]
      %v220 = vld [vmem:[%s191 + $0x60] sm:$0xf]
      %v221 = vld [vmem:[%s191 + $0x64] sm:$0xff]
      %v222 = vld [vmem:[%s191 + $0x6c] sm:$0xff]
      %v223 = vld [vmem:[%s191 + $0x74] sm:$0xf]
      %v224 = vld [vmem:[%s191 + $0x78] sm:$0xff]
      %v225 = vld [vmem:[%s191 + $0x80] sm:$0xff]
      %v226 = vld [vmem:[%s191 + $0x88] sm:$0xf]
      %v227 = vld [vmem:[%s191 + $0x8c] sm:$0xff]
      %v228 = vld [vmem:[%s191 + $0x94] sm:$0xff]
      %v229 = vld [vmem:[%s191 + $0x9c] sm:$0xf]
      %v230 = vld [vmem:[%s191 + $0xa0] sm:$0xff]
      %v231 = vld [vmem:[%s191 + $0xa8] sm:$0xff]
      %v232 = vld [vmem:[%s191 + $0xb0] sm:$0xf]
      %v233 = vld [vmem:[%s191 + $0xb4] sm:$0xff]
      %v234 = vld [vmem:[%s191 + $0xbc] sm:$0xff]
      %v235 = vld [vmem:[%s191 + $0xc4] sm:$0xf]
      %v236 = vld [vmem:[%s191 + $0xc8] sm:$0xff]
      %v237 = vld [vmem:[%s191 + $0xd0] sm:$0xff]
      %v238 = vld [vmem:[%s191 + $0xd8] sm:$0xf]
      %v239 = vld [vmem:[%s191 + $0xdc] sm:$0xff]
      %v240 = vld [vmem:[%s191 + $0xe4] sm:$0xff]
      %v241 = vld [vmem:[%s191 + $0xec] sm:$0xf]
      %v242 = vld [vmem:[%s191 + $0xf0] sm:$0x11]
      %v243 = vld [vmem:[%s191 + $0xf8] sm:$0x11]
      %v244 = vld [vmem:[%s191 + $0x100] sm:$0x1]
      %v245 = vld [vmem:[%s196] sm:$0xf]
      %v246 = vld [vmem:[%s196 + $0x4] sm:$0xf]
      %v247 = vld [vmem:[%s196 + $0x8] sm:$0xf]
      %v248 = vld [vmem:[%s196 + $0xc] sm:$0xf]
      %v249 = vld [vmem:[%s196 + $0x10] sm:$0xf]
      %v250 = vld [vmem:[%s196 + $0x14] sm:$0xf]
      %v251 = vld [vmem:[%s196 + $0x18] sm:$0xf]
      %v252 = vld [vmem:[%s196 + $0x1c] sm:$0xf]
      %v253 = vld [vmem:[%s196 + $0x20] sm:$0xf]
      %v254 = vld [vmem:[%s196 + $0x24] sm:$0xf]
      %v255 = vld [vmem:[%s196 + $0x28] sm:$0xf]
      %v256 = vld [vmem:[%s196 + $0x2c] sm:$0xf]
      %v257 = vld [vmem:[%s196 + $0x30] sm:$0xf]
      %v258 = vld [vmem:[%s196 + $0x34] sm:$0xf]
      %v259 = vld [vmem:[%s196 + $0x38] sm:$0xf]
      %v260 = vld [vmem:[%s196 + $0x3c] sm:$0xf]
      %v261 = vld [vmem:[%s196 + $0x40] sm:$0xf]
      %v262 = vld [vmem:[%s196 + $0x44] sm:$0xf]
      %v263 = vld [vmem:[%s196 + $0x48] sm:$0xf]
      %v264 = vld [vmem:[%s196 + $0x4c] sm:$0xf]
      %v265 = vld [vmem:[%s196 + $0x50] sm:$0xf]
      %v266 = vld [vmem:[%s196 + $0x54] sm:$0xf]
      %v267 = vld [vmem:[%s196 + $0x58] sm:$0xf]
      %v268 = vld [vmem:[%s196 + $0x5c] sm:$0xf]
      %v269 = vld [vmem:[%s196 + $0x60] sm:$0xf]
      %v270 = vld [vmem:[%s196 + $0x64] sm:$0xf]
      %v271 = vld [vmem:[%s196 + $0x68] sm:$0xf]
      %v272 = vld [vmem:[%s196 + $0x6c] sm:$0xf]
      %v273 = vld [vmem:[%s196 + $0x70] sm:$0xf]
      %v274 = vld [vmem:[%s196 + $0x74] sm:$0xf]
      %v275 = vld [vmem:[%s196 + $0x78] sm:$0xf]
      %v276 = vld [vmem:[%s196 + $0x7c] sm:$0xf]
      %v277 = vld [vmem:[%s196 + $0x80] sm:$0xf]
      %v278 = vld [vmem:[%s196 + $0x84] sm:$0xf]
      %v279 = vld [vmem:[%s196 + $0x88] sm:$0xf]
      %v280 = vld [vmem:[%s196 + $0x8c] sm:$0xf]
      %v281 = vld [vmem:[%s196 + $0x90] sm:$0xf]
      %v282 = vld [vmem:[%s196 + $0x94] sm:$0xf]
      %v283 = vld [vmem:[%s196 + $0x98] sm:$0xf]
      %v284 = vld [vmem:[%s196 + $0x9c] sm:$0xf]
      %v285 = vld [vmem:[%s196 + $0xa0] sm:$0xf]
      %v286 = vld [vmem:[%s196 + $0xa4] sm:$0xf]
      %v287 = vld [vmem:[%s196 + $0xa8] sm:$0xf]
      %v288 = vld [vmem:[%s196 + $0xac] sm:$0xf]
      %v289 = vld [vmem:[%s196 + $0xb0] sm:$0xf]
      %v290 = vld [vmem:[%s196 + $0xb4] sm:$0xf]
      %v291 = vld [vmem:[%s196 + $0xb8] sm:$0xf]
      %v292 = vld [vmem:[%s196 + $0xbc] sm:$0xf]
      %v293 = vld [vmem:[%s196 + $0xc0] sm:$0xf]
      %v294 = vld [vmem:[%s196 + $0xc4] sm:$0xf]
      %v295 = vld [vmem:[%s196 + $0xc8] sm:$0xf]
      %v296 = vld [vmem:[%s196 + $0xcc] sm:$0xf]
      %v297 = vld [vmem:[%s196 + $0xd0] sm:$0xf]
      %v298 = vld [vmem:[%s196 + $0xd4] sm:$0xf]
      %v299 = vld [vmem:[%s196 + $0xd8] sm:$0xf]
      %v300 = vld [vmem:[%s196 + $0xdc] sm:$0xf]
      %v301 = vld [vmem:[%s196 + $0xe0] sm:$0xf]
      %v302 = vld [vmem:[%s196 + $0xe4] sm:$0xf]
      %v303 = vld [vmem:[%s196 + $0xe8] sm:$0xf]
      %v304 = vld [vmem:[%s196 + $0xec] sm:$0xf]
      %v305 = vld [vmem:[%s196 + $0xf0] sm:$0xf]
      %v306 = vld [vmem:[%s196 + $0xf4] sm:$0xf]
      %v307 = vld [vmem:[%s196 + $0xf8] sm:$0xf]
      %v308 = vld [vmem:[%s196 + $0xfc] sm:$0xf]
      %v309 = vld [vmem:[%s196 + $0x100] sm:$0xf]
      %v310 = vld [vmem:[%s196 + $0x104] sm:$0xf]
      %v311 = vld [vmem:[%s196 + $0x108] sm:$0xf]
      %v312 = vld [vmem:[%s196 + $0x10c] sm:$0xf]
      %v313 = vld [vmem:[%s196 + $0x110] sm:$0xf]
      %v314 = vld [vmem:[%s196 + $0x114] sm:$0xf]
      %v315 = vld [vmem:[%s196 + $0x118] sm:$0xf]
      %v316 = vld [vmem:[%s196 + $0x11c] sm:$0xf]
      %v317 = vld [vmem:[%s199] sm:$0x1]
      %v319 = vlaneseq
      %v320 = vshrl.u32 %v319, 7
      %v321 = vsub.s32 0, %v320
      %v322 = vrot.slane %v317, %v321
      %v363 = vunpack.c.l.b16 %v206
      %v364 = vunpack.c.h.b16 %v206
      %v365 = vunpack.c.l.b16 %v207
      %v366 = vunpack.c.h.b16 %v207
      %v367 = vunpack.c.l.b16 %v208
      %v368 = vunpack.c.l.b16 %v209
      %v369 = vunpack.c.h.b16 %v209
      %v370 = vunpack.c.l.b16 %v210
      %v371 = vunpack.c.h.b16 %v210
      %v372 = vunpack.c.l.b16 %v211
      %v373 = vunpack.c.l.b16 %v212
      %v374 = vunpack.c.h.b16 %v212
      %v375 = vunpack.c.l.b16 %v213
      %v376 = vunpack.c.h.b16 %v213
      %v377 = vunpack.c.l.b16 %v214
      %v378 = vunpack.c.l.b16 %v215
      %v379 = vunpack.c.h.b16 %v215
      %v380 = vunpack.c.l.b16 %v216
      %v381 = vunpack.c.h.b16 %v216
      %v382 = vunpack.c.l.b16 %v217
      %v383 = vunpack.c.l.b16 %v218
      %v384 = vunpack.c.h.b16 %v218
      %v385 = vunpack.c.l.b16 %v219
      %v386 = vunpack.c.h.b16 %v219
      %v387 = vunpack.c.l.b16 %v220
      %v388 = vunpack.c.l.b16 %v221
      %v389 = vunpack.c.h.b16 %v221
      %v390 = vunpack.c.l.b16 %v222
      %v391 = vunpack.c.h.b16 %v222
      %v392 = vunpack.c.l.b16 %v223
      %v393 = vunpack.c.l.b16 %v224
      %v394 = vunpack.c.h.b16 %v224
      %v395 = vunpack.c.l.b16 %v225
      %v396 = vunpack.c.h.b16 %v225
      %v397 = vunpack.c.l.b16 %v226
      %v398 = vunpack.c.l.b16 %v227
      %v399 = vunpack.c.h.b16 %v227
      %v400 = vunpack.c.l.b16 %v228
      %v401 = vunpack.c.h.b16 %v228
      %v402 = vunpack.c.l.b16 %v229
      %v403 = vunpack.c.l.b16 %v230
      %v404 = vunpack.c.h.b16 %v230
      %v405 = vunpack.c.l.b16 %v231
      %v406 = vunpack.c.h.b16 %v231
      %v407 = vunpack.c.l.b16 %v232
      %v408 = vunpack.c.l.b16 %v233
      %v409 = vunpack.c.h.b16 %v233
      %v410 = vunpack.c.l.b16 %v234
      %v411 = vunpack.c.h.b16 %v234
      %v412 = vunpack.c.l.b16 %v235
      %v413 = vunpack.c.l.b16 %v236
      %v414 = vunpack.c.h.b16 %v236
      %v415 = vunpack.c.l.b16 %v237
      %v416 = vunpack.c.h.b16 %v237
      %v417 = vunpack.c.l.b16 %v238
      %v418 = vunpack.c.l.b16 %v239
      %v419 = vunpack.c.h.b16 %v239
      %v420 = vunpack.c.l.b16 %v240
      %v421 = vunpack.c.h.b16 %v240
      %v422 = vunpack.c.l.b16 %v241
      %v423 = vunpack.c.l.b16 %v242
      %v424 = vunpack.c.h.b16 %v242
      %v425 = vunpack.c.l.b16 %v243
      %v426 = vunpack.c.h.b16 %v243
      %v427 = vunpack.c.l.b16 %v244
      %v428 = vpack.c.b16 %v368, %v363
      %v429 = vpack.c.b16 %v369, %v364
      %v430 = vpack.c.b16 %v370, %v365
      %v431 = vpack.c.b16 %v371, %v366
      %v432 = vpack.c.b16 %v372, %v367
      %v433 = vpack.c.b16 %v378, %v373
      %v434 = vpack.c.b16 %v379, %v374
      %v435 = vpack.c.b16 %v380, %v375
      %v436 = vpack.c.b16 %v381, %v376
      %v437 = vpack.c.b16 %v382, %v377
      %v438 = vpack.c.b16 %v388, %v383
      %v439 = vpack.c.b16 %v389, %v384
      %v440 = vpack.c.b16 %v390, %v385
      %v441 = vpack.c.b16 %v391, %v386
      %v442 = vpack.c.b16 %v392, %v387
      %v443 = vpack.c.b16 %v398, %v393
      %v444 = vpack.c.b16 %v399, %v394
      %v445 = vpack.c.b16 %v400, %v395
      %v446 = vpack.c.b16 %v401, %v396
      %v447 = vpack.c.b16 %v402, %v397
      %v448 = vpack.c.b16 %v408, %v403
      %v449 = vpack.c.b16 %v409, %v404
      %v450 = vpack.c.b16 %v410, %v405
      %v451 = vpack.c.b16 %v411, %v406
      %v452 = vpack.c.b16 %v412, %v407
      %v453 = vpack.c.b16 %v418, %v413
      %v454 = vpack.c.b16 %v419, %v414
      %v455 = vpack.c.b16 %v420, %v415
      %v456 = vpack.c.b16 %v421, %v416
      %v457 = vpack.c.b16 %v422, %v417
      %v458 = vpack.c.b16 %v423, %v423
      %v459 = vpack.c.b16 %v424, %v424
      %v460 = vpack.c.b16 %v425, %v425
      %v461 = vpack.c.b16 %v426, %v426
      %v462 = vpack.c.b16 %v427, %v427
      %v563 = vunpack.c.l.b16 %v245
      %v564 = vunpack.c.l.b16 %v246
      %v565 = vunpack.c.l.b16 %v247
      %v566 = vunpack.c.l.b16 %v248
      %v567 = vunpack.c.l.b16 %v249
      %v568 = vunpack.c.l.b16 %v250
      %v569 = vunpack.c.l.b16 %v251
      %v570 = vunpack.c.l.b16 %v252
      %v571 = vunpack.c.l.b16 %v253
      %v572 = vunpack.c.l.b16 %v254
      %v573 = vunpack.c.l.b16 %v255
      %v574 = vunpack.c.l.b16 %v256
      %v575 = vunpack.c.l.b16 %v257
      %v576 = vunpack.c.l.b16 %v258
      %v577 = vunpack.c.l.b16 %v259
      %v578 = vunpack.c.l.b16 %v260
      %v579 = vunpack.c.l.b16 %v261
      %v580 = vunpack.c.l.b16 %v262
      %v581 = vunpack.c.l.b16 %v263
      %v582 = vunpack.c.l.b16 %v264
      %v583 = vunpack.c.l.b16 %v265
      %v584 = vunpack.c.l.b16 %v266
      %v585 = vunpack.c.l.b16 %v267
      %v586 = vunpack.c.l.b16 %v268
      %v587 = vunpack.c.l.b16 %v269
      %v588 = vunpack.c.l.b16 %v270
      %v589 = vunpack.c.l.b16 %v271
      %v590 = vunpack.c.l.b16 %v272
      %v591 = vunpack.c.l.b16 %v273
      %v592 = vunpack.c.l.b16 %v274
      %v593 = vunpack.c.l.b16 %v275
      %v594 = vunpack.c.l.b16 %v276
      %v595 = vunpack.c.l.b16 %v277
      %v596 = vunpack.c.l.b16 %v278
      %v597 = vunpack.c.l.b16 %v279
      %v598 = vunpack.c.l.b16 %v280
      %v599 = vunpack.c.l.b16 %v281
      %v600 = vunpack.c.l.b16 %v282
      %v601 = vunpack.c.l.b16 %v283
      %v602 = vunpack.c.l.b16 %v284
      %v603 = vunpack.c.l.b16 %v285
      %v604 = vunpack.c.l.b16 %v286
      %v605 = vunpack.c.l.b16 %v287
      %v606 = vunpack.c.l.b16 %v288
      %v607 = vunpack.c.l.b16 %v289
      %v608 = vunpack.c.l.b16 %v290
      %v609 = vunpack.c.l.b16 %v291
      %v610 = vunpack.c.l.b16 %v292
      %v611 = vunpack.c.l.b16 %v293
      %v612 = vunpack.c.l.b16 %v294
      %v613 = vunpack.c.l.b16 %v295
      %v614 = vunpack.c.l.b16 %v296
      %v615 = vunpack.c.l.b16 %v297
      %v616 = vunpack.c.l.b16 %v298
      %v617 = vunpack.c.l.b16 %v299
      %v618 = vunpack.c.l.b16 %v300
      %v619 = vunpack.c.l.b16 %v301
      %v620 = vunpack.c.l.b16 %v302
      %v621 = vunpack.c.l.b16 %v303
      %v622 = vunpack.c.l.b16 %v304
      %v623 = vunpack.c.l.b16 %v305
      %v624 = vunpack.c.l.b16 %v306
      %v625 = vunpack.c.l.b16 %v307
      %v626 = vunpack.c.l.b16 %v308
      %v627 = vunpack.c.l.b16 %v309
      %v628 = vunpack.c.l.b16 %v310
      %v629 = vunpack.c.l.b16 %v311
      %v630 = vunpack.c.l.b16 %v312
      %v631 = vunpack.c.l.b16 %v313
      %v632 = vunpack.c.l.b16 %v314
      %v633 = vunpack.c.l.b16 %v315
      %v634 = vunpack.c.l.b16 %v316
      %v635 = vpack.c.b16 %v564, %v563
      %v636 = vpack.c.b16 %v566, %v565
      %v637 = vpack.c.b16 %v568, %v567
      %v638 = vpack.c.b16 %v570, %v569
      %v639 = vpack.c.b16 %v572, %v571
      %v640 = vpack.c.b16 %v574, %v573
      %v641 = vpack.c.b16 %v576, %v575
      %v642 = vpack.c.b16 %v578, %v577
      %v643 = vpack.c.b16 %v580, %v579
      %v644 = vpack.c.b16 %v582, %v581
      %v645 = vpack.c.b16 %v584, %v583
      %v646 = vpack.c.b16 %v586, %v585
      %v647 = vpack.c.b16 %v588, %v587
      %v648 = vpack.c.b16 %v590, %v589
      %v649 = vpack.c.b16 %v592, %v591
      %v650 = vpack.c.b16 %v594, %v593
      %v651 = vpack.c.b16 %v596, %v595
      %v652 = vpack.c.b16 %v598, %v597
      %v653 = vpack.c.b16 %v600, %v599
      %v654 = vpack.c.b16 %v602, %v601
      %v655 = vpack.c.b16 %v604, %v603
      %v656 = vpack.c.b16 %v606, %v605
      %v657 = vpack.c.b16 %v608, %v607
      %v658 = vpack.c.b16 %v610, %v609
      %v659 = vpack.c.b16 %v612, %v611
      %v660 = vpack.c.b16 %v614, %v613
      %v661 = vpack.c.b16 %v616, %v615
      %v662 = vpack.c.b16 %v618, %v617
      %v663 = vpack.c.b16 %v620, %v619
      %v664 = vpack.c.b16 %v622, %v621
      %v665 = vpack.c.b16 %v624, %v623
      %v666 = vpack.c.b16 %v626, %v625
      %v667 = vpack.c.b16 %v628, %v627
      %v668 = vpack.c.b16 %v630, %v629
      %v669 = vpack.c.b16 %v632, %v631
      %v670 = vpack.c.b16 %v634, %v633
      %vm707 = vcmask 523264
      %v709 = vsel %vm707, %v432, 0
      %v712 = vsel %vm707, %v437, 0
      %v715 = vsel %vm707, %v442, 0
      %v718 = vsel %vm707, %v447, 0
      %v721 = vsel %vm707, %v452, 0
      %v724 = vsel %vm707, %v457, 0
      %v727 = vsel %vm707, %v462, 0
      %729 = vmatprep.subr.bf16.mxu0 0
      %730 = vmatpush1.bf16.msra.mxu0 %v635
      %731 = vmatprep.subr.bf16.mxu0 0
      %732 = vmatpush1.bf16.msra.mxu0 %v636
      %733 = vmatprep.subr.bf16.mxu0 0
      %734 = vmatpush1.bf16.msra.mxu0 %v637
      %735 = vmatprep.subr.bf16.mxu0 0
      %736 = vmatpush1.bf16.msra.mxu0 %v638
      %737 = vmatprep.subr.bf16.mxu0 0
      %738 = vmatpush1.bf16.msra.mxu0 %v639
      %739 = vmatprep.subr.bf16.mxu0 0
      %740 = vmatpush1.bf16.msra.mxu0 %v640
      %741 = vmatprep.subr.bf16.mxu0 0
      %742 = vmatpush1.bf16.msra.mxu0 %v641
      %743 = vmatprep.subr.bf16.mxu0 0
      %744 = vmatpush1.bf16.msra.mxu0 %v642
      %745 = vmatprep.subr.bf16.mxu0 0
      %746 = vmatpush1.bf16.msra.mxu0 %v643
      %747 = vmatprep.subr.bf16.mxu0 0
      %748 = vmatpush1.bf16.msra.mxu0 %v644
      %749 = vmatprep.subr.bf16.mxu0 0
      %750 = vmatpush1.bf16.msra.mxu0 %v645
      %751 = vmatprep.subr.bf16.mxu0 0
      %752 = vmatpush1.bf16.msra.mxu0 %v646
      %753 = vmatprep.subr.bf16.mxu0 0
      %754 = vmatpush1.bf16.msra.mxu0 %v647
      %755 = vmatprep.subr.bf16.mxu0 0
      %756 = vmatpush1.bf16.msra.mxu0 %v648
      %757 = vmatprep.subr.bf16.mxu0 0
      %758 = vmatpush1.bf16.msra.mxu0 %v649
      %759 = vmatprep.subr.bf16.mxu0 0
      %760 = vmatpush1.bf16.msra.mxu0 %v650
      %761 = vmatprep.mubr.bf16.mxu0 %v429
      %762 = vmatmul.mubr.bf16.gmra.mrb[0].mxu0 %v428
      %v763 = vpop.f32.mrb[0].mxu0
      %v764 = vadd.f32 %v322, %v763
      %v765 = vpop.f32.mrb[0].mxu0
      %v766 = vpop.f32.mrb[0].mxu0
      %v767 = vadd.f32 %v322, %v766
      %v768 = vpop.f32.mrb[0].mxu0
      %769 = vmatprep.mubr.bf16.mxu0 %v434
      %770 = vmatmul.mubr.bf16.gmra.mrb[0].mxu0 %v433
      %v771 = vpop.f32.mrb[0].mxu0
      %v772 = vadd.f32 %v322, %v771
      %v773 = vpop.f32.mrb[0].mxu0
      %v774 = vpop.f32.mrb[0].mxu0
      %v775 = vadd.f32 %v322, %v774
      %v776 = vpop.f32.mrb[0].mxu0
      %777 = vmatprep.mubr.bf16.mxu0 %v439
      %778 = vmatmul.mubr.bf16.gmra.mrb[0].mxu0 %v438
      %v779 = vpop.f32.mrb[0].mxu0
      %v780 = vadd.f32 %v322, %v779
      %v781 = vpop.f32.mrb[0].mxu0
      %v782 = vpop.f32.mrb[0].mxu0
      %v783 = vadd.f32 %v322, %v782
      %v784 = vpop.f32.mrb[0].mxu0
      %785 = vmatprep.mubr.bf16.mxu0 %v444
      %786 = vmatmul.mubr.bf16.gmra.mrb[0].mxu0 %v443
      %v787 = vpop.f32.mrb[0].mxu0
      %v788 = vadd.f32 %v322, %v787
      %v789 = vpop.f32.mrb[0].mxu0
      %v790 = vpop.f32.mrb[0].mxu0
      %v791 = vadd.f32 %v322, %v790
      %v792 = vpop.f32.mrb[0].mxu0
      %793 = vmatprep.mubr.bf16.mxu0 %v449
      %794 = vmatmul.mubr.bf16.gmra.mrb[0].mxu0 %v448
      %v795 = vpop.f32.mrb[0].mxu0
      %v796 = vadd.f32 %v322, %v795
      %v797 = vpop.f32.mrb[0].mxu0
      %v798 = vpop.f32.mrb[0].mxu0
      %v799 = vadd.f32 %v322, %v798
      %v800 = vpop.f32.mrb[0].mxu0
      %801 = vmatprep.mubr.bf16.mxu0 %v454
      %802 = vmatmul.mubr.bf16.gmra.mrb[0].mxu0 %v453
      %v803 = vpop.f32.mrb[0].mxu0
      %v804 = vadd.f32 %v322, %v803
      %v805 = vpop.f32.mrb[0].mxu0
      %v806 = vpop.f32.mrb[0].mxu0
      %v807 = vadd.f32 %v322, %v806
      %v808 = vpop.f32.mrb[0].mxu0
      %809 = vmatprep.mubr.bf16.mxu0 %v459
      %810 = vmatmul.mubr.bf16.gmra.mrb[0].mxu0 %v458
      %v811 = vpop.f32.mrb[0].mxu0
      %v812 = vadd.f32 %v322, %v811
      %v813 = vpop.f32.mrb[0].mxu0
      %v814 = vpop.f32.mrb[0].mxu0
      %v815 = vpop.f32.mrb[0].mxu0
      %816 = vdwg.mxu0
      %817 = vmatprep.subr.bf16.mxu0 0
      %818 = vmatpush1.bf16.msra.mxu0 %v651
      %819 = vmatprep.subr.bf16.mxu0 0
      %820 = vmatpush1.bf16.msra.mxu0 %v652
      %821 = vmatprep.subr.bf16.mxu0 0
      %822 = vmatpush1.bf16.msra.mxu0 %v653
      %823 = vmatprep.subr.bf16.mxu0 0
      %824 = vmatpush1.bf16.msra.mxu0 %v654
      %825 = vmatprep.subr.bf16.mxu0 0
      %826 = vmatpush1.bf16.msra.mxu0 %v655
      %827 = vmatprep.subr.bf16.mxu0 0
      %828 = vmatpush1.bf16.msra.mxu0 %v656
      %829 = vmatprep.subr.bf16.mxu0 0
      %830 = vmatpush1.bf16.msra.mxu0 %v657
      %831 = vmatprep.subr.bf16.mxu0 0
      %832 = vmatpush1.bf16.msra.mxu0 %v658
      %833 = vmatprep.subr.bf16.mxu0 0
      %834 = vmatpush1.bf16.msra.mxu0 %v659
      %835 = vmatprep.subr.bf16.mxu0 0
      %836 = vmatpush1.bf16.msra.mxu0 %v660
      %837 = vmatprep.subr.bf16.mxu0 0
      %838 = vmatpush1.bf16.msra.mxu0 %v661
      %839 = vmatprep.subr.bf16.mxu0 0
      %840 = vmatpush1.bf16.msra.mxu0 %v662
      %841 = vmatprep.subr.bf16.mxu0 0
      %842 = vmatpush1.bf16.msra.mxu0 %v663
      %843 = vmatprep.subr.bf16.mxu0 0
      %844 = vmatpush1.bf16.msra.mxu0 %v664
      %845 = vmatprep.subr.bf16.mxu0 0
      %846 = vmatpush1.bf16.msra.mxu0 %v665
      %847 = vmatprep.subr.bf16.mxu0 0
      %848 = vmatpush1.bf16.msra.mxu0 %v666
      %849 = vmatprep.mubr.bf16.mxu0 %v431
      %850 = vmatmul.mubr.bf16.gmra.mrb[0].mxu0 %v430
      %v851 = vpop.f32.mrb[0].mxu0
      %v852 = vadd.f32 %v764, %v851
      %v853 = vpop.f32.mrb[0].mxu0
      %v854 = vpop.f32.mrb[0].mxu0
      %v855 = vadd.f32 %v767, %v854
      %v856 = vpop.f32.mrb[0].mxu0
      %857 = vmatprep.mubr.bf16.mxu0 %v436
      %858 = vmatmul.mubr.bf16.gmra.mrb[0].mxu0 %v435
      %v859 = vpop.f32.mrb[0].mxu0
      %v860 = vadd.f32 %v772, %v859
      %v861 = vpop.f32.mrb[0].mxu0
      %v862 = vpop.f32.mrb[0].mxu0
      %v863 = vadd.f32 %v775, %v862
      %v864 = vpop.f32.mrb[0].mxu0
      %865 = vmatprep.mubr.bf16.mxu0 %v441
      %866 = vmatmul.mubr.bf16.gmra.mrb[0].mxu0 %v440
      %v867 = vpop.f32.mrb[0].mxu0
      %v868 = vadd.f32 %v780, %v867
      %v869 = vpop.f32.mrb[0].mxu0
      %v870 = vpop.f32.mrb[0].mxu0
      %v871 = vadd.f32 %v783, %v870
      %v872 = vpop.f32.mrb[0].mxu0
      %873 = vmatprep.mubr.bf16.mxu0 %v446
      %874 = vmatmul.mubr.bf16.gmra.mrb[0].mxu0 %v445
      %v875 = vpop.f32.mrb[0].mxu0
      %v876 = vadd.f32 %v788, %v875
      %v877 = vpop.f32.mrb[0].mxu0
      %v878 = vpop.f32.mrb[0].mxu0
      %v879 = vadd.f32 %v791, %v878
      %v880 = vpop.f32.mrb[0].mxu0
      %881 = vmatprep.mubr.bf16.mxu0 %v451
      %882 = vmatmul.mubr.bf16.gmra.mrb[0].mxu0 %v450
      %v883 = vpop.f32.mrb[0].mxu0
      %v884 = vadd.f32 %v796, %v883
      %v885 = vpop.f32.mrb[0].mxu0
      %v886 = vpop.f32.mrb[0].mxu0
      %v887 = vadd.f32 %v799, %v886
      %v888 = vpop.f32.mrb[0].mxu0
      %889 = vmatprep.mubr.bf16.mxu0 %v456
      %890 = vmatmul.mubr.bf16.gmra.mrb[0].mxu0 %v455
      %v891 = vpop.f32.mrb[0].mxu0
      %v892 = vadd.f32 %v804, %v891
      %v893 = vpop.f32.mrb[0].mxu0
      %v894 = vpop.f32.mrb[0].mxu0
      %v895 = vadd.f32 %v807, %v894
      %v896 = vpop.f32.mrb[0].mxu0
      %897 = vmatprep.mubr.bf16.mxu0 %v461
      %898 = vmatmul.mubr.bf16.gmra.mrb[0].mxu0 %v460
      %v899 = vpop.f32.mrb[0].mxu0
      %v900 = vadd.f32 %v812, %v899
      %v901 = vpop.f32.mrb[0].mxu0
      %v902 = vpop.f32.mrb[0].mxu0
      %v903 = vpop.f32.mrb[0].mxu0
      %904 = vdwg.mxu0
      %905 = vmatprep.subr.bf16.mxu0 0
      %906 = vmatpush1.bf16.msra.mxu0 %v667
      %907 = vmatprep.subr.bf16.mxu0 0
      %908 = vmatpush1.bf16.msra.mxu0 %v668
      %909 = vmatprep.subr.bf16.mxu0 0
      %910 = vmatpush1.bf16.msra.mxu0 %v669
      %911 = vmatprep.subr.bf16.mxu0 0
      %912 = vmatpush1.bf16.msra.mxu0 %v670
      %913 = vmatprep.subr.bf16.mxu0 0
      %914 = vmatpush1.bf16.msra.mxu0 0
      %915 = vmatprep.subr.bf16.mxu0 0
      %916 = vmatpush1.bf16.msra.mxu0 0
      %917 = vmatprep.subr.bf16.mxu0 0
      %918 = vmatpush1.bf16.msra.mxu0 0
      %919 = vmatprep.subr.bf16.mxu0 0
      %920 = vmatpush1.bf16.msra.mxu0 0
      %921 = vmatprep.subr.bf16.mxu0 0
      %922 = vmatpush1.bf16.msra.mxu0 0
      %923 = vmatprep.subr.bf16.mxu0 0
      %924 = vmatpush1.bf16.msra.mxu0 0
      %925 = vmatprep.subr.bf16.mxu0 0
      %926 = vmatpush1.bf16.msra.mxu0 0
      %927 = vmatprep.subr.bf16.mxu0 0
      %928 = vmatpush1.bf16.msra.mxu0 0
      %929 = vmatprep.subr.bf16.mxu0 0
      %930 = vmatpush1.bf16.msra.mxu0 0
      %931 = vmatprep.subr.bf16.mxu0 0
      %932 = vmatpush1.bf16.msra.mxu0 0
      %933 = vmatprep.subr.bf16.mxu0 0
      %934 = vmatpush1.bf16.msra.mxu0 0
      %935 = vmatprep.subr.bf16.mxu0 0
      %936 = vmatpush1.bf16.msra.mxu0 0
      %937 = vmatprep.mubr.bf16.mxu0 0
      %938 = vmatmul.mubr.bf16.gmra.mrb[0].mxu0 %v709
      %v939 = vpop.f32.mrb[0].mxu0
      %v940 = vadd.f32 %v852, %v939
      %v941 = vpop.f32.mrb[0].mxu0
      %v942 = vpop.f32.mrb[0].mxu0
      %v943 = vadd.f32 %v855, %v942
      %v944 = vpop.f32.mrb[0].mxu0
      %945 = vmatprep.mubr.bf16.mxu0 0
      %946 = vmatmul.mubr.bf16.gmra.mrb[0].mxu0 %v712
      %v947 = vpop.f32.mrb[0].mxu0
      %v948 = vadd.f32 %v860, %v947
      %v949 = vpop.f32.mrb[0].mxu0
      %v950 = vpop.f32.mrb[0].mxu0
      %v951 = vadd.f32 %v863, %v950
      %v952 = vpop.f32.mrb[0].mxu0
      %953 = vmatprep.mubr.bf16.mxu0 0
      %954 = vmatmul.mubr.bf16.gmra.mrb[0].mxu0 %v715
      %v955 = vpop.f32.mrb[0].mxu0
      %v956 = vadd.f32 %v868, %v955
      %v957 = vpop.f32.mrb[0].mxu0
      %v958 = vpop.f32.mrb[0].mxu0
      %v959 = vadd.f32 %v871, %v958
      %v960 = vpop.f32.mrb[0].mxu0
      %961 = vmatprep.mubr.bf16.mxu0 0
      %962 = vmatmul.mubr.bf16.gmra.mrb[0].mxu0 %v718
      %v963 = vpop.f32.mrb[0].mxu0
      %v964 = vadd.f32 %v876, %v963
      %v965 = vpop.f32.mrb[0].mxu0
      %v966 = vpop.f32.mrb[0].mxu0
      %v967 = vadd.f32 %v879, %v966
      %v968 = vpop.f32.mrb[0].mxu0
      %969 = vmatprep.mubr.bf16.mxu0 0
      %970 = vmatmul.mubr.bf16.gmra.mrb[0].mxu0 %v721
      %v971 = vpop.f32.mrb[0].mxu0
      %v972 = vadd.f32 %v884, %v971
      %v973 = vpop.f32.mrb[0].mxu0
      %v974 = vpop.f32.mrb[0].mxu0
      %v975 = vadd.f32 %v887, %v974
      %v976 = vpop.f32.mrb[0].mxu0
      %977 = vmatprep.mubr.bf16.mxu0 0
      %978 = vmatmul.mubr.bf16.gmra.mrb[0].mxu0 %v724
      %v979 = vpop.f32.mrb[0].mxu0
      %v980 = vadd.f32 %v892, %v979
      %v981 = vpop.f32.mrb[0].mxu0
      %v982 = vpop.f32.mrb[0].mxu0
      %v983 = vadd.f32 %v895, %v982
      %v984 = vpop.f32.mrb[0].mxu0
      %985 = vmatprep.mubr.bf16.mxu0 0
      %986 = vmatmul.mubr.bf16.gmra.mrb[0].mxu0 %v727
      %v987 = vpop.f32.mrb[0].mxu0
      %v988 = vadd.f32 %v900, %v987
      %v989 = vpop.f32.mrb[0].mxu0
      %v990 = vpop.f32.mrb[0].mxu0
      %v991 = vpop.f32.mrb[0].mxu0
      %992 = vdwg.mxu0
      %v993 = vmax.f32 %v940, 0.0
      %v994 = vmax.f32 %v943, 0.0
      %v995 = vmax.f32 %v948, 0.0
      %v996 = vmax.f32 %v951, 0.0
      %v997 = vmax.f32 %v956, 0.0
      %v998 = vmax.f32 %v959, 0.0
      %v999 = vmax.f32 %v964, 0.0
      %v1000 = vmax.f32 %v967, 0.0
      %v1001 = vmax.f32 %v972, 0.0
      %v1002 = vmax.f32 %v975, 0.0
      %v1003 = vmax.f32 %v980, 0.0
      %v1004 = vmax.f32 %v983, 0.0
      %v1005 = vmax.f32 %v988, 0.0
      %v1006 = vpack.c.bf16 %v994, %v993
      %v1007 = vpack.c.bf16 %v996, %v995
      %v1008 = vpack.c.bf16 %v998, %v997
      %v1009 = vpack.c.bf16 %v1000, %v999
      %v1010 = vpack.c.bf16 %v1002, %v1001
      %v1011 = vpack.c.bf16 %v1004, %v1003
      %v1012 = vpack.c.bf16 %v1005, %v1005
      %v1020 = vunpack.c.l.b16 %v1006
      %v1021 = vunpack.c.h.b16 %v1006
      %v1022 = vunpack.c.l.b16 %v1007
      %v1023 = vunpack.c.h.b16 %v1007
      %v1024 = vunpack.c.l.b16 %v1008
      %v1025 = vunpack.c.h.b16 %v1008
      %v1026 = vunpack.c.l.b16 %v1009
      %v1027 = vunpack.c.h.b16 %v1009
      %v1028 = vunpack.c.l.b16 %v1010
      %v1029 = vunpack.c.h.b16 %v1010
      %v1030 = vunpack.c.l.b16 %v1011
      %v1031 = vunpack.c.h.b16 %v1011
      %v1032 = vunpack.c.l.b16 %v1012
      %v1033 = vpack.c.b16 %v1020, %v1020
      %v1034 = vpack.c.b16 %v1021, %v1021
      %v1035 = vpack.c.b16 %v1022, %v1022
      %v1036 = vpack.c.b16 %v1023, %v1023
      %v1037 = vpack.c.b16 %v1024, %v1024
      %v1038 = vpack.c.b16 %v1025, %v1025
      %v1039 = vpack.c.b16 %v1026, %v1026
      %v1040 = vpack.c.b16 %v1027, %v1027
      %v1041 = vpack.c.b16 %v1028, %v1028
      %v1042 = vpack.c.b16 %v1029, %v1029
      %v1043 = vpack.c.b16 %v1030, %v1030
      %v1044 = vpack.c.b16 %v1031, %v1031
      %v1045 = vpack.c.b16 %v1032, %v1032
      %vm1059 = vcmask 519168
      %1060 = vst.msk [vmem:[%s204] sm:$0xf] %vm1059, %v1033
      %1061 = vst.msk [vmem:[%s204 + $0x4] sm:$0xf] %vm1059, %v1034
      %1062 = vst.msk [vmem:[%s204 + $0x8] sm:$0xf] %vm1059, %v1035
      %1063 = vst.msk [vmem:[%s204 + $0xc] sm:$0xf] %vm1059, %v1036
      %1064 = vst.msk [vmem:[%s204 + $0x10] sm:$0xf] %vm1059, %v1037
      %1065 = vst.msk [vmem:[%s204 + $0x14] sm:$0xf] %vm1059, %v1038
      %1066 = vst.msk [vmem:[%s204 + $0x18] sm:$0xf] %vm1059, %v1039
      %1067 = vst.msk [vmem:[%s204 + $0x1c] sm:$0xf] %vm1059, %v1040
      %1068 = vst.msk [vmem:[%s204 + $0x20] sm:$0xf] %vm1059, %v1041
      %1069 = vst.msk [vmem:[%s204 + $0x24] sm:$0xf] %vm1059, %v1042
      %1070 = vst.msk [vmem:[%s204 + $0x28] sm:$0xf] %vm1059, %v1043
      %1071 = vst.msk [vmem:[%s204 + $0x2c] sm:$0xf] %vm1059, %v1044
      %vm1072 = vcmask 516096
      %1073 = vst.msk [vmem:[%s204 + $0x30] sm:$0x1] %vm1072, %v1045
      %p1074 = scmp.lt.s32.totalorder %s14, 1
      %s1075 = scalar_select %p1074, %s14, 1
      %s1076 = smul.addr %s1075, 13
      %s1077 = smul.addr %s1076, 4
      %s1078 = scalar_lea.vmem %s3, %s1077
      // Predicated region
      $region33: #{agent_forward.6} parent=31 // pred_check
        %p1079 = pneg %p110
      $region34: #{agent_forward.6} parent=31 // pred_check_branch
        %1081 = sbr.rel (%p1079) target = $region36
      $region35: #{agent_forward.6} parent=31 // pred_region
        _
      $region36: #{agent_forward.6} parent=31 // pred_fallthru
        _
    $region32: #{agent_forward.6} parent=5 // pred_fallthru
      _
    %p1082 = scmp.le.s32.totalorder 2, %s9
    // Predicated region
    $region37: #{agent_forward.6} parent=5 // pred_check
      %p1083 = pneg %p1082
    $region38: #{agent_forward.6} parent=5 // pred_check_branch
      %1085 = sbr.rel (%p1083) target = $region40
    $region39: #{agent_forward.6} parent=5 // pred_region
      %s1086 = ssub.s32 %s9, 2
      // Predicated region
      $region41: #{agent_forward.6} parent=39 // pred_check
        %p1087 = pneg %p116
      $region42: #{agent_forward.6} parent=39 // pred_check_branch
        %1089 = sbr.rel (%p1087) target = $region44
      $region43: #{agent_forward.6} parent=39 // pred_region
        %p1090 = scmp.lt.s32.totalorder %s15, 1
        %s1091 = scalar_select %p1090, %s15, 1
        %s1092 = smul.addr %s1091, 13
        %s1093 = smul.addr %s1092, 4
        %s1094 = scalar_lea.vmem %s3, %s1093
      $region44: #{agent_forward.6} parent=39 // pred_fallthru
        _
    $region40: #{agent_forward.6} parent=5 // pred_fallthru
      _
  $region6: #{agent_forward.6} parent=0 // loop_footer
    %s13 = sadd.s32 1, %s9
  $region7: #{agent_forward.6} parent=0 // loop_footer_branch
    %8 = sbr.rel target = $region3
  $region8: #{agent_forward.6} parent=0 // loop_exit
    _

// kernel: agent_forward.7
$region0: #{agent_forward.7}
  #allocation0 [shape = 'u32[]', space=smem, size = 0x4, offset = 0x4, fixed_abs, tag = 'smem constant byte address 0x4 - core index']
  #allocation1 [shape = 'u32[144,128]{1,0:T(1,128)}', space=vmem, size = 0x12000, scoped, tag = 'internal scratch']
  %s0 = inlined_call_operand.vmem [shape: bf16[2,2,3136], index: 0, kind: input, shape index: {}]
  %s1 = inlined_call_operand.vmem [shape: bf16[2,3136,512], index: 1, kind: input, shape index: {}]
  %s2 = inlined_call_operand.vmem [shape: f32[2,1,512], index: 2, kind: input, shape index: {}]
  %s3 = inlined_call_operand.vmem [shape: bf16[2,512,8], index: 3, kind: input, shape index: {}]
  %s4 = inlined_call_operand.vmem [shape: f32[2,1,8], index: 4, kind: input, shape index: {}]
  %s5 = inlined_call_operand.vmem [shape: f32[2,2,8], index: 5, kind: output, shape index: {}]
  %s6 = sld [smem:[#allocation0]]
  $region53: #{agent_forward.7} parent=0
    _
  %s8 = ssub.s32 1, %s6
  %s9 = scalar_select 0, %s8, %s6
  loop: start=0, step=1, limit=4
  $region2: #{agent_forward.7} parent=0 // loop_pre_header
    _
  $region3: #{agent_forward.7} parent=0 // loop_header
    %s11 = sphi 0, %s15
    %p12 = scmp.ge.s32.totalorder %s11, 4
    %s21 = sphi 0, %s23
    %s24 = sphi 0, %s21
    %s25 = sphi 0, %s24
    %s41 = sphi 0, %s25
    %s47 = sphi 0, %s49
    %s50 = sphi 0, %s47
    %s51 = sphi 0, %s50
    %s67 = sphi 0, %s51
    %s73 = sphi 0, %s75
    %s76 = sphi 0, %s73
    %s77 = sphi 0, %s76
    %s93 = sphi 0, %s77
    %s99 = sphi 0, %s101
    %s102 = sphi 0, %s99
    %s103 = sphi 0, %s102
    %s119 = sphi 0, %s103
    %s125 = sphi 0, %s127
    %s128 = sphi 0, %s125
    %s129 = sphi 0, %s128
    %s145 = sphi 0, %s129
    %s151 = sphi 0, %s153
    %s154 = sphi 0, %s151
    %s155 = sphi 0, %s154
    %s171 = sphi 0, %s155
  $region4: #{agent_forward.7} parent=0 // loop_header_branch
    %14 = sbr.rel (%p12) target = $region8
  $region5: #{agent_forward.7} parent=0 // loop_body
    %s16 = ssub.s32 %s11, 1
    %s17 = ssub.s32 %s11, 2
    %s18 = sadd.s32 %s11, 1
    %s19 = ssub.s32 %s11, %s18
    %p20 = scmp.eq.s32.totalorder %s19, 0
    %s22 = sadd.s32 %s21, 1
    %s23 = scalar_select %p20, %s21, %s22
    %p26 = pneg %p20
    %p27 = scmp.eq.s32.totalorder %s11, 1
    %p28 = por %p26, %p27
    %p29 = scmp.ne.s32.totalorder %s21, %s24
    %p30 = scmp.eq.s32.totalorder %s11, 0
    %p31 = por %p29, %p30
    %p32 = scmp.ne.s32.totalorder %s21, %s24
    %p33 = scmp.eq.s32.totalorder %s16, 1
    %p34 = por %p32, %p33
    %p35 = scmp.ne.s32.totalorder %s24, %s25
    %p36 = scmp.eq.s32.totalorder %s16, 0
    %p37 = por %p35, %p36
    %p38 = scmp.ne.s32.totalorder %s24, %s25
    %p39 = scmp.eq.s32.totalorder %s17, 1
    %p40 = por %p38, %p39
    %p42 = scmp.ne.s32.totalorder %s25, %s41
    %p43 = scmp.eq.s32.totalorder %s17, 0
    %p44 = por %p42, %p43
    %s45 = ssub.s32 %s11, %s18
    %p46 = scmp.eq.s32.totalorder %s45, 0
    %s48 = sadd.s32 %s47, 1
    %s49 = scalar_select %p46, %s47, %s48
    %p52 = pneg %p46
    %p53 = scmp.eq.s32.totalorder %s11, 1
    %p54 = por %p52, %p53
    %p55 = scmp.ne.s32.totalorder %s47, %s50
    %p56 = scmp.eq.s32.totalorder %s11, 0
    %p57 = por %p55, %p56
    %p58 = scmp.ne.s32.totalorder %s47, %s50
    %p59 = scmp.eq.s32.totalorder %s16, 1
    %p60 = por %p58, %p59
    %p61 = scmp.ne.s32.totalorder %s50, %s51
    %p62 = scmp.eq.s32.totalorder %s16, 0
    %p63 = por %p61, %p62
    %p64 = scmp.ne.s32.totalorder %s50, %s51
    %p65 = scmp.eq.s32.totalorder %s17, 1
    %p66 = por %p64, %p65
    %p68 = scmp.ne.s32.totalorder %s51, %s67
    %p69 = scmp.eq.s32.totalorder %s17, 0
    %p70 = por %p68, %p69
    %s71 = ssub.s32 %s11, %s18
    %p72 = scmp.eq.s32.totalorder %s71, 0
    %s74 = sadd.s32 %s73, 1
    %s75 = scalar_select %p72, %s73, %s74
    %p78 = pneg %p72
    %p79 = scmp.eq.s32.totalorder %s11, 1
    %p80 = por %p78, %p79
    %p81 = scmp.ne.s32.totalorder %s73, %s76
    %p82 = scmp.eq.s32.totalorder %s11, 0
    %p83 = por %p81, %p82
    %p84 = scmp.ne.s32.totalorder %s73, %s76
    %p85 = scmp.eq.s32.totalorder %s16, 1
    %p86 = por %p84, %p85
    %p87 = scmp.ne.s32.totalorder %s76, %s77
    %p88 = scmp.eq.s32.totalorder %s16, 0
    %p89 = por %p87, %p88
    %p90 = scmp.ne.s32.totalorder %s76, %s77
    %p91 = scmp.eq.s32.totalorder %s17, 1
    %p92 = por %p90, %p91
    %p94 = scmp.ne.s32.totalorder %s77, %s93
    %p95 = scmp.eq.s32.totalorder %s17, 0
    %p96 = por %p94, %p95
    %s97 = ssub.s32 %s11, %s18
    %p98 = scmp.eq.s32.totalorder %s97, 0
    %s100 = sadd.s32 %s99, 1
    %s101 = scalar_select %p98, %s99, %s100
    %p104 = pneg %p98
    %p105 = scmp.eq.s32.totalorder %s11, 1
    %p106 = por %p104, %p105
    %p107 = scmp.ne.s32.totalorder %s99, %s102
    %p108 = scmp.eq.s32.totalorder %s11, 0
    %p109 = por %p107, %p108
    %p110 = scmp.ne.s32.totalorder %s99, %s102
    %p111 = scmp.eq.s32.totalorder %s16, 1
    %p112 = por %p110, %p111
    %p113 = scmp.ne.s32.totalorder %s102, %s103
    %p114 = scmp.eq.s32.totalorder %s16, 0
    %p115 = por %p113, %p114
    %p116 = scmp.ne.s32.totalorder %s102, %s103
    %p117 = scmp.eq.s32.totalorder %s17, 1
    %p118 = por %p116, %p117
    %p120 = scmp.ne.s32.totalorder %s103, %s119
    %p121 = scmp.eq.s32.totalorder %s17, 0
    %p122 = por %p120, %p121
    %s123 = ssub.s32 %s11, %s18
    %p124 = scmp.eq.s32.totalorder %s123, 0
    %s126 = sadd.s32 %s125, 1
    %s127 = scalar_select %p124, %s125, %s126
    %p130 = pneg %p124
    %p131 = scmp.eq.s32.totalorder %s11, 1
    %p132 = por %p130, %p131
    %p133 = scmp.ne.s32.totalorder %s125, %s128
    %p134 = scmp.eq.s32.totalorder %s11, 0
    %p135 = por %p133, %p134
    %p136 = scmp.ne.s32.totalorder %s125, %s128
    %p137 = scmp.eq.s32.totalorder %s16, 1
    %p138 = por %p136, %p137
    %p139 = scmp.ne.s32.totalorder %s128, %s129
    %p140 = scmp.eq.s32.totalorder %s16, 0
    %p141 = por %p139, %p140
    %p142 = scmp.ne.s32.totalorder %s128, %s129
    %p143 = scmp.eq.s32.totalorder %s17, 1
    %p144 = por %p142, %p143
    %p146 = scmp.ne.s32.totalorder %s129, %s145
    %p147 = scmp.eq.s32.totalorder %s17, 0
    %p148 = por %p146, %p147
    %s149 = ssub.s32 %s11, %s18
    %p150 = scmp.eq.s32.totalorder %s149, 0
    %s152 = sadd.s32 %s151, 1
    %s153 = scalar_select %p150, %s151, %s152
    %p156 = pneg %p150
    %p157 = scmp.eq.s32.totalorder %s11, 1
    %p158 = por %p156, %p157
    %p159 = scmp.ne.s32.totalorder %s151, %s154
    %p160 = scmp.eq.s32.totalorder %s11, 0
    %p161 = por %p159, %p160
    %p162 = scmp.ne.s32.totalorder %s151, %s154
    %p163 = scmp.eq.s32.totalorder %s16, 1
    %p164 = por %p162, %p163
    %p165 = scmp.ne.s32.totalorder %s154, %s155
    %p166 = scmp.eq.s32.totalorder %s16, 0
    %p167 = por %p165, %p166
    %p168 = scmp.ne.s32.totalorder %s154, %s155
    %p169 = scmp.eq.s32.totalorder %s17, 1
    %p170 = por %p168, %p169
    %p172 = scmp.ne.s32.totalorder %s155, %s171
    %p173 = scmp.eq.s32.totalorder %s17, 0
    %p174 = por %p172, %p173
    %p175 = scmp.le.s32.totalorder 1, %s11
    %p176 = scmp.lt.s32.totalorder %s11, 3
    %p177 = pnand %p175, %p176
    %p178 = pneg %p177
    // Predicated region
    $region9: #{agent_forward.7} parent=5 // pred_check
      _
    $region10: #{agent_forward.7} parent=5 // pred_check_branch
      %180 = sbr.rel (%p177) target = $region12
    $region11: #{agent_forward.7} parent=5 // pred_region
      %s181 = ssub.s32 %s11, 1
    $region12: #{agent_forward.7} parent=5 // pred_fallthru
      _
    %p182 = scmp.lt.s32.totalorder %s11, 2
    // Predicated region
    $region13: #{agent_forward.7} parent=5 // pred_check
      %p183 = pneg %p182
    $region14: #{agent_forward.7} parent=5 // pred_check_branch
      %185 = sbr.rel (%p183) target = $region16
    $region15: #{agent_forward.7} parent=5 // pred_region
      // Predicated region
      $region17: #{agent_forward.7} parent=15 // pred_check
        %p186 = pneg %p31
      $region18: #{agent_forward.7} parent=15 // pred_check_branch
        %188 = sbr.rel (%p186) target = $region20
      $region19: #{agent_forward.7} parent=15 // pred_region
        %p189 = scmp.lt.s32.totalorder %s11, 1
        %s190 = scalar_select %p189, %s11, 1
        %s191 = smul.addr %s190, 25
        %s192 = scalar_lea.vmem %s0, %s191
      $region20: #{agent_forward.7} parent=15 // pred_fallthru
        _
      // Predicated region
      $region21: #{agent_forward.7} parent=15 // pred_check
        %p193 = pneg %p57
      $region22: #{agent_forward.7} parent=15 // pred_check_branch
        %195 = sbr.rel (%p193) target = $region24
      $region23: #{agent_forward.7} parent=15 // pred_region
        %p196 = scmp.lt.s32.totalorder %s11, 1
        %s197 = scalar_select %p196, %s11, 1
        %s198 = smul.addr %s197, 1568
        %s199 = smul.addr %s198, 4
        %s200 = scalar_lea.vmem %s1, %s199
      $region24: #{agent_forward.7} parent=15 // pred_fallthru
        _
      // Predicated region
      $region25: #{agent_forward.7} parent=15 // pred_check
        %p201 = pneg %p83
      $region26: #{agent_forward.7} parent=15 // pred_check_branch
        %203 = sbr.rel (%p201) target = $region28
      $region27: #{agent_forward.7} parent=15 // pred_region
        %p204 = scmp.lt.s32.totalorder %s11, 1
        %s205 = scalar_select %p204, %s11, 1
        %s206 = smul.addr %s205, 4
        %s207 = scalar_lea.vmem %s2, %s206
      $region28: #{agent_forward.7} parent=15 // pred_fallthru
        _
      // Predicated region
      $region29: #{agent_forward.7} parent=15 // pred_check
        %p208 = pneg %p109
      $region30: #{agent_forward.7} parent=15 // pred_check_branch
        %210 = sbr.rel (%p208) target = $region32
      $region31: #{agent_forward.7} parent=15 // pred_region
        %p211 = scmp.lt.s32.totalorder %s11, 1
        %s212 = scalar_select %p211, %s11, 1
        %s213 = smul.addr %s212, 64
        %s214 = smul.addr %s213, 4
        %s215 = scalar_lea.vmem %s3, %s214
      $region32: #{agent_forward.7} parent=15 // pred_fallthru
        _
      // Predicated region
      $region33: #{agent_forward.7} parent=15 // pred_check
        %p216 = pneg %p135
      $region34: #{agent_forward.7} parent=15 // pred_check_branch
        %218 = sbr.rel (%p216) target = $region36
      $region35: #{agent_forward.7} parent=15 // pred_region
        %p219 = scmp.lt.s32.totalorder %s11, 1
        %s220 = scalar_select %p219, %s11, 1
        %s221 = scalar_lea.vmem %s4, %s220
      $region36: #{agent_forward.7} parent=15 // pred_fallthru
        _
    $region16: #{agent_forward.7} parent=5 // pred_fallthru
      _
    %p222 = scmp.le.s32.totalorder 1, %s11
    %p223 = scmp.lt.s32.totalorder %s11, 3
    %p224 = pnand %p222, %p223
    %p225 = pneg %p224
    // Predicated region
    $region37: #{agent_forward.7} parent=5 // pred_check
      _
    $region38: #{agent_forward.7} parent=5 // pred_check_branch
      %227 = sbr.rel (%p224) target = $region40
    $region39: #{agent_forward.7} parent=5 // pred_region
      %s228 = ssub.s32 %s11, 1
      %p229 = scmp.lt.s32.totalorder %s16, 1
      %s230 = scalar_select %p229, %s16, 1
      %s231 = smul.addr %s230, 25
      %s232 = scalar_lea.vmem %s0, %s231
      %p233 = pneg %p37
      %p234 = pneg %p34
      %p235 = scmp.lt.s32.totalorder %s16, 1
      %s236 = scalar_select %p235, %s16, 1
      %s237 = smul.addr %s236, 1568
      %s238 = smul.addr %s237, 4
      %s239 = scalar_lea.vmem %s1, %s238
      %p240 = pneg %p63
      %p241 = pneg %p60
      %p242 = scmp.lt.s32.totalorder %s16, 1
      %s243 = scalar_select %p242, %s16, 1
      %s244 = smul.addr %s243, 4
      %s245 = scalar_lea.vmem %s2, %s244
      %p246 = pneg %p89
      %p247 = pneg %p86
      %p248 = scmp.lt.s32.totalorder %s16, 1
      %s249 = scalar_select %p248, %s16, 1
      %s250 = smul.addr %s249, 64
      %s251 = smul.addr %s250, 4
      %s252 = scalar_lea.vmem %s3, %s251
      %p253 = pneg %p115
      %p254 = pneg %p112
      %p255 = scmp.lt.s32.totalorder %s16, 1
      %s256 = scalar_select %p255, %s16, 1
      %s257 = scalar_lea.vmem %s4, %s256
      %p258 = pneg %p141
      %p259 = pneg %p138
      %p260 = pneg %p167
      %p261 = pneg %p164
      %p262 = scmp.lt.s32.totalorder %s16, 1
      %s263 = scalar_select %p262, %s16, 1
      %s264 = smul.addr %s263, 2
      %s265 = scalar_lea.vmem %s5, %s264
      %p266 = scmp.lt.s32.totalorder %s16, 1
      %s267 = scalar_select %p266, %s16, 1
      %s268 = smul.addr %s267, 25
      %s269 = scalar_lea.vmem %s0, %s268
      %p270 = scmp.lt.s32.totalorder %s16, 1
      %s271 = scalar_select %p270, %s16, 1
      %s272 = smul.addr %s271, 1568
      %s273 = smul.addr %s272, 4
      %s274 = scalar_lea.vmem %s1, %s273
      %p275 = scmp.lt.s32.totalorder %s16, 1
      %s276 = scalar_select %p275, %s16, 1
      %s277 = smul.addr %s276, 4
      %s278 = scalar_lea.vmem %s2, %s277
      %p279 = scmp.lt.s32.totalorder %s16, 1
      %s280 = scalar_select %p279, %s16, 1
      %s281 = smul.addr %s280, 64
      %s282 = smul.addr %s281, 4
      %s283 = scalar_lea.vmem %s3, %s282
      %p284 = scmp.lt.s32.totalorder %s16, 1
      %s285 = scalar_select %p284, %s16, 1
      %s286 = scalar_lea.vmem %s4, %s285
      %p287 = scmp.lt.s32.totalorder %s16, 1
      %s288 = scalar_select %p287, %s16, 1
      %s289 = smul.addr %s288, 2
      %s290 = scalar_lea.vmem %s5, %s289
      %v292 = vld [vmem:[%s269] sm:$0xff]
      %v293 = vld [vmem:[%s269 + $0x8] sm:$0xff]
      %v294 = vld [vmem:[%s269 + $0x10] sm:$0xff]
      %v295 = vld [vmem:[%s269 + $0x18] sm:$0x1]
      %v296 = vld [vmem:[%s274] sm:$0xff]
      %v297 = vld [vmem:[%s274 + $0x8] sm:$0xff]
      %v298 = vld [vmem:[%s274 + $0x10] sm:$0xff]
      %v299 = vld [vmem:[%s274 + $0x18] sm:$0xff]
      %v300 = vld [vmem:[%s274 + $0x20] sm:$0xff]
      %v301 = vld [vmem:[%s274 + $0x28] sm:$0xff]
      %v302 = vld [vmem:[%s274 + $0x30] sm:$0xff]
      %v303 = vld [vmem:[%s274 + $0x38] sm:$0xff]
      %v304 = vld [vmem:[%s274 + $0x40] sm:$0xff]
      %v305 = vld [vmem:[%s274 + $0x48] sm:$0xff]
      %v306 = vld [vmem:[%s274 + $0x50] sm:$0xff]
      %v307 = vld [vmem:[%s274 + $0x58] sm:$0xff]
      %v308 = vld [vmem:[%s274 + $0x60] sm:$0xff]
      %v309 = vld [vmem:[%s274 + $0x68] sm:$0xff]
      %v310 = vld [vmem:[%s274 + $0x70] sm:$0xff]
      %v311 = vld [vmem:[%s274 + $0x78] sm:$0xff]
      %v312 = vld [vmem:[%s274 + $0x80] sm:$0xff]
      %v313 = vld [vmem:[%s274 + $0x88] sm:$0xff]
      %v314 = vld [vmem:[%s274 + $0x90] sm:$0xff]
      %v315 = vld [vmem:[%s274 + $0x98] sm:$0xff]
      %v316 = vld [vmem:[%s274 + $0xa0] sm:$0xff]
      %v317 = vld [vmem:[%s274 + $0xa8] sm:$0xff]
      %v318 = vld [vmem:[%s274 + $0xb0] sm:$0xff]
      %v319 = vld [vmem:[%s274 + $0xb8] sm:$0xff]
      %v320 = vld [vmem:[%s274 + $0xc0] sm:$0xff]
      %v321 = vld [vmem:[%s274 + $0xc8] sm:$0xff]
      %v322 = vld [vmem:[%s274 + $0xd0] sm:$0xff]
      %v323 = vld [vmem:[%s274 + $0xd8] sm:$0xff]
      %v324 = vld [vmem:[%s274 + $0xe0] sm:$0xff]
      %v325 = vld [vmem:[%s274 + $0xe8] sm:$0xff]
      %v326 = vld [vmem:[%s274 + $0xf0] sm:$0xff]
      %v327 = vld [vmem:[%s274 + $0xf8] sm:$0xff]
      %v328 = vld [vmem:[%s274 + $0x100] sm:$0xff]
      %v329 = vld [vmem:[%s274 + $0x108] sm:$0xff]
      %v330 = vld [vmem:[%s274 + $0x110] sm:$0xff]
      %v331 = vld [vmem:[%s274 + $0x118] sm:$0xff]
      %v332 = vld [vmem:[%s274 + $0x120] sm:$0xff]
      %v333 = vld [vmem:[%s274 + $0x128] sm:$0xff]
      %v334 = vld [vmem:[%s274 + $0x130] sm:$0xff]
      %v335 = vld [vmem:[%s274 + $0x138] sm:$0xff]
      %v336 = vld [vmem:[%s274 + $0x140] sm:$0xff]
      %v337 = vld [vmem:[%s274 + $0x148] sm:$0xff]
      %v338 = vld [vmem:[%s274 + $0x150] sm:$0xff]
      %v339 = vld [vmem:[%s274 + $0x158] sm:$0xff]
      %v340 = vld [vmem:[%s274 + $0x160] sm:$0xff]
      %v341 = vld [vmem:[%s274 + $0x168] sm:$0xff]
      %v342 = vld [vmem:[%s274 + $0x170] sm:$0xff]
      %v343 = vld [vmem:[%s274 + $0x178] sm:$0xff]
      %v344 = vld [vmem:[%s274 + $0x180] sm:$0xff]
      %v345 = vld [vmem:[%s274 + $0x188] sm:$0xff]
      %v346 = vld [vmem:[%s274 + $0x190] sm:$0xff]
      %v347 = vld [vmem:[%s274 + $0x198] sm:$0xff]
      %v348 = vld [vmem:[%s274 + $0x1a0] sm:$0xff]
      %v349 = vld [vmem:[%s274 + $0x1a8] sm:$0xff]
      %v350 = vld [vmem:[%s274 + $0x1b0] sm:$0xff]
      %v351 = vld [vmem:[%s274 + $0x1b8] sm:$0xff]
      %v352 = vld [vmem:[%s274 + $0x1c0] sm:$0xff]
      %v353 = vld [vmem:[%s274 + $0x1c8] sm:$0xff]
      %v354 = vld [vmem:[%s274 + $0x1d0] sm:$0xff]
      %v355 = vld [vmem:[%s274 + $0x1d8] sm:$0xff]
      %v356 = vld [vmem:[%s274 + $0x1e0] sm:$0xff]
      %v357 = vld [vmem:[%s274 + $0x1e8] sm:$0xff]
      %v358 = vld [vmem:[%s274 + $0x1f0] sm:$0xff]
      %v359 = vld [vmem:[%s274 + $0x1f8] sm:$0xff]
      %v360 = vld [vmem:[%s274 + $0x200] sm:$0xff]
      %v361 = vld [vmem:[%s274 + $0x208] sm:$0xff]
      %v362 = vld [vmem:[%s274 + $0x210] sm:$0xff]
      %v363 = vld [vmem:[%s274 + $0x218] sm:$0xff]
      %v364 = vld [vmem:[%s274 + $0x220] sm:$0xff]
      %v365 = vld [vmem:[%s274 + $0x228] sm:$0xff]
      %v366 = vld [vmem:[%s274 + $0x230] sm:$0xff]
      %v367 = vld [vmem:[%s274 + $0x238] sm:$0xff]
      %v368 = vld [vmem:[%s274 + $0x240] sm:$0xff]
      %v369 = vld [vmem:[%s274 + $0x248] sm:$0xff]
      %v370 = vld [vmem:[%s274 + $0x250] sm:$0xff]
      %v371 = vld [vmem:[%s274 + $0x258] sm:$0xff]
      %v372 = vld [vmem:[%s274 + $0x260] sm:$0xff]
      %v373 = vld [vmem:[%s274 + $0x268] sm:$0xff]
      %v374 = vld [vmem:[%s274 + $0x270] sm:$0xff]
      %v375 = vld [vmem:[%s274 + $0x278] sm:$0xff]
      %v376 = vld [vmem:[%s274 + $0x280] sm:$0xff]
      %v377 = vld [vmem:[%s274 + $0x288] sm:$0xff]
      %v378 = vld [vmem:[%s274 + $0x290] sm:$0xff]
      %v379 = vld [vmem:[%s274 + $0x298] sm:$0xff]
      %v380 = vld [vmem:[%s274 + $0x2a0] sm:$0xff]
      %v381 = vld [vmem:[%s274 + $0x2a8] sm:$0xff]
      %v382 = vld [vmem:[%s274 + $0x2b0] sm:$0xff]
      %v383 = vld [vmem:[%s274 + $0x2b8] sm:$0xff]
      %v384 = vld [vmem:[%s274 + $0x2c0] sm:$0xff]
      %v385 = vld [vmem:[%s274 + $0x2c8] sm:$0xff]
      %v386 = vld [vmem:[%s274 + $0x2d0] sm:$0xff]
      %v387 = vld [vmem:[%s274 + $0x2d8] sm:$0xff]
      %v388 = vld [vmem:[%s274 + $0x2e0] sm:$0xff]
      %v389 = vld [vmem:[%s274 + $0x2e8] sm:$0xff]
      %v390 = vld [vmem:[%s274 + $0x2f0] sm:$0xff]
      %v391 = vld [vmem:[%s274 + $0x2f8] sm:$0xff]
      %v392 = vld [vmem:[%s274 + $0x300] sm:$0xff]
      %v393 = vld [vmem:[%s274 + $0x308] sm:$0xff]
      %v394 = vld [vmem:[%s274 + $0x310] sm:$0xff]
      %v395 = vld [vmem:[%s274 + $0x318] sm:$0xff]
      %v396 = vld [vmem:[%s274 + $0x320] sm:$0xff]
      %v397 = vld [vmem:[%s274 + $0x328] sm:$0xff]
      %v398 = vld [vmem:[%s274 + $0x330] sm:$0xff]
      %v399 = vld [vmem:[%s274 + $0x338] sm:$0xff]
      %v400 = vld [vmem:[%s274 + $0x340] sm:$0xff]
      %v401 = vld [vmem:[%s274 + $0x348] sm:$0xff]
      %v402 = vld [vmem:[%s274 + $0x350] sm:$0xff]
      %v403 = vld [vmem:[%s274 + $0x358] sm:$0xff]
      %v404 = vld [vmem:[%s274 + $0x360] sm:$0xff]
      %v405 = vld [vmem:[%s274 + $0x368] sm:$0xff]
      %v406 = vld [vmem:[%s274 + $0x370] sm:$0xff]
      %v407 = vld [vmem:[%s274 + $0x378] sm:$0xff]
      %v408 = vld [vmem:[%s274 + $0x380] sm:$0xff]
      %v409 = vld [vmem:[%s274 + $0x388] sm:$0xff]
      %v410 = vld [vmem:[%s274 + $0x390] sm:$0xff]
      %v411 = vld [vmem:[%s274 + $0x398] sm:$0xff]
      %v412 = vld [vmem:[%s274 + $0x3a0] sm:$0xff]
      %v413 = vld [vmem:[%s274 + $0x3a8] sm:$0xff]
      %v414 = vld [vmem:[%s274 + $0x3b0] sm:$0xff]
      %v415 = vld [vmem:[%s274 + $0x3b8] sm:$0xff]
      %v416 = vld [vmem:[%s274 + $0x3c0] sm:$0xff]
      %v417 = vld [vmem:[%s274 + $0x3c8] sm:$0xff]
      %v418 = vld [vmem:[%s274 + $0x3d0] sm:$0xff]
      %v419 = vld [vmem:[%s274 + $0x3d8] sm:$0xff]
      %v420 = vld [vmem:[%s274 + $0x3e0] sm:$0xff]
      %v421 = vld [vmem:[%s274 + $0x3e8] sm:$0xff]
      %v422 = vld [vmem:[%s274 + $0x3f0] sm:$0xff]
      %v423 = vld [vmem:[%s274 + $0x3f8] sm:$0xff]
      %v424 = vld [vmem:[%s274 + $0x400] sm:$0xff]
      %v425 = vld [vmem:[%s274 + $0x408] sm:$0xff]
      %v426 = vld [vmem:[%s274 + $0x410] sm:$0xff]
      %v427 = vld [vmem:[%s274 + $0x418] sm:$0xff]
      %v428 = vld [vmem:[%s274 + $0x420] sm:$0xff]
      %v429 = vld [vmem:[%s274 + $0x428] sm:$0xff]
      %v430 = vld [vmem:[%s274 + $0x430] sm:$0xff]
      %v431 = vld [vmem:[%s274 + $0x438] sm:$0xff]
      %v432 = vld [vmem:[%s274 + $0x440] sm:$0xff]
      %v433 = vld [vmem:[%s274 + $0x448] sm:$0xff]
      %v434 = vld [vmem:[%s274 + $0x450] sm:$0xff]
      %v435 = vld [vmem:[%s274 + $0x458] sm:$0xff]
      %v436 = vld [vmem:[%s274 + $0x460] sm:$0xff]
      %v437 = vld [vmem:[%s274 + $0x468] sm:$0xff]
      %v438 = vld [vmem:[%s274 + $0x470] sm:$0xff]
      %v439 = vld [vmem:[%s274 + $0x478] sm:$0xff]
      %v440 = vld [vmem:[%s274 + $0x480] sm:$0xff]
      %v441 = vld [vmem:[%s274 + $0x488] sm:$0xff]
      %v442 = vld [vmem:[%s274 + $0x490] sm:$0xff]
      %v443 = vld [vmem:[%s274 + $0x498] sm:$0xff]
      %v444 = vld [vmem:[%s274 + $0x4a0] sm:$0xff]
      %v445 = vld [vmem:[%s274 + $0x4a8] sm:$0xff]
      %v446 = vld [vmem:[%s274 + $0x4b0] sm:$0xff]
      %v447 = vld [vmem:[%s274 + $0x4b8] sm:$0xff]
      %v448 = vld [vmem:[%s274 + $0x4c0] sm:$0xff]
      %v449 = vld [vmem:[%s274 + $0x4c8] sm:$0xff]
      %v450 = vld [vmem:[%s274 + $0x4d0] sm:$0xff]
      %v451 = vld [vmem:[%s274 + $0x4d8] sm:$0xff]
      %v452 = vld [vmem:[%s274 + $0x4e0] sm:$0xff]
      %v453 = vld [vmem:[%s274 + $0x4e8] sm:$0xff]
      %v454 = vld [vmem:[%s274 + $0x4f0] sm:$0xff]
      %v455 = vld [vmem:[%s274 + $0x4f8] sm:$0xff]
      %v456 = vld [vmem:[%s274 + $0x500] sm:$0xff]
      %v457 = vld [vmem:[%s274 + $0x508] sm:$0xff]
      %v458 = vld [vmem:[%s274 + $0x510] sm:$0xff]
      %v459 = vld [vmem:[%s274 + $0x518] sm:$0xff]
      %v460 = vld [vmem:[%s274 + $0x520] sm:$0xff]
      %v461 = vld [vmem:[%s274 + $0x528] sm:$0xff]
      %v462 = vld [vmem:[%s274 + $0x530] sm:$0xff]
      %v463 = vld [vmem:[%s274 + $0x538] sm:$0xff]
      %v464 = vld [vmem:[%s274 + $0x540] sm:$0xff]
      %v465 = vld [vmem:[%s274 + $0x548] sm:$0xff]
      %v466 = vld [vmem:[%s274 + $0x550] sm:$0xff]
      %v467 = vld [vmem:[%s274 + $0x558] sm:$0xff]
      %v468 = vld [vmem:[%s274 + $0x560] sm:$0xff]
      %v469 = vld [vmem:[%s274 + $0x568] sm:$0xff]
      %v470 = vld [vmem:[%s274 + $0x570] sm:$0xff]
      %v471 = vld [vmem:[%s274 + $0x578] sm:$0xff]
      %v472 = vld [vmem:[%s274 + $0x580] sm:$0xff]
      %v473 = vld [vmem:[%s274 + $0x588] sm:$0xff]
      %v474 = vld [vmem:[%s274 + $0x590] sm:$0xff]
      %v475 = vld [vmem:[%s274 + $0x598] sm:$0xff]
      %v476 = vld [vmem:[%s274 + $0x5a0] sm:$0xff]
      %v477 = vld [vmem:[%s274 + $0x5a8] sm:$0xff]
      %v478 = vld [vmem:[%s274 + $0x5b0] sm:$0xff]
      %v479 = vld [vmem:[%s274 + $0x5b8] sm:$0xff]
      %v480 = vld [vmem:[%s274 + $0x5c0] sm:$0xff]
      %v481 = vld [vmem:[%s274 + $0x5c8] sm:$0xff]
      %v482 = vld [vmem:[%s274 + $0x5d0] sm:$0xff]
      %v483 = vld [vmem:[%s274 + $0x5d8] sm:$0xff]
      %v484 = vld [vmem:[%s274 + $0x5e0] sm:$0xff]
      %v485 = vld [vmem:[%s274 + $0x5e8] sm:$0xff]
      %v486 = vld [vmem:[%s274 + $0x5f0] sm:$0xff]
      %v487 = vld [vmem:[%s274 + $0x5f8] sm:$0xff]
      %v488 = vld [vmem:[%s274 + $0x600] sm:$0xff]
      %v489 = vld [vmem:[%s274 + $0x608] sm:$0xff]
      %v490 = vld [vmem:[%s274 + $0x610] sm:$0xff]
      %v491 = vld [vmem:[%s274 + $0x618] sm:$0xff]
      %v492 = vld [vmem:[%s274 + $0x620] sm:$0xff]
      %v493 = vld [vmem:[%s274 + $0x628] sm:$0xff]
      %v494 = vld [vmem:[%s274 + $0x630] sm:$0xff]
      %v495 = vld [vmem:[%s274 + $0x638] sm:$0xff]
      %v496 = vld [vmem:[%s274 + $0x640] sm:$0xff]
      %v497 = vld [vmem:[%s274 + $0x648] sm:$0xff]
      %v498 = vld [vmem:[%s274 + $0x650] sm:$0xff]
      %v499 = vld [vmem:[%s274 + $0x658] sm:$0xff]
      %v500 = vld [vmem:[%s274 + $0x660] sm:$0xff]
      %v501 = vld [vmem:[%s274 + $0x668] sm:$0xff]
      %v502 = vld [vmem:[%s274 + $0x670] sm:$0xff]
      %v503 = vld [vmem:[%s274 + $0x678] sm:$0xff]
      %v504 = vld [vmem:[%s274 + $0x680] sm:$0xff]
      %v505 = vld [vmem:[%s274 + $0x688] sm:$0xff]
      %v506 = vld [vmem:[%s274 + $0x690] sm:$0xff]
      %v507 = vld [vmem:[%s274 + $0x698] sm:$0xff]
      %v508 = vld [vmem:[%s274 + $0x6a0] sm:$0xff]
      %v509 = vld [vmem:[%s274 + $0x6a8] sm:$0xff]
      %v510 = vld [vmem:[%s274 + $0x6b0] sm:$0xff]
      %v511 = vld [vmem:[%s274 + $0x6b8] sm:$0xff]
      %v512 = vld [vmem:[%s274 + $0x6c0] sm:$0xff]
      %v513 = vld [vmem:[%s274 + $0x6c8] sm:$0xff]
      %v514 = vld [vmem:[%s274 + $0x6d0] sm:$0xff]
      %v515 = vld [vmem:[%s274 + $0x6d8] sm:$0xff]
      %v516 = vld [vmem:[%s274 + $0x6e0] sm:$0xff]
      %v517 = vld [vmem:[%s274 + $0x6e8] sm:$0xff]
      %v518 = vld [vmem:[%s274 + $0x6f0] sm:$0xff]
      %v519 = vld [vmem:[%s274 + $0x6f8] sm:$0xff]
      %v520 = vld [vmem:[%s274 + $0x700] sm:$0xff]
      %v521 = vld [vmem:[%s274 + $0x708] sm:$0xff]
      %v522 = vld [vmem:[%s274 + $0x710] sm:$0xff]
      %v523 = vld [vmem:[%s274 + $0x718] sm:$0xff]
      %v524 = vld [vmem:[%s274 + $0x720] sm:$0xff]
      %v525 = vld [vmem:[%s274 + $0x728] sm:$0xff]
      %v526 = vld [vmem:[%s274 + $0x730] sm:$0xff]
      %v527 = vld [vmem:[%s274 + $0x738] sm:$0xff]
      %v528 = vld [vmem:[%s274 + $0x740] sm:$0xff]
      %v529 = vld [vmem:[%s274 + $0x748] sm:$0xff]
      %v530 = vld [vmem:[%s274 + $0x750] sm:$0xff]
      %v531 = vld [vmem:[%s274 + $0x758] sm:$0xff]
      %v532 = vld [vmem:[%s274 + $0x760] sm:$0xff]
      %v533 = vld [vmem:[%s274 + $0x768] sm:$0xff]
      %v534 = vld [vmem:[%s274 + $0x770] sm:$0xff]
      %v535 = vld [vmem:[%s274 + $0x778] sm:$0xff]
      %v536 = vld [vmem:[%s274 + $0x780] sm:$0xff]
      %v537 = vld [vmem:[%s274 + $0x788] sm:$0xff]
      %v538 = vld [vmem:[%s274 + $0x790] sm:$0xff]
      %v539 = vld [vmem:[%s274 + $0x798] sm:$0xff]
      %v540 = vld [vmem:[%s274 + $0x7a0] sm:$0xff]
      %v541 = vld [vmem:[%s274 + $0x7a8] sm:$0xff]
      %v542 = vld [vmem:[%s274 + $0x7b0] sm:$0xff]
      %v543 = vld [vmem:[%s274 + $0x7b8] sm:$0xff]
      %v544 = vld [vmem:[%s274 + $0x7c0] sm:$0xff]
      %v545 = vld [vmem:[%s274 + $0x7c8] sm:$0xff]
      %v546 = vld [vmem:[%s274 + $0x7d0] sm:$0xff]
      %v547 = vld [vmem:[%s274 + $0x7d8] sm:$0xff]
      %v548 = vld [vmem:[%s274 + $0x7e0] sm:$0xff]
      %v549 = vld [vmem:[%s274 + $0x7e8] sm:$0xff]
      %v550 = vld [vmem:[%s274 + $0x7f0] sm:$0xff]
      %v551 = vld [vmem:[%s274 + $0x7f8] sm:$0xff]
      %v552 = vld [vmem:[%s274 + $0x800] sm:$0xff]
      %v553 = vld [vmem:[%s274 + $0x808] sm:$0xff]
      %v554 = vld [vmem:[%s274 + $0x810] sm:$0xff]
      %v555 = vld [vmem:[%s274 + $0x818] sm:$0xff]
      %v556 = vld [vmem:[%s274 + $0x820] sm:$0xff]
      %v557 = vld [vmem:[%s274 + $0x828] sm:$0xff]
      %v558 = vld [vmem:[%s274 + $0x830] sm:$0xff]
      %v559 = vld [vmem:[%s274 + $0x838] sm:$0xff]
      %v560 = vld [vmem:[%s274 + $0x840] sm:$0xff]
      %v561 = vld [vmem:[%s274 + $0x848] sm:$0xff]
      %v562 = vld [vmem:[%s274 + $0x850] sm:$0xff]
      %v563 = vld [vmem:[%s274 + $0x858] sm:$0xff]
      %v564 = vld [vmem:[%s274 + $0x860] sm:$0xff]
      %v565 = vld [vmem:[%s274 + $0x868] sm:$0xff]
      %v566 = vld [vmem:[%s274 + $0x870] sm:$0xff]
      %v567 = vld [vmem:[%s274 + $0x878] sm:$0xff]
      %v568 = vld [vmem:[%s274 + $0x880] sm:$0xff]
      %v569 = vld [vmem:[%s274 + $0x888] sm:$0xff]
      %v570 = vld [vmem:[%s274 + $0x890] sm:$0xff]
      %v571 = vld [vmem:[%s274 + $0x898] sm:$0xff]
      %v572 = vld [vmem:[%s274 + $0x8a0] sm:$0xff]
      %v573 = vld [vmem:[%s274 + $0x8a8] sm:$0xff]
      %v574 = vld [vmem:[%s274 + $0x8b0] sm:$0xff]
      %v575 = vld [vmem:[%s274 + $0x8b8] sm:$0xff]
      %v576 = vld [vmem:[%s274 + $0x8c0] sm:$0xff]
      %v577 = vld [vmem:[%s274 + $0x8c8] sm:$0xff]
      %v578 = vld [vmem:[%s274 + $0x8d0] sm:$0xff]
      %v579 = vld [vmem:[%s274 + $0x8d8] sm:$0xff]
      %v580 = vld [vmem:[%s274 + $0x8e0] sm:$0xff]
      %v581 = vld [vmem:[%s274 + $0x8e8] sm:$0xff]
      %v582 = vld [vmem:[%s274 + $0x8f0] sm:$0xff]
      %v583 = vld [vmem:[%s274 + $0x8f8] sm:$0xff]
      %v584 = vld [vmem:[%s274 + $0x900] sm:$0xff]
      %v585 = vld [vmem:[%s274 + $0x908] sm:$0xff]
      %v586 = vld [vmem:[%s274 + $0x910] sm:$0xff]
      %v587 = vld [vmem:[%s274 + $0x918] sm:$0xff]
      %v588 = vld [vmem:[%s274 + $0x920] sm:$0xff]
      %v589 = vld [vmem:[%s274 + $0x928] sm:$0xff]
      %v590 = vld [vmem:[%s274 + $0x930] sm:$0xff]
      %v591 = vld [vmem:[%s274 + $0x938] sm:$0xff]
      %v592 = vld [vmem:[%s274 + $0x940] sm:$0xff]
      %v593 = vld [vmem:[%s274 + $0x948] sm:$0xff]
      %v594 = vld [vmem:[%s274 + $0x950] sm:$0xff]
      %v595 = vld [vmem:[%s274 + $0x958] sm:$0xff]
      %v596 = vld [vmem:[%s274 + $0x960] sm:$0xff]
      %v597 = vld [vmem:[%s274 + $0x968] sm:$0xff]
      %v598 = vld [vmem:[%s274 + $0x970] sm:$0xff]
      %v599 = vld [vmem:[%s274 + $0x978] sm:$0xff]
      %v600 = vld [vmem:[%s274 + $0x980] sm:$0xff]
      %v601 = vld [vmem:[%s274 + $0x988] sm:$0xff]
      %v602 = vld [vmem:[%s274 + $0x990] sm:$0xff]
      %v603 = vld [vmem:[%s274 + $0x998] sm:$0xff]
      %v604 = vld [vmem:[%s274 + $0x9a0] sm:$0xff]
      %v605 = vld [vmem:[%s274 + $0x9a8] sm:$0xff]
      %v606 = vld [vmem:[%s274 + $0x9b0] sm:$0xff]
      %v607 = vld [vmem:[%s274 + $0x9b8] sm:$0xff]
      %v608 = vld [vmem:[%s274 + $0x9c0] sm:$0xff]
      %v609 = vld [vmem:[%s274 + $0x9c8] sm:$0xff]
      %v610 = vld [vmem:[%s274 + $0x9d0] sm:$0xff]
      %v611 = vld [vmem:[%s274 + $0x9d8] sm:$0xff]
      %v612 = vld [vmem:[%s274 + $0x9e0] sm:$0xff]
      %v613 = vld [vmem:[%s274 + $0x9e8] sm:$0xff]
      %v614 = vld [vmem:[%s274 + $0x9f0] sm:$0xff]
      %v615 = vld [vmem:[%s274 + $0x9f8] sm:$0xff]
      %v616 = vld [vmem:[%s274 + $0xa00] sm:$0xff]
      %v617 = vld [vmem:[%s274 + $0xa08] sm:$0xff]
      %v618 = vld [vmem:[%s274 + $0xa10] sm:$0xff]
      %v619 = vld [vmem:[%s274 + $0xa18] sm:$0xff]
      %v620 = vld [vmem:[%s274 + $0xa20] sm:$0xff]
      %v621 = vld [vmem:[%s274 + $0xa28] sm:$0xff]
      %v622 = vld [vmem:[%s274 + $0xa30] sm:$0xff]
      %v623 = vld [vmem:[%s274 + $0xa38] sm:$0xff]
      %v624 = vld [vmem:[%s274 + $0xa40] sm:$0xff]
      %v625 = vld [vmem:[%s274 + $0xa48] sm:$0xff]
      %v626 = vld [vmem:[%s274 + $0xa50] sm:$0xff]
      %v627 = vld [vmem:[%s274 + $0xa58] sm:$0xff]
      %v628 = vld [vmem:[%s274 + $0xa60] sm:$0xff]
      %v629 = vld [vmem:[%s274 + $0xa68] sm:$0xff]
      %v630 = vld [vmem:[%s274 + $0xa70] sm:$0xff]
      %v631 = vld [vmem:[%s274 + $0xa78] sm:$0xff]
      %v632 = vld [vmem:[%s274 + $0xa80] sm:$0xff]
      %v633 = vld [vmem:[%s274 + $0xa88] sm:$0xff]
      %v634 = vld [vmem:[%s274 + $0xa90] sm:$0xff]
      %v635 = vld [vmem:[%s274 + $0xa98] sm:$0xff]
      %v636 = vld [vmem:[%s274 + $0xaa0] sm:$0xff]
      %v637 = vld [vmem:[%s274 + $0xaa8] sm:$0xff]
      %v638 = vld [vmem:[%s274 + $0xab0] sm:$0xff]
      %v639 = vld [vmem:[%s274 + $0xab8] sm:$0xff]
      %v640 = vld [vmem:[%s274 + $0xac0] sm:$0xff]
      %v641 = vld [vmem:[%s274 + $0xac8] sm:$0xff]
      %v642 = vld [vmem:[%s274 + $0xad0] sm:$0xff]
      %v643 = vld [vmem:[%s274 + $0xad8] sm:$0xff]
      %v644 = vld [vmem:[%s274 + $0xae0] sm:$0xff]
      %v645 = vld [vmem:[%s274 + $0xae8] sm:$0xff]
      %v646 = vld [vmem:[%s274 + $0xaf0] sm:$0xff]
      %v647 = vld [vmem:[%s274 + $0xaf8] sm:$0xff]
      %v648 = vld [vmem:[%s274 + $0xb00] sm:$0xff]
      %v649 = vld [vmem:[%s274 + $0xb08] sm:$0xff]
      %v650 = vld [vmem:[%s274 + $0xb10] sm:$0xff]
      %v651 = vld [vmem:[%s274 + $0xb18] sm:$0xff]
      %v652 = vld [vmem:[%s274 + $0xb20] sm:$0xff]
      %v653 = vld [vmem:[%s274 + $0xb28] sm:$0xff]
      %v654 = vld [vmem:[%s274 + $0xb30] sm:$0xff]
      %v655 = vld [vmem:[%s274 + $0xb38] sm:$0xff]
      %v656 = vld [vmem:[%s274 + $0xb40] sm:$0xff]
      %v657 = vld [vmem:[%s274 + $0xb48] sm:$0xff]
      %v658 = vld [vmem:[%s274 + $0xb50] sm:$0xff]
      %v659 = vld [vmem:[%s274 + $0xb58] sm:$0xff]
      %v660 = vld [vmem:[%s274 + $0xb60] sm:$0xff]
      %v661 = vld [vmem:[%s274 + $0xb68] sm:$0xff]
      %v662 = vld [vmem:[%s274 + $0xb70] sm:$0xff]
      %v663 = vld [vmem:[%s274 + $0xb78] sm:$0xff]
      %v664 = vld [vmem:[%s274 + $0xb80] sm:$0xff]
      %v665 = vld [vmem:[%s274 + $0xb88] sm:$0xff]
      %v666 = vld [vmem:[%s274 + $0xb90] sm:$0xff]
      %v667 = vld [vmem:[%s274 + $0xb98] sm:$0xff]
      %v668 = vld [vmem:[%s274 + $0xba0] sm:$0xff]
      %v669 = vld [vmem:[%s274 + $0xba8] sm:$0xff]
      %v670 = vld [vmem:[%s274 + $0xbb0] sm:$0xff]
      %v671 = vld [vmem:[%s274 + $0xbb8] sm:$0xff]
      %v672 = vld [vmem:[%s274 + $0xbc0] sm:$0xff]
      %v673 = vld [vmem:[%s274 + $0xbc8] sm:$0xff]
      %v674 = vld [vmem:[%s274 + $0xbd0] sm:$0xff]
      %v675 = vld [vmem:[%s274 + $0xbd8] sm:$0xff]
      %v676 = vld [vmem:[%s274 + $0xbe0] sm:$0xff]
      %v677 = vld [vmem:[%s274 + $0xbe8] sm:$0xff]
      %v678 = vld [vmem:[%s274 + $0xbf0] sm:$0xff]
      %v679 = vld [vmem:[%s274 + $0xbf8] sm:$0xff]
      %v680 = vld [vmem:[%s274 + $0xc00] sm:$0xff]
      %v681 = vld [vmem:[%s274 + $0xc08] sm:$0xff]
      %v682 = vld [vmem:[%s274 + $0xc10] sm:$0xff]
      %v683 = vld [vmem:[%s274 + $0xc18] sm:$0xff]
      %v684 = vld [vmem:[%s274 + $0xc20] sm:$0xff]
      %v685 = vld [vmem:[%s274 + $0xc28] sm:$0xff]
      %v686 = vld [vmem:[%s274 + $0xc30] sm:$0xff]
      %v687 = vld [vmem:[%s274 + $0xc38] sm:$0xff]
      %v688 = vld [vmem:[%s274 + $0xc40] sm:$0xff]
      %v689 = vld [vmem:[%s274 + $0xc48] sm:$0xff]
      %v690 = vld [vmem:[%s274 + $0xc50] sm:$0xff]
      %v691 = vld [vmem:[%s274 + $0xc58] sm:$0xff]
      %v692 = vld [vmem:[%s274 + $0xc60] sm:$0xff]
      %v693 = vld [vmem:[%s274 + $0xc68] sm:$0xff]
      %v694 = vld [vmem:[%s274 + $0xc70] sm:$0xff]
      %v695 = vld [vmem:[%s274 + $0xc78] sm:$0xff]
      %v696 = vld [vmem:[%s274 + $0xc80] sm:$0xff]
      %v697 = vld [vmem:[%s274 + $0xc88] sm:$0xff]
      %v698 = vld [vmem:[%s274 + $0xc90] sm:$0xff]
      %v699 = vld [vmem:[%s274 + $0xc98] sm:$0xff]
      %v700 = vld [vmem:[%s274 + $0xca0] sm:$0xff]
      %v701 = vld [vmem:[%s274 + $0xca8] sm:$0xff]
      %v702 = vld [vmem:[%s274 + $0xcb0] sm:$0xff]
      %v703 = vld [vmem:[%s274 + $0xcb8] sm:$0xff]
      %v704 = vld [vmem:[%s274 + $0xcc0] sm:$0xff]
      %v705 = vld [vmem:[%s274 + $0xcc8] sm:$0xff]
      %v706 = vld [vmem:[%s274 + $0xcd0] sm:$0xff]
      %v707 = vld [vmem:[%s274 + $0xcd8] sm:$0xff]
      %v708 = vld [vmem:[%s274 + $0xce0] sm:$0xff]
      %v709 = vld [vmem:[%s274 + $0xce8] sm:$0xff]
      %v710 = vld [vmem:[%s274 + $0xcf0] sm:$0xff]
      %v711 = vld [vmem:[%s274 + $0xcf8] sm:$0xff]
      %v712 = vld [vmem:[%s274 + $0xd00] sm:$0xff]
      %v713 = vld [vmem:[%s274 + $0xd08] sm:$0xff]
      %v714 = vld [vmem:[%s274 + $0xd10] sm:$0xff]
      %v715 = vld [vmem:[%s274 + $0xd18] sm:$0xff]
      %v716 = vld [vmem:[%s274 + $0xd20] sm:$0xff]
      %v717 = vld [vmem:[%s274 + $0xd28] sm:$0xff]
      %v718 = vld [vmem:[%s274 + $0xd30] sm:$0xff]
      %v719 = vld [vmem:[%s274 + $0xd38] sm:$0xff]
      %v720 = vld [vmem:[%s274 + $0xd40] sm:$0xff]
      %v721 = vld [vmem:[%s274 + $0xd48] sm:$0xff]
      %v722 = vld [vmem:[%s274 + $0xd50] sm:$0xff]
      %v723 = vld [vmem:[%s274 + $0xd58] sm:$0xff]
      %v724 = vld [vmem:[%s274 + $0xd60] sm:$0xff]
      %v725 = vld [vmem:[%s274 + $0xd68] sm:$0xff]
      %v726 = vld [vmem:[%s274 + $0xd70] sm:$0xff]
      %v727 = vld [vmem:[%s274 + $0xd78] sm:$0xff]
      %v728 = vld [vmem:[%s274 + $0xd80] sm:$0xff]
      %v729 = vld [vmem:[%s274 + $0xd88] sm:$0xff]
      %v730 = vld [vmem:[%s274 + $0xd90] sm:$0xff]
      %v731 = vld [vmem:[%s274 + $0xd98] sm:$0xff]
      %v732 = vld [vmem:[%s274 + $0xda0] sm:$0xff]
      %v733 = vld [vmem:[%s274 + $0xda8] sm:$0xff]
      %v734 = vld [vmem:[%s274 + $0xdb0] sm:$0xff]
      %v735 = vld [vmem:[%s274 + $0xdb8] sm:$0xff]
      %v736 = vld [vmem:[%s274 + $0xdc0] sm:$0xff]
      %v737 = vld [vmem:[%s274 + $0xdc8] sm:$0xff]
      %v738 = vld [vmem:[%s274 + $0xdd0] sm:$0xff]
      %v739 = vld [vmem:[%s274 + $0xdd8] sm:$0xff]
      %v740 = vld [vmem:[%s274 + $0xde0] sm:$0xff]
      %v741 = vld [vmem:[%s274 + $0xde8] sm:$0xff]
      %v742 = vld [vmem:[%s274 + $0xdf0] sm:$0xff]
      %v743 = vld [vmem:[%s274 + $0xdf8] sm:$0xff]
      %v744 = vld [vmem:[%s274 + $0xe00] sm:$0xff]
      %v745 = vld [vmem:[%s274 + $0xe08] sm:$0xff]
      %v746 = vld [vmem:[%s274 + $0xe10] sm:$0xff]
      %v747 = vld [vmem:[%s274 + $0xe18] sm:$0xff]
      %v748 = vld [vmem:[%s274 + $0xe20] sm:$0xff]
      %v749 = vld [vmem:[%s274 + $0xe28] sm:$0xff]
      %v750 = vld [vmem:[%s274 + $0xe30] sm:$0xff]
      %v751 = vld [vmem:[%s274 + $0xe38] sm:$0xff]
      %v752 = vld [vmem:[%s274 + $0xe40] sm:$0xff]
      %v753 = vld [vmem:[%s274 + $0xe48] sm:$0xff]
      %v754 = vld [vmem:[%s274 + $0xe50] sm:$0xff]
      %v755 = vld [vmem:[%s274 + $0xe58] sm:$0xff]
      %v756 = vld [vmem:[%s274 + $0xe60] sm:$0xff]
      %v757 = vld [vmem:[%s274 + $0xe68] sm:$0xff]
      %v758 = vld [vmem:[%s274 + $0xe70] sm:$0xff]
      %v759 = vld [vmem:[%s274 + $0xe78] sm:$0xff]
      %v760 = vld [vmem:[%s274 + $0xe80] sm:$0xff]
      %v761 = vld [vmem:[%s274 + $0xe88] sm:$0xff]
      %v762 = vld [vmem:[%s274 + $0xe90] sm:$0xff]
      %v763 = vld [vmem:[%s274 + $0xe98] sm:$0xff]
      %v764 = vld [vmem:[%s274 + $0xea0] sm:$0xff]
      %v765 = vld [vmem:[%s274 + $0xea8] sm:$0xff]
      %v766 = vld [vmem:[%s274 + $0xeb0] sm:$0xff]
      %v767 = vld [vmem:[%s274 + $0xeb8] sm:$0xff]
      %v768 = vld [vmem:[%s274 + $0xec0] sm:$0xff]
      %v769 = vld [vmem:[%s274 + $0xec8] sm:$0xff]
      %v770 = vld [vmem:[%s274 + $0xed0] sm:$0xff]
      %v771 = vld [vmem:[%s274 + $0xed8] sm:$0xff]
      %v772 = vld [vmem:[%s274 + $0xee0] sm:$0xff]
      %v773 = vld [vmem:[%s274 + $0xee8] sm:$0xff]
      %v774 = vld [vmem:[%s274 + $0xef0] sm:$0xff]
      %v775 = vld [vmem:[%s274 + $0xef8] sm:$0xff]
      %v776 = vld [vmem:[%s274 + $0xf00] sm:$0xff]
      %v777 = vld [vmem:[%s274 + $0xf08] sm:$0xff]
      %v778 = vld [vmem:[%s274 + $0xf10] sm:$0xff]
      %v779 = vld [vmem:[%s274 + $0xf18] sm:$0xff]
      %v780 = vld [vmem:[%s274 + $0xf20] sm:$0xff]
      %v781 = vld [vmem:[%s274 + $0xf28] sm:$0xff]
      %v782 = vld [vmem:[%s274 + $0xf30] sm:$0xff]
      %v783 = vld [vmem:[%s274 + $0xf38] sm:$0xff]
      %v784 = vld [vmem:[%s274 + $0xf40] sm:$0xff]
      %v785 = vld [vmem:[%s274 + $0xf48] sm:$0xff]
      %v786 = vld [vmem:[%s274 + $0xf50] sm:$0xff]
      %v787 = vld [vmem:[%s274 + $0xf58] sm:$0xff]
      %v788 = vld [vmem:[%s274 + $0xf60] sm:$0xff]
      %v789 = vld [vmem:[%s274 + $0xf68] sm:$0xff]
      %v790 = vld [vmem:[%s274 + $0xf70] sm:$0xff]
      %v791 = vld [vmem:[%s274 + $0xf78] sm:$0xff]
      %v792 = vld [vmem:[%s274 + $0xf80] sm:$0xff]
      %v793 = vld [vmem:[%s274 + $0xf88] sm:$0xff]
      %v794 = vld [vmem:[%s274 + $0xf90] sm:$0xff]
      %v795 = vld [vmem:[%s274 + $0xf98] sm:$0xff]
      %v796 = vld [vmem:[%s274 + $0xfa0] sm:$0xff]
      %v797 = vld [vmem:[%s274 + $0xfa8] sm:$0xff]
      %v798 = vld [vmem:[%s274 + $0xfb0] sm:$0xff]
      %v799 = vld [vmem:[%s274 + $0xfb8] sm:$0xff]
      %v800 = vld [vmem:[%s274 + $0xfc0] sm:$0xff]
      %v801 = vld [vmem:[%s274 + $0xfc8] sm:$0xff]
      %v802 = vld [vmem:[%s274 + $0xfd0] sm:$0xff]
      %v803 = vld [vmem:[%s274 + $0xfd8] sm:$0xff]
      %v804 = vld [vmem:[%s274 + $0xfe0] sm:$0xff]
      %v805 = vld [vmem:[%s274 + $0xfe8] sm:$0xff]
      %v806 = vld [vmem:[%s274 + $0xff0] sm:$0xff]
      %v807 = vld [vmem:[%s274 + $0xff8] sm:$0xff]
      %v808 = vld [vmem:[%s274 + $0x1000] sm:$0xff]
      %v809 = vld [vmem:[%s274 + $0x1008] sm:$0xff]
      %v810 = vld [vmem:[%s274 + $0x1010] sm:$0xff]
      %v811 = vld [vmem:[%s274 + $0x1018] sm:$0xff]
      %v812 = vld [vmem:[%s274 + $0x1020] sm:$0xff]
      %v813 = vld [vmem:[%s274 + $0x1028] sm:$0xff]
      %v814 = vld [vmem:[%s274 + $0x1030] sm:$0xff]
      %v815 = vld [vmem:[%s274 + $0x1038] sm:$0xff]
      %v816 = vld [vmem:[%s274 + $0x1040] sm:$0xff]
      %v817 = vld [vmem:[%s274 + $0x1048] sm:$0xff]
      %v818 = vld [vmem:[%s274 + $0x1050] sm:$0xff]
      %v819 = vld [vmem:[%s274 + $0x1058] sm:$0xff]
      %v820 = vld [vmem:[%s274 + $0x1060] sm:$0xff]
      %v821 = vld [vmem:[%s274 + $0x1068] sm:$0xff]
      %v822 = vld [vmem:[%s274 + $0x1070] sm:$0xff]
      %v823 = vld [vmem:[%s274 + $0x1078] sm:$0xff]
      %v824 = vld [vmem:[%s274 + $0x1080] sm:$0xff]
      %v825 = vld [vmem:[%s274 + $0x1088] sm:$0xff]
      %v826 = vld [vmem:[%s274 + $0x1090] sm:$0xff]
      %v827 = vld [vmem:[%s274 + $0x1098] sm:$0xff]
      %v828 = vld [vmem:[%s274 + $0x10a0] sm:$0xff]
      %v829 = vld [vmem:[%s274 + $0x10a8] sm:$0xff]
      %v830 = vld [vmem:[%s274 + $0x10b0] sm:$0xff]
      %v831 = vld [vmem:[%s274 + $0x10b8] sm:$0xff]
      %v832 = vld [vmem:[%s274 + $0x10c0] sm:$0xff]
      %v833 = vld [vmem:[%s274 + $0x10c8] sm:$0xff]
      %v834 = vld [vmem:[%s274 + $0x10d0] sm:$0xff]
      %v835 = vld [vmem:[%s274 + $0x10d8] sm:$0xff]
      %v836 = vld [vmem:[%s274 + $0x10e0] sm:$0xff]
      %v837 = vld [vmem:[%s274 + $0x10e8] sm:$0xff]
      %v838 = vld [vmem:[%s274 + $0x10f0] sm:$0xff]
      %v839 = vld [vmem:[%s274 + $0x10f8] sm:$0xff]
      %v840 = vld [vmem:[%s274 + $0x1100] sm:$0xff]
      %v841 = vld [vmem:[%s274 + $0x1108] sm:$0xff]
      %v842 = vld [vmem:[%s274 + $0x1110] sm:$0xff]
      %v843 = vld [vmem:[%s274 + $0x1118] sm:$0xff]
      %v844 = vld [vmem:[%s274 + $0x1120] sm:$0xff]
      %v845 = vld [vmem:[%s274 + $0x1128] sm:$0xff]
      %v846 = vld [vmem:[%s274 + $0x1130] sm:$0xff]
      %v847 = vld [vmem:[%s274 + $0x1138] sm:$0xff]
      %v848 = vld [vmem:[%s274 + $0x1140] sm:$0xff]
      %v849 = vld [vmem:[%s274 + $0x1148] sm:$0xff]
      %v850 = vld [vmem:[%s274 + $0x1150] sm:$0xff]
      %v851 = vld [vmem:[%s274 + $0x1158] sm:$0xff]
      %v852 = vld [vmem:[%s274 + $0x1160] sm:$0xff]
      %v853 = vld [vmem:[%s274 + $0x1168] sm:$0xff]
      %v854 = vld [vmem:[%s274 + $0x1170] sm:$0xff]
      %v855 = vld [vmem:[%s274 + $0x1178] sm:$0xff]
      %v856 = vld [vmem:[%s274 + $0x1180] sm:$0xff]
      %v857 = vld [vmem:[%s274 + $0x1188] sm:$0xff]
      %v858 = vld [vmem:[%s274 + $0x1190] sm:$0xff]
      %v859 = vld [vmem:[%s274 + $0x1198] sm:$0xff]
      %v860 = vld [vmem:[%s274 + $0x11a0] sm:$0xff]
      %v861 = vld [vmem:[%s274 + $0x11a8] sm:$0xff]
      %v862 = vld [vmem:[%s274 + $0x11b0] sm:$0xff]
      %v863 = vld [vmem:[%s274 + $0x11b8] sm:$0xff]
      %v864 = vld [vmem:[%s274 + $0x11c0] sm:$0xff]
      %v865 = vld [vmem:[%s274 + $0x11c8] sm:$0xff]
      %v866 = vld [vmem:[%s274 + $0x11d0] sm:$0xff]
      %v867 = vld [vmem:[%s274 + $0x11d8] sm:$0xff]
      %v868 = vld [vmem:[%s274 + $0x11e0] sm:$0xff]
      %v869 = vld [vmem:[%s274 + $0x11e8] sm:$0xff]
      %v870 = vld [vmem:[%s274 + $0x11f0] sm:$0xff]
      %v871 = vld [vmem:[%s274 + $0x11f8] sm:$0xff]
      %v872 = vld [vmem:[%s274 + $0x1200] sm:$0xff]
      %v873 = vld [vmem:[%s274 + $0x1208] sm:$0xff]
      %v874 = vld [vmem:[%s274 + $0x1210] sm:$0xff]
      %v875 = vld [vmem:[%s274 + $0x1218] sm:$0xff]
      %v876 = vld [vmem:[%s274 + $0x1220] sm:$0xff]
      %v877 = vld [vmem:[%s274 + $0x1228] sm:$0xff]
      %v878 = vld [vmem:[%s274 + $0x1230] sm:$0xff]
      %v879 = vld [vmem:[%s274 + $0x1238] sm:$0xff]
      %v880 = vld [vmem:[%s274 + $0x1240] sm:$0xff]
      %v881 = vld [vmem:[%s274 + $0x1248] sm:$0xff]
      %v882 = vld [vmem:[%s274 + $0x1250] sm:$0xff]
      %v883 = vld [vmem:[%s274 + $0x1258] sm:$0xff]
      %v884 = vld [vmem:[%s274 + $0x1260] sm:$0xff]
      %v885 = vld [vmem:[%s274 + $0x1268] sm:$0xff]
      %v886 = vld [vmem:[%s274 + $0x1270] sm:$0xff]
      %v887 = vld [vmem:[%s274 + $0x1278] sm:$0xff]
      %v888 = vld [vmem:[%s274 + $0x1280] sm:$0xff]
      %v889 = vld [vmem:[%s274 + $0x1288] sm:$0xff]
      %v890 = vld [vmem:[%s274 + $0x1290] sm:$0xff]
      %v891 = vld [vmem:[%s274 + $0x1298] sm:$0xff]
      %v892 = vld [vmem:[%s274 + $0x12a0] sm:$0xff]
      %v893 = vld [vmem:[%s274 + $0x12a8] sm:$0xff]
      %v894 = vld [vmem:[%s274 + $0x12b0] sm:$0xff]
      %v895 = vld [vmem:[%s274 + $0x12b8] sm:$0xff]
      %v896 = vld [vmem:[%s274 + $0x12c0] sm:$0xff]
      %v897 = vld [vmem:[%s274 + $0x12c8] sm:$0xff]
      %v898 = vld [vmem:[%s274 + $0x12d0] sm:$0xff]
      %v899 = vld [vmem:[%s274 + $0x12d8] sm:$0xff]
      %v900 = vld [vmem:[%s274 + $0x12e0] sm:$0xff]
      %v901 = vld [vmem:[%s274 + $0x12e8] sm:$0xff]
      %v902 = vld [vmem:[%s274 + $0x12f0] sm:$0xff]
      %v903 = vld [vmem:[%s274 + $0x12f8] sm:$0xff]
      %v904 = vld [vmem:[%s274 + $0x1300] sm:$0xff]
      %v905 = vld [vmem:[%s274 + $0x1308] sm:$0xff]
      %v906 = vld [vmem:[%s274 + $0x1310] sm:$0xff]
      %v907 = vld [vmem:[%s274 + $0x1318] sm:$0xff]
      %v908 = vld [vmem:[%s274 + $0x1320] sm:$0xff]
      %v909 = vld [vmem:[%s274 + $0x1328] sm:$0xff]
      %v910 = vld [vmem:[%s274 + $0x1330] sm:$0xff]
      %v911 = vld [vmem:[%s274 + $0x1338] sm:$0xff]
      %v912 = vld [vmem:[%s274 + $0x1340] sm:$0xff]
      %v913 = vld [vmem:[%s274 + $0x1348] sm:$0xff]
      %v914 = vld [vmem:[%s274 + $0x1350] sm:$0xff]
      %v915 = vld [vmem:[%s274 + $0x1358] sm:$0xff]
      %v916 = vld [vmem:[%s274 + $0x1360] sm:$0xff]
      %v917 = vld [vmem:[%s274 + $0x1368] sm:$0xff]
      %v918 = vld [vmem:[%s274 + $0x1370] sm:$0xff]
      %v919 = vld [vmem:[%s274 + $0x1378] sm:$0xff]
      %v920 = vld [vmem:[%s274 + $0x1380] sm:$0xff]
      %v921 = vld [vmem:[%s274 + $0x1388] sm:$0xff]
      %v922 = vld [vmem:[%s274 + $0x1390] sm:$0xff]
      %v923 = vld [vmem:[%s274 + $0x1398] sm:$0xff]
      %v924 = vld [vmem:[%s274 + $0x13a0] sm:$0xff]
      %v925 = vld [vmem:[%s274 + $0x13a8] sm:$0xff]
      %v926 = vld [vmem:[%s274 + $0x13b0] sm:$0xff]
      %v927 = vld [vmem:[%s274 + $0x13b8] sm:$0xff]
      %v928 = vld [vmem:[%s274 + $0x13c0] sm:$0xff]
      %v929 = vld [vmem:[%s274 + $0x13c8] sm:$0xff]
      %v930 = vld [vmem:[%s274 + $0x13d0] sm:$0xff]
      %v931 = vld [vmem:[%s274 + $0x13d8] sm:$0xff]
      %v932 = vld [vmem:[%s274 + $0x13e0] sm:$0xff]
      %v933 = vld [vmem:[%s274 + $0x13e8] sm:$0xff]
      %v934 = vld [vmem:[%s274 + $0x13f0] sm:$0xff]
      %v935 = vld [vmem:[%s274 + $0x13f8] sm:$0xff]
      %v936 = vld [vmem:[%s274 + $0x1400] sm:$0xff]
      %v937 = vld [vmem:[%s274 + $0x1408] sm:$0xff]
      %v938 = vld [vmem:[%s274 + $0x1410] sm:$0xff]
      %v939 = vld [vmem:[%s274 + $0x1418] sm:$0xff]
      %v940 = vld [vmem:[%s274 + $0x1420] sm:$0xff]
      %v941 = vld [vmem:[%s274 + $0x1428] sm:$0xff]
      %v942 = vld [vmem:[%s274 + $0x1430] sm:$0xff]
      %v943 = vld [vmem:[%s274 + $0x1438] sm:$0xff]
      %v944 = vld [vmem:[%s274 + $0x1440] sm:$0xff]
      %v945 = vld [vmem:[%s274 + $0x1448] sm:$0xff]
      %v946 = vld [vmem:[%s274 + $0x1450] sm:$0xff]
      %v947 = vld [vmem:[%s274 + $0x1458] sm:$0xff]
      %v948 = vld [vmem:[%s274 + $0x1460] sm:$0xff]
      %v949 = vld [vmem:[%s274 + $0x1468] sm:$0xff]
      %v950 = vld [vmem:[%s274 + $0x1470] sm:$0xff]
      %v951 = vld [vmem:[%s274 + $0x1478] sm:$0xff]
      %v952 = vld [vmem:[%s274 + $0x1480] sm:$0xff]
      %v953 = vld [vmem:[%s274 + $0x1488] sm:$0xff]
      %v954 = vld [vmem:[%s274 + $0x1490] sm:$0xff]
      %v955 = vld [vmem:[%s274 + $0x1498] sm:$0xff]
      %v956 = vld [vmem:[%s274 + $0x14a0] sm:$0xff]
      %v957 = vld [vmem:[%s274 + $0x14a8] sm:$0xff]
      %v958 = vld [vmem:[%s274 + $0x14b0] sm:$0xff]
      %v959 = vld [vmem:[%s274 + $0x14b8] sm:$0xff]
      %v960 = vld [vmem:[%s274 + $0x14c0] sm:$0xff]
      %v961 = vld [vmem:[%s274 + $0x14c8] sm:$0xff]
      %v962 = vld [vmem:[%s274 + $0x14d0] sm:$0xff]
      %v963 = vld [vmem:[%s274 + $0x14d8] sm:$0xff]
      %v964 = vld [vmem:[%s274 + $0x14e0] sm:$0xff]
      %v965 = vld [vmem:[%s274 + $0x14e8] sm:$0xff]
      %v966 = vld [vmem:[%s274 + $0x14f0] sm:$0xff]
      %v967 = vld [vmem:[%s274 + $0x14f8] sm:$0xff]
      %v968 = vld [vmem:[%s274 + $0x1500] sm:$0xff]
      %v969 = vld [vmem:[%s274 + $0x1508] sm:$0xff]
      %v970 = vld [vmem:[%s274 + $0x1510] sm:$0xff]
      %v971 = vld [vmem:[%s274 + $0x1518] sm:$0xff]
      %v972 = vld [vmem:[%s274 + $0x1520] sm:$0xff]
      %v973 = vld [vmem:[%s274 + $0x1528] sm:$0xff]
      %v974 = vld [vmem:[%s274 + $0x1530] sm:$0xff]
      %v975 = vld [vmem:[%s274 + $0x1538] sm:$0xff]
      %v976 = vld [vmem:[%s274 + $0x1540] sm:$0xff]
      %v977 = vld [vmem:[%s274 + $0x1548] sm:$0xff]
      %v978 = vld [vmem:[%s274 + $0x1550] sm:$0xff]
      %v979 = vld [vmem:[%s274 + $0x1558] sm:$0xff]
      %v980 = vld [vmem:[%s274 + $0x1560] sm:$0xff]
      %v981 = vld [vmem:[%s274 + $0x1568] sm:$0xff]
      %v982 = vld [vmem:[%s274 + $0x1570] sm:$0xff]
      %v983 = vld [vmem:[%s274 + $0x1578] sm:$0xff]
      %v984 = vld [vmem:[%s274 + $0x1580] sm:$0xff]
      %v985 = vld [vmem:[%s274 + $0x1588] sm:$0xff]
      %v986 = vld [vmem:[%s274 + $0x1590] sm:$0xff]
      %v987 = vld [vmem:[%s274 + $0x1598] sm:$0xff]
      %v988 = vld [vmem:[%s274 + $0x15a0] sm:$0xff]
      %v989 = vld [vmem:[%s274 + $0x15a8] sm:$0xff]
      %v990 = vld [vmem:[%s274 + $0x15b0] sm:$0xff]
      %v991 = vld [vmem:[%s274 + $0x15b8] sm:$0xff]
      %v992 = vld [vmem:[%s274 + $0x15c0] sm:$0xff]
      %v993 = vld [vmem:[%s274 + $0x15c8] sm:$0xff]
      %v994 = vld [vmem:[%s274 + $0x15d0] sm:$0xff]
      %v995 = vld [vmem:[%s274 + $0x15d8] sm:$0xff]
      %v996 = vld [vmem:[%s274 + $0x15e0] sm:$0xff]
      %v997 = vld [vmem:[%s274 + $0x15e8] sm:$0xff]
      %v998 = vld [vmem:[%s274 + $0x15f0] sm:$0xff]
      %v999 = vld [vmem:[%s274 + $0x15f8] sm:$0xff]
      %v1000 = vld [vmem:[%s274 + $0x1600] sm:$0xff]
      %v1001 = vld [vmem:[%s274 + $0x1608] sm:$0xff]
      %v1002 = vld [vmem:[%s274 + $0x1610] sm:$0xff]
      %v1003 = vld [vmem:[%s274 + $0x1618] sm:$0xff]
      %v1004 = vld [vmem:[%s274 + $0x1620] sm:$0xff]
      %v1005 = vld [vmem:[%s274 + $0x1628] sm:$0xff]
      %v1006 = vld [vmem:[%s274 + $0x1630] sm:$0xff]
      %v1007 = vld [vmem:[%s274 + $0x1638] sm:$0xff]
      %v1008 = vld [vmem:[%s274 + $0x1640] sm:$0xff]
      %v1009 = vld [vmem:[%s274 + $0x1648] sm:$0xff]
      %v1010 = vld [vmem:[%s274 + $0x1650] sm:$0xff]
      %v1011 = vld [vmem:[%s274 + $0x1658] sm:$0xff]
      %v1012 = vld [vmem:[%s274 + $0x1660] sm:$0xff]
      %v1013 = vld [vmem:[%s274 + $0x1668] sm:$0xff]
      %v1014 = vld [vmem:[%s274 + $0x1670] sm:$0xff]
      %v1015 = vld [vmem:[%s274 + $0x1678] sm:$0xff]
      %v1016 = vld [vmem:[%s274 + $0x1680] sm:$0xff]
      %v1017 = vld [vmem:[%s274 + $0x1688] sm:$0xff]
      %v1018 = vld [vmem:[%s274 + $0x1690] sm:$0xff]
      %v1019 = vld [vmem:[%s274 + $0x1698] sm:$0xff]
      %v1020 = vld [vmem:[%s274 + $0x16a0] sm:$0xff]
      %v1021 = vld [vmem:[%s274 + $0x16a8] sm:$0xff]
      %v1022 = vld [vmem:[%s274 + $0x16b0] sm:$0xff]
      %v1023 = vld [vmem:[%s274 + $0x16b8] sm:$0xff]
      %v1024 = vld [vmem:[%s274 + $0x16c0] sm:$0xff]
      %v1025 = vld [vmem:[%s274 + $0x16c8] sm:$0xff]
      %v1026 = vld [vmem:[%s274 + $0x16d0] sm:$0xff]
      %v1027 = vld [vmem:[%s274 + $0x16d8] sm:$0xff]
      %v1028 = vld [vmem:[%s274 + $0x16e0] sm:$0xff]
      %v1029 = vld [vmem:[%s274 + $0x16e8] sm:$0xff]
      %v1030 = vld [vmem:[%s274 + $0x16f0] sm:$0xff]
      %v1031 = vld [vmem:[%s274 + $0x16f8] sm:$0xff]
      %v1032 = vld [vmem:[%s274 + $0x1700] sm:$0xff]
      %v1033 = vld [vmem:[%s274 + $0x1708] sm:$0xff]
      %v1034 = vld [vmem:[%s274 + $0x1710] sm:$0xff]
      %v1035 = vld [vmem:[%s274 + $0x1718] sm:$0xff]
      %v1036 = vld [vmem:[%s274 + $0x1720] sm:$0xff]
      %v1037 = vld [vmem:[%s274 + $0x1728] sm:$0xff]
      %v1038 = vld [vmem:[%s274 + $0x1730] sm:$0xff]
      %v1039 = vld [vmem:[%s274 + $0x1738] sm:$0xff]
      %v1040 = vld [vmem:[%s274 + $0x1740] sm:$0xff]
      %v1041 = vld [vmem:[%s274 + $0x1748] sm:$0xff]
      %v1042 = vld [vmem:[%s274 + $0x1750] sm:$0xff]
      %v1043 = vld [vmem:[%s274 + $0x1758] sm:$0xff]
      %v1044 = vld [vmem:[%s274 + $0x1760] sm:$0xff]
      %v1045 = vld [vmem:[%s274 + $0x1768] sm:$0xff]
      %v1046 = vld [vmem:[%s274 + $0x1770] sm:$0xff]
      %v1047 = vld [vmem:[%s274 + $0x1778] sm:$0xff]
      %v1048 = vld [vmem:[%s274 + $0x1780] sm:$0xff]
      %v1049 = vld [vmem:[%s274 + $0x1788] sm:$0xff]
      %v1050 = vld [vmem:[%s274 + $0x1790] sm:$0xff]
      %v1051 = vld [vmem:[%s274 + $0x1798] sm:$0xff]
      %v1052 = vld [vmem:[%s274 + $0x17a0] sm:$0xff]
      %v1053 = vld [vmem:[%s274 + $0x17a8] sm:$0xff]
      %v1054 = vld [vmem:[%s274 + $0x17b0] sm:$0xff]
      %v1055 = vld [vmem:[%s274 + $0x17b8] sm:$0xff]
      %v1056 = vld [vmem:[%s274 + $0x17c0] sm:$0xff]
      %v1057 = vld [vmem:[%s274 + $0x17c8] sm:$0xff]
      %v1058 = vld [vmem:[%s274 + $0x17d0] sm:$0xff]
      %v1059 = vld [vmem:[%s274 + $0x17d8] sm:$0xff]
      %v1060 = vld [vmem:[%s274 + $0x17e0] sm:$0xff]
      %v1061 = vld [vmem:[%s274 + $0x17e8] sm:$0xff]
      %v1062 = vld [vmem:[%s274 + $0x17f0] sm:$0xff]
      %v1063 = vld [vmem:[%s274 + $0x17f8] sm:$0xff]
      %v1064 = vld [vmem:[%s274 + $0x1800] sm:$0xff]
      %v1065 = vld [vmem:[%s274 + $0x1808] sm:$0xff]
      %v1066 = vld [vmem:[%s274 + $0x1810] sm:$0xff]
      %v1067 = vld [vmem:[%s274 + $0x1818] sm:$0xff]
      %v1068 = vld [vmem:[%s274 + $0x1820] sm:$0xff]
      %v1069 = vld [vmem:[%s274 + $0x1828] sm:$0xff]
      %v1070 = vld [vmem:[%s274 + $0x1830] sm:$0xff]
      %v1071 = vld [vmem:[%s274 + $0x1838] sm:$0xff]
      %v1072 = vld [vmem:[%s274 + $0x1840] sm:$0xff]
      %v1073 = vld [vmem:[%s274 + $0x1848] sm:$0xff]
      %v1074 = vld [vmem:[%s274 + $0x1850] sm:$0xff]
      %v1075 = vld [vmem:[%s274 + $0x1858] sm:$0xff]
      %v1076 = vld [vmem:[%s274 + $0x1860] sm:$0xff]
      %v1077 = vld [vmem:[%s274 + $0x1868] sm:$0xff]
      %v1078 = vld [vmem:[%s274 + $0x1870] sm:$0xff]
      %v1079 = vld [vmem:[%s274 + $0x1878] sm:$0xff]
      %v1080 = vld [vmem:[%s278] sm:$0xf]
      %v1082 = vlaneseq
      %v1083 = vshrl.u32 %v1082, 7
      %v1084 = vsub.s32 0, %v1083
      %v1085 = vrot.slane %v1080, %v1084
      %v1086 = vlaneseq
      %v1087 = vshrl.u32 %v1086, 7
      %v1088 = vsub.s32 1, %v1087
      %v1089 = vrot.slane %v1080, %v1088
      %v1090 = vlaneseq
      %v1091 = vshrl.u32 %v1090, 7
      %v1092 = vsub.s32 2, %v1091
      %v1093 = vrot.slane %v1080, %v1092
      %v1094 = vlaneseq
      %v1095 = vshrl.u32 %v1094, 7
      %v1096 = vsub.s32 3, %v1095
      %v1097 = vrot.slane %v1080, %v1096
      %v1106 = vcombine.high %v292, %v292
      %v1108 = vunpack.c.l.s4 1966171168
      %v1109 = vunpack.c.0.s8 %v1108
      %v1110 = vlaneseq
      %v1111 = vshrl.u32 %v1110, 7
      %v1112 = vsub.s32 %v1109, %v1111
      %v1113 = vrot.slane %v292, %v1112
      %v1115 = vunpack.c.l.s4 1966171168
      %v1116 = vunpack.c.0.s8 %v1115
      %v1117 = vlaneseq
      %v1118 = vshrl.u32 %v1117, 7
      %v1119 = vsub.s32 %v1116, %v1118
      %v1120 = vrot.slane %v1106, %v1119
      %v1121 = vcombine.high %v1113, %v1113
      %v1122 = vcombine.high %v1120, %v1120
      %v1124 = vunpack.c.l.s4 1966171168
      %v1125 = vunpack.c.0.s8 %v1124
      %v1126 = vlaneseq
      %v1127 = vshrl.u32 %v1126, 7
      %v1128 = vsub.s32 %v1125, %v1127
      %v1129 = vrot.slane %v1113, %v1128
      %v1131 = vunpack.c.l.s4 1966171168
      %v1132 = vunpack.c.0.s8 %v1131
      %v1133 = vlaneseq
      %v1134 = vshrl.u32 %v1133, 7
      %v1135 = vsub.s32 %v1132, %v1134
      %v1136 = vrot.slane %v1120, %v1135
      %v1138 = vunpack.c.l.s4 1966171168
      %v1139 = vunpack.c.0.s8 %v1138
      %v1140 = vlaneseq
      %v1141 = vshrl.u32 %v1140, 7
      %v1142 = vsub.s32 %v1139, %v1141
      %v1143 = vrot.slane %v1121, %v1142
      %v1145 = vunpack.c.l.s4 1966171168
      %v1146 = vunpack.c.0.s8 %v1145
      %v1147 = vlaneseq
      %v1148 = vshrl.u32 %v1147, 7
      %v1149 = vsub.s32 %v1146, %v1148
      %v1150 = vrot.slane %v1122, %v1149
      %v1151 = vcombine.high %v1129, %v1129
      %v1152 = vcombine.high %v1136, %v1136
      %v1153 = vcombine.high %v1143, %v1143
      %v1154 = vcombine.high %v1150, %v1150
      %v1155 = vcombine.high %v293, %v293
      %v1157 = vunpack.c.l.s4 1966171168
      %v1158 = vunpack.c.0.s8 %v1157
      %v1159 = vlaneseq
      %v1160 = vshrl.u32 %v1159, 7
      %v1161 = vsub.s32 %v1158, %v1160
      %v1162 = vrot.slane %v293, %v1161
      %v1164 = vunpack.c.l.s4 1966171168
      %v1165 = vunpack.c.0.s8 %v1164
      %v1166 = vlaneseq
      %v1167 = vshrl.u32 %v1166, 7
      %v1168 = vsub.s32 %v1165, %v1167
      %v1169 = vrot.slane %v1155, %v1168
      %v1170 = vcombine.high %v1162, %v1162
      %v1171 = vcombine.high %v1169, %v1169
      %v1173 = vunpack.c.l.s4 1966171168
      %v1174 = vunpack.c.0.s8 %v1173
      %v1175 = vlaneseq
      %v1176 = vshrl.u32 %v1175, 7
      %v1177 = vsub.s32 %v1174, %v1176
      %v1178 = vrot.slane %v1162, %v1177
      %v1180 = vunpack.c.l.s4 1966171168
      %v1181 = vunpack.c.0.s8 %v1180
      %v1182 = vlaneseq
      %v1183 = vshrl.u32 %v1182, 7
      %v1184 = vsub.s32 %v1181, %v1183
      %v1185 = vrot.slane %v1169, %v1184
      %v1187 = vunpack.c.l.s4 1966171168
      %v1188 = vunpack.c.0.s8 %v1187
      %v1189 = vlaneseq
      %v1190 = vshrl.u32 %v1189, 7
      %v1191 = vsub.s32 %v1188, %v1190
      %v1192 = vrot.slane %v1170, %v1191
      %v1194 = vunpack.c.l.s4 1966171168
      %v1195 = vunpack.c.0.s8 %v1194
      %v1196 = vlaneseq
      %v1197 = vshrl.u32 %v1196, 7
      %v1198 = vsub.s32 %v1195, %v1197
      %v1199 = vrot.slane %v1171, %v1198
      %v1200 = vcombine.high %v1178, %v1178
      %v1201 = vcombine.high %v1185, %v1185
      %v1202 = vcombine.high %v1192, %v1192
      %v1203 = vcombine.high %v1199, %v1199
      %v1204 = vcombine.high %v294, %v294
      %v1206 = vunpack.c.l.s4 1966171168
      %v1207 = vunpack.c.0.s8 %v1206
      %v1208 = vlaneseq
      %v1209 = vshrl.u32 %v1208, 7
      %v1210 = vsub.s32 %v1207, %v1209
      %v1211 = vrot.slane %v294, %v1210
      %v1213 = vunpack.c.l.s4 1966171168
      %v1214 = vunpack.c.0.s8 %v1213
      %v1215 = vlaneseq
      %v1216 = vshrl.u32 %v1215, 7
      %v1217 = vsub.s32 %v1214, %v1216
      %v1218 = vrot.slane %v1204, %v1217
      %v1219 = vcombine.high %v1211, %v1211
      %v1220 = vcombine.high %v1218, %v1218
      %v1222 = vunpack.c.l.s4 1966171168
      %v1223 = vunpack.c.0.s8 %v1222
      %v1224 = vlaneseq
      %v1225 = vshrl.u32 %v1224, 7
      %v1226 = vsub.s32 %v1223, %v1225
      %v1227 = vrot.slane %v1211, %v1226
      %v1229 = vunpack.c.l.s4 1966171168
      %v1230 = vunpack.c.0.s8 %v1229
      %v1231 = vlaneseq
      %v1232 = vshrl.u32 %v1231, 7
      %v1233 = vsub.s32 %v1230, %v1232
      %v1234 = vrot.slane %v1218, %v1233
      %v1236 = vunpack.c.l.s4 1966171168
      %v1237 = vunpack.c.0.s8 %v1236
      %v1238 = vlaneseq
      %v1239 = vshrl.u32 %v1238, 7
      %v1240 = vsub.s32 %v1237, %v1239
      %v1241 = vrot.slane %v1219, %v1240
      %v1243 = vunpack.c.l.s4 1966171168
      %v1244 = vunpack.c.0.s8 %v1243
      %v1245 = vlaneseq
      %v1246 = vshrl.u32 %v1245, 7
      %v1247 = vsub.s32 %v1244, %v1246
      %v1248 = vrot.slane %v1220, %v1247
      %v1249 = vcombine.high %v1227, %v1227
      %v1250 = vcombine.high %v1234, %v1234
      %v1251 = vcombine.high %v1241, %v1241
      %v1252 = vcombine.high %v1248, %v1248
      %v1254 = vunpack.c.l.s4 1966171168
      %v1255 = vunpack.c.0.s8 %v1254
      %v1256 = vlaneseq
      %v1257 = vshrl.u32 %v1256, 7
      %v1258 = vsub.s32 %v1255, %v1257
      %v1259 = vrot.slane %v295, %v1258
      %v1261 = vunpack.c.l.s4 1966171168
      %v1262 = vunpack.c.0.s8 %v1261
      %v1263 = vlaneseq
      %v1264 = vshrl.u32 %v1263, 7
      %v1265 = vsub.s32 %v1262, %v1264
      %v1266 = vrot.slane %v1259, %v1265
      %v2075 = vunpack.c.l.b16 %v296
      %v2076 = vunpack.c.h.b16 %v296
      %v2077 = vunpack.c.l.b16 %v297
      %v2078 = vunpack.c.h.b16 %v297
      %v2079 = vunpack.c.l.b16 %v298
      %v2080 = vunpack.c.h.b16 %v298
      %v2081 = vunpack.c.l.b16 %v299
      %v2082 = vunpack.c.h.b16 %v299
      %v2083 = vunpack.c.l.b16 %v300
      %v2084 = vunpack.c.h.b16 %v300
      %v2085 = vunpack.c.l.b16 %v301
      %v2086 = vunpack.c.h.b16 %v301
      %v2087 = vunpack.c.l.b16 %v302
      %v2088 = vunpack.c.h.b16 %v302
      %v2089 = vunpack.c.l.b16 %v303
      %v2090 = vunpack.c.h.b16 %v303
      %v2091 = vunpack.c.l.b16 %v304
      %v2092 = vunpack.c.h.b16 %v304
      %v2093 = vunpack.c.l.b16 %v305
      %v2094 = vunpack.c.h.b16 %v305
      %v2095 = vunpack.c.l.b16 %v306
      %v2096 = vunpack.c.h.b16 %v306
      %v2097 = vunpack.c.l.b16 %v307
      %v2098 = vunpack.c.h.b16 %v307
      %v2099 = vunpack.c.l.b16 %v308
      %v2100 = vunpack.c.h.b16 %v308
      %v2101 = vunpack.c.l.b16 %v309
      %v2102 = vunpack.c.h.b16 %v309
      %v2103 = vunpack.c.l.b16 %v310
      %v2104 = vunpack.c.h.b16 %v310
      %v2105 = vunpack.c.l.b16 %v311
      %v2106 = vunpack.c.h.b16 %v311
      %v2107 = vunpack.c.l.b16 %v312
      %v2108 = vunpack.c.h.b16 %v312
      %v2109 = vunpack.c.l.b16 %v313
      %v2110 = vunpack.c.h.b16 %v313
      %v2111 = vunpack.c.l.b16 %v314
      %v2112 = vunpack.c.h.b16 %v314
      %v2113 = vunpack.c.l.b16 %v315
      %v2114 = vunpack.c.h.b16 %v315
      %v2115 = vunpack.c.l.b16 %v316
      %v2116 = vunpack.c.h.b16 %v316
      %v2117 = vunpack.c.l.b16 %v317
      %v2118 = vunpack.c.h.b16 %v317
      %v2119 = vunpack.c.l.b16 %v318
      %v2120 = vunpack.c.h.b16 %v318
      %v2121 = vunpack.c.l.b16 %v319
      %v2122 = vunpack.c.h.b16 %v319
      %v2123 = vunpack.c.l.b16 %v320
      %v2124 = vunpack.c.h.b16 %v320
      %v2125 = vunpack.c.l.b16 %v321
      %v2126 = vunpack.c.h.b16 %v321
      %v2127 = vunpack.c.l.b16 %v322
      %v2128 = vunpack.c.h.b16 %v322
      %v2129 = vunpack.c.l.b16 %v323
      %v2130 = vunpack.c.h.b16 %v323
      %v2131 = vunpack.c.l.b16 %v324
      %v2132 = vunpack.c.h.b16 %v324
      %v2133 = vunpack.c.l.b16 %v325
      %v2134 = vunpack.c.h.b16 %v325
      %v2135 = vunpack.c.l.b16 %v326
      %v2136 = vunpack.c.h.b16 %v326
      %v2137 = vunpack.c.l.b16 %v327
      %v2138 = vunpack.c.h.b16 %v327
      %v2139 = vunpack.c.l.b16 %v328
      %v2140 = vunpack.c.h.b16 %v328
      %v2141 = vunpack.c.l.b16 %v329
      %v2142 = vunpack.c.h.b16 %v329
      %v2143 = vunpack.c.l.b16 %v330
      %v2144 = vunpack.c.h.b16 %v330
      %v2145 = vunpack.c.l.b16 %v331
      %v2146 = vunpack.c.h.b16 %v331
      %v2147 = vunpack.c.l.b16 %v332
      %v2148 = vunpack.c.h.b16 %v332
      %v2149 = vunpack.c.l.b16 %v333
      %v2150 = vunpack.c.h.b16 %v333
      %v2151 = vunpack.c.l.b16 %v334
      %v2152 = vunpack.c.h.b16 %v334
      %v2153 = vunpack.c.l.b16 %v335
      %v2154 = vunpack.c.h.b16 %v335
      %v2155 = vunpack.c.l.b16 %v336
      %v2156 = vunpack.c.h.b16 %v336
      %v2157 = vunpack.c.l.b16 %v337
      %v2158 = vunpack.c.h.b16 %v337
      %v2159 = vunpack.c.l.b16 %v338
      %v2160 = vunpack.c.h.b16 %v338
      %v2161 = vunpack.c.l.b16 %v339
      %v2162 = vunpack.c.h.b16 %v339
      %v2163 = vunpack.c.l.b16 %v340
      %v2164 = vunpack.c.h.b16 %v340
      %v2165 = vunpack.c.l.b16 %v341
      %v2166 = vunpack.c.h.b16 %v341
      %v2167 = vunpack.c.l.b16 %v342
      %v2168 = vunpack.c.h.b16 %v342
      %v2169 = vunpack.c.l.b16 %v343
      %v2170 = vunpack.c.h.b16 %v343
      %v2171 = vunpack.c.l.b16 %v344
      %v2172 = vunpack.c.h.b16 %v344
      %v2173 = vunpack.c.l.b16 %v345
      %v2174 = vunpack.c.h.b16 %v345
      %v2175 = vunpack.c.l.b16 %v346
      %v2176 = vunpack.c.h.b16 %v346
      %v2177 = vunpack.c.l.b16 %v347
      %v2178 = vunpack.c.h.b16 %v347
      %v2179 = vunpack.c.l.b16 %v348
      %v2180 = vunpack.c.h.b16 %v348
      %v2181 = vunpack.c.l.b16 %v349
      %v2182 = vunpack.c.h.b16 %v349
      %v2183 = vunpack.c.l.b16 %v350
      %v2184 = vunpack.c.h.b16 %v350
      %v2185 = vunpack.c.l.b16 %v351
      %v2186 = vunpack.c.h.b16 %v351
      %v2187 = vunpack.c.l.b16 %v352
      %v2188 = vunpack.c.h.b16 %v352
      %v2189 = vunpack.c.l.b16 %v353
      %v2190 = vunpack.c.h.b16 %v353
      %v2191 = vunpack.c.l.b16 %v354
      %v2192 = vunpack.c.h.b16 %v354
      %v2193 = vunpack.c.l.b16 %v355
      %v2194 = vunpack.c.h.b16 %v355
      %v2195 = vunpack.c.l.b16 %v356
      %v2196 = vunpack.c.h.b16 %v356
      %v2197 = vunpack.c.l.b16 %v357
      %v2198 = vunpack.c.h.b16 %v357
      %v2199 = vunpack.c.l.b16 %v358
      %v2200 = vunpack.c.h.b16 %v358
      %v2201 = vunpack.c.l.b16 %v359
      %v2202 = vunpack.c.h.b16 %v359
      %v2203 = vunpack.c.l.b16 %v360
      %v2204 = vunpack.c.h.b16 %v360
      %v2205 = vunpack.c.l.b16 %v361
      %v2206 = vunpack.c.h.b16 %v361
      %v2207 = vunpack.c.l.b16 %v362
      %v2208 = vunpack.c.h.b16 %v362
      %v2209 = vunpack.c.l.b16 %v363
      %v2210 = vunpack.c.h.b16 %v363
      %v2211 = vunpack.c.l.b16 %v364
      %v2212 = vunpack.c.h.b16 %v364
      %v2213 = vunpack.c.l.b16 %v365
      %v2214 = vunpack.c.h.b16 %v365
      %v2215 = vunpack.c.l.b16 %v366
      %v2216 = vunpack.c.h.b16 %v366
      %v2217 = vunpack.c.l.b16 %v367
      %v2218 = vunpack.c.h.b16 %v367
      %v2219 = vunpack.c.l.b16 %v368
      %v2220 = vunpack.c.h.b16 %v368
      %v2221 = vunpack.c.l.b16 %v369
      %v2222 = vunpack.c.h.b16 %v369
      %v2223 = vunpack.c.l.b16 %v370
      %v2224 = vunpack.c.h.b16 %v370
      %v2225 = vunpack.c.l.b16 %v371
      %v2226 = vunpack.c.h.b16 %v371
      %v2227 = vunpack.c.l.b16 %v372
      %v2228 = vunpack.c.h.b16 %v372
      %v2229 = vunpack.c.l.b16 %v373
      %v2230 = vunpack.c.h.b16 %v373
      %v2231 = vunpack.c.l.b16 %v374
      %v2232 = vunpack.c.h.b16 %v374
      %v2233 = vunpack.c.l.b16 %v375
      %v2234 = vunpack.c.h.b16 %v375
      %v2235 = vunpack.c.l.b16 %v376
      %v2236 = vunpack.c.h.b16 %v376
      %v2237 = vunpack.c.l.b16 %v377
      %v2238 = vunpack.c.h.b16 %v377
      %v2239 = vunpack.c.l.b16 %v378
      %v2240 = vunpack.c.h.b16 %v378
      %v2241 = vunpack.c.l.b16 %v379
      %v2242 = vunpack.c.h.b16 %v379
      %v2243 = vunpack.c.l.b16 %v380
      %v2244 = vunpack.c.h.b16 %v380
      %v2245 = vunpack.c.l.b16 %v381
      %v2246 = vunpack.c.h.b16 %v381
      %v2247 = vunpack.c.l.b16 %v382
      %v2248 = vunpack.c.h.b16 %v382
      %v2249 = vunpack.c.l.b16 %v383
      %v2250 = vunpack.c.h.b16 %v383
      %v2251 = vunpack.c.l.b16 %v384
      %v2252 = vunpack.c.h.b16 %v384
      %v2253 = vunpack.c.l.b16 %v385
      %v2254 = vunpack.c.h.b16 %v385
      %v2255 = vunpack.c.l.b16 %v386
      %v2256 = vunpack.c.h.b16 %v386
      %v2257 = vunpack.c.l.b16 %v387
      %v2258 = vunpack.c.h.b16 %v387
      %v2259 = vunpack.c.l.b16 %v388
      %v2260 = vunpack.c.h.b16 %v388
      %v2261 = vunpack.c.l.b16 %v389
      %v2262 = vunpack.c.h.b16 %v389
      %v2263 = vunpack.c.l.b16 %v390
      %v2264 = vunpack.c.h.b16 %v390
      %v2265 = vunpack.c.l.b16 %v391
      %v2266 = vunpack.c.h.b16 %v391
      %v2267 = vunpack.c.l.b16 %v392
      %v2268 = vunpack.c.h.b16 %v392
      %v2269 = vunpack.c.l.b16 %v393
      %v2270 = vunpack.c.h.b16 %v393
      %v2271 = vunpack.c.l.b16 %v394
      %v2272 = vunpack.c.h.b16 %v394
      %v2273 = vunpack.c.l.b16 %v395
      %v2274 = vunpack.c.h.b16 %v395
      %v2275 = vunpack.c.l.b16 %v396
      %v2276 = vunpack.c.h.b16 %v396
      %v2277 = vunpack.c.l.b16 %v397
      %v2278 = vunpack.c.h.b16 %v397
      %v2279 = vunpack.c.l.b16 %v398
      %v2280 = vunpack.c.h.b16 %v398
      %v2281 = vunpack.c.l.b16 %v399
      %v2282 = vunpack.c.h.b16 %v399
      %v2283 = vunpack.c.l.b16 %v400
      %v2284 = vunpack.c.h.b16 %v400
      %v2285 = vunpack.c.l.b16 %v401
      %v2286 = vunpack.c.h.b16 %v401
      %v2287 = vunpack.c.l.b16 %v402
      %v2288 = vunpack.c.h.b16 %v402
      %v2289 = vunpack.c.l.b16 %v403
      %v2290 = vunpack.c.h.b16 %v403
      %v2291 = vunpack.c.l.b16 %v404
      %v2292 = vunpack.c.h.b16 %v404
      %v2293 = vunpack.c.l.b16 %v405
      %v2294 = vunpack.c.h.b16 %v405
      %v2295 = vunpack.c.l.b16 %v406
      %v2296 = vunpack.c.h.b16 %v406
      %v2297 = vunpack.c.l.b16 %v407
      %v2298 = vunpack.c.h.b16 %v407
      %v2299 = vunpack.c.l.b16 %v408
      %v2300 = vunpack.c.h.b16 %v408
      %v2301 = vunpack.c.l.b16 %v409
      %v2302 = vunpack.c.h.b16 %v409
      %v2303 = vunpack.c.l.b16 %v410
      %v2304 = vunpack.c.h.b16 %v410
      %v2305 = vunpack.c.l.b16 %v411
      %v2306 = vunpack.c.h.b16 %v411
      %v2307 = vunpack.c.l.b16 %v412
      %v2308 = vunpack.c.h.b16 %v412
      %v2309 = vunpack.c.l.b16 %v413
      %v2310 = vunpack.c.h.b16 %v413
      %v2311 = vunpack.c.l.b16 %v414
      %v2312 = vunpack.c.h.b16 %v414
      %v2313 = vunpack.c.l.b16 %v415
      %v2314 = vunpack.c.h.b16 %v415
      %v2315 = vunpack.c.l.b16 %v416
      %v2316 = vunpack.c.h.b16 %v416
      %v2317 = vunpack.c.l.b16 %v417
      %v2318 = vunpack.c.h.b16 %v417
      %v2319 = vunpack.c.l.b16 %v418
      %v2320 = vunpack.c.h.b16 %v418
      %v2321 = vunpack.c.l.b16 %v419
      %v2322 = vunpack.c.h.b16 %v419
      %v2323 = vunpack.c.l.b16 %v420
      %v2324 = vunpack.c.h.b16 %v420
      %v2325 = vunpack.c.l.b16 %v421
      %v2326 = vunpack.c.h.b16 %v421
      %v2327 = vunpack.c.l.b16 %v422
      %v2328 = vunpack.c.h.b16 %v422
      %v2329 = vunpack.c.l.b16 %v423
      %v2330 = vunpack.c.h.b16 %v423
      %v2331 = vunpack.c.l.b16 %v424
      %v2332 = vunpack.c.h.b16 %v424
      %v2333 = vunpack.c.l.b16 %v425
      %v2334 = vunpack.c.h.b16 %v425
      %v2335 = vunpack.c.l.b16 %v426
      %v2336 = vunpack.c.h.b16 %v426
      %v2337 = vunpack.c.l.b16 %v427
      %v2338 = vunpack.c.h.b16 %v427
      %v2339 = vunpack.c.l.b16 %v428
      %v2340 = vunpack.c.h.b16 %v428
      %v2341 = vunpack.c.l.b16 %v429
      %v2342 = vunpack.c.h.b16 %v429
      %v2343 = vunpack.c.l.b16 %v430
      %v2344 = vunpack.c.h.b16 %v430
      %v2345 = vunpack.c.l.b16 %v431
      %v2346 = vunpack.c.h.b16 %v431
      %v2347 = vunpack.c.l.b16 %v432
      %v2348 = vunpack.c.h.b16 %v432
      %v2349 = vunpack.c.l.b16 %v433
      %v2350 = vunpack.c.h.b16 %v433
      %v2351 = vunpack.c.l.b16 %v434
      %v2352 = vunpack.c.h.b16 %v434
      %v2353 = vunpack.c.l.b16 %v435
      %v2354 = vunpack.c.h.b16 %v435
      %v2355 = vunpack.c.l.b16 %v436
      %v2356 = vunpack.c.h.b16 %v436
      %v2357 = vunpack.c.l.b16 %v437
      %v2358 = vunpack.c.h.b16 %v437
      %v2359 = vunpack.c.l.b16 %v438
      %v2360 = vunpack.c.h.b16 %v438
      %v2361 = vunpack.c.l.b16 %v439
      %v2362 = vunpack.c.h.b16 %v439
      %v2363 = vunpack.c.l.b16 %v440
      %v2364 = vunpack.c.h.b16 %v440
      %v2365 = vunpack.c.l.b16 %v441
      %v2366 = vunpack.c.h.b16 %v441
      %v2367 = vunpack.c.l.b16 %v442
      %v2368 = vunpack.c.h.b16 %v442
      %v2369 = vunpack.c.l.b16 %v443
      %v2370 = vunpack.c.h.b16 %v443
      %v2371 = vunpack.c.l.b16 %v444
      %v2372 = vunpack.c.h.b16 %v444
      %v2373 = vunpack.c.l.b16 %v445
      %v2374 = vunpack.c.h.b16 %v445
      %v2375 = vunpack.c.l.b16 %v446
      %v2376 = vunpack.c.h.b16 %v446
      %v2377 = vunpack.c.l.b16 %v447
      %v2378 = vunpack.c.h.b16 %v447
      %v2379 = vunpack.c.l.b16 %v448
      %v2380 = vunpack.c.h.b16 %v448
      %v2381 = vunpack.c.l.b16 %v449
      %v2382 = vunpack.c.h.b16 %v449
      %v2383 = vunpack.c.l.b16 %v450
      %v2384 = vunpack.c.h.b16 %v450
      %v2385 = vunpack.c.l.b16 %v451
      %v2386 = vunpack.c.h.b16 %v451
      %v2387 = vunpack.c.l.b16 %v452
      %v2388 = vunpack.c.h.b16 %v452
      %v2389 = vunpack.c.l.b16 %v453
      %v2390 = vunpack.c.h.b16 %v453
      %v2391 = vunpack.c.l.b16 %v454
      %v2392 = vunpack.c.h.b16 %v454
      %v2393 = vunpack.c.l.b16 %v455
      %v2394 = vunpack.c.h.b16 %v455
      %v2395 = vunpack.c.l.b16 %v456
      %v2396 = vunpack.c.h.b16 %v456
      %v2397 = vunpack.c.l.b16 %v457
      %v2398 = vunpack.c.h.b16 %v457
      %v2399 = vunpack.c.l.b16 %v458
      %v2400 = vunpack.c.h.b16 %v458
      %v2401 = vunpack.c.l.b16 %v459
      %v2402 = vunpack.c.h.b16 %v459
      %v2403 = vunpack.c.l.b16 %v460
      %v2404 = vunpack.c.h.b16 %v460
      %v2405 = vunpack.c.l.b16 %v461
      %v2406 = vunpack.c.h.b16 %v461
      %v2407 = vunpack.c.l.b16 %v462
      %v2408 = vunpack.c.h.b16 %v462
      %v2409 = vunpack.c.l.b16 %v463
      %v2410 = vunpack.c.h.b16 %v463
      %v2411 = vunpack.c.l.b16 %v464
      %v2412 = vunpack.c.h.b16 %v464
      %v2413 = vunpack.c.l.b16 %v465
      %v2414 = vunpack.c.h.b16 %v465
      %v2415 = vunpack.c.l.b16 %v466
      %v2416 = vunpack.c.h.b16 %v466
      %v2417 = vunpack.c.l.b16 %v467
      %v2418 = vunpack.c.h.b16 %v467
      %v2419 = vunpack.c.l.b16 %v468
      %v2420 = vunpack.c.h.b16 %v468
      %v2421 = vunpack.c.l.b16 %v469
      %v2422 = vunpack.c.h.b16 %v469
      %v2423 = vunpack.c.l.b16 %v470
      %v2424 = vunpack.c.h.b16 %v470
      %v2425 = vunpack.c.l.b16 %v471
      %v2426 = vunpack.c.h.b16 %v471
      %v2427 = vunpack.c.l.b16 %v472
      %v2428 = vunpack.c.h.b16 %v472
      %v2429 = vunpack.c.l.b16 %v473
      %v2430 = vunpack.c.h.b16 %v473
      %v2431 = vunpack.c.l.b16 %v474
      %v2432 = vunpack.c.h.b16 %v474
      %v2433 = vunpack.c.l.b16 %v475
      %v2434 = vunpack.c.h.b16 %v475
      %v2435 = vunpack.c.l.b16 %v476
      %v2436 = vunpack.c.h.b16 %v476
      %v2437 = vunpack.c.l.b16 %v477
      %v2438 = vunpack.c.h.b16 %v477
      %v2439 = vunpack.c.l.b16 %v478
      %v2440 = vunpack.c.h.b16 %v478
      %v2441 = vunpack.c.l.b16 %v479
      %v2442 = vunpack.c.h.b16 %v479
      %v2443 = vunpack.c.l.b16 %v480
      %v2444 = vunpack.c.h.b16 %v480
      %v2445 = vunpack.c.l.b16 %v481
      %v2446 = vunpack.c.h.b16 %v481
      %v2447 = vunpack.c.l.b16 %v482
      %v2448 = vunpack.c.h.b16 %v482
      %v2449 = vunpack.c.l.b16 %v483
      %v2450 = vunpack.c.h.b16 %v483
      %v2451 = vunpack.c.l.b16 %v484
      %v2452 = vunpack.c.h.b16 %v484
      %v2453 = vunpack.c.l.b16 %v485
      %v2454 = vunpack.c.h.b16 %v485
      %v2455 = vunpack.c.l.b16 %v486
      %v2456 = vunpack.c.h.b16 %v486
      %v2457 = vunpack.c.l.b16 %v487
      %v2458 = vunpack.c.h.b16 %v487
      %v2459 = vunpack.c.l.b16 %v488
      %v2460 = vunpack.c.h.b16 %v488
      %v2461 = vunpack.c.l.b16 %v489
      %v2462 = vunpack.c.h.b16 %v489
      %v2463 = vunpack.c.l.b16 %v490
      %v2464 = vunpack.c.h.b16 %v490
      %v2465 = vunpack.c.l.b16 %v491
      %v2466 = vunpack.c.h.b16 %v491
      %v2467 = vunpack.c.l.b16 %v492
      %v2468 = vunpack.c.h.b16 %v492
      %v2469 = vunpack.c.l.b16 %v493
      %v2470 = vunpack.c.h.b16 %v493
      %v2471 = vunpack.c.l.b16 %v494
      %v2472 = vunpack.c.h.b16 %v494
      %v2473 = vunpack.c.l.b16 %v495
      %v2474 = vunpack.c.h.b16 %v495
      %v2475 = vunpack.c.l.b16 %v496
      %v2476 = vunpack.c.h.b16 %v496
      %v2477 = vunpack.c.l.b16 %v497
      %v2478 = vunpack.c.h.b16 %v497
      %v2479 = vunpack.c.l.b16 %v498
      %v2480 = vunpack.c.h.b16 %v498
      %v2481 = vunpack.c.l.b16 %v499
      %v2482 = vunpack.c.h.b16 %v499
      %v2483 = vunpack.c.l.b16 %v500
      %v2484 = vunpack.c.h.b16 %v500
      %v2485 = vunpack.c.l.b16 %v501
      %v2486 = vunpack.c.h.b16 %v501
      %v2487 = vunpack.c.l.b16 %v502
      %v2488 = vunpack.c.h.b16 %v502
      %v2489 = vunpack.c.l.b16 %v503
      %v2490 = vunpack.c.h.b16 %v503
      %v2491 = vunpack.c.l.b16 %v504
      %v2492 = vunpack.c.h.b16 %v504
      %v2493 = vunpack.c.l.b16 %v505
      %v2494 = vunpack.c.h.b16 %v505
      %v2495 = vunpack.c.l.b16 %v506
      %v2496 = vunpack.c.h.b16 %v506
      %v2497 = vunpack.c.l.b16 %v507
      %v2498 = vunpack.c.h.b16 %v507
      %v2499 = vunpack.c.l.b16 %v508
      %v2500 = vunpack.c.h.b16 %v508
      %v2501 = vunpack.c.l.b16 %v509
      %v2502 = vunpack.c.h.b16 %v509
      %v2503 = vunpack.c.l.b16 %v510
      %v2504 = vunpack.c.h.b16 %v510
      %v2505 = vunpack.c.l.b16 %v511
      %v2506 = vunpack.c.h.b16 %v511
      %v2507 = vunpack.c.l.b16 %v512
      %v2508 = vunpack.c.h.b16 %v512
      %v2509 = vunpack.c.l.b16 %v513
      %v2510 = vunpack.c.h.b16 %v513
      %v2511 = vunpack.c.l.b16 %v514
      %v2512 = vunpack.c.h.b16 %v514
      %v2513 = vunpack.c.l.b16 %v515
      %v2514 = vunpack.c.h.b16 %v515
      %v2515 = vunpack.c.l.b16 %v516
      %v2516 = vunpack.c.h.b16 %v516
      %v2517 = vunpack.c.l.b16 %v517
      %v2518 = vunpack.c.h.b16 %v517
      %v2519 = vunpack.c.l.b16 %v518
      %v2520 = vunpack.c.h.b16 %v518
      %v2521 = vunpack.c.l.b16 %v519
      %v2522 = vunpack.c.h.b16 %v519
      %v2523 = vunpack.c.l.b16 %v520
      %v2524 = vunpack.c.h.b16 %v520
      %v2525 = vunpack.c.l.b16 %v521
      %v2526 = vunpack.c.h.b16 %v521
      %v2527 = vunpack.c.l.b16 %v522
      %v2528 = vunpack.c.h.b16 %v522
      %v2529 = vunpack.c.l.b16 %v523
      %v2530 = vunpack.c.h.b16 %v523
      %v2531 = vunpack.c.l.b16 %v524
      %v2532 = vunpack.c.h.b16 %v524
      %v2533 = vunpack.c.l.b16 %v525
      %v2534 = vunpack.c.h.b16 %v525
      %v2535 = vunpack.c.l.b16 %v526
      %v2536 = vunpack.c.h.b16 %v526
      %v2537 = vunpack.c.l.b16 %v527
      %v2538 = vunpack.c.h.b16 %v527
      %v2539 = vunpack.c.l.b16 %v528
      %v2540 = vunpack.c.h.b16 %v528
      %v2541 = vunpack.c.l.b16 %v529
      %v2542 = vunpack.c.h.b16 %v529
      %v2543 = vunpack.c.l.b16 %v530
      %v2544 = vunpack.c.h.b16 %v530
      %v2545 = vunpack.c.l.b16 %v531
      %v2546 = vunpack.c.h.b16 %v531
      %v2547 = vunpack.c.l.b16 %v532
      %v2548 = vunpack.c.h.b16 %v532
      %v2549 = vunpack.c.l.b16 %v533
      %v2550 = vunpack.c.h.b16 %v533
      %v2551 = vunpack.c.l.b16 %v534
      %v2552 = vunpack.c.h.b16 %v534
      %v2553 = vunpack.c.l.b16 %v535
      %v2554 = vunpack.c.h.b16 %v535
      %v2555 = vunpack.c.l.b16 %v536
      %v2556 = vunpack.c.h.b16 %v536
      %v2557 = vunpack.c.l.b16 %v537
      %v2558 = vunpack.c.h.b16 %v537
      %v2559 = vunpack.c.l.b16 %v538
      %v2560 = vunpack.c.h.b16 %v538
      %v2561 = vunpack.c.l.b16 %v539
      %v2562 = vunpack.c.h.b16 %v539
      %v2563 = vunpack.c.l.b16 %v540
      %v2564 = vunpack.c.h.b16 %v540
      %v2565 = vunpack.c.l.b16 %v541
      %v2566 = vunpack.c.h.b16 %v541
      %v2567 = vunpack.c.l.b16 %v542
      %v2568 = vunpack.c.h.b16 %v542
      %v2569 = vunpack.c.l.b16 %v543
      %v2570 = vunpack.c.h.b16 %v543
      %v2571 = vunpack.c.l.b16 %v544
      %v2572 = vunpack.c.h.b16 %v544
      %v2573 = vunpack.c.l.b16 %v545
      %v2574 = vunpack.c.h.b16 %v545
      %v2575 = vunpack.c.l.b16 %v546
      %v2576 = vunpack.c.h.b16 %v546
      %v2577 = vunpack.c.l.b16 %v547
      %v2578 = vunpack.c.h.b16 %v547
      %v2579 = vunpack.c.l.b16 %v548
      %v2580 = vunpack.c.h.b16 %v548
      %v2581 = vunpack.c.l.b16 %v549
      %v2582 = vunpack.c.h.b16 %v549
      %v2583 = vunpack.c.l.b16 %v550
      %v2584 = vunpack.c.h.b16 %v550
      %v2585 = vunpack.c.l.b16 %v551
      %v2586 = vunpack.c.h.b16 %v551
      %v2587 = vunpack.c.l.b16 %v552
      %v2588 = vunpack.c.h.b16 %v552
      %v2589 = vunpack.c.l.b16 %v553
      %v2590 = vunpack.c.h.b16 %v553
      %v2591 = vunpack.c.l.b16 %v554
      %v2592 = vunpack.c.h.b16 %v554
      %v2593 = vunpack.c.l.b16 %v555
      %v2594 = vunpack.c.h.b16 %v555
      %v2595 = vunpack.c.l.b16 %v556
      %v2596 = vunpack.c.h.b16 %v556
      %v2597 = vunpack.c.l.b16 %v557
      %v2598 = vunpack.c.h.b16 %v557
      %v2599 = vunpack.c.l.b16 %v558
      %v2600 = vunpack.c.h.b16 %v558
      %v2601 = vunpack.c.l.b16 %v559
      %v2602 = vunpack.c.h.b16 %v559
      %v2603 = vunpack.c.l.b16 %v560
      %v2604 = vunpack.c.h.b16 %v560
      %v2605 = vunpack.c.l.b16 %v561
      %v2606 = vunpack.c.h.b16 %v561
      %v2607 = vunpack.c.l.b16 %v562
      %v2608 = vunpack.c.h.b16 %v562
      %v2609 = vunpack.c.l.b16 %v563
      %v2610 = vunpack.c.h.b16 %v563
      %v2611 = vunpack.c.l.b16 %v564
      %v2612 = vunpack.c.h.b16 %v564
      %v2613 = vunpack.c.l.b16 %v565
      %v2614 = vunpack.c.h.b16 %v565
      %v2615 = vunpack.c.l.b16 %v566
      %v2616 = vunpack.c.h.b16 %v566
      %v2617 = vunpack.c.l.b16 %v567
      %v2618 = vunpack.c.h.b16 %v567
      %v2619 = vunpack.c.l.b16 %v568
      %v2620 = vunpack.c.h.b16 %v568
      %v2621 = vunpack.c.l.b16 %v569
      %v2622 = vunpack.c.h.b16 %v569
      %v2623 = vunpack.c.l.b16 %v570
      %v2624 = vunpack.c.h.b16 %v570
      %v2625 = vunpack.c.l.b16 %v571
      %v2626 = vunpack.c.h.b16 %v571
      %v2627 = vunpack.c.l.b16 %v572
      %v2628 = vunpack.c.h.b16 %v572
      %v2629 = vunpack.c.l.b16 %v573
      %v2630 = vunpack.c.h.b16 %v573
      %v2631 = vunpack.c.l.b16 %v574
      %v2632 = vunpack.c.h.b16 %v574
      %v2633 = vunpack.c.l.b16 %v575
      %v2634 = vunpack.c.h.b16 %v575
      %v2635 = vunpack.c.l.b16 %v576
      %v2636 = vunpack.c.h.b16 %v576
      %v2637 = vunpack.c.l.b16 %v577
      %v2638 = vunpack.c.h.b16 %v577
      %v2639 = vunpack.c.l.b16 %v578
      %v2640 = vunpack.c.h.b16 %v578
      %v2641 = vunpack.c.l.b16 %v579
      %v2642 = vunpack.c.h.b16 %v579
      %v2643 = vunpack.c.l.b16 %v580
      %v2644 = vunpack.c.h.b16 %v580
      %v2645 = vunpack.c.l.b16 %v581
      %v2646 = vunpack.c.h.b16 %v581
      %v2647 = vunpack.c.l.b16 %v582
      %v2648 = vunpack.c.h.b16 %v582
      %v2649 = vunpack.c.l.b16 %v583
      %v2650 = vunpack.c.h.b16 %v583
      %v2651 = vunpack.c.l.b16 %v584
      %v2652 = vunpack.c.h.b16 %v584
      %v2653 = vunpack.c.l.b16 %v585
      %v2654 = vunpack.c.h.b16 %v585
      %v2655 = vunpack.c.l.b16 %v586
      %v2656 = vunpack.c.h.b16 %v586
      %v2657 = vunpack.c.l.b16 %v587
      %v2658 = vunpack.c.h.b16 %v587
      %v2659 = vunpack.c.l.b16 %v588
      %v2660 = vunpack.c.h.b16 %v588
      %v2661 = vunpack.c.l.b16 %v589
      %v2662 = vunpack.c.h.b16 %v589
      %v2663 = vunpack.c.l.b16 %v590
      %v2664 = vunpack.c.h.b16 %v590
      %v2665 = vunpack.c.l.b16 %v591
      %v2666 = vunpack.c.h.b16 %v591
      %v2667 = vunpack.c.l.b16 %v592
      %v2668 = vunpack.c.h.b16 %v592
      %v2669 = vunpack.c.l.b16 %v593
      %v2670 = vunpack.c.h.b16 %v593
      %v2671 = vunpack.c.l.b16 %v594
      %v2672 = vunpack.c.h.b16 %v594
      %v2673 = vunpack.c.l.b16 %v595
      %v2674 = vunpack.c.h.b16 %v595
      %v2675 = vunpack.c.l.b16 %v596
      %v2676 = vunpack.c.h.b16 %v596
      %v2677 = vunpack.c.l.b16 %v597
      %v2678 = vunpack.c.h.b16 %v597
      %v2679 = vunpack.c.l.b16 %v598
      %v2680 = vunpack.c.h.b16 %v598
      %v2681 = vunpack.c.l.b16 %v599
      %v2682 = vunpack.c.h.b16 %v599
      %v2683 = vunpack.c.l.b16 %v600
      %v2684 = vunpack.c.h.b16 %v600
      %v2685 = vunpack.c.l.b16 %v601
      %v2686 = vunpack.c.h.b16 %v601
      %v2687 = vunpack.c.l.b16 %v602
      %v2688 = vunpack.c.h.b16 %v602
      %v2689 = vunpack.c.l.b16 %v603
      %v2690 = vunpack.c.h.b16 %v603
      %v2691 = vunpack.c.l.b16 %v604
      %v2692 = vunpack.c.h.b16 %v604
      %v2693 = vunpack.c.l.b16 %v605
      %v2694 = vunpack.c.h.b16 %v605
      %v2695 = vunpack.c.l.b16 %v606
      %v2696 = vunpack.c.h.b16 %v606
      %v2697 = vunpack.c.l.b16 %v607
      %v2698 = vunpack.c.h.b16 %v607
      %v2699 = vunpack.c.l.b16 %v608
      %v2700 = vunpack.c.h.b16 %v608
      %v2701 = vunpack.c.l.b16 %v609
      %v2702 = vunpack.c.h.b16 %v609
      %v2703 = vunpack.c.l.b16 %v610
      %v2704 = vunpack.c.h.b16 %v610
      %v2705 = vunpack.c.l.b16 %v611
      %v2706 = vunpack.c.h.b16 %v611
      %v2707 = vunpack.c.l.b16 %v612
      %v2708 = vunpack.c.h.b16 %v612
      %v2709 = vunpack.c.l.b16 %v613
      %v2710 = vunpack.c.h.b16 %v613
      %v2711 = vunpack.c.l.b16 %v614
      %v2712 = vunpack.c.h.b16 %v614
      %v2713 = vunpack.c.l.b16 %v615
      %v2714 = vunpack.c.h.b16 %v615
      %v2715 = vunpack.c.l.b16 %v616
      %v2716 = vunpack.c.h.b16 %v616
      %v2717 = vunpack.c.l.b16 %v617
      %v2718 = vunpack.c.h.b16 %v617
      %v2719 = vunpack.c.l.b16 %v618
      %v2720 = vunpack.c.h.b16 %v618
      %v2721 = vunpack.c.l.b16 %v619
      %v2722 = vunpack.c.h.b16 %v619
      %v2723 = vunpack.c.l.b16 %v620
      %v2724 = vunpack.c.h.b16 %v620
      %v2725 = vunpack.c.l.b16 %v621
      %v2726 = vunpack.c.h.b16 %v621
      %v2727 = vunpack.c.l.b16 %v622
      %v2728 = vunpack.c.h.b16 %v622
      %v2729 = vunpack.c.l.b16 %v623
      %v2730 = vunpack.c.h.b16 %v623
      %v2731 = vunpack.c.l.b16 %v624
      %v2732 = vunpack.c.h.b16 %v624
      %v2733 = vunpack.c.l.b16 %v625
      %v2734 = vunpack.c.h.b16 %v625
      %v2735 = vunpack.c.l.b16 %v626
      %v2736 = vunpack.c.h.b16 %v626
      %v2737 = vunpack.c.l.b16 %v627
      %v2738 = vunpack.c.h.b16 %v627
      %v2739 = vunpack.c.l.b16 %v628
      %v2740 = vunpack.c.h.b16 %v628
      %v2741 = vunpack.c.l.b16 %v629
      %v2742 = vunpack.c.h.b16 %v629
      %v2743 = vunpack.c.l.b16 %v630
      %v2744 = vunpack.c.h.b16 %v630
      %v2745 = vunpack.c.l.b16 %v631
      %v2746 = vunpack.c.h.b16 %v631
      %v2747 = vunpack.c.l.b16 %v632
      %v2748 = vunpack.c.h.b16 %v632
      %v2749 = vunpack.c.l.b16 %v633
      %v2750 = vunpack.c.h.b16 %v633
      %v2751 = vunpack.c.l.b16 %v634
      %v2752 = vunpack.c.h.b16 %v634
      %v2753 = vunpack.c.l.b16 %v635
      %v2754 = vunpack.c.h.b16 %v635
      %v2755 = vunpack.c.l.b16 %v636
      %v2756 = vunpack.c.h.b16 %v636
      %v2757 = vunpack.c.l.b16 %v637
      %v2758 = vunpack.c.h.b16 %v637
      %v2759 = vunpack.c.l.b16 %v638
      %v2760 = vunpack.c.h.b16 %v638
      %v2761 = vunpack.c.l.b16 %v639
      %v2762 = vunpack.c.h.b16 %v639
      %v2763 = vunpack.c.l.b16 %v640
      %v2764 = vunpack.c.h.b16 %v640
      %v2765 = vunpack.c.l.b16 %v641
      %v2766 = vunpack.c.h.b16 %v641
      %v2767 = vunpack.c.l.b16 %v642
      %v2768 = vunpack.c.h.b16 %v642
      %v2769 = vunpack.c.l.b16 %v643
      %v2770 = vunpack.c.h.b16 %v643
      %v2771 = vunpack.c.l.b16 %v644
      %v2772 = vunpack.c.h.b16 %v644
      %v2773 = vunpack.c.l.b16 %v645
      %v2774 = vunpack.c.h.b16 %v645
      %v2775 = vunpack.c.l.b16 %v646
      %v2776 = vunpack.c.h.b16 %v646
      %v2777 = vunpack.c.l.b16 %v647
      %v2778 = vunpack.c.h.b16 %v647
      %v2779 = vunpack.c.l.b16 %v648
      %v2780 = vunpack.c.h.b16 %v648
      %v2781 = vunpack.c.l.b16 %v649
      %v2782 = vunpack.c.h.b16 %v649
      %v2783 = vunpack.c.l.b16 %v650
      %v2784 = vunpack.c.h.b16 %v650
      %v2785 = vunpack.c.l.b16 %v651
      %v2786 = vunpack.c.h.b16 %v651
      %v2787 = vunpack.c.l.b16 %v652
      %v2788 = vunpack.c.h.b16 %v652
      %v2789 = vunpack.c.l.b16 %v653
      %v2790 = vunpack.c.h.b16 %v653
      %v2791 = vunpack.c.l.b16 %v654
      %v2792 = vunpack.c.h.b16 %v654
      %v2793 = vunpack.c.l.b16 %v655
      %v2794 = vunpack.c.h.b16 %v655
      %v2795 = vunpack.c.l.b16 %v656
      %v2796 = vunpack.c.h.b16 %v656
      %v2797 = vunpack.c.l.b16 %v657
      %v2798 = vunpack.c.h.b16 %v657
      %v2799 = vunpack.c.l.b16 %v658
      %v2800 = vunpack.c.h.b16 %v658
      %v2801 = vunpack.c.l.b16 %v659
      %v2802 = vunpack.c.h.b16 %v659
      %v2803 = vunpack.c.l.b16 %v660
      %v2804 = vunpack.c.h.b16 %v660
      %v2805 = vunpack.c.l.b16 %v661
      %v2806 = vunpack.c.h.b16 %v661
      %v2807 = vunpack.c.l.b16 %v662
      %v2808 = vunpack.c.h.b16 %v662
      %v2809 = vunpack.c.l.b16 %v663
      %v2810 = vunpack.c.h.b16 %v663
      %v2811 = vunpack.c.l.b16 %v664
      %v2812 = vunpack.c.h.b16 %v664
      %v2813 = vunpack.c.l.b16 %v665
      %v2814 = vunpack.c.h.b16 %v665
      %v2815 = vunpack.c.l.b16 %v666
      %v2816 = vunpack.c.h.b16 %v666
      %v2817 = vunpack.c.l.b16 %v667
      %v2818 = vunpack.c.h.b16 %v667
      %v2819 = vunpack.c.l.b16 %v668
      %v2820 = vunpack.c.h.b16 %v668
      %v2821 = vunpack.c.l.b16 %v669
      %v2822 = vunpack.c.h.b16 %v669
      %v2823 = vunpack.c.l.b16 %v670
      %v2824 = vunpack.c.h.b16 %v670
      %v2825 = vunpack.c.l.b16 %v671
      %v2826 = vunpack.c.h.b16 %v671
      %v2827 = vunpack.c.l.b16 %v672
      %v2828 = vunpack.c.h.b16 %v672
      %v2829 = vunpack.c.l.b16 %v673
      %v2830 = vunpack.c.h.b16 %v673
      %v2831 = vunpack.c.l.b16 %v674
      %v2832 = vunpack.c.h.b16 %v674
      %v2833 = vunpack.c.l.b16 %v675
      %v2834 = vunpack.c.h.b16 %v675
      %v2835 = vunpack.c.l.b16 %v676
      %v2836 = vunpack.c.h.b16 %v676
      %v2837 = vunpack.c.l.b16 %v677
      %v2838 = vunpack.c.h.b16 %v677
      %v2839 = vunpack.c.l.b16 %v678
      %v2840 = vunpack.c.h.b16 %v678
      %v2841 = vunpack.c.l.b16 %v679
      %v2842 = vunpack.c.h.b16 %v679
      %v2843 = vunpack.c.l.b16 %v680
      %v2844 = vunpack.c.h.b16 %v680
      %v2845 = vunpack.c.l.b16 %v681
      %v2846 = vunpack.c.h.b16 %v681
      %v2847 = vunpack.c.l.b16 %v682
      %v2848 = vunpack.c.h.b16 %v682
      %v2849 = vunpack.c.l.b16 %v683
      %v2850 = vunpack.c.h.b16 %v683
      %v2851 = vunpack.c.l.b16 %v684
      %v2852 = vunpack.c.h.b16 %v684
      %v2853 = vunpack.c.l.b16 %v685
      %v2854 = vunpack.c.h.b16 %v685
      %v2855 = vunpack.c.l.b16 %v686
      %v2856 = vunpack.c.h.b16 %v686
      %v2857 = vunpack.c.l.b16 %v687
      %v2858 = vunpack.c.h.b16 %v687
      %v2859 = vunpack.c.l.b16 %v688
      %v2860 = vunpack.c.h.b16 %v688
      %v2861 = vunpack.c.l.b16 %v689
      %v2862 = vunpack.c.h.b16 %v689
      %v2863 = vunpack.c.l.b16 %v690
      %v2864 = vunpack.c.h.b16 %v690
      %v2865 = vunpack.c.l.b16 %v691
      %v2866 = vunpack.c.h.b16 %v691
      %v2867 = vunpack.c.l.b16 %v692
      %v2868 = vunpack.c.h.b16 %v692
      %v2869 = vunpack.c.l.b16 %v693
      %v2870 = vunpack.c.h.b16 %v693
      %v2871 = vunpack.c.l.b16 %v694
      %v2872 = vunpack.c.h.b16 %v694
      %v2873 = vunpack.c.l.b16 %v695
      %v2874 = vunpack.c.h.b16 %v695
      %v2875 = vunpack.c.l.b16 %v696
      %v2876 = vunpack.c.h.b16 %v696
      %v2877 = vunpack.c.l.b16 %v697
      %v2878 = vunpack.c.h.b16 %v697
      %v2879 = vunpack.c.l.b16 %v698
      %v2880 = vunpack.c.h.b16 %v698
      %v2881 = vunpack.c.l.b16 %v699
      %v2882 = vunpack.c.h.b16 %v699
      %v2883 = vunpack.c.l.b16 %v700
      %v2884 = vunpack.c.h.b16 %v700
      %v2885 = vunpack.c.l.b16 %v701
      %v2886 = vunpack.c.h.b16 %v701
      %v2887 = vunpack.c.l.b16 %v702
      %v2888 = vunpack.c.h.b16 %v702
      %v2889 = vunpack.c.l.b16 %v703
      %v2890 = vunpack.c.h.b16 %v703
      %v2891 = vunpack.c.l.b16 %v704
      %v2892 = vunpack.c.h.b16 %v704
      %v2893 = vunpack.c.l.b16 %v705
      %v2894 = vunpack.c.h.b16 %v705
      %v2895 = vunpack.c.l.b16 %v706
      %v2896 = vunpack.c.h.b16 %v706
      %v2897 = vunpack.c.l.b16 %v707
      %v2898 = vunpack.c.h.b16 %v707
      %v2899 = vunpack.c.l.b16 %v708
      %v2900 = vunpack.c.h.b16 %v708
      %v2901 = vunpack.c.l.b16 %v709
      %v2902 = vunpack.c.h.b16 %v709
      %v2903 = vunpack.c.l.b16 %v710
      %v2904 = vunpack.c.h.b16 %v710
      %v2905 = vunpack.c.l.b16 %v711
      %v2906 = vunpack.c.h.b16 %v711
      %v2907 = vunpack.c.l.b16 %v712
      %v2908 = vunpack.c.h.b16 %v712
      %v2909 = vunpack.c.l.b16 %v713
      %v2910 = vunpack.c.h.b16 %v713
      %v2911 = vunpack.c.l.b16 %v714
      %v2912 = vunpack.c.h.b16 %v714
      %v2913 = vunpack.c.l.b16 %v715
      %v2914 = vunpack.c.h.b16 %v715
      %v2915 = vunpack.c.l.b16 %v716
      %v2916 = vunpack.c.h.b16 %v716
      %v2917 = vunpack.c.l.b16 %v717
      %v2918 = vunpack.c.h.b16 %v717
      %v2919 = vunpack.c.l.b16 %v718
      %v2920 = vunpack.c.h.b16 %v718
      %v2921 = vunpack.c.l.b16 %v719
      %v2922 = vunpack.c.h.b16 %v719
      %v2923 = vunpack.c.l.b16 %v720
      %v2924 = vunpack.c.h.b16 %v720
      %v2925 = vunpack.c.l.b16 %v721
      %v2926 = vunpack.c.h.b16 %v721
      %v2927 = vunpack.c.l.b16 %v722
      %v2928 = vunpack.c.h.b16 %v722
      %v2929 = vunpack.c.l.b16 %v723
      %v2930 = vunpack.c.h.b16 %v723
      %v2931 = vunpack.c.l.b16 %v724
      %v2932 = vunpack.c.h.b16 %v724
      %v2933 = vunpack.c.l.b16 %v725
      %v2934 = vunpack.c.h.b16 %v725
      %v2935 = vunpack.c.l.b16 %v726
      %v2936 = vunpack.c.h.b16 %v726
      %v2937 = vunpack.c.l.b16 %v727
      %v2938 = vunpack.c.h.b16 %v727
      %v2939 = vunpack.c.l.b16 %v728
      %v2940 = vunpack.c.h.b16 %v728
      %v2941 = vunpack.c.l.b16 %v729
      %v2942 = vunpack.c.h.b16 %v729
      %v2943 = vunpack.c.l.b16 %v730
      %v2944 = vunpack.c.h.b16 %v730
      %v2945 = vunpack.c.l.b16 %v731
      %v2946 = vunpack.c.h.b16 %v731
      %v2947 = vunpack.c.l.b16 %v732
      %v2948 = vunpack.c.h.b16 %v732
      %v2949 = vunpack.c.l.b16 %v733
      %v2950 = vunpack.c.h.b16 %v733
      %v2951 = vunpack.c.l.b16 %v734
      %v2952 = vunpack.c.h.b16 %v734
      %v2953 = vunpack.c.l.b16 %v735
      %v2954 = vunpack.c.h.b16 %v735
      %v2955 = vunpack.c.l.b16 %v736
      %v2956 = vunpack.c.h.b16 %v736
      %v2957 = vunpack.c.l.b16 %v737
      %v2958 = vunpack.c.h.b16 %v737
      %v2959 = vunpack.c.l.b16 %v738
      %v2960 = vunpack.c.h.b16 %v738
      %v2961 = vunpack.c.l.b16 %v739
      %v2962 = vunpack.c.h.b16 %v739
      %v2963 = vunpack.c.l.b16 %v740
      %v2964 = vunpack.c.h.b16 %v740
      %v2965 = vunpack.c.l.b16 %v741
      %v2966 = vunpack.c.h.b16 %v741
      %v2967 = vunpack.c.l.b16 %v742
      %v2968 = vunpack.c.h.b16 %v742
      %v2969 = vunpack.c.l.b16 %v743
      %v2970 = vunpack.c.h.b16 %v743
      %v2971 = vunpack.c.l.b16 %v744
      %v2972 = vunpack.c.h.b16 %v744
      %v2973 = vunpack.c.l.b16 %v745
      %v2974 = vunpack.c.h.b16 %v745
      %v2975 = vunpack.c.l.b16 %v746
      %v2976 = vunpack.c.h.b16 %v746
      %v2977 = vunpack.c.l.b16 %v747
      %v2978 = vunpack.c.h.b16 %v747
      %v2979 = vunpack.c.l.b16 %v748
      %v2980 = vunpack.c.h.b16 %v748
      %v2981 = vunpack.c.l.b16 %v749
      %v2982 = vunpack.c.h.b16 %v749
      %v2983 = vunpack.c.l.b16 %v750
      %v2984 = vunpack.c.h.b16 %v750
      %v2985 = vunpack.c.l.b16 %v751
      %v2986 = vunpack.c.h.b16 %v751
      %v2987 = vunpack.c.l.b16 %v752
      %v2988 = vunpack.c.h.b16 %v752
      %v2989 = vunpack.c.l.b16 %v753
      %v2990 = vunpack.c.h.b16 %v753
      %v2991 = vunpack.c.l.b16 %v754
      %v2992 = vunpack.c.h.b16 %v754
      %v2993 = vunpack.c.l.b16 %v755
      %v2994 = vunpack.c.h.b16 %v755
      %v2995 = vunpack.c.l.b16 %v756
      %v2996 = vunpack.c.h.b16 %v756
      %v2997 = vunpack.c.l.b16 %v757
      %v2998 = vunpack.c.h.b16 %v757
      %v2999 = vunpack.c.l.b16 %v758
      %v3000 = vunpack.c.h.b16 %v758
      %v3001 = vunpack.c.l.b16 %v759
      %v3002 = vunpack.c.h.b16 %v759
      %v3003 = vunpack.c.l.b16 %v760
      %v3004 = vunpack.c.h.b16 %v760
      %v3005 = vunpack.c.l.b16 %v761
      %v3006 = vunpack.c.h.b16 %v761
      %v3007 = vunpack.c.l.b16 %v762
      %v3008 = vunpack.c.h.b16 %v762
      %v3009 = vunpack.c.l.b16 %v763
      %v3010 = vunpack.c.h.b16 %v763
      %v3011 = vunpack.c.l.b16 %v764
      %v3012 = vunpack.c.h.b16 %v764
      %v3013 = vunpack.c.l.b16 %v765
      %v3014 = vunpack.c.h.b16 %v765
      %v3015 = vunpack.c.l.b16 %v766
      %v3016 = vunpack.c.h.b16 %v766
      %v3017 = vunpack.c.l.b16 %v767
      %v3018 = vunpack.c.h.b16 %v767
      %v3019 = vunpack.c.l.b16 %v768
      %v3020 = vunpack.c.h.b16 %v768
      %v3021 = vunpack.c.l.b16 %v769
      %v3022 = vunpack.c.h.b16 %v769
      %v3023 = vunpack.c.l.b16 %v770
      %v3024 = vunpack.c.h.b16 %v770
      %v3025 = vunpack.c.l.b16 %v771
      %v3026 = vunpack.c.h.b16 %v771
      %v3027 = vunpack.c.l.b16 %v772
      %v3028 = vunpack.c.h.b16 %v772
      %v3029 = vunpack.c.l.b16 %v773
      %v3030 = vunpack.c.h.b16 %v773
      %v3031 = vunpack.c.l.b16 %v774
      %v3032 = vunpack.c.h.b16 %v774
      %v3033 = vunpack.c.l.b16 %v775
      %v3034 = vunpack.c.h.b16 %v775
      %v3035 = vunpack.c.l.b16 %v776
      %v3036 = vunpack.c.h.b16 %v776
      %v3037 = vunpack.c.l.b16 %v777
      %v3038 = vunpack.c.h.b16 %v777
      %v3039 = vunpack.c.l.b16 %v778
      %v3040 = vunpack.c.h.b16 %v778
      %v3041 = vunpack.c.l.b16 %v779
      %v3042 = vunpack.c.h.b16 %v779
      %v3043 = vunpack.c.l.b16 %v780
      %v3044 = vunpack.c.h.b16 %v780
      %v3045 = vunpack.c.l.b16 %v781
      %v3046 = vunpack.c.h.b16 %v781
      %v3047 = vunpack.c.l.b16 %v782
      %v3048 = vunpack.c.h.b16 %v782
      %v3049 = vunpack.c.l.b16 %v783
      %v3050 = vunpack.c.h.b16 %v783
      %v3051 = vunpack.c.l.b16 %v784
      %v3052 = vunpack.c.h.b16 %v784
      %v3053 = vunpack.c.l.b16 %v785
      %v3054 = vunpack.c.h.b16 %v785
      %v3055 = vunpack.c.l.b16 %v786
      %v3056 = vunpack.c.h.b16 %v786
      %v3057 = vunpack.c.l.b16 %v787
      %v3058 = vunpack.c.h.b16 %v787
      %v3059 = vunpack.c.l.b16 %v788
      %v3060 = vunpack.c.h.b16 %v788
      %v3061 = vunpack.c.l.b16 %v789
      %v3062 = vunpack.c.h.b16 %v789
      %v3063 = vunpack.c.l.b16 %v790
      %v3064 = vunpack.c.h.b16 %v790
      %v3065 = vunpack.c.l.b16 %v791
      %v3066 = vunpack.c.h.b16 %v791
      %v3067 = vunpack.c.l.b16 %v792
      %v3068 = vunpack.c.h.b16 %v792
      %v3069 = vunpack.c.l.b16 %v793
      %v3070 = vunpack.c.h.b16 %v793
      %v3071 = vunpack.c.l.b16 %v794
      %v3072 = vunpack.c.h.b16 %v794
      %v3073 = vunpack.c.l.b16 %v795
      %v3074 = vunpack.c.h.b16 %v795
      %v3075 = vunpack.c.l.b16 %v796
      %v3076 = vunpack.c.h.b16 %v796
      %v3077 = vunpack.c.l.b16 %v797
      %v3078 = vunpack.c.h.b16 %v797
      %v3079 = vunpack.c.l.b16 %v798
      %v3080 = vunpack.c.h.b16 %v798
      %v3081 = vunpack.c.l.b16 %v799
      %v3082 = vunpack.c.h.b16 %v799
      %v3083 = vunpack.c.l.b16 %v800
      %v3084 = vunpack.c.h.b16 %v800
      %v3085 = vunpack.c.l.b16 %v801
      %v3086 = vunpack.c.h.b16 %v801
      %v3087 = vunpack.c.l.b16 %v802
      %v3088 = vunpack.c.h.b16 %v802
      %v3089 = vunpack.c.l.b16 %v803
      %v3090 = vunpack.c.h.b16 %v803
      %v3091 = vunpack.c.l.b16 %v804
      %v3092 = vunpack.c.h.b16 %v804
      %v3093 = vunpack.c.l.b16 %v805
      %v3094 = vunpack.c.h.b16 %v805
      %v3095 = vunpack.c.l.b16 %v806
      %v3096 = vunpack.c.h.b16 %v806
      %v3097 = vunpack.c.l.b16 %v807
      %v3098 = vunpack.c.h.b16 %v807
      %v3099 = vunpack.c.l.b16 %v808
      %v3100 = vunpack.c.h.b16 %v808
      %v3101 = vunpack.c.l.b16 %v809
      %v3102 = vunpack.c.h.b16 %v809
      %v3103 = vunpack.c.l.b16 %v810
      %v3104 = vunpack.c.h.b16 %v810
      %v3105 = vunpack.c.l.b16 %v811
      %v3106 = vunpack.c.h.b16 %v811
      %v3107 = vunpack.c.l.b16 %v812
      %v3108 = vunpack.c.h.b16 %v812
      %v3109 = vunpack.c.l.b16 %v813
      %v3110 = vunpack.c.h.b16 %v813
      %v3111 = vunpack.c.l.b16 %v814
      %v3112 = vunpack.c.h.b16 %v814
      %v3113 = vunpack.c.l.b16 %v815
      %v3114 = vunpack.c.h.b16 %v815
      %v3115 = vunpack.c.l.b16 %v816
      %v3116 = vunpack.c.h.b16 %v816
      %v3117 = vunpack.c.l.b16 %v817
      %v3118 = vunpack.c.h.b16 %v817
      %v3119 = vunpack.c.l.b16 %v818
      %v3120 = vunpack.c.h.b16 %v818
      %v3121 = vunpack.c.l.b16 %v819
      %v3122 = vunpack.c.h.b16 %v819
      %v3123 = vunpack.c.l.b16 %v820
      %v3124 = vunpack.c.h.b16 %v820
      %v3125 = vunpack.c.l.b16 %v821
      %v3126 = vunpack.c.h.b16 %v821
      %v3127 = vunpack.c.l.b16 %v822
      %v3128 = vunpack.c.h.b16 %v822
      %v3129 = vunpack.c.l.b16 %v823
      %v3130 = vunpack.c.h.b16 %v823
      %v3131 = vunpack.c.l.b16 %v824
      %v3132 = vunpack.c.h.b16 %v824
      %v3133 = vunpack.c.l.b16 %v825
      %v3134 = vunpack.c.h.b16 %v825
      %v3135 = vunpack.c.l.b16 %v826
      %v3136 = vunpack.c.h.b16 %v826
      %v3137 = vunpack.c.l.b16 %v827
      %v3138 = vunpack.c.h.b16 %v827
      %v3139 = vunpack.c.l.b16 %v828
      %v3140 = vunpack.c.h.b16 %v828
      %v3141 = vunpack.c.l.b16 %v829
      %v3142 = vunpack.c.h.b16 %v829
      %v3143 = vunpack.c.l.b16 %v830
      %v3144 = vunpack.c.h.b16 %v830
      %v3145 = vunpack.c.l.b16 %v831
      %v3146 = vunpack.c.h.b16 %v831
      %v3147 = vunpack.c.l.b16 %v832
      %v3148 = vunpack.c.h.b16 %v832
      %v3149 = vunpack.c.l.b16 %v833
      %v3150 = vunpack.c.h.b16 %v833
      %v3151 = vunpack.c.l.b16 %v834
      %v3152 = vunpack.c.h.b16 %v834
      %v3153 = vunpack.c.l.b16 %v835
      %v3154 = vunpack.c.h.b16 %v835
      %v3155 = vunpack.c.l.b16 %v836
      %v3156 = vunpack.c.h.b16 %v836
      %v3157 = vunpack.c.l.b16 %v837
      %v3158 = vunpack.c.h.b16 %v837
      %v3159 = vunpack.c.l.b16 %v838
      %v3160 = vunpack.c.h.b16 %v838
      %v3161 = vunpack.c.l.b16 %v839
      %v3162 = vunpack.c.h.b16 %v839
      %v3163 = vunpack.c.l.b16 %v840
      %v3164 = vunpack.c.h.b16 %v840
      %v3165 = vunpack.c.l.b16 %v841
      %v3166 = vunpack.c.h.b16 %v841
      %v3167 = vunpack.c.l.b16 %v842
      %v3168 = vunpack.c.h.b16 %v842
      %v3169 = vunpack.c.l.b16 %v843
      %v3170 = vunpack.c.h.b16 %v843
      %v3171 = vunpack.c.l.b16 %v844
      %v3172 = vunpack.c.h.b16 %v844
      %v3173 = vunpack.c.l.b16 %v845
      %v3174 = vunpack.c.h.b16 %v845
      %v3175 = vunpack.c.l.b16 %v846
      %v3176 = vunpack.c.h.b16 %v846
      %v3177 = vunpack.c.l.b16 %v847
      %v3178 = vunpack.c.h.b16 %v847
      %v3179 = vunpack.c.l.b16 %v848
      %v3180 = vunpack.c.h.b16 %v848
      %v3181 = vunpack.c.l.b16 %v849
      %v3182 = vunpack.c.h.b16 %v849
      %v3183 = vunpack.c.l.b16 %v850
      %v3184 = vunpack.c.h.b16 %v850
      %v3185 = vunpack.c.l.b16 %v851
      %v3186 = vunpack.c.h.b16 %v851
      %v3187 = vunpack.c.l.b16 %v852
      %v3188 = vunpack.c.h.b16 %v852
      %v3189 = vunpack.c.l.b16 %v853
      %v3190 = vunpack.c.h.b16 %v853
      %v3191 = vunpack.c.l.b16 %v854
      %v3192 = vunpack.c.h.b16 %v854
      %v3193 = vunpack.c.l.b16 %v855
      %v3194 = vunpack.c.h.b16 %v855
      %v3195 = vunpack.c.l.b16 %v856
      %v3196 = vunpack.c.h.b16 %v856
      %v3197 = vunpack.c.l.b16 %v857
      %v3198 = vunpack.c.h.b16 %v857
      %v3199 = vunpack.c.l.b16 %v858
      %v3200 = vunpack.c.h.b16 %v858
      %v3201 = vunpack.c.l.b16 %v859
      %v3202 = vunpack.c.h.b16 %v859
      %v3203 = vunpack.c.l.b16 %v860
      %v3204 = vunpack.c.h.b16 %v860
      %v3205 = vunpack.c.l.b16 %v861
      %v3206 = vunpack.c.h.b16 %v861
      %v3207 = vunpack.c.l.b16 %v862
      %v3208 = vunpack.c.h.b16 %v862
      %v3209 = vunpack.c.l.b16 %v863
      %v3210 = vunpack.c.h.b16 %v863
      %v3211 = vunpack.c.l.b16 %v864
      %v3212 = vunpack.c.h.b16 %v864
      %v3213 = vunpack.c.l.b16 %v865
      %v3214 = vunpack.c.h.b16 %v865
      %v3215 = vunpack.c.l.b16 %v866
      %v3216 = vunpack.c.h.b16 %v866
      %v3217 = vunpack.c.l.b16 %v867
      %v3218 = vunpack.c.h.b16 %v867
      %v3219 = vunpack.c.l.b16 %v868
      %v3220 = vunpack.c.h.b16 %v868
      %v3221 = vunpack.c.l.b16 %v869
      %v3222 = vunpack.c.h.b16 %v869
      %v3223 = vunpack.c.l.b16 %v870
      %v3224 = vunpack.c.h.b16 %v870
      %v3225 = vunpack.c.l.b16 %v871
      %v3226 = vunpack.c.h.b16 %v871
      %v3227 = vunpack.c.l.b16 %v872
      %v3228 = vunpack.c.h.b16 %v872
      %v3229 = vunpack.c.l.b16 %v873
      %v3230 = vunpack.c.h.b16 %v873
      %v3231 = vunpack.c.l.b16 %v874
      %v3232 = vunpack.c.h.b16 %v874
      %v3233 = vunpack.c.l.b16 %v875
      %v3234 = vunpack.c.h.b16 %v875
      %v3235 = vunpack.c.l.b16 %v876
      %v3236 = vunpack.c.h.b16 %v876
      %v3237 = vunpack.c.l.b16 %v877
      %v3238 = vunpack.c.h.b16 %v877
      %v3239 = vunpack.c.l.b16 %v878
      %v3240 = vunpack.c.h.b16 %v878
      %v3241 = vunpack.c.l.b16 %v879
      %v3242 = vunpack.c.h.b16 %v879
      %v3243 = vunpack.c.l.b16 %v880
      %v3244 = vunpack.c.h.b16 %v880
      %v3245 = vunpack.c.l.b16 %v881
      %v3246 = vunpack.c.h.b16 %v881
      %v3247 = vunpack.c.l.b16 %v882
      %v3248 = vunpack.c.h.b16 %v882
      %v3249 = vunpack.c.l.b16 %v883
      %v3250 = vunpack.c.h.b16 %v883
      %v3251 = vunpack.c.l.b16 %v884
      %v3252 = vunpack.c.h.b16 %v884
      %v3253 = vunpack.c.l.b16 %v885
      %v3254 = vunpack.c.h.b16 %v885
      %v3255 = vunpack.c.l.b16 %v886
      %v3256 = vunpack.c.h.b16 %v886
      %v3257 = vunpack.c.l.b16 %v887
      %v3258 = vunpack.c.h.b16 %v887
      %v3259 = vunpack.c.l.b16 %v888
      %v3260 = vunpack.c.h.b16 %v888
      %v3261 = vunpack.c.l.b16 %v889
      %v3262 = vunpack.c.h.b16 %v889
      %v3263 = vunpack.c.l.b16 %v890
      %v3264 = vunpack.c.h.b16 %v890
      %v3265 = vunpack.c.l.b16 %v891
      %v3266 = vunpack.c.h.b16 %v891
      %v3267 = vunpack.c.l.b16 %v892
      %v3268 = vunpack.c.h.b16 %v892
      %v3269 = vunpack.c.l.b16 %v893
      %v3270 = vunpack.c.h.b16 %v893
      %v3271 = vunpack.c.l.b16 %v894
      %v3272 = vunpack.c.h.b16 %v894
      %v3273 = vunpack.c.l.b16 %v895
      %v3274 = vunpack.c.h.b16 %v895
      %v3275 = vunpack.c.l.b16 %v896
      %v3276 = vunpack.c.h.b16 %v896
      %v3277 = vunpack.c.l.b16 %v897
      %v3278 = vunpack.c.h.b16 %v897
      %v3279 = vunpack.c.l.b16 %v898
      %v3280 = vunpack.c.h.b16 %v898
      %v3281 = vunpack.c.l.b16 %v899
      %v3282 = vunpack.c.h.b16 %v899
      %v3283 = vunpack.c.l.b16 %v900
      %v3284 = vunpack.c.h.b16 %v900
      %v3285 = vunpack.c.l.b16 %v901
      %v3286 = vunpack.c.h.b16 %v901
      %v3287 = vunpack.c.l.b16 %v902
      %v3288 = vunpack.c.h.b16 %v902
      %v3289 = vunpack.c.l.b16 %v903
      %v3290 = vunpack.c.h.b16 %v903
      %v3291 = vunpack.c.l.b16 %v904
      %v3292 = vunpack.c.h.b16 %v904
      %v3293 = vunpack.c.l.b16 %v905
      %v3294 = vunpack.c.h.b16 %v905
      %v3295 = vunpack.c.l.b16 %v906
      %v3296 = vunpack.c.h.b16 %v906
      %v3297 = vunpack.c.l.b16 %v907
      %v3298 = vunpack.c.h.b16 %v907
      %v3299 = vunpack.c.l.b16 %v908
      %v3300 = vunpack.c.h.b16 %v908
      %v3301 = vunpack.c.l.b16 %v909
      %v3302 = vunpack.c.h.b16 %v909
      %v3303 = vunpack.c.l.b16 %v910
      %v3304 = vunpack.c.h.b16 %v910
      %v3305 = vunpack.c.l.b16 %v911
      %v3306 = vunpack.c.h.b16 %v911
      %v3307 = vunpack.c.l.b16 %v912
      %v3308 = vunpack.c.h.b16 %v912
      %v3309 = vunpack.c.l.b16 %v913
      %v3310 = vunpack.c.h.b16 %v913
      %v3311 = vunpack.c.l.b16 %v914
      %v3312 = vunpack.c.h.b16 %v914
      %v3313 = vunpack.c.l.b16 %v915
      %v3314 = vunpack.c.h.b16 %v915
      %v3315 = vunpack.c.l.b16 %v916
      %v3316 = vunpack.c.h.b16 %v916
      %v3317 = vunpack.c.l.b16 %v917
      %v3318 = vunpack.c.h.b16 %v917
      %v3319 = vunpack.c.l.b16 %v918
      %v3320 = vunpack.c.h.b16 %v918
      %v3321 = vunpack.c.l.b16 %v919
      %v3322 = vunpack.c.h.b16 %v919
      %v3323 = vunpack.c.l.b16 %v920
      %v3324 = vunpack.c.h.b16 %v920
      %v3325 = vunpack.c.l.b16 %v921
      %v3326 = vunpack.c.h.b16 %v921
      %v3327 = vunpack.c.l.b16 %v922
      %v3328 = vunpack.c.h.b16 %v922
      %v3329 = vunpack.c.l.b16 %v923
      %v3330 = vunpack.c.h.b16 %v923
      %v3331 = vunpack.c.l.b16 %v924
      %v3332 = vunpack.c.h.b16 %v924
      %v3333 = vunpack.c.l.b16 %v925
      %v3334 = vunpack.c.h.b16 %v925
      %v3335 = vunpack.c.l.b16 %v926
      %v3336 = vunpack.c.h.b16 %v926
      %v3337 = vunpack.c.l.b16 %v927
      %v3338 = vunpack.c.h.b16 %v927
      %v3339 = vunpack.c.l.b16 %v928
      %v3340 = vunpack.c.h.b16 %v928
      %v3341 = vunpack.c.l.b16 %v929
      %v3342 = vunpack.c.h.b16 %v929
      %v3343 = vunpack.c.l.b16 %v930
      %v3344 = vunpack.c.h.b16 %v930
      %v3345 = vunpack.c.l.b16 %v931
      %v3346 = vunpack.c.h.b16 %v931
      %v3347 = vunpack.c.l.b16 %v932
      %v3348 = vunpack.c.h.b16 %v932
      %v3349 = vunpack.c.l.b16 %v933
      %v3350 = vunpack.c.h.b16 %v933
      %v3351 = vunpack.c.l.b16 %v934
      %v3352 = vunpack.c.h.b16 %v934
      %v3353 = vunpack.c.l.b16 %v935
      %v3354 = vunpack.c.h.b16 %v935
      %v3355 = vunpack.c.l.b16 %v936
      %v3356 = vunpack.c.h.b16 %v936
      %v3357 = vunpack.c.l.b16 %v937
      %v3358 = vunpack.c.h.b16 %v937
      %v3359 = vunpack.c.l.b16 %v938
      %v3360 = vunpack.c.h.b16 %v938
      %v3361 = vunpack.c.l.b16 %v939
      %v3362 = vunpack.c.h.b16 %v939
      %v3363 = vunpack.c.l.b16 %v940
      %v3364 = vunpack.c.h.b16 %v940
      %v3365 = vunpack.c.l.b16 %v941
      %v3366 = vunpack.c.h.b16 %v941
      %v3367 = vunpack.c.l.b16 %v942
      %v3368 = vunpack.c.h.b16 %v942
      %v3369 = vunpack.c.l.b16 %v943
      %v3370 = vunpack.c.h.b16 %v943
      %v3371 = vunpack.c.l.b16 %v944
      %v3372 = vunpack.c.h.b16 %v944
      %v3373 = vunpack.c.l.b16 %v945
      %v3374 = vunpack.c.h.b16 %v945
      %v3375 = vunpack.c.l.b16 %v946
      %v3376 = vunpack.c.h.b16 %v946
      %v3377 = vunpack.c.l.b16 %v947
      %v3378 = vunpack.c.h.b16 %v947
      %v3379 = vunpack.c.l.b16 %v948
      %v3380 = vunpack.c.h.b16 %v948
      %v3381 = vunpack.c.l.b16 %v949
      %v3382 = vunpack.c.h.b16 %v949
      %v3383 = vunpack.c.l.b16 %v950
      %v3384 = vunpack.c.h.b16 %v950
      %v3385 = vunpack.c.l.b16 %v951
      %v3386 = vunpack.c.h.b16 %v951
      %v3387 = vunpack.c.l.b16 %v952
      %v3388 = vunpack.c.h.b16 %v952
      %v3389 = vunpack.c.l.b16 %v953
      %v3390 = vunpack.c.h.b16 %v953
      %v3391 = vunpack.c.l.b16 %v954
      %v3392 = vunpack.c.h.b16 %v954
      %v3393 = vunpack.c.l.b16 %v955
      %v3394 = vunpack.c.h.b16 %v955
      %v3395 = vunpack.c.l.b16 %v956
      %v3396 = vunpack.c.h.b16 %v956
      %v3397 = vunpack.c.l.b16 %v957
      %v3398 = vunpack.c.h.b16 %v957
      %v3399 = vunpack.c.l.b16 %v958
      %v3400 = vunpack.c.h.b16 %v958
      %v3401 = vunpack.c.l.b16 %v959
      %v3402 = vunpack.c.h.b16 %v959
      %v3403 = vunpack.c.l.b16 %v960
      %v3404 = vunpack.c.h.b16 %v960
      %v3405 = vunpack.c.l.b16 %v961
      %v3406 = vunpack.c.h.b16 %v961
      %v3407 = vunpack.c.l.b16 %v962
      %v3408 = vunpack.c.h.b16 %v962
      %v3409 = vunpack.c.l.b16 %v963
      %v3410 = vunpack.c.h.b16 %v963
      %v3411 = vunpack.c.l.b16 %v964
      %v3412 = vunpack.c.h.b16 %v964
      %v3413 = vunpack.c.l.b16 %v965
      %v3414 = vunpack.c.h.b16 %v965
      %v3415 = vunpack.c.l.b16 %v966
      %v3416 = vunpack.c.h.b16 %v966
      %v3417 = vunpack.c.l.b16 %v967
      %v3418 = vunpack.c.h.b16 %v967
      %v3419 = vunpack.c.l.b16 %v968
      %v3420 = vunpack.c.h.b16 %v968
      %v3421 = vunpack.c.l.b16 %v969
      %v3422 = vunpack.c.h.b16 %v969
      %v3423 = vunpack.c.l.b16 %v970
      %v3424 = vunpack.c.h.b16 %v970
      %v3425 = vunpack.c.l.b16 %v971
      %v3426 = vunpack.c.h.b16 %v971
      %v3427 = vunpack.c.l.b16 %v972
      %v3428 = vunpack.c.h.b16 %v972
      %v3429 = vunpack.c.l.b16 %v973
      %v3430 = vunpack.c.h.b16 %v973
      %v3431 = vunpack.c.l.b16 %v974
      %v3432 = vunpack.c.h.b16 %v974
      %v3433 = vunpack.c.l.b16 %v975
      %v3434 = vunpack.c.h.b16 %v975
      %v3435 = vunpack.c.l.b16 %v976
      %v3436 = vunpack.c.h.b16 %v976
      %v3437 = vunpack.c.l.b16 %v977
      %v3438 = vunpack.c.h.b16 %v977
      %v3439 = vunpack.c.l.b16 %v978
      %v3440 = vunpack.c.h.b16 %v978
      %v3441 = vunpack.c.l.b16 %v979
      %v3442 = vunpack.c.h.b16 %v979
      %v3443 = vunpack.c.l.b16 %v980
      %v3444 = vunpack.c.h.b16 %v980
      %v3445 = vunpack.c.l.b16 %v981
      %v3446 = vunpack.c.h.b16 %v981
      %v3447 = vunpack.c.l.b16 %v982
      %v3448 = vunpack.c.h.b16 %v982
      %v3449 = vunpack.c.l.b16 %v983
      %v3450 = vunpack.c.h.b16 %v983
      %v3451 = vunpack.c.l.b16 %v984
      %v3452 = vunpack.c.h.b16 %v984
      %v3453 = vunpack.c.l.b16 %v985
      %v3454 = vunpack.c.h.b16 %v985
      %v3455 = vunpack.c.l.b16 %v986
      %v3456 = vunpack.c.h.b16 %v986
      %v3457 = vunpack.c.l.b16 %v987
      %v3458 = vunpack.c.h.b16 %v987
      %v3459 = vunpack.c.l.b16 %v988
      %v3460 = vunpack.c.h.b16 %v988
      %v3461 = vunpack.c.l.b16 %v989
      %v3462 = vunpack.c.h.b16 %v989
      %v3463 = vunpack.c.l.b16 %v990
      %v3464 = vunpack.c.h.b16 %v990
      %v3465 = vunpack.c.l.b16 %v991
      %v3466 = vunpack.c.h.b16 %v991
      %v3467 = vunpack.c.l.b16 %v992
      %v3468 = vunpack.c.h.b16 %v992
      %v3469 = vunpack.c.l.b16 %v993
      %v3470 = vunpack.c.h.b16 %v993
      %v3471 = vunpack.c.l.b16 %v994
      %v3472 = vunpack.c.h.b16 %v994
      %v3473 = vunpack.c.l.b16 %v995
      %v3474 = vunpack.c.h.b16 %v995
      %v3475 = vunpack.c.l.b16 %v996
      %v3476 = vunpack.c.h.b16 %v996
      %v3477 = vunpack.c.l.b16 %v997
      %v3478 = vunpack.c.h.b16 %v997
      %v3479 = vunpack.c.l.b16 %v998
      %v3480 = vunpack.c.h.b16 %v998
      %v3481 = vunpack.c.l.b16 %v999
      %v3482 = vunpack.c.h.b16 %v999
      %v3483 = vunpack.c.l.b16 %v1000
      %v3484 = vunpack.c.h.b16 %v1000
      %v3485 = vunpack.c.l.b16 %v1001
      %v3486 = vunpack.c.h.b16 %v1001
      %v3487 = vunpack.c.l.b16 %v1002
      %v3488 = vunpack.c.h.b16 %v1002
      %v3489 = vunpack.c.l.b16 %v1003
      %v3490 = vunpack.c.h.b16 %v1003
      %v3491 = vunpack.c.l.b16 %v1004
      %v3492 = vunpack.c.h.b16 %v1004
      %v3493 = vunpack.c.l.b16 %v1005
      %v3494 = vunpack.c.h.b16 %v1005
      %v3495 = vunpack.c.l.b16 %v1006
      %v3496 = vunpack.c.h.b16 %v1006
      %v3497 = vunpack.c.l.b16 %v1007
      %v3498 = vunpack.c.h.b16 %v1007
      %v3499 = vunpack.c.l.b16 %v1008
      %v3500 = vunpack.c.h.b16 %v1008
      %v3501 = vunpack.c.l.b16 %v1009
      %v3502 = vunpack.c.h.b16 %v1009
      %v3503 = vunpack.c.l.b16 %v1010
      %v3504 = vunpack.c.h.b16 %v1010
      %v3505 = vunpack.c.l.b16 %v1011
      %v3506 = vunpack.c.h.b16 %v1011
      %v3507 = vunpack.c.l.b16 %v1012
      %v3508 = vunpack.c.h.b16 %v1012
      %v3509 = vunpack.c.l.b16 %v1013
      %v3510 = vunpack.c.h.b16 %v1013
      %v3511 = vunpack.c.l.b16 %v1014
      %v3512 = vunpack.c.h.b16 %v1014
      %v3513 = vunpack.c.l.b16 %v1015
      %v3514 = vunpack.c.h.b16 %v1015
      %v3515 = vunpack.c.l.b16 %v1016
      %v3516 = vunpack.c.h.b16 %v1016
      %v3517 = vunpack.c.l.b16 %v1017
      %v3518 = vunpack.c.h.b16 %v1017
      %v3519 = vunpack.c.l.b16 %v1018
      %v3520 = vunpack.c.h.b16 %v1018
      %v3521 = vunpack.c.l.b16 %v1019
      %v3522 = vunpack.c.h.b16 %v1019
      %v3523 = vunpack.c.l.b16 %v1020
      %v3524 = vunpack.c.h.b16 %v1020
      %v3525 = vunpack.c.l.b16 %v1021
      %v3526 = vunpack.c.h.b16 %v1021
      %v3527 = vunpack.c.l.b16 %v1022
      %v3528 = vunpack.c.h.b16 %v1022
      %v3529 = vunpack.c.l.b16 %v1023
      %v3530 = vunpack.c.h.b16 %v1023
      %v3531 = vunpack.c.l.b16 %v1024
      %v3532 = vunpack.c.h.b16 %v1024
      %v3533 = vunpack.c.l.b16 %v1025
      %v3534 = vunpack.c.h.b16 %v1025
      %v3535 = vunpack.c.l.b16 %v1026
      %v3536 = vunpack.c.h.b16 %v1026
      %v3537 = vunpack.c.l.b16 %v1027
      %v3538 = vunpack.c.h.b16 %v1027
      %v3539 = vunpack.c.l.b16 %v1028
      %v3540 = vunpack.c.h.b16 %v1028
      %v3541 = vunpack.c.l.b16 %v1029
      %v3542 = vunpack.c.h.b16 %v1029
      %v3543 = vunpack.c.l.b16 %v1030
      %v3544 = vunpack.c.h.b16 %v1030
      %v3545 = vunpack.c.l.b16 %v1031
      %v3546 = vunpack.c.h.b16 %v1031
      %v3547 = vunpack.c.l.b16 %v1032
      %v3548 = vunpack.c.h.b16 %v1032
      %v3549 = vunpack.c.l.b16 %v1033
      %v3550 = vunpack.c.h.b16 %v1033
      %v3551 = vunpack.c.l.b16 %v1034
      %v3552 = vunpack.c.h.b16 %v1034
      %v3553 = vunpack.c.l.b16 %v1035
      %v3554 = vunpack.c.h.b16 %v1035
      %v3555 = vunpack.c.l.b16 %v1036
      %v3556 = vunpack.c.h.b16 %v1036
      %v3557 = vunpack.c.l.b16 %v1037
      %v3558 = vunpack.c.h.b16 %v1037
      %v3559 = vunpack.c.l.b16 %v1038
      %v3560 = vunpack.c.h.b16 %v1038
      %v3561 = vunpack.c.l.b16 %v1039
      %v3562 = vunpack.c.h.b16 %v1039
      %v3563 = vunpack.c.l.b16 %v1040
      %v3564 = vunpack.c.h.b16 %v1040
      %v3565 = vunpack.c.l.b16 %v1041
      %v3566 = vunpack.c.h.b16 %v1041
      %v3567 = vunpack.c.l.b16 %v1042
      %v3568 = vunpack.c.h.b16 %v1042
      %v3569 = vunpack.c.l.b16 %v1043
      %v3570 = vunpack.c.h.b16 %v1043
      %v3571 = vunpack.c.l.b16 %v1044
      %v3572 = vunpack.c.h.b16 %v1044
      %v3573 = vunpack.c.l.b16 %v1045
      %v3574 = vunpack.c.h.b16 %v1045
      %v3575 = vunpack.c.l.b16 %v1046
      %v3576 = vunpack.c.h.b16 %v1046
      %v3577 = vunpack.c.l.b16 %v1047
      %v3578 = vunpack.c.h.b16 %v1047
      %v3579 = vunpack.c.l.b16 %v1048
      %v3580 = vunpack.c.h.b16 %v1048
      %v3581 = vunpack.c.l.b16 %v1049
      %v3582 = vunpack.c.h.b16 %v1049
      %v3583 = vunpack.c.l.b16 %v1050
      %v3584 = vunpack.c.h.b16 %v1050
      %v3585 = vunpack.c.l.b16 %v1051
      %v3586 = vunpack.c.h.b16 %v1051
      %v3587 = vunpack.c.l.b16 %v1052
      %v3588 = vunpack.c.h.b16 %v1052
      %v3589 = vunpack.c.l.b16 %v1053
      %v3590 = vunpack.c.h.b16 %v1053
      %v3591 = vunpack.c.l.b16 %v1054
      %v3592 = vunpack.c.h.b16 %v1054
      %v3593 = vunpack.c.l.b16 %v1055
      %v3594 = vunpack.c.h.b16 %v1055
      %v3595 = vunpack.c.l.b16 %v1056
      %v3596 = vunpack.c.h.b16 %v1056
      %v3597 = vunpack.c.l.b16 %v1057
      %v3598 = vunpack.c.h.b16 %v1057
      %v3599 = vunpack.c.l.b16 %v1058
      %v3600 = vunpack.c.h.b16 %v1058
      %v3601 = vunpack.c.l.b16 %v1059
      %v3602 = vunpack.c.h.b16 %v1059
      %v3603 = vunpack.c.l.b16 %v1060
      %v3604 = vunpack.c.h.b16 %v1060
      %v3605 = vunpack.c.l.b16 %v1061
      %v3606 = vunpack.c.h.b16 %v1061
      %v3607 = vunpack.c.l.b16 %v1062
      %v3608 = vunpack.c.h.b16 %v1062
      %v3609 = vunpack.c.l.b16 %v1063
      %v3610 = vunpack.c.h.b16 %v1063
      %v3611 = vunpack.c.l.b16 %v1064
      %v3612 = vunpack.c.h.b16 %v1064
      %v3613 = vunpack.c.l.b16 %v1065
      %v3614 = vunpack.c.h.b16 %v1065
      %v3615 = vunpack.c.l.b16 %v1066
      %v3616 = vunpack.c.h.b16 %v1066
      %v3617 = vunpack.c.l.b16 %v1067
      %v3618 = vunpack.c.h.b16 %v1067
      %v3619 = vunpack.c.l.b16 %v1068
      %v3620 = vunpack.c.h.b16 %v1068
      %v3621 = vunpack.c.l.b16 %v1069
      %v3622 = vunpack.c.h.b16 %v1069
      %v3623 = vunpack.c.l.b16 %v1070
      %v3624 = vunpack.c.h.b16 %v1070
      %v3625 = vunpack.c.l.b16 %v1071
      %v3626 = vunpack.c.h.b16 %v1071
      %v3627 = vunpack.c.l.b16 %v1072
      %v3628 = vunpack.c.h.b16 %v1072
      %v3629 = vunpack.c.l.b16 %v1073
      %v3630 = vunpack.c.h.b16 %v1073
      %v3631 = vunpack.c.l.b16 %v1074
      %v3632 = vunpack.c.h.b16 %v1074
      %v3633 = vunpack.c.l.b16 %v1075
      %v3634 = vunpack.c.h.b16 %v1075
      %v3635 = vunpack.c.l.b16 %v1076
      %v3636 = vunpack.c.h.b16 %v1076
      %v3637 = vunpack.c.l.b16 %v1077
      %v3638 = vunpack.c.h.b16 %v1077
      %v3639 = vunpack.c.l.b16 %v1078
      %v3640 = vunpack.c.h.b16 %v1078
      %v3641 = vunpack.c.l.b16 %v1079
      %v3642 = vunpack.c.h.b16 %v1079
      %v3643 = vpack.c.b16 %v2079, %v2075
      %v3644 = vpack.c.b16 %v2080, %v2076
      %v3645 = vpack.c.b16 %v2081, %v2077
      %v3646 = vpack.c.b16 %v2082, %v2078
      %v3647 = vpack.c.b16 %v2087, %v2083
      %v3648 = vpack.c.b16 %v2088, %v2084
      %v3649 = vpack.c.b16 %v2089, %v2085
      %v3650 = vpack.c.b16 %v2090, %v2086
      %v3651 = vpack.c.b16 %v2095, %v2091
      %v3652 = vpack.c.b16 %v2096, %v2092
      %v3653 = vpack.c.b16 %v2097, %v2093
      %v3654 = vpack.c.b16 %v2098, %v2094
      %v3655 = vpack.c.b16 %v2103, %v2099
      %v3656 = vpack.c.b16 %v2104, %v2100
      %v3657 = vpack.c.b16 %v2105, %v2101
      %v3658 = vpack.c.b16 %v2106, %v2102
      %v3659 = vpack.c.b16 %v2111, %v2107
      %v3660 = vpack.c.b16 %v2112, %v2108
      %v3661 = vpack.c.b16 %v2113, %v2109
      %v3662 = vpack.c.b16 %v2114, %v2110
      %v3663 = vpack.c.b16 %v2119, %v2115
      %v3664 = vpack.c.b16 %v2120, %v2116
      %v3665 = vpack.c.b16 %v2121, %v2117
      %v3666 = vpack.c.b16 %v2122, %v2118
      %v3667 = vpack.c.b16 %v2127, %v2123
      %v3668 = vpack.c.b16 %v2128, %v2124
      %v3669 = vpack.c.b16 %v2129, %v2125
      %v3670 = vpack.c.b16 %v2130, %v2126
      %v3671 = vpack.c.b16 %v2135, %v2131
      %v3672 = vpack.c.b16 %v2136, %v2132
      %v3673 = vpack.c.b16 %v2137, %v2133
      %v3674 = vpack.c.b16 %v2138, %v2134
      %v3675 = vpack.c.b16 %v2143, %v2139
      %v3676 = vpack.c.b16 %v2144, %v2140
      %v3677 = vpack.c.b16 %v2145, %v2141
      %v3678 = vpack.c.b16 %v2146, %v2142
      %v3679 = vpack.c.b16 %v2151, %v2147
      %v3680 = vpack.c.b16 %v2152, %v2148
      %v3681 = vpack.c.b16 %v2153, %v2149
      %v3682 = vpack.c.b16 %v2154, %v2150
      %v3683 = vpack.c.b16 %v2159, %v2155
      %v3684 = vpack.c.b16 %v2160, %v2156
      %v3685 = vpack.c.b16 %v2161, %v2157
      %v3686 = vpack.c.b16 %v2162, %v2158
      %v3687 = vpack.c.b16 %v2167, %v2163
      %v3688 = vpack.c.b16 %v2168, %v2164
      %v3689 = vpack.c.b16 %v2169, %v2165
      %v3690 = vpack.c.b16 %v2170, %v2166
      %v3691 = vpack.c.b16 %v2175, %v2171
      %v3692 = vpack.c.b16 %v2176, %v2172
      %v3693 = vpack.c.b16 %v2177, %v2173
      %v3694 = vpack.c.b16 %v2178, %v2174
      %v3695 = vpack.c.b16 %v2183, %v2179
      %v3696 = vpack.c.b16 %v2184, %v2180
      %v3697 = vpack.c.b16 %v2185, %v2181
      %v3698 = vpack.c.b16 %v2186, %v2182
      %v3699 = vpack.c.b16 %v2191, %v2187
      %v3700 = vpack.c.b16 %v2192, %v2188
      %v3701 = vpack.c.b16 %v2193, %v2189
      %v3702 = vpack.c.b16 %v2194, %v2190
      %v3703 = vpack.c.b16 %v2199, %v2195
      %v3704 = vpack.c.b16 %v2200, %v2196
      %v3705 = vpack.c.b16 %v2201, %v2197
      %v3706 = vpack.c.b16 %v2202, %v2198
      %v3707 = vpack.c.b16 %v2207, %v2203
      %v3708 = vpack.c.b16 %v2208, %v2204
      %v3709 = vpack.c.b16 %v2209, %v2205
      %v3710 = vpack.c.b16 %v2210, %v2206
      %v3711 = vpack.c.b16 %v2215, %v2211
      %v3712 = vpack.c.b16 %v2216, %v2212
      %v3713 = vpack.c.b16 %v2217, %v2213
      %v3714 = vpack.c.b16 %v2218, %v2214
      %v3715 = vpack.c.b16 %v2223, %v2219
      %v3716 = vpack.c.b16 %v2224, %v2220
      %v3717 = vpack.c.b16 %v2225, %v2221
      %v3718 = vpack.c.b16 %v2226, %v2222
      %v3719 = vpack.c.b16 %v2231, %v2227
      %v3720 = vpack.c.b16 %v2232, %v2228
      %v3721 = vpack.c.b16 %v2233, %v2229
      %v3722 = vpack.c.b16 %v2234, %v2230
      %v3723 = vpack.c.b16 %v2239, %v2235
      %v3724 = vpack.c.b16 %v2240, %v2236
      %v3725 = vpack.c.b16 %v2241, %v2237
      %v3726 = vpack.c.b16 %v2242, %v2238
      %v3727 = vpack.c.b16 %v2247, %v2243
      %v3728 = vpack.c.b16 %v2248, %v2244
      %v3729 = vpack.c.b16 %v2249, %v2245
      %v3730 = vpack.c.b16 %v2250, %v2246
      %v3731 = vpack.c.b16 %v2255, %v2251
      %v3732 = vpack.c.b16 %v2256, %v2252
      %v3733 = vpack.c.b16 %v2257, %v2253
      %v3734 = vpack.c.b16 %v2258, %v2254
      %v3735 = vpack.c.b16 %v2263, %v2259
      %v3736 = vpack.c.b16 %v2264, %v2260
      %v3737 = vpack.c.b16 %v2265, %v2261
      %v3738 = vpack.c.b16 %v2266, %v2262
      %v3739 = vpack.c.b16 %v2271, %v2267
      %v3740 = vpack.c.b16 %v2272, %v2268
      %v3741 = vpack.c.b16 %v2273, %v2269
      %v3742 = vpack.c.b16 %v2274, %v2270
      %v3743 = vpack.c.b16 %v2279, %v2275
      %v3744 = vpack.c.b16 %v2280, %v2276
      %v3745 = vpack.c.b16 %v2281, %v2277
      %v3746 = vpack.c.b16 %v2282, %v2278
      %v3747 = vpack.c.b16 %v2287, %v2283
      %v3748 = vpack.c.b16 %v2288, %v2284
      %v3749 = vpack.c.b16 %v2289, %v2285
      %v3750 = vpack.c.b16 %v2290, %v2286
      %v3751 = vpack.c.b16 %v2295, %v2291
      %v3752 = vpack.c.b16 %v2296, %v2292
      %v3753 = vpack.c.b16 %v2297, %v2293
      %v3754 = vpack.c.b16 %v2298, %v2294
      %v3755 = vpack.c.b16 %v2303, %v2299
      %v3756 = vpack.c.b16 %v2304, %v2300
      %v3757 = vpack.c.b16 %v2305, %v2301
      %v3758 = vpack.c.b16 %v2306, %v2302
      %v3759 = vpack.c.b16 %v2311, %v2307
      %v3760 = vpack.c.b16 %v2312, %v2308
      %v3761 = vpack.c.b16 %v2313, %v2309
      %v3762 = vpack.c.b16 %v2314, %v2310
      %v3763 = vpack.c.b16 %v2319, %v2315
      %v3764 = vpack.c.b16 %v2320, %v2316
      %v3765 = vpack.c.b16 %v2321, %v2317
      %v3766 = vpack.c.b16 %v2322, %v2318
      %v3767 = vpack.c.b16 %v2327, %v2323
      %v3768 = vpack.c.b16 %v2328, %v2324
      %v3769 = vpack.c.b16 %v2329, %v2325
      %v3770 = vpack.c.b16 %v2330, %v2326
      %v3771 = vpack.c.b16 %v2335, %v2331
      %v3772 = vpack.c.b16 %v2336, %v2332
      %v3773 = vpack.c.b16 %v2337, %v2333
      %v3774 = vpack.c.b16 %v2338, %v2334
      %v3775 = vpack.c.b16 %v2343, %v2339
      %v3776 = vpack.c.b16 %v2344, %v2340
      %v3777 = vpack.c.b16 %v2345, %v2341
      %v3778 = vpack.c.b16 %v2346, %v2342
      %v3779 = vpack.c.b16 %v2351, %v2347
      %v3780 = vpack.c.b16 %v2352, %v2348
      %v3781 = vpack.c.b16 %v2353, %v2349
      %v3782 = vpack.c.b16 %v2354, %v2350
      %v3783 = vpack.c.b16 %v2359, %v2355
      %v3784 = vpack.c.b16 %v2360, %v2356
      %v3785 = vpack.c.b16 %v2361, %v2357
      %v3786 = vpack.c.b16 %v2362, %v2358
      %v3787 = vpack.c.b16 %v2367, %v2363
      %v3788 = vpack.c.b16 %v2368, %v2364
      %v3789 = vpack.c.b16 %v2369, %v2365
      %v3790 = vpack.c.b16 %v2370, %v2366
      %v3791 = vpack.c.b16 %v2375, %v2371
      %v3792 = vpack.c.b16 %v2376, %v2372
      %v3793 = vpack.c.b16 %v2377, %v2373
      %v3794 = vpack.c.b16 %v2378, %v2374
      %v3795 = vpack.c.b16 %v2383, %v2379
      %v3796 = vpack.c.b16 %v2384, %v2380
      %v3797 = vpack.c.b16 %v2385, %v2381
      %v3798 = vpack.c.b16 %v2386, %v2382
      %v3799 = vpack.c.b16 %v2391, %v2387
      %v3800 = vpack.c.b16 %v2392, %v2388
      %v3801 = vpack.c.b16 %v2393, %v2389
      %v3802 = vpack.c.b16 %v2394, %v2390
      %v3803 = vpack.c.b16 %v2399, %v2395
      %v3804 = vpack.c.b16 %v2400, %v2396
      %v3805 = vpack.c.b16 %v2401, %v2397
      %v3806 = vpack.c.b16 %v2402, %v2398
      %v3807 = vpack.c.b16 %v2407, %v2403
      %v3808 = vpack.c.b16 %v2408, %v2404
      %v3809 = vpack.c.b16 %v2409, %v2405
      %v3810 = vpack.c.b16 %v2410, %v2406
      %v3811 = vpack.c.b16 %v2415, %v2411
      %v3812 = vpack.c.b16 %v2416, %v2412
      %v3813 = vpack.c.b16 %v2417, %v2413
      %v3814 = vpack.c.b16 %v2418, %v2414
      %v3815 = vpack.c.b16 %v2423, %v2419
      %v3816 = vpack.c.b16 %v2424, %v2420
      %v3817 = vpack.c.b16 %v2425, %v2421
      %v3818 = vpack.c.b16 %v2426, %v2422
      %v3819 = vpack.c.b16 %v2431, %v2427
      %v3820 = vpack.c.b16 %v2432, %v2428
      %v3821 = vpack.c.b16 %v2433, %v2429
      %v3822 = vpack.c.b16 %v2434, %v2430
      %v3823 = vpack.c.b16 %v2439, %v2435
      %v3824 = vpack.c.b16 %v2440, %v2436
      %v3825 = vpack.c.b16 %v2441, %v2437
      %v3826 = vpack.c.b16 %v2442, %v2438
      %v3827 = vpack.c.b16 %v2447, %v2443
      %v3828 = vpack.c.b16 %v2448, %v2444
      %v3829 = vpack.c.b16 %v2449, %v2445
      %v3830 = vpack.c.b16 %v2450, %v2446
      %v3831 = vpack.c.b16 %v2455, %v2451
      %v3832 = vpack.c.b16 %v2456, %v2452
      %v3833 = vpack.c.b16 %v2457, %v2453
      %v3834 = vpack.c.b16 %v2458, %v2454
      %v3835 = vpack.c.b16 %v2463, %v2459
      %v3836 = vpack.c.b16 %v2464, %v2460
      %v3837 = vpack.c.b16 %v2465, %v2461
      %v3838 = vpack.c.b16 %v2466, %v2462
      %v3839 = vpack.c.b16 %v2471, %v2467
      %v3840 = vpack.c.b16 %v2472, %v2468
      %v3841 = vpack.c.b16 %v2473, %v2469
      %v3842 = vpack.c.b16 %v2474, %v2470
      %v3843 = vpack.c.b16 %v2479, %v2475
      %v3844 = vpack.c.b16 %v2480, %v2476
      %v3845 = vpack.c.b16 %v2481, %v2477
      %v3846 = vpack.c.b16 %v2482, %v2478
      %v3847 = vpack.c.b16 %v2487, %v2483
      %v3848 = vpack.c.b16 %v2488, %v2484
      %v3849 = vpack.c.b16 %v2489, %v2485
      %v3850 = vpack.c.b16 %v2490, %v2486
      %v3851 = vpack.c.b16 %v2495, %v2491
      %v3852 = vpack.c.b16 %v2496, %v2492
      %v3853 = vpack.c.b16 %v2497, %v2493
      %v3854 = vpack.c.b16 %v2498, %v2494
      %v3855 = vpack.c.b16 %v2503, %v2499
      %v3856 = vpack.c.b16 %v2504, %v2500
      %v3857 = vpack.c.b16 %v2505, %v2501
      %v3858 = vpack.c.b16 %v2506, %v2502
      %v3859 = vpack.c.b16 %v2511, %v2507
      %v3860 = vpack.c.b16 %v2512, %v2508
      %v3861 = vpack.c.b16 %v2513, %v2509
      %v3862 = vpack.c.b16 %v2514, %v2510
      %v3863 = vpack.c.b16 %v2519, %v2515
      %v3864 = vpack.c.b16 %v2520, %v2516
      %v3865 = vpack.c.b16 %v2521, %v2517
      %v3866 = vpack.c.b16 %v2522, %v2518
      %v3867 = vpack.c.b16 %v2527, %v2523
      %v3868 = vpack.c.b16 %v2528, %v2524
      %v3869 = vpack.c.b16 %v2529, %v2525
      %v3870 = vpack.c.b16 %v2530, %v2526
      %v3871 = vpack.c.b16 %v2535, %v2531
      %v3872 = vpack.c.b16 %v2536, %v2532
      %v3873 = vpack.c.b16 %v2537, %v2533
      %v3874 = vpack.c.b16 %v2538, %v2534
      %v3875 = vpack.c.b16 %v2543, %v2539
      %v3876 = vpack.c.b16 %v2544, %v2540
      %v3877 = vpack.c.b16 %v2545, %v2541
      %v3878 = vpack.c.b16 %v2546, %v2542
      %v3879 = vpack.c.b16 %v2551, %v2547
      %v3880 = vpack.c.b16 %v2552, %v2548
      %v3881 = vpack.c.b16 %v2553, %v2549
      %v3882 = vpack.c.b16 %v2554, %v2550
      %v3883 = vpack.c.b16 %v2559, %v2555
      %v3884 = vpack.c.b16 %v2560, %v2556
      %v3885 = vpack.c.b16 %v2561, %v2557
      %v3886 = vpack.c.b16 %v2562, %v2558
      %v3887 = vpack.c.b16 %v2567, %v2563
      %v3888 = vpack.c.b16 %v2568, %v2564
      %v3889 = vpack.c.b16 %v2569, %v2565
      %v3890 = vpack.c.b16 %v2570, %v2566
      %v3891 = vpack.c.b16 %v2575, %v2571
      %v3892 = vpack.c.b16 %v2576, %v2572
      %v3893 = vpack.c.b16 %v2577, %v2573
      %v3894 = vpack.c.b16 %v2578, %v2574
      %v3895 = vpack.c.b16 %v2583, %v2579
      %v3896 = vpack.c.b16 %v2584, %v2580
      %v3897 = vpack.c.b16 %v2585, %v2581
      %v3898 = vpack.c.b16 %v2586, %v2582
      %v3899 = vpack.c.b16 %v2591, %v2587
      %v3900 = vpack.c.b16 %v2592, %v2588
      %v3901 = vpack.c.b16 %v2593, %v2589
      %v3902 = vpack.c.b16 %v2594, %v2590
      %v3903 = vpack.c.b16 %v2599, %v2595
      %v3904 = vpack.c.b16 %v2600, %v2596
      %v3905 = vpack.c.b16 %v2601, %v2597
      %v3906 = vpack.c.b16 %v2602, %v2598
      %v3907 = vpack.c.b16 %v2607, %v2603
      %v3908 = vpack.c.b16 %v2608, %v2604
      %v3909 = vpack.c.b16 %v2609, %v2605
      %v3910 = vpack.c.b16 %v2610, %v2606
      %v3911 = vpack.c.b16 %v2615, %v2611
      %v3912 = vpack.c.b16 %v2616, %v2612
      %v3913 = vpack.c.b16 %v2617, %v2613
      %v3914 = vpack.c.b16 %v2618, %v2614
      %v3915 = vpack.c.b16 %v2623, %v2619
      %v3916 = vpack.c.b16 %v2624, %v2620
      %v3917 = vpack.c.b16 %v2625, %v2621
      %v3918 = vpack.c.b16 %v2626, %v2622
      %v3919 = vpack.c.b16 %v2631, %v2627
      %v3920 = vpack.c.b16 %v2632, %v2628
      %v3921 = vpack.c.b16 %v2633, %v2629
      %v3922 = vpack.c.b16 %v2634, %v2630
      %v3923 = vpack.c.b16 %v2639, %v2635
      %v3924 = vpack.c.b16 %v2640, %v2636
      %v3925 = vpack.c.b16 %v2641, %v2637
      %v3926 = vpack.c.b16 %v2642, %v2638
      %v3927 = vpack.c.b16 %v2647, %v2643
      %v3928 = vpack.c.b16 %v2648, %v2644
      %v3929 = vpack.c.b16 %v2649, %v2645
      %v3930 = vpack.c.b16 %v2650, %v2646
      %v3931 = vpack.c.b16 %v2655, %v2651
      %v3932 = vpack.c.b16 %v2656, %v2652
      %v3933 = vpack.c.b16 %v2657, %v2653
      %v3934 = vpack.c.b16 %v2658, %v2654
      %v3935 = vpack.c.b16 %v2663, %v2659
      %v3936 = vpack.c.b16 %v2664, %v2660
      %v3937 = vpack.c.b16 %v2665, %v2661
      %v3938 = vpack.c.b16 %v2666, %v2662
      %v3939 = vpack.c.b16 %v2671, %v2667
      %v3940 = vpack.c.b16 %v2672, %v2668
      %v3941 = vpack.c.b16 %v2673, %v2669
      %v3942 = vpack.c.b16 %v2674, %v2670
      %v3943 = vpack.c.b16 %v2679, %v2675
      %v3944 = vpack.c.b16 %v2680, %v2676
      %v3945 = vpack.c.b16 %v2681, %v2677
      %v3946 = vpack.c.b16 %v2682, %v2678
      %v3947 = vpack.c.b16 %v2687, %v2683
      %v3948 = vpack.c.b16 %v2688, %v2684
      %v3949 = vpack.c.b16 %v2689, %v2685
      %v3950 = vpack.c.b16 %v2690, %v2686
      %v3951 = vpack.c.b16 %v2695, %v2691
      %v3952 = vpack.c.b16 %v2696, %v2692
      %v3953 = vpack.c.b16 %v2697, %v2693
      %v3954 = vpack.c.b16 %v2698, %v2694
      %v3955 = vpack.c.b16 %v2703, %v2699
      %v3956 = vpack.c.b16 %v2704, %v2700
      %v3957 = vpack.c.b16 %v2705, %v2701
      %v3958 = vpack.c.b16 %v2706, %v2702
      %v3959 = vpack.c.b16 %v2711, %v2707
      %v3960 = vpack.c.b16 %v2712, %v2708
      %v3961 = vpack.c.b16 %v2713, %v2709
      %v3962 = vpack.c.b16 %v2714, %v2710
      %v3963 = vpack.c.b16 %v2719, %v2715
      %v3964 = vpack.c.b16 %v2720, %v2716
      %v3965 = vpack.c.b16 %v2721, %v2717
      %v3966 = vpack.c.b16 %v2722, %v2718
      %v3967 = vpack.c.b16 %v2727, %v2723
      %v3968 = vpack.c.b16 %v2728, %v2724
      %v3969 = vpack.c.b16 %v2729, %v2725
      %v3970 = vpack.c.b16 %v2730, %v2726
      %v3971 = vpack.c.b16 %v2735, %v2731
      %v3972 = vpack.c.b16 %v2736, %v2732
      %v3973 = vpack.c.b16 %v2737, %v2733
      %v3974 = vpack.c.b16 %v2738, %v2734
      %v3975 = vpack.c.b16 %v2743, %v2739
      %v3976 = vpack.c.b16 %v2744, %v2740
      %v3977 = vpack.c.b16 %v2745, %v2741
      %v3978 = vpack.c.b16 %v2746, %v2742
      %v3979 = vpack.c.b16 %v2751, %v2747
      %v3980 = vpack.c.b16 %v2752, %v2748
      %v3981 = vpack.c.b16 %v2753, %v2749
      %v3982 = vpack.c.b16 %v2754, %v2750
      %v3983 = vpack.c.b16 %v2759, %v2755
      %v3984 = vpack.c.b16 %v2760, %v2756
      %v3985 = vpack.c.b16 %v2761, %v2757
      %v3986 = vpack.c.b16 %v2762, %v2758
      %v3987 = vpack.c.b16 %v2767, %v2763
      %v3988 = vpack.c.b16 %v2768, %v2764
      %v3989 = vpack.c.b16 %v2769, %v2765
      %v3990 = vpack.c.b16 %v2770, %v2766
      %v3991 = vpack.c.b16 %v2775, %v2771
      %v3992 = vpack.c.b16 %v2776, %v2772
      %v3993 = vpack.c.b16 %v2777, %v2773
      %v3994 = vpack.c.b16 %v2778, %v2774
      %v3995 = vpack.c.b16 %v2783, %v2779
      %v3996 = vpack.c.b16 %v2784, %v2780
      %v3997 = vpack.c.b16 %v2785, %v2781
      %v3998 = vpack.c.b16 %v2786, %v2782
      %v3999 = vpack.c.b16 %v2791, %v2787
      %v4000 = vpack.c.b16 %v2792, %v2788
      %v4001 = vpack.c.b16 %v2793, %v2789
      %v4002 = vpack.c.b16 %v2794, %v2790
      %v4003 = vpack.c.b16 %v2799, %v2795
      %v4004 = vpack.c.b16 %v2800, %v2796
      %v4005 = vpack.c.b16 %v2801, %v2797
      %v4006 = vpack.c.b16 %v2802, %v2798
      %v4007 = vpack.c.b16 %v2807, %v2803
      %v4008 = vpack.c.b16 %v2808, %v2804
      %v4009 = vpack.c.b16 %v2809, %v2805
      %v4010 = vpack.c.b16 %v2810, %v2806
      %v4011 = vpack.c.b16 %v2815, %v2811
      %v4012 = vpack.c.b16 %v2816, %v2812
      %v4013 = vpack.c.b16 %v2817, %v2813
      %v4014 = vpack.c.b16 %v2818, %v2814
      %v4015 = vpack.c.b16 %v2823, %v2819
      %v4016 = vpack.c.b16 %v2824, %v2820
      %v4017 = vpack.c.b16 %v2825, %v2821
      %v4018 = vpack.c.b16 %v2826, %v2822
      %v4019 = vpack.c.b16 %v2831, %v2827
      %v4020 = vpack.c.b16 %v2832, %v2828
      %v4021 = vpack.c.b16 %v2833, %v2829
      %v4022 = vpack.c.b16 %v2834, %v2830
      %v4023 = vpack.c.b16 %v2839, %v2835
      %v4024 = vpack.c.b16 %v2840, %v2836
      %v4025 = vpack.c.b16 %v2841, %v2837
      %v4026 = vpack.c.b16 %v2842, %v2838
      %v4027 = vpack.c.b16 %v2847, %v2843
      %v4028 = vpack.c.b16 %v2848, %v2844
      %v4029 = vpack.c.b16 %v2849, %v2845
      %v4030 = vpack.c.b16 %v2850, %v2846
      %v4031 = vpack.c.b16 %v2855, %v2851
      %v4032 = vpack.c.b16 %v2856, %v2852
      %v4033 = vpack.c.b16 %v2857, %v2853
      %v4034 = vpack.c.b16 %v2858, %v2854
      %v4035 = vpack.c.b16 %v2863, %v2859
      %v4036 = vpack.c.b16 %v2864, %v2860
      %v4037 = vpack.c.b16 %v2865, %v2861
      %v4038 = vpack.c.b16 %v2866, %v2862
      %v4039 = vpack.c.b16 %v2871, %v2867
      %v4040 = vpack.c.b16 %v2872, %v2868
      %v4041 = vpack.c.b16 %v2873, %v2869
      %v4042 = vpack.c.b16 %v2874, %v2870
      %v4043 = vpack.c.b16 %v2879, %v2875
      %v4044 = vpack.c.b16 %v2880, %v2876
      %v4045 = vpack.c.b16 %v2881, %v2877
      %v4046 = vpack.c.b16 %v2882, %v2878
      %v4047 = vpack.c.b16 %v2887, %v2883
      %v4048 = vpack.c.b16 %v2888, %v2884
      %v4049 = vpack.c.b16 %v2889, %v2885
      %v4050 = vpack.c.b16 %v2890, %v2886
      %v4051 = vpack.c.b16 %v2895, %v2891
      %v4052 = vpack.c.b16 %v2896, %v2892
      %v4053 = vpack.c.b16 %v2897, %v2893
      %v4054 = vpack.c.b16 %v2898, %v2894
      %v4055 = vpack.c.b16 %v2903, %v2899
      %v4056 = vpack.c.b16 %v2904, %v2900
      %v4057 = vpack.c.b16 %v2905, %v2901
      %v4058 = vpack.c.b16 %v2906, %v2902
      %v4059 = vpack.c.b16 %v2911, %v2907
      %v4060 = vpack.c.b16 %v2912, %v2908
      %v4061 = vpack.c.b16 %v2913, %v2909
      %v4062 = vpack.c.b16 %v2914, %v2910
      %v4063 = vpack.c.b16 %v2919, %v2915
      %v4064 = vpack.c.b16 %v2920, %v2916
      %v4065 = vpack.c.b16 %v2921, %v2917
      %v4066 = vpack.c.b16 %v2922, %v2918
      %v4067 = vpack.c.b16 %v2927, %v2923
      %v4068 = vpack.c.b16 %v2928, %v2924
      %v4069 = vpack.c.b16 %v2929, %v2925
      %v4070 = vpack.c.b16 %v2930, %v2926
      %v4071 = vpack.c.b16 %v2935, %v2931
      %v4072 = vpack.c.b16 %v2936, %v2932
      %v4073 = vpack.c.b16 %v2937, %v2933
      %v4074 = vpack.c.b16 %v2938, %v2934
      %v4075 = vpack.c.b16 %v2943, %v2939
      %v4076 = vpack.c.b16 %v2944, %v2940
      %v4077 = vpack.c.b16 %v2945, %v2941
      %v4078 = vpack.c.b16 %v2946, %v2942
      %v4079 = vpack.c.b16 %v2951, %v2947
      %v4080 = vpack.c.b16 %v2952, %v2948
      %v4081 = vpack.c.b16 %v2953, %v2949
      %v4082 = vpack.c.b16 %v2954, %v2950
      %v4083 = vpack.c.b16 %v2959, %v2955
      %v4084 = vpack.c.b16 %v2960, %v2956
      %v4085 = vpack.c.b16 %v2961, %v2957
      %v4086 = vpack.c.b16 %v2962, %v2958
      %v4087 = vpack.c.b16 %v2967, %v2963
      %v4088 = vpack.c.b16 %v2968, %v2964
      %v4089 = vpack.c.b16 %v2969, %v2965
      %v4090 = vpack.c.b16 %v2970, %v2966
      %v4091 = vpack.c.b16 %v2975, %v2971
      %v4092 = vpack.c.b16 %v2976, %v2972
      %v4093 = vpack.c.b16 %v2977, %v2973
      %v4094 = vpack.c.b16 %v2978, %v2974
      %v4095 = vpack.c.b16 %v2983, %v2979
      %v4096 = vpack.c.b16 %v2984, %v2980
      %v4097 = vpack.c.b16 %v2985, %v2981
      %v4098 = vpack.c.b16 %v2986, %v2982
      %v4099 = vpack.c.b16 %v2991, %v2987
      %v4100 = vpack.c.b16 %v2992, %v2988
      %v4101 = vpack.c.b16 %v2993, %v2989
      %v4102 = vpack.c.b16 %v2994, %v2990
      %v4103 = vpack.c.b16 %v2999, %v2995
      %v4104 = vpack.c.b16 %v3000, %v2996
      %v4105 = vpack.c.b16 %v3001, %v2997
      %v4106 = vpack.c.b16 %v3002, %v2998
      %v4107 = vpack.c.b16 %v3007, %v3003
      %v4108 = vpack.c.b16 %v3008, %v3004
      %v4109 = vpack.c.b16 %v3009, %v3005
      %v4110 = vpack.c.b16 %v3010, %v3006
      %v4111 = vpack.c.b16 %v3015, %v3011
      %v4112 = vpack.c.b16 %v3016, %v3012
      %v4113 = vpack.c.b16 %v3017, %v3013
      %v4114 = vpack.c.b16 %v3018, %v3014
      %v4115 = vpack.c.b16 %v3023, %v3019
      %v4116 = vpack.c.b16 %v3024, %v3020
      %v4117 = vpack.c.b16 %v3025, %v3021
      %v4118 = vpack.c.b16 %v3026, %v3022
      %v4119 = vpack.c.b16 %v3031, %v3027
      %v4120 = vpack.c.b16 %v3032, %v3028
      %v4121 = vpack.c.b16 %v3033, %v3029
      %v4122 = vpack.c.b16 %v3034, %v3030
      %v4123 = vpack.c.b16 %v3039, %v3035
      %v4124 = vpack.c.b16 %v3040, %v3036
      %v4125 = vpack.c.b16 %v3041, %v3037
      %v4126 = vpack.c.b16 %v3042, %v3038
      %v4127 = vpack.c.b16 %v3047, %v3043
      %v4128 = vpack.c.b16 %v3048, %v3044
      %v4129 = vpack.c.b16 %v3049, %v3045
      %v4130 = vpack.c.b16 %v3050, %v3046
      %v4131 = vpack.c.b16 %v3055, %v3051
      %v4132 = vpack.c.b16 %v3056, %v3052
      %v4133 = vpack.c.b16 %v3057, %v3053
      %v4134 = vpack.c.b16 %v3058, %v3054
      %v4135 = vpack.c.b16 %v3063, %v3059
      %v4136 = vpack.c.b16 %v3064, %v3060
      %v4137 = vpack.c.b16 %v3065, %v3061
      %v4138 = vpack.c.b16 %v3066, %v3062
      %v4139 = vpack.c.b16 %v3071, %v3067
      %v4140 = vpack.c.b16 %v3072, %v3068
      %v4141 = vpack.c.b16 %v3073, %v3069
      %v4142 = vpack.c.b16 %v3074, %v3070
      %v4143 = vpack.c.b16 %v3079, %v3075
      %v4144 = vpack.c.b16 %v3080, %v3076
      %v4145 = vpack.c.b16 %v3081, %v3077
      %v4146 = vpack.c.b16 %v3082, %v3078
      %v4147 = vpack.c.b16 %v3087, %v3083
      %v4148 = vpack.c.b16 %v3088, %v3084
      %v4149 = vpack.c.b16 %v3089, %v3085
      %v4150 = vpack.c.b16 %v3090, %v3086
      %v4151 = vpack.c.b16 %v3095, %v3091
      %v4152 = vpack.c.b16 %v3096, %v3092
      %v4153 = vpack.c.b16 %v3097, %v3093
      %v4154 = vpack.c.b16 %v3098, %v3094
      %v4155 = vpack.c.b16 %v3103, %v3099
      %v4156 = vpack.c.b16 %v3104, %v3100
      %v4157 = vpack.c.b16 %v3105, %v3101
      %v4158 = vpack.c.b16 %v3106, %v3102
      %v4159 = vpack.c.b16 %v3111, %v3107
      %v4160 = vpack.c.b16 %v3112, %v3108
      %v4161 = vpack.c.b16 %v3113, %v3109
      %v4162 = vpack.c.b16 %v3114, %v3110
      %v4163 = vpack.c.b16 %v3119, %v3115
      %v4164 = vpack.c.b16 %v3120, %v3116
      %v4165 = vpack.c.b16 %v3121, %v3117
      %v4166 = vpack.c.b16 %v3122, %v3118
      %v4167 = vpack.c.b16 %v3127, %v3123
      %v4168 = vpack.c.b16 %v3128, %v3124
      %v4169 = vpack.c.b16 %v3129, %v3125
      %v4170 = vpack.c.b16 %v3130, %v3126
      %v4171 = vpack.c.b16 %v3135, %v3131
      %v4172 = vpack.c.b16 %v3136, %v3132
      %v4173 = vpack.c.b16 %v3137, %v3133
      %v4174 = vpack.c.b16 %v3138, %v3134
      %v4175 = vpack.c.b16 %v3143, %v3139
      %v4176 = vpack.c.b16 %v3144, %v3140
      %v4177 = vpack.c.b16 %v3145, %v3141
      %v4178 = vpack.c.b16 %v3146, %v3142
      %v4179 = vpack.c.b16 %v3151, %v3147
      %v4180 = vpack.c.b16 %v3152, %v3148
      %v4181 = vpack.c.b16 %v3153, %v3149
      %v4182 = vpack.c.b16 %v3154, %v3150
      %v4183 = vpack.c.b16 %v3159, %v3155
      %v4184 = vpack.c.b16 %v3160, %v3156
      %v4185 = vpack.c.b16 %v3161, %v3157
      %v4186 = vpack.c.b16 %v3162, %v3158
      %v4187 = vpack.c.b16 %v3167, %v3163
      %v4188 = vpack.c.b16 %v3168, %v3164
      %v4189 = vpack.c.b16 %v3169, %v3165
      %v4190 = vpack.c.b16 %v3170, %v3166
      %v4191 = vpack.c.b16 %v3175, %v3171
      %v4192 = vpack.c.b16 %v3176, %v3172
      %v4193 = vpack.c.b16 %v3177, %v3173
      %v4194 = vpack.c.b16 %v3178, %v3174
      %v4195 = vpack.c.b16 %v3183, %v3179
      %v4196 = vpack.c.b16 %v3184, %v3180
      %v4197 = vpack.c.b16 %v3185, %v3181
      %v4198 = vpack.c.b16 %v3186, %v3182
      %v4199 = vpack.c.b16 %v3191, %v3187
      %v4200 = vpack.c.b16 %v3192, %v3188
      %v4201 = vpack.c.b16 %v3193, %v3189
      %v4202 = vpack.c.b16 %v3194, %v3190
      %v4203 = vpack.c.b16 %v3199, %v3195
      %v4204 = vpack.c.b16 %v3200, %v3196
      %v4205 = vpack.c.b16 %v3201, %v3197
      %v4206 = vpack.c.b16 %v3202, %v3198
      %v4207 = vpack.c.b16 %v3207, %v3203
      %v4208 = vpack.c.b16 %v3208, %v3204
      %v4209 = vpack.c.b16 %v3209, %v3205
      %v4210 = vpack.c.b16 %v3210, %v3206
      %v4211 = vpack.c.b16 %v3215, %v3211
      %v4212 = vpack.c.b16 %v3216, %v3212
      %v4213 = vpack.c.b16 %v3217, %v3213
      %v4214 = vpack.c.b16 %v3218, %v3214
      %v4215 = vpack.c.b16 %v3223, %v3219
      %v4216 = vpack.c.b16 %v3224, %v3220
      %v4217 = vpack.c.b16 %v3225, %v3221
      %v4218 = vpack.c.b16 %v3226, %v3222
      %v4219 = vpack.c.b16 %v3231, %v3227
      %v4220 = vpack.c.b16 %v3232, %v3228
      %v4221 = vpack.c.b16 %v3233, %v3229
      %v4222 = vpack.c.b16 %v3234, %v3230
      %v4223 = vpack.c.b16 %v3239, %v3235
      %v4224 = vpack.c.b16 %v3240, %v3236
      %v4225 = vpack.c.b16 %v3241, %v3237
      %v4226 = vpack.c.b16 %v3242, %v3238
      %v4227 = vpack.c.b16 %v3247, %v3243
      %v4228 = vpack.c.b16 %v3248, %v3244
      %v4229 = vpack.c.b16 %v3249, %v3245
      %v4230 = vpack.c.b16 %v3250, %v3246
      %v4231 = vpack.c.b16 %v3255, %v3251
      %v4232 = vpack.c.b16 %v3256, %v3252
      %v4233 = vpack.c.b16 %v3257, %v3253
      %v4234 = vpack.c.b16 %v3258, %v3254
      %v4235 = vpack.c.b16 %v3263, %v3259
      %v4236 = vpack.c.b16 %v3264, %v3260
      %v4237 = vpack.c.b16 %v3265, %v3261
      %v4238 = vpack.c.b16 %v3266, %v3262
      %v4239 = vpack.c.b16 %v3271, %v3267
      %v4240 = vpack.c.b16 %v3272, %v3268
      %v4241 = vpack.c.b16 %v3273, %v3269
      %v4242 = vpack.c.b16 %v3274, %v3270
      %v4243 = vpack.c.b16 %v3279, %v3275
      %v4244 = vpack.c.b16 %v3280, %v3276
      %v4245 = vpack.c.b16 %v3281, %v3277
      %v4246 = vpack.c.b16 %v3282, %v3278
      %v4247 = vpack.c.b16 %v3287, %v3283
      %v4248 = vpack.c.b16 %v3288, %v3284
      %v4249 = vpack.c.b16 %v3289, %v3285
      %v4250 = vpack.c.b16 %v3290, %v3286
      %v4251 = vpack.c.b16 %v3295, %v3291
      %v4252 = vpack.c.b16 %v3296, %v3292
      %v4253 = vpack.c.b16 %v3297, %v3293
      %v4254 = vpack.c.b16 %v3298, %v3294
      %v4255 = vpack.c.b16 %v3303, %v3299
      %v4256 = vpack.c.b16 %v3304, %v3300
      %v4257 = vpack.c.b16 %v3305, %v3301
      %v4258 = vpack.c.b16 %v3306, %v3302
      %v4259 = vpack.c.b16 %v3311, %v3307
      %v4260 = vpack.c.b16 %v3312, %v3308
      %v4261 = vpack.c.b16 %v3313, %v3309
      %v4262 = vpack.c.b16 %v3314, %v3310
      %v4263 = vpack.c.b16 %v3319, %v3315
      %v4264 = vpack.c.b16 %v3320, %v3316
      %v4265 = vpack.c.b16 %v3321, %v3317
      %v4266 = vpack.c.b16 %v3322, %v3318
      %v4267 = vpack.c.b16 %v3327, %v3323
      %v4268 = vpack.c.b16 %v3328, %v3324
      %v4269 = vpack.c.b16 %v3329, %v3325
      %v4270 = vpack.c.b16 %v3330, %v3326
      %v4271 = vpack.c.b16 %v3335, %v3331
      %v4272 = vpack.c.b16 %v3336, %v3332
      %v4273 = vpack.c.b16 %v3337, %v3333
      %v4274 = vpack.c.b16 %v3338, %v3334
      %v4275 = vpack.c.b16 %v3343, %v3339
      %v4276 = vpack.c.b16 %v3344, %v3340
      %v4277 = vpack.c.b16 %v3345, %v3341
      %v4278 = vpack.c.b16 %v3346, %v3342
      %v4279 = vpack.c.b16 %v3351, %v3347
      %v4280 = vpack.c.b16 %v3352, %v3348
      %v4281 = vpack.c.b16 %v3353, %v3349
      %v4282 = vpack.c.b16 %v3354, %v3350
      %v4283 = vpack.c.b16 %v3359, %v3355
      %v4284 = vpack.c.b16 %v3360, %v3356
      %v4285 = vpack.c.b16 %v3361, %v3357
      %v4286 = vpack.c.b16 %v3362, %v3358
      %v4287 = vpack.c.b16 %v3367, %v3363
      %v4288 = vpack.c.b16 %v3368, %v3364
      %v4289 = vpack.c.b16 %v3369, %v3365
      %v4290 = vpack.c.b16 %v3370, %v3366
      %v4291 = vpack.c.b16 %v3375, %v3371
      %v4292 = vpack.c.b16 %v3376, %v3372
      %v4293 = vpack.c.b16 %v3377, %v3373
      %v4294 = vpack.c.b16 %v3378, %v3374
      %v4295 = vpack.c.b16 %v3383, %v3379
      %v4296 = vpack.c.b16 %v3384, %v3380
      %v4297 = vpack.c.b16 %v3385, %v3381
      %v4298 = vpack.c.b16 %v3386, %v3382
      %v4299 = vpack.c.b16 %v3391, %v3387
      %v4300 = vpack.c.b16 %v3392, %v3388
      %v4301 = vpack.c.b16 %v3393, %v3389
      %v4302 = vpack.c.b16 %v3394, %v3390
      %v4303 = vpack.c.b16 %v3399, %v3395
      %v4304 = vpack.c.b16 %v3400, %v3396
      %v4305 = vpack.c.b16 %v3401, %v3397
      %v4306 = vpack.c.b16 %v3402, %v3398
      %v4307 = vpack.c.b16 %v3407, %v3403
      %v4308 = vpack.c.b16 %v3408, %v3404
      %v4309 = vpack.c.b16 %v3409, %v3405
      %v4310 = vpack.c.b16 %v3410, %v3406
      %v4311 = vpack.c.b16 %v3415, %v3411
      %v4312 = vpack.c.b16 %v3416, %v3412
      %v4313 = vpack.c.b16 %v3417, %v3413
      %v4314 = vpack.c.b16 %v3418, %v3414
      %v4315 = vpack.c.b16 %v3423, %v3419
      %v4316 = vpack.c.b16 %v3424, %v3420
      %v4317 = vpack.c.b16 %v3425, %v3421
      %v4318 = vpack.c.b16 %v3426, %v3422
      %v4319 = vpack.c.b16 %v3431, %v3427
      %v4320 = vpack.c.b16 %v3432, %v3428
      %v4321 = vpack.c.b16 %v3433, %v3429
      %v4322 = vpack.c.b16 %v3434, %v3430
      %v4323 = vpack.c.b16 %v3439, %v3435
      %v4324 = vpack.c.b16 %v3440, %v3436
      %v4325 = vpack.c.b16 %v3441, %v3437
      %v4326 = vpack.c.b16 %v3442, %v3438
      %v4327 = vpack.c.b16 %v3447, %v3443
      %v4328 = vpack.c.b16 %v3448, %v3444
      %v4329 = vpack.c.b16 %v3449, %v3445
      %v4330 = vpack.c.b16 %v3450, %v3446
      %v4331 = vpack.c.b16 %v3455, %v3451
      %v4332 = vpack.c.b16 %v3456, %v3452
      %v4333 = vpack.c.b16 %v3457, %v3453
      %v4334 = vpack.c.b16 %v3458, %v3454
      %v4335 = vpack.c.b16 %v3463, %v3459
      %v4336 = vpack.c.b16 %v3464, %v3460
      %v4337 = vpack.c.b16 %v3465, %v3461
      %v4338 = vpack.c.b16 %v3466, %v3462
      %v4339 = vpack.c.b16 %v3471, %v3467
      %v4340 = vpack.c.b16 %v3472, %v3468
      %v4341 = vpack.c.b16 %v3473, %v3469
      %v4342 = vpack.c.b16 %v3474, %v3470
      %v4343 = vpack.c.b16 %v3479, %v3475
      %v4344 = vpack.c.b16 %v3480, %v3476
      %v4345 = vpack.c.b16 %v3481, %v3477
      %v4346 = vpack.c.b16 %v3482, %v3478
      %v4347 = vpack.c.b16 %v3487, %v3483
      %v4348 = vpack.c.b16 %v3488, %v3484
      %v4349 = vpack.c.b16 %v3489, %v3485
      %v4350 = vpack.c.b16 %v3490, %v3486
      %v4351 = vpack.c.b16 %v3495, %v3491
      %v4352 = vpack.c.b16 %v3496, %v3492
      %v4353 = vpack.c.b16 %v3497, %v3493
      %v4354 = vpack.c.b16 %v3498, %v3494
      %v4355 = vpack.c.b16 %v3503, %v3499
      %v4356 = vpack.c.b16 %v3504, %v3500
      %v4357 = vpack.c.b16 %v3505, %v3501
      %v4358 = vpack.c.b16 %v3506, %v3502
      %v4359 = vpack.c.b16 %v3511, %v3507
      %v4360 = vpack.c.b16 %v3512, %v3508
      %v4361 = vpack.c.b16 %v3513, %v3509
      %v4362 = vpack.c.b16 %v3514, %v3510
      %v4363 = vpack.c.b16 %v3519, %v3515
      %v4364 = vpack.c.b16 %v3520, %v3516
      %v4365 = vpack.c.b16 %v3521, %v3517
      %v4366 = vpack.c.b16 %v3522, %v3518
      %v4367 = vpack.c.b16 %v3527, %v3523
      %v4368 = vpack.c.b16 %v3528, %v3524
      %v4369 = vpack.c.b16 %v3529, %v3525
      %v4370 = vpack.c.b16 %v3530, %v3526
      %v4371 = vpack.c.b16 %v3535, %v3531
      %v4372 = vpack.c.b16 %v3536, %v3532
      %v4373 = vpack.c.b16 %v3537, %v3533
      %v4374 = vpack.c.b16 %v3538, %v3534
      %v4375 = vpack.c.b16 %v3543, %v3539
      %v4376 = vpack.c.b16 %v3544, %v3540
      %v4377 = vpack.c.b16 %v3545, %v3541
      %v4378 = vpack.c.b16 %v3546, %v3542
      %v4379 = vpack.c.b16 %v3551, %v3547
      %v4380 = vpack.c.b16 %v3552, %v3548
      %v4381 = vpack.c.b16 %v3553, %v3549
      %v4382 = vpack.c.b16 %v3554, %v3550
      %v4383 = vpack.c.b16 %v3559, %v3555
      %v4384 = vpack.c.b16 %v3560, %v3556
      %v4385 = vpack.c.b16 %v3561, %v3557
      %v4386 = vpack.c.b16 %v3562, %v3558
      %v4387 = vpack.c.b16 %v3567, %v3563
      %v4388 = vpack.c.b16 %v3568, %v3564
      %v4389 = vpack.c.b16 %v3569, %v3565
      %v4390 = vpack.c.b16 %v3570, %v3566
      %v4391 = vpack.c.b16 %v3575, %v3571
      %v4392 = vpack.c.b16 %v3576, %v3572
      %v4393 = vpack.c.b16 %v3577, %v3573
      %v4394 = vpack.c.b16 %v3578, %v3574
      %v4395 = vpack.c.b16 %v3583, %v3579
      %v4396 = vpack.c.b16 %v3584, %v3580
      %v4397 = vpack.c.b16 %v3585, %v3581
      %v4398 = vpack.c.b16 %v3586, %v3582
      %v4399 = vpack.c.b16 %v3591, %v3587
      %v4400 = vpack.c.b16 %v3592, %v3588
      %v4401 = vpack.c.b16 %v3593, %v3589
      %v4402 = vpack.c.b16 %v3594, %v3590
      %v4403 = vpack.c.b16 %v3599, %v3595
      %v4404 = vpack.c.b16 %v3600, %v3596
      %v4405 = vpack.c.b16 %v3601, %v3597
      %v4406 = vpack.c.b16 %v3602, %v3598
      %v4407 = vpack.c.b16 %v3607, %v3603
      %v4408 = vpack.c.b16 %v3608, %v3604
      %v4409 = vpack.c.b16 %v3609, %v3605
      %v4410 = vpack.c.b16 %v3610, %v3606
      %v4411 = vpack.c.b16 %v3615, %v3611
      %v4412 = vpack.c.b16 %v3616, %v3612
      %v4413 = vpack.c.b16 %v3617, %v3613
      %v4414 = vpack.c.b16 %v3618, %v3614
      %v4415 = vpack.c.b16 %v3623, %v3619
      %v4416 = vpack.c.b16 %v3624, %v3620
      %v4417 = vpack.c.b16 %v3625, %v3621
      %v4418 = vpack.c.b16 %v3626, %v3622
      %v4419 = vpack.c.b16 %v3631, %v3627
      %v4420 = vpack.c.b16 %v3632, %v3628
      %v4421 = vpack.c.b16 %v3633, %v3629
      %v4422 = vpack.c.b16 %v3634, %v3630
      %v4423 = vpack.c.b16 %v3639, %v3635
      %v4424 = vpack.c.b16 %v3640, %v3636
      %v4425 = vpack.c.b16 %v3641, %v3637
      %v4426 = vpack.c.b16 %v3642, %v3638
      %vm5211 = vcmask 523264
      %v5213 = vsel %vm5211, %v1266, 0
      %5215 = vmatprep.subr.bf16.mxu0 %v3644
      %5216 = vmatpush1.bf16.msra.mxu0 %v3643
      %5217 = vmatprep.subr.bf16.mxu0 %v3648
      %5218 = vmatpush1.bf16.msra.mxu0 %v3647
      %5219 = vmatprep.subr.bf16.mxu0 %v3652
      %5220 = vmatpush1.bf16.msra.mxu0 %v3651
      %5221 = vmatprep.subr.bf16.mxu0 %v3656
      %5222 = vmatpush1.bf16.msra.mxu0 %v3655
      %5223 = vmatprep.subr.bf16.mxu0 %v3660
      %5224 = vmatpush1.bf16.msra.mxu0 %v3659
      %5225 = vmatprep.subr.bf16.mxu0 %v3664
      %5226 = vmatpush1.bf16.msra.mxu0 %v3663
      %5227 = vmatprep.subr.bf16.mxu0 %v3668
      %5228 = vmatpush1.bf16.msra.mxu0 %v3667
      %5229 = vmatprep.subr.bf16.mxu0 %v3672
      %5230 = vmatpush1.bf16.msra.mxu0 %v3671
      %5231 = vmatprep.subr.bf16.mxu0 %v3676
      %5232 = vmatpush1.bf16.msra.mxu0 %v3675
      %5233 = vmatprep.subr.bf16.mxu0 %v3680
      %5234 = vmatpush1.bf16.msra.mxu0 %v3679
      %5235 = vmatprep.subr.bf16.mxu0 %v3684
      %5236 = vmatpush1.bf16.msra.mxu0 %v3683
      %5237 = vmatprep.subr.bf16.mxu0 %v3688
      %5238 = vmatpush1.bf16.msra.mxu0 %v3687
      %5239 = vmatprep.subr.bf16.mxu0 %v3692
      %5240 = vmatpush1.bf16.msra.mxu0 %v3691
      %5241 = vmatprep.subr.bf16.mxu0 %v3696
      %5242 = vmatpush1.bf16.msra.mxu0 %v3695
      %5243 = vmatprep.subr.bf16.mxu0 %v3700
      %5244 = vmatpush1.bf16.msra.mxu0 %v3699
      %5245 = vmatprep.subr.bf16.mxu0 %v3704
      %5246 = vmatpush1.bf16.msra.mxu0 %v3703
      %5247 = vmatprep.mubr.bf16.mxu0 %v1143
      %5248 = vmatmul.mubr.bf16.gmra.mrb[0].mxu0 %v1129
      %v5249 = vpop.f32.mrb[0].mxu0
      %v5250 = vadd.f32 %v1085, %v5249
      %v5251 = vpop.f32.mrb[0].mxu0
      %v5252 = vadd.f32 %v1089, %v5251
      %v5253 = vpop.f32.mrb[0].mxu0
      %v5254 = vpop.f32.mrb[0].mxu0
      %5255 = vdwg.mxu0
      %5256 = vmatprep.subr.bf16.mxu0 %v3708
      %5257 = vmatpush1.bf16.msra.mxu0 %v3707
      %5258 = vmatprep.subr.bf16.mxu0 %v3712
      %5259 = vmatpush1.bf16.msra.mxu0 %v3711
      %5260 = vmatprep.subr.bf16.mxu0 %v3716
      %5261 = vmatpush1.bf16.msra.mxu0 %v3715
      %5262 = vmatprep.subr.bf16.mxu0 %v3720
      %5263 = vmatpush1.bf16.msra.mxu0 %v3719
      %5264 = vmatprep.subr.bf16.mxu0 %v3724
      %5265 = vmatpush1.bf16.msra.mxu0 %v3723
      %5266 = vmatprep.subr.bf16.mxu0 %v3728
      %5267 = vmatpush1.bf16.msra.mxu0 %v3727
      %5268 = vmatprep.subr.bf16.mxu0 %v3732
      %5269 = vmatpush1.bf16.msra.mxu0 %v3731
      %5270 = vmatprep.subr.bf16.mxu0 %v3736
      %5271 = vmatpush1.bf16.msra.mxu0 %v3735
      %5272 = vmatprep.subr.bf16.mxu0 %v3740
      %5273 = vmatpush1.bf16.msra.mxu0 %v3739
      %5274 = vmatprep.subr.bf16.mxu0 %v3744
      %5275 = vmatpush1.bf16.msra.mxu0 %v3743
      %5276 = vmatprep.subr.bf16.mxu0 %v3748
      %5277 = vmatpush1.bf16.msra.mxu0 %v3747
      %5278 = vmatprep.subr.bf16.mxu0 %v3752
      %5279 = vmatpush1.bf16.msra.mxu0 %v3751
      %5280 = vmatprep.subr.bf16.mxu0 %v3756
      %5281 = vmatpush1.bf16.msra.mxu0 %v3755
      %5282 = vmatprep.subr.bf16.mxu0 %v3760
      %5283 = vmatpush1.bf16.msra.mxu0 %v3759
      %5284 = vmatprep.subr.bf16.mxu0 %v3764
      %5285 = vmatpush1.bf16.msra.mxu0 %v3763
      %5286 = vmatprep.subr.bf16.mxu0 %v3768
      %5287 = vmatpush1.bf16.msra.mxu0 %v3767
      %5288 = vmatprep.mubr.bf16.mxu0 %v1153
      %5289 = vmatmul.mubr.bf16.gmra.mrb[0].mxu0 %v1151
      %v5290 = vpop.f32.mrb[0].mxu0
      %v5291 = vadd.f32 %v5250, %v5290
      %v5292 = vpop.f32.mrb[0].mxu0
      %v5293 = vadd.f32 %v5252, %v5292
      %v5294 = vpop.f32.mrb[0].mxu0
      %v5295 = vpop.f32.mrb[0].mxu0
      %5296 = vdwg.mxu0
      %5297 = vmatprep.subr.bf16.mxu0 %v3772
      %5298 = vmatpush1.bf16.msra.mxu0 %v3771
      %5299 = vmatprep.subr.bf16.mxu0 %v3776
      %5300 = vmatpush1.bf16.msra.mxu0 %v3775
      %5301 = vmatprep.subr.bf16.mxu0 %v3780
      %5302 = vmatpush1.bf16.msra.mxu0 %v3779
      %5303 = vmatprep.subr.bf16.mxu0 %v3784
      %5304 = vmatpush1.bf16.msra.mxu0 %v3783
      %5305 = vmatprep.subr.bf16.mxu0 %v3788
      %5306 = vmatpush1.bf16.msra.mxu0 %v3787
      %5307 = vmatprep.subr.bf16.mxu0 %v3792
      %5308 = vmatpush1.bf16.msra.mxu0 %v3791
      %5309 = vmatprep.subr.bf16.mxu0 %v3796
      %5310 = vmatpush1.bf16.msra.mxu0 %v3795
      %5311 = vmatprep.subr.bf16.mxu0 %v3800
      %5312 = vmatpush1.bf16.msra.mxu0 %v3799
      %5313 = vmatprep.subr.bf16.mxu0 %v3804
      %5314 = vmatpush1.bf16.msra.mxu0 %v3803
      %5315 = vmatprep.subr.bf16.mxu0 %v3808
      %5316 = vmatpush1.bf16.msra.mxu0 %v3807
      %5317 = vmatprep.subr.bf16.mxu0 %v3812
      %5318 = vmatpush1.bf16.msra.mxu0 %v3811
      %5319 = vmatprep.subr.bf16.mxu0 %v3816
      %5320 = vmatpush1.bf16.msra.mxu0 %v3815
      %5321 = vmatprep.subr.bf16.mxu0 %v3820
      %5322 = vmatpush1.bf16.msra.mxu0 %v3819
      %5323 = vmatprep.subr.bf16.mxu0 %v3824
      %5324 = vmatpush1.bf16.msra.mxu0 %v3823
      %5325 = vmatprep.subr.bf16.mxu0 %v3828
      %5326 = vmatpush1.bf16.msra.mxu0 %v3827
      %5327 = vmatprep.subr.bf16.mxu0 %v3832
      %5328 = vmatpush1.bf16.msra.mxu0 %v3831
      %5329 = vmatprep.mubr.bf16.mxu0 %v1150
      %5330 = vmatmul.mubr.bf16.gmra.mrb[0].mxu0 %v1136
      %v5331 = vpop.f32.mrb[0].mxu0
      %v5332 = vadd.f32 %v5291, %v5331
      %v5333 = vpop.f32.mrb[0].mxu0
      %v5334 = vadd.f32 %v5293, %v5333
      %v5335 = vpop.f32.mrb[0].mxu0
      %v5336 = vpop.f32.mrb[0].mxu0
      %5337 = vdwg.mxu0
      %5338 = vmatprep.subr.bf16.mxu0 %v3836
      %5339 = vmatpush1.bf16.msra.mxu0 %v3835
      %5340 = vmatprep.subr.bf16.mxu0 %v3840
      %5341 = vmatpush1.bf16.msra.mxu0 %v3839
      %5342 = vmatprep.subr.bf16.mxu0 %v3844
      %5343 = vmatpush1.bf16.msra.mxu0 %v3843
      %5344 = vmatprep.subr.bf16.mxu0 %v3848
      %5345 = vmatpush1.bf16.msra.mxu0 %v3847
      %5346 = vmatprep.subr.bf16.mxu0 %v3852
      %5347 = vmatpush1.bf16.msra.mxu0 %v3851
      %5348 = vmatprep.subr.bf16.mxu0 %v3856
      %5349 = vmatpush1.bf16.msra.mxu0 %v3855
      %5350 = vmatprep.subr.bf16.mxu0 %v3860
      %5351 = vmatpush1.bf16.msra.mxu0 %v3859
      %5352 = vmatprep.subr.bf16.mxu0 %v3864
      %5353 = vmatpush1.bf16.msra.mxu0 %v3863
      %5354 = vmatprep.subr.bf16.mxu0 %v3868
      %5355 = vmatpush1.bf16.msra.mxu0 %v3867
      %5356 = vmatprep.subr.bf16.mxu0 %v3872
      %5357 = vmatpush1.bf16.msra.mxu0 %v3871
      %5358 = vmatprep.subr.bf16.mxu0 %v3876
      %5359 = vmatpush1.bf16.msra.mxu0 %v3875
      %5360 = vmatprep.subr.bf16.mxu0 %v3880
      %5361 = vmatpush1.bf16.msra.mxu0 %v3879
      %5362 = vmatprep.subr.bf16.mxu0 %v3884
      %5363 = vmatpush1.bf16.msra.mxu0 %v3883
      %5364 = vmatprep.subr.bf16.mxu0 %v3888
      %5365 = vmatpush1.bf16.msra.mxu0 %v3887
      %5366 = vmatprep.subr.bf16.mxu0 %v3892
      %5367 = vmatpush1.bf16.msra.mxu0 %v3891
      %5368 = vmatprep.subr.bf16.mxu0 %v3896
      %5369 = vmatpush1.bf16.msra.mxu0 %v3895
      %5370 = vmatprep.mubr.bf16.mxu0 %v1154
      %5371 = vmatmul.mubr.bf16.gmra.mrb[0].mxu0 %v1152
      %v5372 = vpop.f32.mrb[0].mxu0
      %v5373 = vadd.f32 %v5332, %v5372
      %v5374 = vpop.f32.mrb[0].mxu0
      %v5375 = vadd.f32 %v5334, %v5374
      %v5376 = vpop.f32.mrb[0].mxu0
      %v5377 = vpop.f32.mrb[0].mxu0
      %5378 = vdwg.mxu0
      %5379 = vmatprep.subr.bf16.mxu0 %v3900
      %5380 = vmatpush1.bf16.msra.mxu0 %v3899
      %5381 = vmatprep.subr.bf16.mxu0 %v3904
      %5382 = vmatpush1.bf16.msra.mxu0 %v3903
      %5383 = vmatprep.subr.bf16.mxu0 %v3908
      %5384 = vmatpush1.bf16.msra.mxu0 %v3907
      %5385 = vmatprep.subr.bf16.mxu0 %v3912
      %5386 = vmatpush1.bf16.msra.mxu0 %v3911
      %5387 = vmatprep.subr.bf16.mxu0 %v3916
      %5388 = vmatpush1.bf16.msra.mxu0 %v3915
      %5389 = vmatprep.subr.bf16.mxu0 %v3920
      %5390 = vmatpush1.bf16.msra.mxu0 %v3919
      %5391 = vmatprep.subr.bf16.mxu0 %v3924
      %5392 = vmatpush1.bf16.msra.mxu0 %v3923
      %5393 = vmatprep.subr.bf16.mxu0 %v3928
      %5394 = vmatpush1.bf16.msra.mxu0 %v3927
      %5395 = vmatprep.subr.bf16.mxu0 %v3932
      %5396 = vmatpush1.bf16.msra.mxu0 %v3931
      %5397 = vmatprep.subr.bf16.mxu0 %v3936
      %5398 = vmatpush1.bf16.msra.mxu0 %v3935
      %5399 = vmatprep.subr.bf16.mxu0 %v3940
      %5400 = vmatpush1.bf16.msra.mxu0 %v3939
      %5401 = vmatprep.subr.bf16.mxu0 %v3944
      %5402 = vmatpush1.bf16.msra.mxu0 %v3943
      %5403 = vmatprep.subr.bf16.mxu0 %v3948
      %5404 = vmatpush1.bf16.msra.mxu0 %v3947
      %5405 = vmatprep.subr.bf16.mxu0 %v3952
      %5406 = vmatpush1.bf16.msra.mxu0 %v3951
      %5407 = vmatprep.subr.bf16.mxu0 %v3956
      %5408 = vmatpush1.bf16.msra.mxu0 %v3955
      %5409 = vmatprep.subr.bf16.mxu0 %v3960
      %5410 = vmatpush1.bf16.msra.mxu0 %v3959
      %5411 = vmatprep.mubr.bf16.mxu0 %v1192
      %5412 = vmatmul.mubr.bf16.gmra.mrb[0].mxu0 %v1178
      %v5413 = vpop.f32.mrb[0].mxu0
      %v5414 = vadd.f32 %v5373, %v5413
      %v5415 = vpop.f32.mrb[0].mxu0
      %v5416 = vadd.f32 %v5375, %v5415
      %v5417 = vpop.f32.mrb[0].mxu0
      %v5418 = vpop.f32.mrb[0].mxu0
      %5419 = vdwg.mxu0
      %5420 = vmatprep.subr.bf16.mxu0 %v3964
      %5421 = vmatpush1.bf16.msra.mxu0 %v3963
      %5422 = vmatprep.subr.bf16.mxu0 %v3968
      %5423 = vmatpush1.bf16.msra.mxu0 %v3967
      %5424 = vmatprep.subr.bf16.mxu0 %v3972
      %5425 = vmatpush1.bf16.msra.mxu0 %v3971
      %5426 = vmatprep.subr.bf16.mxu0 %v3976
      %5427 = vmatpush1.bf16.msra.mxu0 %v3975
      %5428 = vmatprep.subr.bf16.mxu0 %v3980
      %5429 = vmatpush1.bf16.msra.mxu0 %v3979
      %5430 = vmatprep.subr.bf16.mxu0 %v3984
      %5431 = vmatpush1.bf16.msra.mxu0 %v3983
      %5432 = vmatprep.subr.bf16.mxu0 %v3988
      %5433 = vmatpush1.bf16.msra.mxu0 %v3987
      %5434 = vmatprep.subr.bf16.mxu0 %v3992
      %5435 = vmatpush1.bf16.msra.mxu0 %v3991
      %5436 = vmatprep.subr.bf16.mxu0 %v3996
      %5437 = vmatpush1.bf16.msra.mxu0 %v3995
      %5438 = vmatprep.subr.bf16.mxu0 %v4000
      %5439 = vmatpush1.bf16.msra.mxu0 %v3999
      %5440 = vmatprep.subr.bf16.mxu0 %v4004
      %5441 = vmatpush1.bf16.msra.mxu0 %v4003
      %5442 = vmatprep.subr.bf16.mxu0 %v4008
      %5443 = vmatpush1.bf16.msra.mxu0 %v4007
      %5444 = vmatprep.subr.bf16.mxu0 %v4012
      %5445 = vmatpush1.bf16.msra.mxu0 %v4011
      %5446 = vmatprep.subr.bf16.mxu0 %v4016
      %5447 = vmatpush1.bf16.msra.mxu0 %v4015
      %5448 = vmatprep.subr.bf16.mxu0 %v4020
      %5449 = vmatpush1.bf16.msra.mxu0 %v4019
      %5450 = vmatprep.subr.bf16.mxu0 %v4024
      %5451 = vmatpush1.bf16.msra.mxu0 %v4023
      %5452 = vmatprep.mubr.bf16.mxu0 %v1202
      %5453 = vmatmul.mubr.bf16.gmra.mrb[0].mxu0 %v1200
      %v5454 = vpop.f32.mrb[0].mxu0
      %v5455 = vadd.f32 %v5414, %v5454
      %v5456 = vpop.f32.mrb[0].mxu0
      %v5457 = vadd.f32 %v5416, %v5456
      %v5458 = vpop.f32.mrb[0].mxu0
      %v5459 = vpop.f32.mrb[0].mxu0
      %5460 = vdwg.mxu0
      %5461 = vmatprep.subr.bf16.mxu0 %v4028
      %5462 = vmatpush1.bf16.msra.mxu0 %v4027
      %5463 = vmatprep.subr.bf16.mxu0 %v4032
      %5464 = vmatpush1.bf16.msra.mxu0 %v4031
      %5465 = vmatprep.subr.bf16.mxu0 %v4036
      %5466 = vmatpush1.bf16.msra.mxu0 %v4035
      %5467 = vmatprep.subr.bf16.mxu0 %v4040
      %5468 = vmatpush1.bf16.msra.mxu0 %v4039
      %5469 = vmatprep.subr.bf16.mxu0 %v4044
      %5470 = vmatpush1.bf16.msra.mxu0 %v4043
      %5471 = vmatprep.subr.bf16.mxu0 %v4048
      %5472 = vmatpush1.bf16.msra.mxu0 %v4047
      %5473 = vmatprep.subr.bf16.mxu0 %v4052
      %5474 = vmatpush1.bf16.msra.mxu0 %v4051
      %5475 = vmatprep.subr.bf16.mxu0 %v4056
      %5476 = vmatpush1.bf16.msra.mxu0 %v4055
      %5477 = vmatprep.subr.bf16.mxu0 %v4060
      %5478 = vmatpush1.bf16.msra.mxu0 %v4059
      %5479 = vmatprep.subr.bf16.mxu0 %v4064
      %5480 = vmatpush1.bf16.msra.mxu0 %v4063
      %5481 = vmatprep.subr.bf16.mxu0 %v4068
      %5482 = vmatpush1.bf16.msra.mxu0 %v4067
      %5483 = vmatprep.subr.bf16.mxu0 %v4072
      %5484 = vmatpush1.bf16.msra.mxu0 %v4071
      %5485 = vmatprep.subr.bf16.mxu0 %v4076
      %5486 = vmatpush1.bf16.msra.mxu0 %v4075
      %5487 = vmatprep.subr.bf16.mxu0 %v4080
      %5488 = vmatpush1.bf16.msra.mxu0 %v4079
      %5489 = vmatprep.subr.bf16.mxu0 %v4084
      %5490 = vmatpush1.bf16.msra.mxu0 %v4083
      %5491 = vmatprep.subr.bf16.mxu0 %v4088
      %5492 = vmatpush1.bf16.msra.mxu0 %v4087
      %5493 = vmatprep.mubr.bf16.mxu0 %v1199
      %5494 = vmatmul.mubr.bf16.gmra.mrb[0].mxu0 %v1185
      %v5495 = vpop.f32.mrb[0].mxu0
      %v5496 = vadd.f32 %v5455, %v5495
      %v5497 = vpop.f32.mrb[0].mxu0
      %v5498 = vadd.f32 %v5457, %v5497
      %v5499 = vpop.f32.mrb[0].mxu0
      %v5500 = vpop.f32.mrb[0].mxu0
      %5501 = vdwg.mxu0
      %5502 = vmatprep.subr.bf16.mxu0 %v4092
      %5503 = vmatpush1.bf16.msra.mxu0 %v4091
      %5504 = vmatprep.subr.bf16.mxu0 %v4096
      %5505 = vmatpush1.bf16.msra.mxu0 %v4095
      %5506 = vmatprep.subr.bf16.mxu0 %v4100
      %5507 = vmatpush1.bf16.msra.mxu0 %v4099
      %5508 = vmatprep.subr.bf16.mxu0 %v4104
      %5509 = vmatpush1.bf16.msra.mxu0 %v4103
      %5510 = vmatprep.subr.bf16.mxu0 %v4108
      %5511 = vmatpush1.bf16.msra.mxu0 %v4107
      %5512 = vmatprep.subr.bf16.mxu0 %v4112
      %5513 = vmatpush1.bf16.msra.mxu0 %v4111
      %5514 = vmatprep.subr.bf16.mxu0 %v4116
      %5515 = vmatpush1.bf16.msra.mxu0 %v4115
      %5516 = vmatprep.subr.bf16.mxu0 %v4120
      %5517 = vmatpush1.bf16.msra.mxu0 %v4119
      %5518 = vmatprep.subr.bf16.mxu0 %v4124
      %5519 = vmatpush1.bf16.msra.mxu0 %v4123
      %5520 = vmatprep.subr.bf16.mxu0 %v4128
      %5521 = vmatpush1.bf16.msra.mxu0 %v4127
      %5522 = vmatprep.subr.bf16.mxu0 %v4132
      %5523 = vmatpush1.bf16.msra.mxu0 %v4131
      %5524 = vmatprep.subr.bf16.mxu0 %v4136
      %5525 = vmatpush1.bf16.msra.mxu0 %v4135
      %5526 = vmatprep.subr.bf16.mxu0 %v4140
      %5527 = vmatpush1.bf16.msra.mxu0 %v4139
      %5528 = vmatprep.subr.bf16.mxu0 %v4144
      %5529 = vmatpush1.bf16.msra.mxu0 %v4143
      %5530 = vmatprep.subr.bf16.mxu0 %v4148
      %5531 = vmatpush1.bf16.msra.mxu0 %v4147
      %5532 = vmatprep.subr.bf16.mxu0 %v4152
      %5533 = vmatpush1.bf16.msra.mxu0 %v4151
      %5534 = vmatprep.mubr.bf16.mxu0 %v1203
      %5535 = vmatmul.mubr.bf16.gmra.mrb[0].mxu0 %v1201
      %v5536 = vpop.f32.mrb[0].mxu0
      %v5537 = vadd.f32 %v5496, %v5536
      %v5538 = vpop.f32.mrb[0].mxu0
      %v5539 = vadd.f32 %v5498, %v5538
      %v5540 = vpop.f32.mrb[0].mxu0
      %v5541 = vpop.f32.mrb[0].mxu0
      %5542 = vdwg.mxu0
      %5543 = vmatprep.subr.bf16.mxu0 %v4156
      %5544 = vmatpush1.bf16.msra.mxu0 %v4155
      %5545 = vmatprep.subr.bf16.mxu0 %v4160
      %5546 = vmatpush1.bf16.msra.mxu0 %v4159
      %5547 = vmatprep.subr.bf16.mxu0 %v4164
      %5548 = vmatpush1.bf16.msra.mxu0 %v4163
      %5549 = vmatprep.subr.bf16.mxu0 %v4168
      %5550 = vmatpush1.bf16.msra.mxu0 %v4167
      %5551 = vmatprep.subr.bf16.mxu0 %v4172
      %5552 = vmatpush1.bf16.msra.mxu0 %v4171
      %5553 = vmatprep.subr.bf16.mxu0 %v4176
      %5554 = vmatpush1.bf16.msra.mxu0 %v4175
      %5555 = vmatprep.subr.bf16.mxu0 %v4180
      %5556 = vmatpush1.bf16.msra.mxu0 %v4179
      %5557 = vmatprep.subr.bf16.mxu0 %v4184
      %5558 = vmatpush1.bf16.msra.mxu0 %v4183
      %5559 = vmatprep.subr.bf16.mxu0 %v4188
      %5560 = vmatpush1.bf16.msra.mxu0 %v4187
      %5561 = vmatprep.subr.bf16.mxu0 %v4192
      %5562 = vmatpush1.bf16.msra.mxu0 %v4191
      %5563 = vmatprep.subr.bf16.mxu0 %v4196
      %5564 = vmatpush1.bf16.msra.mxu0 %v4195
      %5565 = vmatprep.subr.bf16.mxu0 %v4200
      %5566 = vmatpush1.bf16.msra.mxu0 %v4199
      %5567 = vmatprep.subr.bf16.mxu0 %v4204
      %5568 = vmatpush1.bf16.msra.mxu0 %v4203
      %5569 = vmatprep.subr.bf16.mxu0 %v4208
      %5570 = vmatpush1.bf16.msra.mxu0 %v4207
      %5571 = vmatprep.subr.bf16.mxu0 %v4212
      %5572 = vmatpush1.bf16.msra.mxu0 %v4211
      %5573 = vmatprep.subr.bf16.mxu0 %v4216
      %5574 = vmatpush1.bf16.msra.mxu0 %v4215
      %5575 = vmatprep.mubr.bf16.mxu0 %v1241
      %5576 = vmatmul.mubr.bf16.gmra.mrb[0].mxu0 %v1227
      %v5577 = vpop.f32.mrb[0].mxu0
      %v5578 = vadd.f32 %v5537, %v5577
      %v5579 = vpop.f32.mrb[0].mxu0
      %v5580 = vadd.f32 %v5539, %v5579
      %v5581 = vpop.f32.mrb[0].mxu0
      %v5582 = vpop.f32.mrb[0].mxu0
      %5583 = vdwg.mxu0
      %5584 = vmatprep.subr.bf16.mxu0 %v4220
      %5585 = vmatpush1.bf16.msra.mxu0 %v4219
      %5586 = vmatprep.subr.bf16.mxu0 %v4224
      %5587 = vmatpush1.bf16.msra.mxu0 %v4223
      %5588 = vmatprep.subr.bf16.mxu0 %v4228
      %5589 = vmatpush1.bf16.msra.mxu0 %v4227
      %5590 = vmatprep.subr.bf16.mxu0 %v4232
      %5591 = vmatpush1.bf16.msra.mxu0 %v4231
      %5592 = vmatprep.subr.bf16.mxu0 %v4236
      %5593 = vmatpush1.bf16.msra.mxu0 %v4235
      %5594 = vmatprep.subr.bf16.mxu0 %v4240
      %5595 = vmatpush1.bf16.msra.mxu0 %v4239
      %5596 = vmatprep.subr.bf16.mxu0 %v4244
      %5597 = vmatpush1.bf16.msra.mxu0 %v4243
      %5598 = vmatprep.subr.bf16.mxu0 %v4248
      %5599 = vmatpush1.bf16.msra.mxu0 %v4247
      %5600 = vmatprep.subr.bf16.mxu0 %v4252
      %5601 = vmatpush1.bf16.msra.mxu0 %v4251
      %5602 = vmatprep.subr.bf16.mxu0 %v4256
      %5603 = vmatpush1.bf16.msra.mxu0 %v4255
      %5604 = vmatprep.subr.bf16.mxu0 %v4260
      %5605 = vmatpush1.bf16.msra.mxu0 %v4259
      %5606 = vmatprep.subr.bf16.mxu0 %v4264
      %5607 = vmatpush1.bf16.msra.mxu0 %v4263
      %5608 = vmatprep.subr.bf16.mxu0 %v4268
      %5609 = vmatpush1.bf16.msra.mxu0 %v4267
      %5610 = vmatprep.subr.bf16.mxu0 %v4272
      %5611 = vmatpush1.bf16.msra.mxu0 %v4271
      %5612 = vmatprep.subr.bf16.mxu0 %v4276
      %5613 = vmatpush1.bf16.msra.mxu0 %v4275
      %5614 = vmatprep.subr.bf16.mxu0 %v4280
      %5615 = vmatpush1.bf16.msra.mxu0 %v4279
      %5616 = vmatprep.mubr.bf16.mxu0 %v1251
      %5617 = vmatmul.mubr.bf16.gmra.mrb[0].mxu0 %v1249
      %v5618 = vpop.f32.mrb[0].mxu0
      %v5619 = vadd.f32 %v5578, %v5618
      %v5620 = vpop.f32.mrb[0].mxu0
      %v5621 = vadd.f32 %v5580, %v5620
      %v5622 = vpop.f32.mrb[0].mxu0
      %v5623 = vpop.f32.mrb[0].mxu0
      %5624 = vdwg.mxu0
      %5625 = vmatprep.subr.bf16.mxu0 %v4284
      %5626 = vmatpush1.bf16.msra.mxu0 %v4283
      %5627 = vmatprep.subr.bf16.mxu0 %v4288
      %5628 = vmatpush1.bf16.msra.mxu0 %v4287
      %5629 = vmatprep.subr.bf16.mxu0 %v4292
      %5630 = vmatpush1.bf16.msra.mxu0 %v4291
      %5631 = vmatprep.subr.bf16.mxu0 %v4296
      %5632 = vmatpush1.bf16.msra.mxu0 %v4295
      %5633 = vmatprep.subr.bf16.mxu0 %v4300
      %5634 = vmatpush1.bf16.msra.mxu0 %v4299
      %5635 = vmatprep.subr.bf16.mxu0 %v4304
      %5636 = vmatpush1.bf16.msra.mxu0 %v4303
      %5637 = vmatprep.subr.bf16.mxu0 %v4308
      %5638 = vmatpush1.bf16.msra.mxu0 %v4307
      %5639 = vmatprep.subr.bf16.mxu0 %v4312
      %5640 = vmatpush1.bf16.msra.mxu0 %v4311
      %5641 = vmatprep.subr.bf16.mxu0 %v4316
      %5642 = vmatpush1.bf16.msra.mxu0 %v4315
      %5643 = vmatprep.subr.bf16.mxu0 %v4320
      %5644 = vmatpush1.bf16.msra.mxu0 %v4319
      %5645 = vmatprep.subr.bf16.mxu0 %v4324
      %5646 = vmatpush1.bf16.msra.mxu0 %v4323
      %5647 = vmatprep.subr.bf16.mxu0 %v4328
      %5648 = vmatpush1.bf16.msra.mxu0 %v4327
      %5649 = vmatprep.subr.bf16.mxu0 %v4332
      %5650 = vmatpush1.bf16.msra.mxu0 %v4331
      %5651 = vmatprep.subr.bf16.mxu0 %v4336
      %5652 = vmatpush1.bf16.msra.mxu0 %v4335
      %5653 = vmatprep.subr.bf16.mxu0 %v4340
      %5654 = vmatpush1.bf16.msra.mxu0 %v4339
      %5655 = vmatprep.subr.bf16.mxu0 %v4344
      %5656 = vmatpush1.bf16.msra.mxu0 %v4343
      %5657 = vmatprep.mubr.bf16.mxu0 %v1248
      %5658 = vmatmul.mubr.bf16.gmra.mrb[0].mxu0 %v1234
      %v5659 = vpop.f32.mrb[0].mxu0
      %v5660 = vadd.f32 %v5619, %v5659
      %v5661 = vpop.f32.mrb[0].mxu0
      %v5662 = vadd.f32 %v5621, %v5661
      %v5663 = vpop.f32.mrb[0].mxu0
      %v5664 = vpop.f32.mrb[0].mxu0
      %5665 = vdwg.mxu0
      %5666 = vmatprep.subr.bf16.mxu0 %v4348
      %5667 = vmatpush1.bf16.msra.mxu0 %v4347
      %5668 = vmatprep.subr.bf16.mxu0 %v4352
      %5669 = vmatpush1.bf16.msra.mxu0 %v4351
      %5670 = vmatprep.subr.bf16.mxu0 %v4356
      %5671 = vmatpush1.bf16.msra.mxu0 %v4355
      %5672 = vmatprep.subr.bf16.mxu0 %v4360
      %5673 = vmatpush1.bf16.msra.mxu0 %v4359
      %5674 = vmatprep.subr.bf16.mxu0 %v4364
      %5675 = vmatpush1.bf16.msra.mxu0 %v4363
      %5676 = vmatprep.subr.bf16.mxu0 %v4368
      %5677 = vmatpush1.bf16.msra.mxu0 %v4367
      %5678 = vmatprep.subr.bf16.mxu0 %v4372
      %5679 = vmatpush1.bf16.msra.mxu0 %v4371
      %5680 = vmatprep.subr.bf16.mxu0 %v4376
      %5681 = vmatpush1.bf16.msra.mxu0 %v4375
      %5682 = vmatprep.subr.bf16.mxu0 %v4380
      %5683 = vmatpush1.bf16.msra.mxu0 %v4379
      %5684 = vmatprep.subr.bf16.mxu0 %v4384
      %5685 = vmatpush1.bf16.msra.mxu0 %v4383
      %5686 = vmatprep.subr.bf16.mxu0 %v4388
      %5687 = vmatpush1.bf16.msra.mxu0 %v4387
      %5688 = vmatprep.subr.bf16.mxu0 %v4392
      %5689 = vmatpush1.bf16.msra.mxu0 %v4391
      %5690 = vmatprep.subr.bf16.mxu0 %v4396
      %5691 = vmatpush1.bf16.msra.mxu0 %v4395
      %5692 = vmatprep.subr.bf16.mxu0 %v4400
      %5693 = vmatpush1.bf16.msra.mxu0 %v4399
      %5694 = vmatprep.subr.bf16.mxu0 %v4404
      %5695 = vmatpush1.bf16.msra.mxu0 %v4403
      %5696 = vmatprep.subr.bf16.mxu0 %v4408
      %5697 = vmatpush1.bf16.msra.mxu0 %v4407
      %5698 = vmatprep.mubr.bf16.mxu0 %v1252
      %5699 = vmatmul.mubr.bf16.gmra.mrb[0].mxu0 %v1250
      %v5700 = vpop.f32.mrb[0].mxu0
      %v5701 = vadd.f32 %v5660, %v5700
      %v5702 = vpop.f32.mrb[0].mxu0
      %v5703 = vadd.f32 %v5662, %v5702
      %v5704 = vpop.f32.mrb[0].mxu0
      %v5705 = vpop.f32.mrb[0].mxu0
      %5706 = vdwg.mxu0
      %5707 = vmatprep.subr.bf16.mxu0 %v4412
      %5708 = vmatpush1.bf16.msra.mxu0 %v4411
      %5709 = vmatprep.subr.bf16.mxu0 %v4416
      %5710 = vmatpush1.bf16.msra.mxu0 %v4415
      %5711 = vmatprep.subr.bf16.mxu0 %v4420
      %5712 = vmatpush1.bf16.msra.mxu0 %v4419
      %5713 = vmatprep.subr.bf16.mxu0 %v4424
      %5714 = vmatpush1.bf16.msra.mxu0 %v4423
      %5715 = vmatprep.subr.bf16.mxu0 0
      %5716 = vmatpush1.bf16.msra.mxu0 0
      %5717 = vmatprep.subr.bf16.mxu0 0
      %5718 = vmatpush1.bf16.msra.mxu0 0
      %5719 = vmatprep.subr.bf16.mxu0 0
      %5720 = vmatpush1.bf16.msra.mxu0 0
      %5721 = vmatprep.subr.bf16.mxu0 0
      %5722 = vmatpush1.bf16.msra.mxu0 0
      %5723 = vmatprep.subr.bf16.mxu0 0
      %5724 = vmatpush1.bf16.msra.mxu0 0
      %5725 = vmatprep.subr.bf16.mxu0 0
      %5726 = vmatpush1.bf16.msra.mxu0 0
      %5727 = vmatprep.subr.bf16.mxu0 0
      %5728 = vmatpush1.bf16.msra.mxu0 0
      %5729 = vmatprep.subr.bf16.mxu0 0
      %5730 = vmatpush1.bf16.msra.mxu0 0
      %5731 = vmatprep.subr.bf16.mxu0 0
      %5732 = vmatpush1.bf16.msra.mxu0 0
      %5733 = vmatprep.subr.bf16.mxu0 0
      %5734 = vmatpush1.bf16.msra.mxu0 0
      %5735 = vmatprep.subr.bf16.mxu0 0
      %5736 = vmatpush1.bf16.msra.mxu0 0
      %5737 = vmatprep.subr.bf16.mxu0 0
      %5738 = vmatpush1.bf16.msra.mxu0 0
      %5739 = vmatprep.mubr.bf16.mxu0 0
      %5740 = vmatmul.mubr.bf16.gmra.mrb[0].mxu0 %v5213
      %v5741 = vpop.f32.mrb[0].mxu0
      %v5742 = vadd.f32 %v5701, %v5741
      %v5743 = vpop.f32.mrb[0].mxu0
      %v5744 = vadd.f32 %v5703, %v5743
      %v5745 = vpop.f32.mrb[0].mxu0
      %v5746 = vpop.f32.mrb[0].mxu0
      %5747 = vdwg.mxu0
      %5748 = vmatprep.subr.bf16.mxu0 %v3646
      %5749 = vmatpush1.bf16.msra.mxu0 %v3645
      %5750 = vmatprep.subr.bf16.mxu0 %v3650
      %5751 = vmatpush1.bf16.msra.mxu0 %v3649
      %5752 = vmatprep.subr.bf16.mxu0 %v3654
      %5753 = vmatpush1.bf16.msra.mxu0 %v3653
      %5754 = vmatprep.subr.bf16.mxu0 %v3658
      %5755 = vmatpush1.bf16.msra.mxu0 %v3657
      %5756 = vmatprep.subr.bf16.mxu0 %v3662
      %5757 = vmatpush1.bf16.msra.mxu0 %v3661
      %5758 = vmatprep.subr.bf16.mxu0 %v3666
      %5759 = vmatpush1.bf16.msra.mxu0 %v3665
      %5760 = vmatprep.subr.bf16.mxu0 %v3670
      %5761 = vmatpush1.bf16.msra.mxu0 %v3669
      %5762 = vmatprep.subr.bf16.mxu0 %v3674
      %5763 = vmatpush1.bf16.msra.mxu0 %v3673
      %5764 = vmatprep.subr.bf16.mxu0 %v3678
      %5765 = vmatpush1.bf16.msra.mxu0 %v3677
      %5766 = vmatprep.subr.bf16.mxu0 %v3682
      %5767 = vmatpush1.bf16.msra.mxu0 %v3681
      %5768 = vmatprep.subr.bf16.mxu0 %v3686
      %5769 = vmatpush1.bf16.msra.mxu0 %v3685
      %5770 = vmatprep.subr.bf16.mxu0 %v3690
      %5771 = vmatpush1.bf16.msra.mxu0 %v3689
      %5772 = vmatprep.subr.bf16.mxu0 %v3694
      %5773 = vmatpush1.bf16.msra.mxu0 %v3693
      %5774 = vmatprep.subr.bf16.mxu0 %v3698
      %5775 = vmatpush1.bf16.msra.mxu0 %v3697
      %5776 = vmatprep.subr.bf16.mxu0 %v3702
      %5777 = vmatpush1.bf16.msra.mxu0 %v3701
      %5778 = vmatprep.subr.bf16.mxu0 %v3706
      %5779 = vmatpush1.bf16.msra.mxu0 %v3705
      %5780 = vmatprep.mubr.bf16.mxu0 %v1143
      %5781 = vmatmul.mubr.bf16.gmra.mrb[0].mxu0 %v1129
      %v5782 = vpop.f32.mrb[0].mxu0
      %v5783 = vadd.f32 %v1093, %v5782
      %v5784 = vpop.f32.mrb[0].mxu0
      %v5785 = vadd.f32 %v1097, %v5784
      %v5786 = vpop.f32.mrb[0].mxu0
      %v5787 = vpop.f32.mrb[0].mxu0
      %5788 = vdwg.mxu0
      %5789 = vmatprep.subr.bf16.mxu0 %v3710
      %5790 = vmatpush1.bf16.msra.mxu0 %v3709
      %5791 = vmatprep.subr.bf16.mxu0 %v3714
      %5792 = vmatpush1.bf16.msra.mxu0 %v3713
      %5793 = vmatprep.subr.bf16.mxu0 %v3718
      %5794 = vmatpush1.bf16.msra.mxu0 %v3717
      %5795 = vmatprep.subr.bf16.mxu0 %v3722
      %5796 = vmatpush1.bf16.msra.mxu0 %v3721
      %5797 = vmatprep.subr.bf16.mxu0 %v3726
      %5798 = vmatpush1.bf16.msra.mxu0 %v3725
      %5799 = vmatprep.subr.bf16.mxu0 %v3730
      %5800 = vmatpush1.bf16.msra.mxu0 %v3729
      %5801 = vmatprep.subr.bf16.mxu0 %v3734
      %5802 = vmatpush1.bf16.msra.mxu0 %v3733
      %5803 = vmatprep.subr.bf16.mxu0 %v3738
      %5804 = vmatpush1.bf16.msra.mxu0 %v3737
      %5805 = vmatprep.subr.bf16.mxu0 %v3742
      %5806 = vmatpush1.bf16.msra.mxu0 %v3741
      %5807 = vmatprep.subr.bf16.mxu0 %v3746
      %5808 = vmatpush1.bf16.msra.mxu0 %v3745
      %5809 = vmatprep.subr.bf16.mxu0 %v3750
      %5810 = vmatpush1.bf16.msra.mxu0 %v3749
      %5811 = vmatprep.subr.bf16.mxu0 %v3754
      %5812 = vmatpush1.bf16.msra.mxu0 %v3753
      %5813 = vmatprep.subr.bf16.mxu0 %v3758
      %5814 = vmatpush1.bf16.msra.mxu0 %v3757
      %5815 = vmatprep.subr.bf16.mxu0 %v3762
      %5816 = vmatpush1.bf16.msra.mxu0 %v3761
      %5817 = vmatprep.subr.bf16.mxu0 %v3766
      %5818 = vmatpush1.bf16.msra.mxu0 %v3765
      %5819 = vmatprep.subr.bf16.mxu0 %v3770
      %5820 = vmatpush1.bf16.msra.mxu0 %v3769
      %5821 = vmatprep.mubr.bf16.mxu0 %v1153
      %5822 = vmatmul.mubr.bf16.gmra.mrb[0].mxu0 %v1151
      %v5823 = vpop.f32.mrb[0].mxu0
      %v5824 = vadd.f32 %v5783, %v5823
      %v5825 = vpop.f32.mrb[0].mxu0
      %v5826 = vadd.f32 %v5785, %v5825
      %v5827 = vpop.f32.mrb[0].mxu0
      %v5828 = vpop.f32.mrb[0].mxu0
      %5829 = vdwg.mxu0
      %5830 = vmatprep.subr.bf16.mxu0 %v3774
      %5831 = vmatpush1.bf16.msra.mxu0 %v3773
      %5832 = vmatprep.subr.bf16.mxu0 %v3778
      %5833 = vmatpush1.bf16.msra.mxu0 %v3777
      %5834 = vmatprep.subr.bf16.mxu0 %v3782
      %5835 = vmatpush1.bf16.msra.mxu0 %v3781
      %5836 = vmatprep.subr.bf16.mxu0 %v3786
      %5837 = vmatpush1.bf16.msra.mxu0 %v3785
      %5838 = vmatprep.subr.bf16.mxu0 %v3790
      %5839 = vmatpush1.bf16.msra.mxu0 %v3789
      %5840 = vmatprep.subr.bf16.mxu0 %v3794
      %5841 = vmatpush1.bf16.msra.mxu0 %v3793
      %5842 = vmatprep.subr.bf16.mxu0 %v3798
      %5843 = vmatpush1.bf16.msra.mxu0 %v3797
      %5844 = vmatprep.subr.bf16.mxu0 %v3802
      %5845 = vmatpush1.bf16.msra.mxu0 %v3801
      %5846 = vmatprep.subr.bf16.mxu0 %v3806
      %5847 = vmatpush1.bf16.msra.mxu0 %v3805
      %5848 = vmatprep.subr.bf16.mxu0 %v3810
      %5849 = vmatpush1.bf16.msra.mxu0 %v3809
      %5850 = vmatprep.subr.bf16.mxu0 %v3814
      %5851 = vmatpush1.bf16.msra.mxu0 %v3813
      %5852 = vmatprep.subr.bf16.mxu0 %v3818
      %5853 = vmatpush1.bf16.msra.mxu0 %v3817
      %5854 = vmatprep.subr.bf16.mxu0 %v3822
      %5855 = vmatpush1.bf16.msra.mxu0 %v3821
      %5856 = vmatprep.subr.bf16.mxu0 %v3826
      %5857 = vmatpush1.bf16.msra.mxu0 %v3825
      %5858 = vmatprep.subr.bf16.mxu0 %v3830
      %5859 = vmatpush1.bf16.msra.mxu0 %v3829
      %5860 = vmatprep.subr.bf16.mxu0 %v3834
      %5861 = vmatpush1.bf16.msra.mxu0 %v3833
      %5862 = vmatprep.mubr.bf16.mxu0 %v1150
      %5863 = vmatmul.mubr.bf16.gmra.mrb[0].mxu0 %v1136
      %v5864 = vpop.f32.mrb[0].mxu0
      %v5865 = vadd.f32 %v5824, %v5864
      %v5866 = vpop.f32.mrb[0].mxu0
      %v5867 = vadd.f32 %v5826, %v5866
      %v5868 = vpop.f32.mrb[0].mxu0
      %v5869 = vpop.f32.mrb[0].mxu0
      %5870 = vdwg.mxu0
      %5871 = vmatprep.subr.bf16.mxu0 %v3838
      %5872 = vmatpush1.bf16.msra.mxu0 %v3837
      %5873 = vmatprep.subr.bf16.mxu0 %v3842
      %5874 = vmatpush1.bf16.msra.mxu0 %v3841
      %5875 = vmatprep.subr.bf16.mxu0 %v3846
      %5876 = vmatpush1.bf16.msra.mxu0 %v3845
      %5877 = vmatprep.subr.bf16.mxu0 %v3850
      %5878 = vmatpush1.bf16.msra.mxu0 %v3849
      %5879 = vmatprep.subr.bf16.mxu0 %v3854
      %5880 = vmatpush1.bf16.msra.mxu0 %v3853
      %5881 = vmatprep.subr.bf16.mxu0 %v3858
      %5882 = vmatpush1.bf16.msra.mxu0 %v3857
      %5883 = vmatprep.subr.bf16.mxu0 %v3862
      %5884 = vmatpush1.bf16.msra.mxu0 %v3861
      %5885 = vmatprep.subr.bf16.mxu0 %v3866
      %5886 = vmatpush1.bf16.msra.mxu0 %v3865
      %5887 = vmatprep.subr.bf16.mxu0 %v3870
      %5888 = vmatpush1.bf16.msra.mxu0 %v3869
      %5889 = vmatprep.subr.bf16.mxu0 %v3874
      %5890 = vmatpush1.bf16.msra.mxu0 %v3873
      %5891 = vmatprep.subr.bf16.mxu0 %v3878
      %5892 = vmatpush1.bf16.msra.mxu0 %v3877
      %5893 = vmatprep.subr.bf16.mxu0 %v3882
      %5894 = vmatpush1.bf16.msra.mxu0 %v3881
      %5895 = vmatprep.subr.bf16.mxu0 %v3886
      %5896 = vmatpush1.bf16.msra.mxu0 %v3885
      %5897 = vmatprep.subr.bf16.mxu0 %v3890
      %5898 = vmatpush1.bf16.msra.mxu0 %v3889
      %5899 = vmatprep.subr.bf16.mxu0 %v3894
      %5900 = vmatpush1.bf16.msra.mxu0 %v3893
      %5901 = vmatprep.subr.bf16.mxu0 %v3898
      %5902 = vmatpush1.bf16.msra.mxu0 %v3897
      %5903 = vmatprep.mubr.bf16.mxu0 %v1154
      %5904 = vmatmul.mubr.bf16.gmra.mrb[0].mxu0 %v1152
      %v5905 = vpop.f32.mrb[0].mxu0
      %v5906 = vadd.f32 %v5865, %v5905
      %v5907 = vpop.f32.mrb[0].mxu0
      %v5908 = vadd.f32 %v5867, %v5907
      %v5909 = vpop.f32.mrb[0].mxu0
      %v5910 = vpop.f32.mrb[0].mxu0
      %5911 = vdwg.mxu0
      %5912 = vmatprep.subr.bf16.mxu0 %v3902
      %5913 = vmatpush1.bf16.msra.mxu0 %v3901
      %5914 = vmatprep.subr.bf16.mxu0 %v3906
      %5915 = vmatpush1.bf16.msra.mxu0 %v3905
      %5916 = vmatprep.subr.bf16.mxu0 %v3910
      %5917 = vmatpush1.bf16.msra.mxu0 %v3909
      %5918 = vmatprep.subr.bf16.mxu0 %v3914
      %5919 = vmatpush1.bf16.msra.mxu0 %v3913
      %5920 = vmatprep.subr.bf16.mxu0 %v3918
      %5921 = vmatpush1.bf16.msra.mxu0 %v3917
      %5922 = vmatprep.subr.bf16.mxu0 %v3922
      %5923 = vmatpush1.bf16.msra.mxu0 %v3921
      %5924 = vmatprep.subr.bf16.mxu0 %v3926
      %5925 = vmatpush1.bf16.msra.mxu0 %v3925
      %5926 = vmatprep.subr.bf16.mxu0 %v3930
      %5927 = vmatpush1.bf16.msra.mxu0 %v3929
      %5928 = vmatprep.subr.bf16.mxu0 %v3934
      %5929 = vmatpush1.bf16.msra.mxu0 %v3933
      %5930 = vmatprep.subr.bf16.mxu0 %v3938
      %5931 = vmatpush1.bf16.msra.mxu0 %v3937
      %5932 = vmatprep.subr.bf16.mxu0 %v3942
      %5933 = vmatpush1.bf16.msra.mxu0 %v3941
      %5934 = vmatprep.subr.bf16.mxu0 %v3946
      %5935 = vmatpush1.bf16.msra.mxu0 %v3945
      %5936 = vmatprep.subr.bf16.mxu0 %v3950
      %5937 = vmatpush1.bf16.msra.mxu0 %v3949
      %5938 = vmatprep.subr.bf16.mxu0 %v3954
      %5939 = vmatpush1.bf16.msra.mxu0 %v3953
      %5940 = vmatprep.subr.bf16.mxu0 %v3958
      %5941 = vmatpush1.bf16.msra.mxu0 %v3957
      %5942 = vmatprep.subr.bf16.mxu0 %v3962
      %5943 = vmatpush1.bf16.msra.mxu0 %v3961
      %5944 = vmatprep.mubr.bf16.mxu0 %v1192
      %5945 = vmatmul.mubr.bf16.gmra.mrb[0].mxu0 %v1178
      %v5946 = vpop.f32.mrb[0].mxu0
      %v5947 = vadd.f32 %v5906, %v5946
      %v5948 = vpop.f32.mrb[0].mxu0
      %v5949 = vadd.f32 %v5908, %v5948
      %v5950 = vpop.f32.mrb[0].mxu0
      %v5951 = vpop.f32.mrb[0].mxu0
      %5952 = vdwg.mxu0
      %5953 = vmatprep.subr.bf16.mxu0 %v3966
      %5954 = vmatpush1.bf16.msra.mxu0 %v3965
      %5955 = vmatprep.subr.bf16.mxu0 %v3970
      %5956 = vmatpush1.bf16.msra.mxu0 %v3969
      %5957 = vmatprep.subr.bf16.mxu0 %v3974
      %5958 = vmatpush1.bf16.msra.mxu0 %v3973
      %5959 = vmatprep.subr.bf16.mxu0 %v3978
      %5960 = vmatpush1.bf16.msra.mxu0 %v3977
      %5961 = vmatprep.subr.bf16.mxu0 %v3982
      %5962 = vmatpush1.bf16.msra.mxu0 %v3981
      %5963 = vmatprep.subr.bf16.mxu0 %v3986
      %5964 = vmatpush1.bf16.msra.mxu0 %v3985
      %5965 = vmatprep.subr.bf16.mxu0 %v3990
      %5966 = vmatpush1.bf16.msra.mxu0 %v3989
      %5967 = vmatprep.subr.bf16.mxu0 %v3994
      %5968 = vmatpush1.bf16.msra.mxu0 %v3993
      %5969 = vmatprep.subr.bf16.mxu0 %v3998
      %5970 = vmatpush1.bf16.msra.mxu0 %v3997
      %5971 = vmatprep.subr.bf16.mxu0 %v4002
      %5972 = vmatpush1.bf16.msra.mxu0 %v4001
      %5973 = vmatprep.subr.bf16.mxu0 %v4006
      %5974 = vmatpush1.bf16.msra.mxu0 %v4005
      %5975 = vmatprep.subr.bf16.mxu0 %v4010
      %5976 = vmatpush1.bf16.msra.mxu0 %v4009
      %5977 = vmatprep.subr.bf16.mxu0 %v4014
      %5978 = vmatpush1.bf16.msra.mxu0 %v4013
      %5979 = vmatprep.subr.bf16.mxu0 %v4018
      %5980 = vmatpush1.bf16.msra.mxu0 %v4017
      %5981 = vmatprep.subr.bf16.mxu0 %v4022
      %5982 = vmatpush1.bf16.msra.mxu0 %v4021
      %5983 = vmatprep.subr.bf16.mxu0 %v4026
      %5984 = vmatpush1.bf16.msra.mxu0 %v4025
      %5985 = vmatprep.mubr.bf16.mxu0 %v1202
      %5986 = vmatmul.mubr.bf16.gmra.mrb[0].mxu0 %v1200
      %v5987 = vpop.f32.mrb[0].mxu0
      %v5988 = vadd.f32 %v5947, %v5987
      %v5989 = vpop.f32.mrb[0].mxu0
      %v5990 = vadd.f32 %v5949, %v5989
      %v5991 = vpop.f32.mrb[0].mxu0
      %v5992 = vpop.f32.mrb[0].mxu0
      %5993 = vdwg.mxu0
      %5994 = vmatprep.subr.bf16.mxu0 %v4030
      %5995 = vmatpush1.bf16.msra.mxu0 %v4029
      %5996 = vmatprep.subr.bf16.mxu0 %v4034
      %5997 = vmatpush1.bf16.msra.mxu0 %v4033
      %5998 = vmatprep.subr.bf16.mxu0 %v4038
      %5999 = vmatpush1.bf16.msra.mxu0 %v4037
      %6000 = vmatprep.subr.bf16.mxu0 %v4042
      %6001 = vmatpush1.bf16.msra.mxu0 %v4041
      %6002 = vmatprep.subr.bf16.mxu0 %v4046
      %6003 = vmatpush1.bf16.msra.mxu0 %v4045
      %6004 = vmatprep.subr.bf16.mxu0 %v4050
      %6005 = vmatpush1.bf16.msra.mxu0 %v4049
      %6006 = vmatprep.subr.bf16.mxu0 %v4054
      %6007 = vmatpush1.bf16.msra.mxu0 %v4053
      %6008 = vmatprep.subr.bf16.mxu0 %v4058
      %6009 = vmatpush1.bf16.msra.mxu0 %v4057
      %6010 = vmatprep.subr.bf16.mxu0 %v4062
      %6011 = vmatpush1.bf16.msra.mxu0 %v4061
      %6012 = vmatprep.subr.bf16.mxu0 %v4066
      %6013 = vmatpush1.bf16.msra.mxu0 %v4065
      %6014 = vmatprep.subr.bf16.mxu0 %v4070
      %6015 = vmatpush1.bf16.msra.mxu0 %v4069
      %6016 = vmatprep.subr.bf16.mxu0 %v4074
      %6017 = vmatpush1.bf16.msra.mxu0 %v4073
      %6018 = vmatprep.subr.bf16.mxu0 %v4078
      %6019 = vmatpush1.bf16.msra.mxu0 %v4077
      %6020 = vmatprep.subr.bf16.mxu0 %v4082
      %6021 = vmatpush1.bf16.msra.mxu0 %v4081
      %6022 = vmatprep.subr.bf16.mxu0 %v4086
      %6023 = vmatpush1.bf16.msra.mxu0 %v4085
      %6024 = vmatprep.subr.bf16.mxu0 %v4090
      %6025 = vmatpush1.bf16.msra.mxu0 %v4089
      %6026 = vmatprep.mubr.bf16.mxu0 %v1199
      %6027 = vmatmul.mubr.bf16.gmra.mrb[0].mxu0 %v1185
      %v6028 = vpop.f32.mrb[0].mxu0
      %v6029 = vadd.f32 %v5988, %v6028
      %v6030 = vpop.f32.mrb[0].mxu0
      %v6031 = vadd.f32 %v5990, %v6030
      %v6032 = vpop.f32.mrb[0].mxu0
      %v6033 = vpop.f32.mrb[0].mxu0
      %6034 = vdwg.mxu0
      %6035 = vmatprep.subr.bf16.mxu0 %v4094
      %6036 = vmatpush1.bf16.msra.mxu0 %v4093
      %6037 = vmatprep.subr.bf16.mxu0 %v4098
      %6038 = vmatpush1.bf16.msra.mxu0 %v4097
      %6039 = vmatprep.subr.bf16.mxu0 %v4102
      %6040 = vmatpush1.bf16.msra.mxu0 %v4101
      %6041 = vmatprep.subr.bf16.mxu0 %v4106
      %6042 = vmatpush1.bf16.msra.mxu0 %v4105
      %6043 = vmatprep.subr.bf16.mxu0 %v4110
      %6044 = vmatpush1.bf16.msra.mxu0 %v4109
      %6045 = vmatprep.subr.bf16.mxu0 %v4114
      %6046 = vmatpush1.bf16.msra.mxu0 %v4113
      %6047 = vmatprep.subr.bf16.mxu0 %v4118
      %6048 = vmatpush1.bf16.msra.mxu0 %v4117
      %6049 = vmatprep.subr.bf16.mxu0 %v4122
      %6050 = vmatpush1.bf16.msra.mxu0 %v4121
      %6051 = vmatprep.subr.bf16.mxu0 %v4126
      %6052 = vmatpush1.bf16.msra.mxu0 %v4125
      %6053 = vmatprep.subr.bf16.mxu0 %v4130
      %6054 = vmatpush1.bf16.msra.mxu0 %v4129
      %6055 = vmatprep.subr.bf16.mxu0 %v4134
      %6056 = vmatpush1.bf16.msra.mxu0 %v4133
      %6057 = vmatprep.subr.bf16.mxu0 %v4138
      %6058 = vmatpush1.bf16.msra.mxu0 %v4137
      %6059 = vmatprep.subr.bf16.mxu0 %v4142
      %6060 = vmatpush1.bf16.msra.mxu0 %v4141
      %6061 = vmatprep.subr.bf16.mxu0 %v4146
      %6062 = vmatpush1.bf16.msra.mxu0 %v4145
      %6063 = vmatprep.subr.bf16.mxu0 %v4150
      %6064 = vmatpush1.bf16.msra.mxu0 %v4149
      %6065 = vmatprep.subr.bf16.mxu0 %v4154
      %6066 = vmatpush1.bf16.msra.mxu0 %v4153
      %6067 = vmatprep.mubr.bf16.mxu0 %v1203
      %6068 = vmatmul.mubr.bf16.gmra.mrb[0].mxu0 %v1201
      %v6069 = vpop.f32.mrb[0].mxu0
      %v6070 = vadd.f32 %v6029, %v6069
      %v6071 = vpop.f32.mrb[0].mxu0
      %v6072 = vadd.f32 %v6031, %v6071
      %v6073 = vpop.f32.mrb[0].mxu0
      %v6074 = vpop.f32.mrb[0].mxu0
      %6075 = vdwg.mxu0
      %6076 = vmatprep.subr.bf16.mxu0 %v4158
      %6077 = vmatpush1.bf16.msra.mxu0 %v4157
      %6078 = vmatprep.subr.bf16.mxu0 %v4162
      %6079 = vmatpush1.bf16.msra.mxu0 %v4161
      %6080 = vmatprep.subr.bf16.mxu0 %v4166
      %6081 = vmatpush1.bf16.msra.mxu0 %v4165
      %6082 = vmatprep.subr.bf16.mxu0 %v4170
      %6083 = vmatpush1.bf16.msra.mxu0 %v4169
      %6084 = vmatprep.subr.bf16.mxu0 %v4174
      %6085 = vmatpush1.bf16.msra.mxu0 %v4173
      %6086 = vmatprep.subr.bf16.mxu0 %v4178
      %6087 = vmatpush1.bf16.msra.mxu0 %v4177
      %6088 = vmatprep.subr.bf16.mxu0 %v4182
      %6089 = vmatpush1.bf16.msra.mxu0 %v4181
      %6090 = vmatprep.subr.bf16.mxu0 %v4186
      %6091 = vmatpush1.bf16.msra.mxu0 %v4185
      %6092 = vmatprep.subr.bf16.mxu0 %v4190
      %6093 = vmatpush1.bf16.msra.mxu0 %v4189
      %6094 = vmatprep.subr.bf16.mxu0 %v4194
      %6095 = vmatpush1.bf16.msra.mxu0 %v4193
      %6096 = vmatprep.subr.bf16.mxu0 %v4198
      %6097 = vmatpush1.bf16.msra.mxu0 %v4197
      %6098 = vmatprep.subr.bf16.mxu0 %v4202
      %6099 = vmatpush1.bf16.msra.mxu0 %v4201
      %6100 = vmatprep.subr.bf16.mxu0 %v4206
      %6101 = vmatpush1.bf16.msra.mxu0 %v4205
      %6102 = vmatprep.subr.bf16.mxu0 %v4210
      %6103 = vmatpush1.bf16.msra.mxu0 %v4209
      %6104 = vmatprep.subr.bf16.mxu0 %v4214
      %6105 = vmatpush1.bf16.msra.mxu0 %v4213
      %6106 = vmatprep.subr.bf16.mxu0 %v4218
      %6107 = vmatpush1.bf16.msra.mxu0 %v4217
      %6108 = vmatprep.mubr.bf16.mxu0 %v1241
      %6109 = vmatmul.mubr.bf16.gmra.mrb[0].mxu0 %v1227
      %v6110 = vpop.f32.mrb[0].mxu0
      %v6111 = vadd.f32 %v6070, %v6110
      %v6112 = vpop.f32.mrb[0].mxu0
      %v6113 = vadd.f32 %v6072, %v6112
      %v6114 = vpop.f32.mrb[0].mxu0
      %v6115 = vpop.f32.mrb[0].mxu0
      %6116 = vdwg.mxu0
      %6117 = vmatprep.subr.bf16.mxu0 %v4222
      %6118 = vmatpush1.bf16.msra.mxu0 %v4221
      %6119 = vmatprep.subr.bf16.mxu0 %v4226
      %6120 = vmatpush1.bf16.msra.mxu0 %v4225
      %6121 = vmatprep.subr.bf16.mxu0 %v4230
      %6122 = vmatpush1.bf16.msra.mxu0 %v4229
      %6123 = vmatprep.subr.bf16.mxu0 %v4234
      %6124 = vmatpush1.bf16.msra.mxu0 %v4233
      %6125 = vmatprep.subr.bf16.mxu0 %v4238
      %6126 = vmatpush1.bf16.msra.mxu0 %v4237
      %6127 = vmatprep.subr.bf16.mxu0 %v4242
      %6128 = vmatpush1.bf16.msra.mxu0 %v4241
      %6129 = vmatprep.subr.bf16.mxu0 %v4246
      %6130 = vmatpush1.bf16.msra.mxu0 %v4245
      %6131 = vmatprep.subr.bf16.mxu0 %v4250
      %6132 = vmatpush1.bf16.msra.mxu0 %v4249
      %6133 = vmatprep.subr.bf16.mxu0 %v4254
      %6134 = vmatpush1.bf16.msra.mxu0 %v4253
      %6135 = vmatprep.subr.bf16.mxu0 %v4258
      %6136 = vmatpush1.bf16.msra.mxu0 %v4257
      %6137 = vmatprep.subr.bf16.mxu0 %v4262
      %6138 = vmatpush1.bf16.msra.mxu0 %v4261
      %6139 = vmatprep.subr.bf16.mxu0 %v4266
      %6140 = vmatpush1.bf16.msra.mxu0 %v4265
      %6141 = vmatprep.subr.bf16.mxu0 %v4270
      %6142 = vmatpush1.bf16.msra.mxu0 %v4269
      %6143 = vmatprep.subr.bf16.mxu0 %v4274
      %6144 = vmatpush1.bf16.msra.mxu0 %v4273
      %6145 = vmatprep.subr.bf16.mxu0 %v4278
      %6146 = vmatpush1.bf16.msra.mxu0 %v4277
      %6147 = vmatprep.subr.bf16.mxu0 %v4282
      %6148 = vmatpush1.bf16.msra.mxu0 %v4281
      %6149 = vmatprep.mubr.bf16.mxu0 %v1251
      %6150 = vmatmul.mubr.bf16.gmra.mrb[0].mxu0 %v1249
      %v6151 = vpop.f32.mrb[0].mxu0
      %v6152 = vadd.f32 %v6111, %v6151
      %v6153 = vpop.f32.mrb[0].mxu0
      %v6154 = vadd.f32 %v6113, %v6153
      %v6155 = vpop.f32.mrb[0].mxu0
      %v6156 = vpop.f32.mrb[0].mxu0
      %6157 = vdwg.mxu0
      %6158 = vmatprep.subr.bf16.mxu0 %v4286
      %6159 = vmatpush1.bf16.msra.mxu0 %v4285
      %6160 = vmatprep.subr.bf16.mxu0 %v4290
      %6161 = vmatpush1.bf16.msra.mxu0 %v4289
      %6162 = vmatprep.subr.bf16.mxu0 %v4294
      %6163 = vmatpush1.bf16.msra.mxu0 %v4293
      %6164 = vmatprep.subr.bf16.mxu0 %v4298
      %6165 = vmatpush1.bf16.msra.mxu0 %v4297
      %6166 = vmatprep.subr.bf16.mxu0 %v4302
      %6167 = vmatpush1.bf16.msra.mxu0 %v4301
      %6168 = vmatprep.subr.bf16.mxu0 %v4306
      %6169 = vmatpush1.bf16.msra.mxu0 %v4305
      %6170 = vmatprep.subr.bf16.mxu0 %v4310
      %6171 = vmatpush1.bf16.msra.mxu0 %v4309
      %6172 = vmatprep.subr.bf16.mxu0 %v4314
      %6173 = vmatpush1.bf16.msra.mxu0 %v4313
      %6174 = vmatprep.subr.bf16.mxu0 %v4318
      %6175 = vmatpush1.bf16.msra.mxu0 %v4317
      %6176 = vmatprep.subr.bf16.mxu0 %v4322
      %6177 = vmatpush1.bf16.msra.mxu0 %v4321
      %6178 = vmatprep.subr.bf16.mxu0 %v4326
      %6179 = vmatpush1.bf16.msra.mxu0 %v4325
      %6180 = vmatprep.subr.bf16.mxu0 %v4330
      %6181 = vmatpush1.bf16.msra.mxu0 %v4329
      %6182 = vmatprep.subr.bf16.mxu0 %v4334
      %6183 = vmatpush1.bf16.msra.mxu0 %v4333
      %6184 = vmatprep.subr.bf16.mxu0 %v4338
      %6185 = vmatpush1.bf16.msra.mxu0 %v4337
      %6186 = vmatprep.subr.bf16.mxu0 %v4342
      %6187 = vmatpush1.bf16.msra.mxu0 %v4341
      %6188 = vmatprep.subr.bf16.mxu0 %v4346
      %6189 = vmatpush1.bf16.msra.mxu0 %v4345
      %6190 = vmatprep.mubr.bf16.mxu0 %v1248
      %6191 = vmatmul.mubr.bf16.gmra.mrb[0].mxu0 %v1234
      %v6192 = vpop.f32.mrb[0].mxu0
      %v6193 = vadd.f32 %v6152, %v6192
      %v6194 = vpop.f32.mrb[0].mxu0
      %v6195 = vadd.f32 %v6154, %v6194
      %v6196 = vpop.f32.mrb[0].mxu0
      %v6197 = vpop.f32.mrb[0].mxu0
      %6198 = vdwg.mxu0
      %6199 = vmatprep.subr.bf16.mxu0 %v4350
      %6200 = vmatpush1.bf16.msra.mxu0 %v4349
      %6201 = vmatprep.subr.bf16.mxu0 %v4354
      %6202 = vmatpush1.bf16.msra.mxu0 %v4353
      %6203 = vmatprep.subr.bf16.mxu0 %v4358
      %6204 = vmatpush1.bf16.msra.mxu0 %v4357
      %6205 = vmatprep.subr.bf16.mxu0 %v4362
      %6206 = vmatpush1.bf16.msra.mxu0 %v4361
      %6207 = vmatprep.subr.bf16.mxu0 %v4366
      %6208 = vmatpush1.bf16.msra.mxu0 %v4365
      %6209 = vmatprep.subr.bf16.mxu0 %v4370
      %6210 = vmatpush1.bf16.msra.mxu0 %v4369
      %6211 = vmatprep.subr.bf16.mxu0 %v4374
      %6212 = vmatpush1.bf16.msra.mxu0 %v4373
      %6213 = vmatprep.subr.bf16.mxu0 %v4378
      %6214 = vmatpush1.bf16.msra.mxu0 %v4377
      %6215 = vmatprep.subr.bf16.mxu0 %v4382
      %6216 = vmatpush1.bf16.msra.mxu0 %v4381
      %6217 = vmatprep.subr.bf16.mxu0 %v4386
      %6218 = vmatpush1.bf16.msra.mxu0 %v4385
      %6219 = vmatprep.subr.bf16.mxu0 %v4390
      %6220 = vmatpush1.bf16.msra.mxu0 %v4389
      %6221 = vmatprep.subr.bf16.mxu0 %v4394
      %6222 = vmatpush1.bf16.msra.mxu0 %v4393
      %6223 = vmatprep.subr.bf16.mxu0 %v4398
      %6224 = vmatpush1.bf16.msra.mxu0 %v4397
      %6225 = vmatprep.subr.bf16.mxu0 %v4402
      %6226 = vmatpush1.bf16.msra.mxu0 %v4401
      %6227 = vmatprep.subr.bf16.mxu0 %v4406
      %6228 = vmatpush1.bf16.msra.mxu0 %v4405
      %6229 = vmatprep.subr.bf16.mxu0 %v4410
      %6230 = vmatpush1.bf16.msra.mxu0 %v4409
      %6231 = vmatprep.mubr.bf16.mxu0 %v1252
      %6232 = vmatmul.mubr.bf16.gmra.mrb[0].mxu0 %v1250
      %v6233 = vpop.f32.mrb[0].mxu0
      %v6234 = vadd.f32 %v6193, %v6233
      %v6235 = vpop.f32.mrb[0].mxu0
      %v6236 = vadd.f32 %v6195, %v6235
      %v6237 = vpop.f32.mrb[0].mxu0
      %v6238 = vpop.f32.mrb[0].mxu0
      %6239 = vdwg.mxu0
      %6240 = vmatprep.subr.bf16.mxu0 %v4414
      %6241 = vmatpush1.bf16.msra.mxu0 %v4413
      %6242 = vmatprep.subr.bf16.mxu0 %v4418
      %6243 = vmatpush1.bf16.msra.mxu0 %v4417
      %6244 = vmatprep.subr.bf16.mxu0 %v4422
      %6245 = vmatpush1.bf16.msra.mxu0 %v4421
      %6246 = vmatprep.subr.bf16.mxu0 %v4426
      %6247 = vmatpush1.bf16.msra.mxu0 %v4425
      %6248 = vmatprep.subr.bf16.mxu0 0
      %6249 = vmatpush1.bf16.msra.mxu0 0
      %6250 = vmatprep.subr.bf16.mxu0 0
      %6251 = vmatpush1.bf16.msra.mxu0 0
      %6252 = vmatprep.subr.bf16.mxu0 0
      %6253 = vmatpush1.bf16.msra.mxu0 0
      %6254 = vmatprep.subr.bf16.mxu0 0
      %6255 = vmatpush1.bf16.msra.mxu0 0
      %6256 = vmatprep.subr.bf16.mxu0 0
      %6257 = vmatpush1.bf16.msra.mxu0 0
      %6258 = vmatprep.subr.bf16.mxu0 0
      %6259 = vmatpush1.bf16.msra.mxu0 0
      %6260 = vmatprep.subr.bf16.mxu0 0
      %6261 = vmatpush1.bf16.msra.mxu0 0
      %6262 = vmatprep.subr.bf16.mxu0 0
      %6263 = vmatpush1.bf16.msra.mxu0 0
      %6264 = vmatprep.subr.bf16.mxu0 0
      %6265 = vmatpush1.bf16.msra.mxu0 0
      %6266 = vmatprep.subr.bf16.mxu0 0
      %6267 = vmatpush1.bf16.msra.mxu0 0
      %6268 = vmatprep.subr.bf16.mxu0 0
      %6269 = vmatpush1.bf16.msra.mxu0 0
      %6270 = vmatprep.subr.bf16.mxu0 0
      %6271 = vmatpush1.bf16.msra.mxu0 0
      %6272 = vmatprep.mubr.bf16.mxu0 0
      %6273 = vmatmul.mubr.bf16.gmra.mrb[0].mxu0 %v5213
      %v6274 = vpop.f32.mrb[0].mxu0
      %v6275 = vadd.f32 %v6234, %v6274
      %v6276 = vpop.f32.mrb[0].mxu0
      %v6277 = vadd.f32 %v6236, %v6276
      %v6278 = vpop.f32.mrb[0].mxu0
      %v6279 = vpop.f32.mrb[0].mxu0
      %6280 = vdwg.mxu0
      %v6281 = vmax.f32 %v5742, 0.0
      %v6282 = vmax.f32 %v5744, 0.0
      %v6283 = vmax.f32 %v6275, 0.0
      %v6284 = vmax.f32 %v6277, 0.0
      %v6285 = vpack.c.bf16 %v6281, %v6281
      %v6286 = vpack.c.bf16 %v6282, %v6282
      %v6287 = vpack.c.bf16 %v6283, %v6283
      %v6288 = vpack.c.bf16 %v6284, %v6284
      %v6289 = vld [vmem:[%s283] sm:$0xf]
      %v6290 = vld [vmem:[%s283 + $0x4] sm:$0xf]
      %v6291 = vld [vmem:[%s283 + $0x8] sm:$0xf]
      %v6292 = vld [vmem:[%s283 + $0xc] sm:$0xf]
      %v6293 = vld [vmem:[%s283 + $0x10] sm:$0xf]
      %v6294 = vld [vmem:[%s283 + $0x14] sm:$0xf]
      %v6295 = vld [vmem:[%s283 + $0x18] sm:$0xf]
      %v6296 = vld [vmem:[%s283 + $0x1c] sm:$0xf]
      %v6297 = vld [vmem:[%s283 + $0x20] sm:$0xf]
      %v6298 = vld [vmem:[%s283 + $0x24] sm:$0xf]
      %v6299 = vld [vmem:[%s283 + $0x28] sm:$0xf]
      %v6300 = vld [vmem:[%s283 + $0x2c] sm:$0xf]
      %v6301 = vld [vmem:[%s283 + $0x30] sm:$0xf]
      %v6302 = vld [vmem:[%s283 + $0x34] sm:$0xf]
      %v6303 = vld [vmem:[%s283 + $0x38] sm:$0xf]
      %v6304 = vld [vmem:[%s283 + $0x3c] sm:$0xf]
      %v6305 = vld [vmem:[%s283 + $0x40] sm:$0xf]
      %v6306 = vld [vmem:[%s283 + $0x44] sm:$0xf]
      %v6307 = vld [vmem:[%s283 + $0x48] sm:$0xf]
      %v6308 = vld [vmem:[%s283 + $0x4c] sm:$0xf]
      %v6309 = vld [vmem:[%s283 + $0x50] sm:$0xf]
      %v6310 = vld [vmem:[%s283 + $0x54] sm:$0xf]
      %v6311 = vld [vmem:[%s283 + $0x58] sm:$0xf]
      %v6312 = vld [vmem:[%s283 + $0x5c] sm:$0xf]
      %v6313 = vld [vmem:[%s283 + $0x60] sm:$0xf]
      %v6314 = vld [vmem:[%s283 + $0x64] sm:$0xf]
      %v6315 = vld [vmem:[%s283 + $0x68] sm:$0xf]
      %v6316 = vld [vmem:[%s283 + $0x6c] sm:$0xf]
      %v6317 = vld [vmem:[%s283 + $0x70] sm:$0xf]
      %v6318 = vld [vmem:[%s283 + $0x74] sm:$0xf]
      %v6319 = vld [vmem:[%s283 + $0x78] sm:$0xf]
      %v6320 = vld [vmem:[%s283 + $0x7c] sm:$0xf]
      %v6321 = vld [vmem:[%s283 + $0x80] sm:$0xf]
      %v6322 = vld [vmem:[%s283 + $0x84] sm:$0xf]
      %v6323 = vld [vmem:[%s283 + $0x88] sm:$0xf]
      %v6324 = vld [vmem:[%s283 + $0x8c] sm:$0xf]
      %v6325 = vld [vmem:[%s283 + $0x90] sm:$0xf]
      %v6326 = vld [vmem:[%s283 + $0x94] sm:$0xf]
      %v6327 = vld [vmem:[%s283 + $0x98] sm:$0xf]
      %v6328 = vld [vmem:[%s283 + $0x9c] sm:$0xf]
      %v6329 = vld [vmem:[%s283 + $0xa0] sm:$0xf]
      %v6330 = vld [vmem:[%s283 + $0xa4] sm:$0xf]
      %v6331 = vld [vmem:[%s283 + $0xa8] sm:$0xf]
      %v6332 = vld [vmem:[%s283 + $0xac] sm:$0xf]
      %v6333 = vld [vmem:[%s283 + $0xb0] sm:$0xf]
      %v6334 = vld [vmem:[%s283 + $0xb4] sm:$0xf]
      %v6335 = vld [vmem:[%s283 + $0xb8] sm:$0xf]
      %v6336 = vld [vmem:[%s283 + $0xbc] sm:$0xf]
      %v6337 = vld [vmem:[%s283 + $0xc0] sm:$0xf]
      %v6338 = vld [vmem:[%s283 + $0xc4] sm:$0xf]
      %v6339 = vld [vmem:[%s283 + $0xc8] sm:$0xf]
      %v6340 = vld [vmem:[%s283 + $0xcc] sm:$0xf]
      %v6341 = vld [vmem:[%s283 + $0xd0] sm:$0xf]
      %v6342 = vld [vmem:[%s283 + $0xd4] sm:$0xf]
      %v6343 = vld [vmem:[%s283 + $0xd8] sm:$0xf]
      %v6344 = vld [vmem:[%s283 + $0xdc] sm:$0xf]
      %v6345 = vld [vmem:[%s283 + $0xe0] sm:$0xf]
      %v6346 = vld [vmem:[%s283 + $0xe4] sm:$0xf]
      %v6347 = vld [vmem:[%s283 + $0xe8] sm:$0xf]
      %v6348 = vld [vmem:[%s283 + $0xec] sm:$0xf]
      %v6349 = vld [vmem:[%s283 + $0xf0] sm:$0xf]
      %v6350 = vld [vmem:[%s283 + $0xf4] sm:$0xf]
      %v6351 = vld [vmem:[%s283 + $0xf8] sm:$0xf]
      %v6352 = vld [vmem:[%s283 + $0xfc] sm:$0xf]
      %v6353 = vld [vmem:[%s286] sm:$0x1]
      %v6355 = vlaneseq
      %v6356 = vshrl.u32 %v6355, 7
      %v6357 = vsub.s32 0, %v6356
      %v6358 = vrot.slane %v6353, %v6357
      %v6424 = vunpack.c.l.b16 %v6289
      %v6425 = vunpack.c.l.b16 %v6290
      %v6426 = vunpack.c.l.b16 %v6291
      %v6427 = vunpack.c.l.b16 %v6292
      %v6428 = vunpack.c.l.b16 %v6293
      %v6429 = vunpack.c.l.b16 %v6294
      %v6430 = vunpack.c.l.b16 %v6295
      %v6431 = vunpack.c.l.b16 %v6296
      %v6432 = vunpack.c.l.b16 %v6297
      %v6433 = vunpack.c.l.b16 %v6298
      %v6434 = vunpack.c.l.b16 %v6299
      %v6435 = vunpack.c.l.b16 %v6300
      %v6436 = vunpack.c.l.b16 %v6301
      %v6437 = vunpack.c.l.b16 %v6302
      %v6438 = vunpack.c.l.b16 %v6303
      %v6439 = vunpack.c.l.b16 %v6304
      %v6440 = vunpack.c.l.b16 %v6305
      %v6441 = vunpack.c.l.b16 %v6306
      %v6442 = vunpack.c.l.b16 %v6307
      %v6443 = vunpack.c.l.b16 %v6308
      %v6444 = vunpack.c.l.b16 %v6309
      %v6445 = vunpack.c.l.b16 %v6310
      %v6446 = vunpack.c.l.b16 %v6311
      %v6447 = vunpack.c.l.b16 %v6312
      %v6448 = vunpack.c.l.b16 %v6313
      %v6449 = vunpack.c.l.b16 %v6314
      %v6450 = vunpack.c.l.b16 %v6315
      %v6451 = vunpack.c.l.b16 %v6316
      %v6452 = vunpack.c.l.b16 %v6317
      %v6453 = vunpack.c.l.b16 %v6318
      %v6454 = vunpack.c.l.b16 %v6319
      %v6455 = vunpack.c.l.b16 %v6320
      %v6456 = vunpack.c.l.b16 %v6321
      %v6457 = vunpack.c.l.b16 %v6322
      %v6458 = vunpack.c.l.b16 %v6323
      %v6459 = vunpack.c.l.b16 %v6324
      %v6460 = vunpack.c.l.b16 %v6325
      %v6461 = vunpack.c.l.b16 %v6326
      %v6462 = vunpack.c.l.b16 %v6327
      %v6463 = vunpack.c.l.b16 %v6328
      %v6464 = vunpack.c.l.b16 %v6329
      %v6465 = vunpack.c.l.b16 %v6330
      %v6466 = vunpack.c.l.b16 %v6331
      %v6467 = vunpack.c.l.b16 %v6332
      %v6468 = vunpack.c.l.b16 %v6333
      %v6469 = vunpack.c.l.b16 %v6334
      %v6470 = vunpack.c.l.b16 %v6335
      %v6471 = vunpack.c.l.b16 %v6336
      %v6472 = vunpack.c.l.b16 %v6337
      %v6473 = vunpack.c.l.b16 %v6338
      %v6474 = vunpack.c.l.b16 %v6339
      %v6475 = vunpack.c.l.b16 %v6340
      %v6476 = vunpack.c.l.b16 %v6341
      %v6477 = vunpack.c.l.b16 %v6342
      %v6478 = vunpack.c.l.b16 %v6343
      %v6479 = vunpack.c.l.b16 %v6344
      %v6480 = vunpack.c.l.b16 %v6345
      %v6481 = vunpack.c.l.b16 %v6346
      %v6482 = vunpack.c.l.b16 %v6347
      %v6483 = vunpack.c.l.b16 %v6348
      %v6484 = vunpack.c.l.b16 %v6349
      %v6485 = vunpack.c.l.b16 %v6350
      %v6486 = vunpack.c.l.b16 %v6351
      %v6487 = vunpack.c.l.b16 %v6352
      %v6488 = vpack.c.b16 %v6425, %v6424
      %v6489 = vpack.c.b16 %v6427, %v6426
      %v6490 = vpack.c.b16 %v6429, %v6428
      %v6491 = vpack.c.b16 %v6431, %v6430
      %v6492 = vpack.c.b16 %v6433, %v6432
      %v6493 = vpack.c.b16 %v6435, %v6434
      %v6494 = vpack.c.b16 %v6437, %v6436
      %v6495 = vpack.c.b16 %v6439, %v6438
      %v6496 = vpack.c.b16 %v6441, %v6440
      %v6497 = vpack.c.b16 %v6443, %v6442
      %v6498 = vpack.c.b16 %v6445, %v6444
      %v6499 = vpack.c.b16 %v6447, %v6446
      %v6500 = vpack.c.b16 %v6449, %v6448
      %v6501 = vpack.c.b16 %v6451, %v6450
      %v6502 = vpack.c.b16 %v6453, %v6452
      %v6503 = vpack.c.b16 %v6455, %v6454
      %v6504 = vpack.c.b16 %v6457, %v6456
      %v6505 = vpack.c.b16 %v6459, %v6458
      %v6506 = vpack.c.b16 %v6461, %v6460
      %v6507 = vpack.c.b16 %v6463, %v6462
      %v6508 = vpack.c.b16 %v6465, %v6464
      %v6509 = vpack.c.b16 %v6467, %v6466
      %v6510 = vpack.c.b16 %v6469, %v6468
      %v6511 = vpack.c.b16 %v6471, %v6470
      %v6512 = vpack.c.b16 %v6473, %v6472
      %v6513 = vpack.c.b16 %v6475, %v6474
      %v6514 = vpack.c.b16 %v6477, %v6476
      %v6515 = vpack.c.b16 %v6479, %v6478
      %v6516 = vpack.c.b16 %v6481, %v6480
      %v6517 = vpack.c.b16 %v6483, %v6482
      %v6518 = vpack.c.b16 %v6485, %v6484
      %v6519 = vpack.c.b16 %v6487, %v6486
      %6552 = vmatprep.subr.bf16.mxu0 0
      %6553 = vmatpush1.bf16.msra.mxu0 %v6488
      %6554 = vmatprep.subr.bf16.mxu0 0
      %6555 = vmatpush1.bf16.msra.mxu0 %v6489
      %6556 = vmatprep.subr.bf16.mxu0 0
      %6557 = vmatpush1.bf16.msra.mxu0 %v6490
      %6558 = vmatprep.subr.bf16.mxu0 0
      %6559 = vmatpush1.bf16.msra.mxu0 %v6491
      %6560 = vmatprep.subr.bf16.mxu0 0
      %6561 = vmatpush1.bf16.msra.mxu0 %v6492
      %6562 = vmatprep.subr.bf16.mxu0 0
      %6563 = vmatpush1.bf16.msra.mxu0 %v6493
      %6564 = vmatprep.subr.bf16.mxu0 0
      %6565 = vmatpush1.bf16.msra.mxu0 %v6494
      %6566 = vmatprep.subr.bf16.mxu0 0
      %6567 = vmatpush1.bf16.msra.mxu0 %v6495
      %6568 = vmatprep.subr.bf16.mxu0 0
      %6569 = vmatpush1.bf16.msra.mxu0 %v6496
      %6570 = vmatprep.subr.bf16.mxu0 0
      %6571 = vmatpush1.bf16.msra.mxu0 %v6497
      %6572 = vmatprep.subr.bf16.mxu0 0
      %6573 = vmatpush1.bf16.msra.mxu0 %v6498
      %6574 = vmatprep.subr.bf16.mxu0 0
      %6575 = vmatpush1.bf16.msra.mxu0 %v6499
      %6576 = vmatprep.subr.bf16.mxu0 0
      %6577 = vmatpush1.bf16.msra.mxu0 %v6500
      %6578 = vmatprep.subr.bf16.mxu0 0
      %6579 = vmatpush1.bf16.msra.mxu0 %v6501
      %6580 = vmatprep.subr.bf16.mxu0 0
      %6581 = vmatpush1.bf16.msra.mxu0 %v6502
      %6582 = vmatprep.subr.bf16.mxu0 0
      %6583 = vmatpush1.bf16.msra.mxu0 %v6503
      %6584 = vmatprep.mubr.bf16.mxu0 %v6286
      %6585 = vmatmul.mubr.bf16.gmra.mrb[0].mxu0 %v6285
      %v6586 = vpop.f32.mrb[0].mxu0
      %v6587 = vadd.f32 %v6358, %v6586
      %v6588 = vpop.f32.mrb[0].mxu0
      %v6589 = vpop.f32.mrb[0].mxu0
      %v6590 = vpop.f32.mrb[0].mxu0
      %6591 = vdwg.mxu0
      %6592 = vmatprep.subr.bf16.mxu0 0
      %6593 = vmatpush1.bf16.msra.mxu0 %v6504
      %6594 = vmatprep.subr.bf16.mxu0 0
      %6595 = vmatpush1.bf16.msra.mxu0 %v6505
      %6596 = vmatprep.subr.bf16.mxu0 0
      %6597 = vmatpush1.bf16.msra.mxu0 %v6506
      %6598 = vmatprep.subr.bf16.mxu0 0
      %6599 = vmatpush1.bf16.msra.mxu0 %v6507
      %6600 = vmatprep.subr.bf16.mxu0 0
      %6601 = vmatpush1.bf16.msra.mxu0 %v6508
      %6602 = vmatprep.subr.bf16.mxu0 0
      %6603 = vmatpush1.bf16.msra.mxu0 %v6509
      %6604 = vmatprep.subr.bf16.mxu0 0
      %6605 = vmatpush1.bf16.msra.mxu0 %v6510
      %6606 = vmatprep.subr.bf16.mxu0 0
      %6607 = vmatpush1.bf16.msra.mxu0 %v6511
      %6608 = vmatprep.subr.bf16.mxu0 0
      %6609 = vmatpush1.bf16.msra.mxu0 %v6512
      %6610 = vmatprep.subr.bf16.mxu0 0
      %6611 = vmatpush1.bf16.msra.mxu0 %v6513
      %6612 = vmatprep.subr.bf16.mxu0 0
      %6613 = vmatpush1.bf16.msra.mxu0 %v6514
      %6614 = vmatprep.subr.bf16.mxu0 0
      %6615 = vmatpush1.bf16.msra.mxu0 %v6515
      %6616 = vmatprep.subr.bf16.mxu0 0
      %6617 = vmatpush1.bf16.msra.mxu0 %v6516
      %6618 = vmatprep.subr.bf16.mxu0 0
      %6619 = vmatpush1.bf16.msra.mxu0 %v6517
      %6620 = vmatprep.subr.bf16.mxu0 0
      %6621 = vmatpush1.bf16.msra.mxu0 %v6518
      %6622 = vmatprep.subr.bf16.mxu0 0
      %6623 = vmatpush1.bf16.msra.mxu0 %v6519
      %6624 = vmatprep.mubr.bf16.mxu0 %v6288
      %6625 = vmatmul.mubr.bf16.gmra.mrb[0].mxu0 %v6287
      %v6626 = vpop.f32.mrb[0].mxu0
      %v6627 = vadd.f32 %v6587, %v6626
      %v6628 = vpop.f32.mrb[0].mxu0
      %v6629 = vpop.f32.mrb[0].mxu0
      %v6630 = vpop.f32.mrb[0].mxu0
      %6631 = vdwg.mxu0
      %vm6632 = vcmask 58368
      %6633 = vst.msk [vmem:[%s290] sm:$0x3] %vm6632, %v6627
      %p6634 = scmp.lt.s32.totalorder %s16, 1
      %s6635 = scalar_select %p6634, %s16, 1
      %s6636 = smul.addr %s6635, 2
      %s6637 = scalar_lea.vmem %s5, %s6636
      // Predicated region
      $region41: #{agent_forward.7} parent=39 // pred_check
        %p6638 = pneg %p164
      $region42: #{agent_forward.7} parent=39 // pred_check_branch
        %6640 = sbr.rel (%p6638) target = $region44
      $region43: #{agent_forward.7} parent=39 // pred_region
        _
      $region44: #{agent_forward.7} parent=39 // pred_fallthru
        _
    $region40: #{agent_forward.7} parent=5 // pred_fallthru
      _
    %p6641 = scmp.le.s32.totalorder 2, %s11
    // Predicated region
    $region45: #{agent_forward.7} parent=5 // pred_check
      %p6642 = pneg %p6641
    $region46: #{agent_forward.7} parent=5 // pred_check_branch
      %6644 = sbr.rel (%p6642) target = $region48
    $region47: #{agent_forward.7} parent=5 // pred_region
      %s6645 = ssub.s32 %s11, 2
      // Predicated region
      $region49: #{agent_forward.7} parent=47 // pred_check
        %p6646 = pneg %p170
      $region50: #{agent_forward.7} parent=47 // pred_check_branch
        %6648 = sbr.rel (%p6646) target = $region52
      $region51: #{agent_forward.7} parent=47 // pred_region
        %p6649 = scmp.lt.s32.totalorder %s17, 1
        %s6650 = scalar_select %p6649, %s17, 1
        %s6651 = smul.addr %s6650, 2
        %s6652 = scalar_lea.vmem %s5, %s6651
      $region52: #{agent_forward.7} parent=47 // pred_fallthru
        _
    $region48: #{agent_forward.7} parent=5 // pred_fallthru
      _
  $region6: #{agent_forward.7} parent=0 // loop_footer
    %s15 = sadd.s32 1, %s11
  $region7: #{agent_forward.7} parent=0 // loop_footer_branch
    %10 = sbr.rel target = $region3
  $region8: #{agent_forward.7} parent=0 // loop_exit
    _

</llo_original>
